<compile_context>
chip_gen: v5e
topology: v5e:2x2
jax: 0.10.0
libtpu: 0.0.40
codegen_flags: <defaults>
</compile_context>

<pallas_src>
import functools

import jax
import jax.numpy as jnp
from jax.experimental import pallas as pl
from jax.experimental.pallas import tpu as pltpu

H = 256          # LSTM hidden size
E = 256          # embedding dim per table (LSTM input = 2 * E = 512)


def lstm_head_kernel(xi_ref, xc_ref, wii_ref, wic_ref, whh_ref, b_ref,
                     wfc_ref, bfc_ref, out_ref, gx_ref, hl_ref, *, T, B):
    """Full forward (minus the gathers) in one kernel invocation.

    xi_ref : (T*B, E)    image-embedding rows, seq-major        (VMEM)
    xc_ref : (T*B, E)    cell-embedding rows, seq-major         (VMEM)
    wii_ref: (E, 4H)     W_ih[:, :256]^T  (imgs half)
    wic_ref: (E, 4H)     W_ih[:, 256:]^T  (cells half)
    whh_ref: (H, 4H)     W_hh^T
    b_ref  : (1, 4H)     b_ih + b_hh
    wfc_ref: (H, 2)      fc weight^T
    bfc_ref: (1, 2)      fc bias
    out_ref: (T, 2)      sigmoid(fc(h_t[B-1, :]))  for every time step
    gx_ref : (T*B, 4H)   scratch: hoisted input projection
    hl_ref : (T, H)      scratch: lane-dense slab of h_t[B-1, :]
    """
    # Hoisted input projection: two M = T*B MXU passes (concat-free) instead of
    # T tiny M = B passes inside the recurrence.
    gx_ref[...] = (
        jnp.dot(xi_ref[...], wii_ref[...], preferred_element_type=jnp.float32)
        + jnp.dot(xc_ref[...], wic_ref[...], preferred_element_type=jnp.float32)
        + b_ref[...])

    whh = whh_ref[...]
    h = jnp.zeros((B, H), jnp.float32)
    c = jnp.zeros((B, H), jnp.float32)

    # T is small and static: unrolled loop keeps every slice / store index
    # static and lets the scheduler overlap work across time steps.
    for t in range(T):
        gates = gx_ref[pl.ds(t * B, B), :] + jnp.dot(
            h, whh, preferred_element_type=jnp.float32)          # (B, 4H)

        # PyTorch LSTM gate order: i, f, g, o
        i = jax.nn.sigmoid(gates[:, 0 * H:1 * H])
        f = jax.nn.sigmoid(gates[:, 1 * H:2 * H])
        g = jnp.tanh(gates[:, 2 * H:3 * H])
        o = jax.nn.sigmoid(gates[:, 3 * H:4 * H])

        c = f * c + i * g
        h = o * jnp.tanh(c)

        # Only the last batch row is consumed downstream (x[0][:, -1, :]).
        hl_ref[pl.ds(t, 1), :] = h[B - 1:B, :]

    # dropout(eval) == identity; fused fc(256->2) + sigmoid head.
    out_ref[...] = jax.nn.sigmoid(
        jnp.dot(hl_ref[...], wfc_ref[...], preferred_element_type=jnp.float32)
        + bfc_ref[...])


@jax.jit
def temporal_model_forward(cells, imgs, params):
    """cells, imgs: (T, B) int32 index tensors."""
    T, B = cells.shape
    # Embedding lookups are data-dependent HBM gathers; kept in XLA.
    emb_c = jnp.take(params["emb_cell"], cells, axis=0).reshape(T * B, E)
    emb_i = jnp.take(params["emb_ind"], imgs, axis=0).reshape(T * B, E)

    vmem = pltpu.MemorySpace.VMEM
    return pl.pallas_call(
        functools.partial(lstm_head_kernel, T=T, B=B),
        out_shape=jax.ShapeDtypeStruct((T, 2), jnp.float32),
        in_specs=[pl.BlockSpec(memory_space=vmem)] * 8,
        out_specs=pl.BlockSpec(memory_space=vmem),
        scratch_shapes=[pltpu.VMEM((T * B, 4 * H), jnp.float32),  # gx
                        pltpu.VMEM((T, H), jnp.float32)],         # h_last slab
    )(emb_i, emb_c,
      params["wihT_img"], params["wihT_cell"], params["whhT"], params["b"],
      params["wfcT"], params["bfc"])


def ref_forward(cells, imgs, params):
    """Pure-JAX reference (faithful to the PyTorch module) for correctness."""
    emb_c = jnp.take(params["emb_cell"], cells, axis=0)
    emb_i = jnp.take(params["emb_ind"], imgs, axis=0)
    data = jnp.concatenate([emb_i, emb_c], axis=2)                # (T, B, 512)
    T, B, _ = data.shape
    wihT = jnp.concatenate([params["wihT_img"], params["wihT_cell"]], axis=0)

    def step(carry, x_t):
        h, c = carry
        gates = x_t @ wihT + h @ params["whhT"] + params["b"][0]
        i = jax.nn.sigmoid(gates[:, 0 * H:1 * H])
        f = jax.nn.sigmoid(gates[:, 1 * H:2 * H])
        g = jnp.tanh(gates[:, 2 * H:3 * H])
        o = jax.nn.sigmoid(gates[:, 3 * H:4 * H])
        c = f * c + i * g
        h = o * jnp.tanh(c)
        return (h, c), h

    (_, _), hs = jax.lax.scan(
        step,
        (jnp.zeros((B, H), jnp.float32), jnp.zeros((B, H), jnp.float32)),
        data)
    last = hs[:, -1, :]                                           # (T, H)
    return jax.nn.sigmoid(last @ params["wfcT"] + params["bfc"][0])


def init_params(key):
    ks = jax.random.split(key, 9)
    s = 0.05
    return {
        "emb_ind": jax.random.normal(ks[0], (900, E), jnp.float32) * s,
        "emb_cell": jax.random.normal(ks[1], (5, E), jnp.float32) * s,
        # W_ih (4H, 512)^T pre-split into the imgs / cells halves of the concat.
        "wihT_img": jax.random.normal(ks[2], (E, 4 * H), jnp.float32) * s,
        "wihT_cell": jax.random.normal(ks[3], (E, 4 * H), jnp.float32) * s,
        "whhT": jax.random.normal(ks[4], (H, 4 * H), jnp.float32) * s,    # W_hh^T
        "b": (jax.random.normal(ks[5], (1, 4 * H), jnp.float32) * s       # b_ih + b_hh
              + jax.random.normal(ks[6], (1, 4 * H), jnp.float32) * s),
        "wfcT": jax.random.normal(ks[7], (H, 2), jnp.float32) * s,        # fc weight^T
        "bfc": jax.random.normal(ks[8], (1, 2), jnp.float32) * s,
    }


if __name__ == "__main__":
    key = jax.random.PRNGKey(0)
    kp, kc, ki = jax.random.split(key, 3)

    T, B = 8, 4
    params = init_params(kp)
    cells = jax.random.randint(kc, (T, B), 0, 5, dtype=jnp.int32)
    imgs = jax.random.randint(ki, (T, B), 0, 900, dtype=jnp.int32)

    out = temporal_model_forward(cells, imgs, params)
    out = jax.block_until_ready(out)

    ref = ref_forward(cells, imgs, params)
    assert out.shape == (T, 2), out.shape
    assert jnp.allclose(out, ref, atol=2e-5, rtol=2e-5), (out, ref)

    print("KERNEL_OK")
</pallas_src>

<mosaic_0001>
module attributes {stable_mosaic.version = 11 : i64} {
  func.func @lstm_head_kernel(%arg0: memref<32x256xf32, #tpu.memory_space<vmem>>, %arg1: memref<32x256xf32, #tpu.memory_space<vmem>>, %arg2: memref<256x1024xf32, #tpu.memory_space<vmem>>, %arg3: memref<256x1024xf32, #tpu.memory_space<vmem>>, %arg4: memref<256x1024xf32, #tpu.memory_space<vmem>>, %arg5: memref<1x1024xf32, #tpu.memory_space<vmem>>, %arg6: memref<256x2xf32, #tpu.memory_space<vmem>>, %arg7: memref<1x2xf32, #tpu.memory_space<vmem>>, %arg8: memref<8x2xf32, #tpu.memory_space<vmem>>, %arg9: memref<32x1024xf32, #tpu.memory_space<vmem>>, %arg10: memref<8x256xf32, #tpu.memory_space<vmem>>) attributes {dimension_semantics = [], scalar_prefetch = 0 : i64, scratch_operands = 2 : i64, tpu.core_type = #tpu.core_type<tc>} {
    %c0 = arith.constant 0 : index
    %c0_0 = arith.constant 0 : index
    %0 = vector.load %arg0[%c0, %c0_0] : memref<32x256xf32, #tpu.memory_space<vmem>>, vector<32x256xf32>
    %c0_1 = arith.constant 0 : index
    %c0_2 = arith.constant 0 : index
    %1 = vector.load %arg2[%c0_1, %c0_2] : memref<256x1024xf32, #tpu.memory_space<vmem>>, vector<256x1024xf32>
    %cst = arith.constant dense<0.000000e+00> : vector<32x1024xf32>
    %2 = tpu.matmul %0, %1, %cst {dimension_numbers = #tpu.dot_dimension_numbers<[1], [0], [0], [1], [0, 0, 1, 1], [], []>} : vector<32x256xf32>, vector<256x1024xf32>, vector<32x1024xf32> -> vector<32x1024xf32>
    %c0_3 = arith.constant 0 : index
    %c0_4 = arith.constant 0 : index
    %3 = vector.load %arg1[%c0_3, %c0_4] : memref<32x256xf32, #tpu.memory_space<vmem>>, vector<32x256xf32>
    %c0_5 = arith.constant 0 : index
    %c0_6 = arith.constant 0 : index
    %4 = vector.load %arg3[%c0_5, %c0_6] : memref<256x1024xf32, #tpu.memory_space<vmem>>, vector<256x1024xf32>
    %cst_7 = arith.constant dense<0.000000e+00> : vector<32x1024xf32>
    %5 = tpu.matmul %3, %4, %cst_7 {dimension_numbers = #tpu.dot_dimension_numbers<[1], [0], [0], [1], [0, 0, 1, 1], [], []>} : vector<32x256xf32>, vector<256x1024xf32>, vector<32x1024xf32> -> vector<32x1024xf32>
    %6 = arith.addf %2, %5 : vector<32x1024xf32>
    %c0_8 = arith.constant 0 : index
    %c0_9 = arith.constant 0 : index
    %7 = vector.load %arg5[%c0_8, %c0_9] : memref<1x1024xf32, #tpu.memory_space<vmem>>, vector<1x1024xf32>
    %8 = vector.broadcast %7 : vector<1x1024xf32> to vector<32x1024xf32>
    %9 = arith.addf %6, %8 : vector<32x1024xf32>
    %c0_10 = arith.constant 0 : index
    %c0_11 = arith.constant 0 : index
    %10 = vector.load %arg9[%c0_10, %c0_11] : memref<32x1024xf32, #tpu.memory_space<vmem>>, vector<32x1024xf32>
    tpu.vector_store %arg9[%c0_10, %c0_11], %9 {strides = array<i32>} : memref<32x1024xf32, #tpu.memory_space<vmem>>, vector<32x1024xf32>,
    %c0_12 = arith.constant 0 : index
    %c0_13 = arith.constant 0 : index
    %11 = vector.load %arg4[%c0_12, %c0_13] : memref<256x1024xf32, #tpu.memory_space<vmem>>, vector<256x1024xf32>
    %cst_14 = arith.constant 0.000000e+00 : f32
    %12 = vector.broadcast %cst_14 : f32 to vector<4x256xf32>
    %cst_15 = arith.constant 0.000000e+00 : f32
    %13 = vector.broadcast %cst_15 : f32 to vector<4x256xf32>
    %c0_16 = arith.constant 0 : index
    %c0_17 = arith.constant 0 : index
    %14 = vector.load %arg9[%c0_16, %c0_17] : memref<32x1024xf32, #tpu.memory_space<vmem>>, vector<4x1024xf32>
    %cst_18 = arith.constant dense<0.000000e+00> : vector<4x1024xf32>
    %15 = tpu.matmul %12, %11, %cst_18 {dimension_numbers = #tpu.dot_dimension_numbers<[1], [0], [0], [1], [0, 0, 1, 1], [], []>} : vector<4x256xf32>, vector<256x1024xf32>, vector<4x1024xf32> -> vector<4x1024xf32>
    %16 = arith.addf %14, %15 : vector<4x1024xf32>
    %17 = vector.extract_strided_slice %16 {offsets = [0, 0], sizes = [4, 256], strides = [1, 1]} : vector<4x1024xf32> to vector<4x256xf32>
    %18 = arith.negf %17 : vector<4x256xf32>
    %19 = math.exp %18 : vector<4x256xf32>
    %cst_19 = arith.constant 1.000000e+00 : f32
    %20 = vector.broadcast %cst_19 : f32 to vector<4x256xf32>
    %21 = arith.addf %20, %19 : vector<4x256xf32>
    %22 = arith.divf %20, %21 : vector<4x256xf32>
    %23 = vector.extract_strided_slice %16 {offsets = [0, 256], sizes = [4, 256], strides = [1, 1]} : vector<4x1024xf32> to vector<4x256xf32>
    %24 = arith.negf %23 : vector<4x256xf32>
    %25 = math.exp %24 : vector<4x256xf32>
    %cst_20 = arith.constant 1.000000e+00 : f32
    %26 = vector.broadcast %cst_20 : f32 to vector<4x256xf32>
    %27 = arith.addf %26, %25 : vector<4x256xf32>
    %28 = arith.divf %26, %27 : vector<4x256xf32>
    %29 = vector.extract_strided_slice %16 {offsets = [0, 512], sizes = [4, 256], strides = [1, 1]} : vector<4x1024xf32> to vector<4x256xf32>
    %30 = math.tanh %29 : vector<4x256xf32>
    %31 = vector.extract_strided_slice %16 {offsets = [0, 768], sizes = [4, 256], strides = [1, 1]} : vector<4x1024xf32> to vector<4x256xf32>
    %32 = arith.negf %31 : vector<4x256xf32>
    %33 = math.exp %32 : vector<4x256xf32>
    %cst_21 = arith.constant 1.000000e+00 : f32
    %34 = vector.broadcast %cst_21 : f32 to vector<4x256xf32>
    %35 = arith.addf %34, %33 : vector<4x256xf32>
    %36 = arith.divf %34, %35 : vector<4x256xf32>
    %37 = arith.mulf %28, %13 : vector<4x256xf32>
    %38 = arith.mulf %22, %30 : vector<4x256xf32>
    %39 = arith.addf %37, %38 : vector<4x256xf32>
    %40 = math.tanh %39 : vector<4x256xf32>
    %41 = arith.mulf %36, %40 : vector<4x256xf32>
    %42 = vector.extract_strided_slice %41 {offsets = [3, 0], sizes = [1, 256], strides = [1, 1]} : vector<4x256xf32> to vector<1x256xf32>
    %c0_22 = arith.constant 0 : index
    %c0_23 = arith.constant 0 : index
    %43 = vector.load %arg10[%c0_22, %c0_23] : memref<8x256xf32, #tpu.memory_space<vmem>>, vector<1x256xf32>
    tpu.vector_store %arg10[%c0_22, %c0_23], %42 {strides = array<i32>} : memref<8x256xf32, #tpu.memory_space<vmem>>, vector<1x256xf32>,
    %c4 = arith.constant 4 : index
    %c0_24 = arith.constant 0 : index
    %44 = vector.load %arg9[%c4, %c0_24] : memref<32x1024xf32, #tpu.memory_space<vmem>>, vector<4x1024xf32>
    %cst_25 = arith.constant dense<0.000000e+00> : vector<4x1024xf32>
    %45 = tpu.matmul %41, %11, %cst_25 {dimension_numbers = #tpu.dot_dimension_numbers<[1], [0], [0], [1], [0, 0, 1, 1], [], []>} : vector<4x256xf32>, vector<256x1024xf32>, vector<4x1024xf32> -> vector<4x1024xf32>
    %46 = arith.addf %44, %45 : vector<4x1024xf32>
    %47 = vector.extract_strided_slice %46 {offsets = [0, 0], sizes = [4, 256], strides = [1, 1]} : vector<4x1024xf32> to vector<4x256xf32>
    %48 = arith.negf %47 : vector<4x256xf32>
    %49 = math.exp %48 : vector<4x256xf32>
    %cst_26 = arith.constant 1.000000e+00 : f32
    %50 = vector.broadcast %cst_26 : f32 to vector<4x256xf32>
    %51 = arith.addf %50, %49 : vector<4x256xf32>
    %52 = arith.divf %50, %51 : vector<4x256xf32>
    %53 = vector.extract_strided_slice %46 {offsets = [0, 256], sizes = [4, 256], strides = [1, 1]} : vector<4x1024xf32> to vector<4x256xf32>
    %54 = arith.negf %53 : vector<4x256xf32>
    %55 = math.exp %54 : vector<4x256xf32>
    %cst_27 = arith.constant 1.000000e+00 : f32
    %56 = vector.broadcast %cst_27 : f32 to vector<4x256xf32>
    %57 = arith.addf %56, %55 : vector<4x256xf32>
    %58 = arith.divf %56, %57 : vector<4x256xf32>
    %59 = vector.extract_strided_slice %46 {offsets = [0, 512], sizes = [4, 256], strides = [1, 1]} : vector<4x1024xf32> to vector<4x256xf32>
    %60 = math.tanh %59 : vector<4x256xf32>
    %61 = vector.extract_strided_slice %46 {offsets = [0, 768], sizes = [4, 256], strides = [1, 1]} : vector<4x1024xf32> to vector<4x256xf32>
    %62 = arith.negf %61 : vector<4x256xf32>
    %63 = math.exp %62 : vector<4x256xf32>
    %cst_28 = arith.constant 1.000000e+00 : f32
    %64 = vector.broadcast %cst_28 : f32 to vector<4x256xf32>
    %65 = arith.addf %64, %63 : vector<4x256xf32>
    %66 = arith.divf %64, %65 : vector<4x256xf32>
    %67 = arith.mulf %58, %39 : vector<4x256xf32>
    %68 = arith.mulf %52, %60 : vector<4x256xf32>
    %69 = arith.addf %67, %68 : vector<4x256xf32>
    %70 = math.tanh %69 : vector<4x256xf32>
    %71 = arith.mulf %66, %70 : vector<4x256xf32>
    %72 = vector.extract_strided_slice %71 {offsets = [3, 0], sizes = [1, 256], strides = [1, 1]} : vector<4x256xf32> to vector<1x256xf32>
    %c1 = arith.constant 1 : index
    %c0_29 = arith.constant 0 : index
    %73 = vector.load %arg10[%c1, %c0_29] : memref<8x256xf32, #tpu.memory_space<vmem>>, vector<1x256xf32>
    tpu.vector_store %arg10[%c1, %c0_29], %72 {strides = array<i32>} : memref<8x256xf32, #tpu.memory_space<vmem>>, vector<1x256xf32>,
    %c8 = arith.constant 8 : index
    %c0_30 = arith.constant 0 : index
    %74 = vector.load %arg9[%c8, %c0_30] : memref<32x1024xf32, #tpu.memory_space<vmem>>, vector<4x1024xf32>
    %cst_31 = arith.constant dense<0.000000e+00> : vector<4x1024xf32>
    %75 = tpu.matmul %71, %11, %cst_31 {dimension_numbers = #tpu.dot_dimension_numbers<[1], [0], [0], [1], [0, 0, 1, 1], [], []>} : vector<4x256xf32>, vector<256x1024xf32>, vector<4x1024xf32> -> vector<4x1024xf32>
    %76 = arith.addf %74, %75 : vector<4x1024xf32>
    %77 = vector.extract_strided_slice %76 {offsets = [0, 0], sizes = [4, 256], strides = [1, 1]} : vector<4x1024xf32> to vector<4x256xf32>
    %78 = arith.negf %77 : vector<4x256xf32>
    %79 = math.exp %78 : vector<4x256xf32>
    %cst_32 = arith.constant 1.000000e+00 : f32
    %80 = vector.broadcast %cst_32 : f32 to vector<4x256xf32>
    %81 = arith.addf %80, %79 : vector<4x256xf32>
    %82 = arith.divf %80, %81 : vector<4x256xf32>
    %83 = vector.extract_strided_slice %76 {offsets = [0, 256], sizes = [4, 256], strides = [1, 1]} : vector<4x1024xf32> to vector<4x256xf32>
    %84 = arith.negf %83 : vector<4x256xf32>
    %85 = math.exp %84 : vector<4x256xf32>
    %cst_33 = arith.constant 1.000000e+00 : f32
    %86 = vector.broadcast %cst_33 : f32 to vector<4x256xf32>
    %87 = arith.addf %86, %85 : vector<4x256xf32>
    %88 = arith.divf %86, %87 : vector<4x256xf32>
    %89 = vector.extract_strided_slice %76 {offsets = [0, 512], sizes = [4, 256], strides = [1, 1]} : vector<4x1024xf32> to vector<4x256xf32>
    %90 = math.tanh %89 : vector<4x256xf32>
    %91 = vector.extract_strided_slice %76 {offsets = [0, 768], sizes = [4, 256], strides = [1, 1]} : vector<4x1024xf32> to vector<4x256xf32>
    %92 = arith.negf %91 : vector<4x256xf32>
    %93 = math.exp %92 : vector<4x256xf32>
    %cst_34 = arith.constant 1.000000e+00 : f32
    %94 = vector.broadcast %cst_34 : f32 to vector<4x256xf32>
    %95 = arith.addf %94, %93 : vector<4x256xf32>
    %96 = arith.divf %94, %95 : vector<4x256xf32>
    %97 = arith.mulf %88, %69 : vector<4x256xf32>
    %98 = arith.mulf %82, %90 : vector<4x256xf32>
    %99 = arith.addf %97, %98 : vector<4x256xf32>
    %100 = math.tanh %99 : vector<4x256xf32>
    %101 = arith.mulf %96, %100 : vector<4x256xf32>
    %102 = vector.extract_strided_slice %101 {offsets = [3, 0], sizes = [1, 256], strides = [1, 1]} : vector<4x256xf32> to vector<1x256xf32>
    %c2 = arith.constant 2 : index
    %c0_35 = arith.constant 0 : index
    %103 = vector.load %arg10[%c2, %c0_35] : memref<8x256xf32, #tpu.memory_space<vmem>>, vector<1x256xf32>
    tpu.vector_store %arg10[%c2, %c0_35], %102 {strides = array<i32>} : memref<8x256xf32, #tpu.memory_space<vmem>>, vector<1x256xf32>,
    %c12 = arith.constant 12 : index
    %c0_36 = arith.constant 0 : index
    %104 = vector.load %arg9[%c12, %c0_36] : memref<32x1024xf32, #tpu.memory_space<vmem>>, vector<4x1024xf32>
    %cst_37 = arith.constant dense<0.000000e+00> : vector<4x1024xf32>
    %105 = tpu.matmul %101, %11, %cst_37 {dimension_numbers = #tpu.dot_dimension_numbers<[1], [0], [0], [1], [0, 0, 1, 1], [], []>} : vector<4x256xf32>, vector<256x1024xf32>, vector<4x1024xf32> -> vector<4x1024xf32>
    %106 = arith.addf %104, %105 : vector<4x1024xf32>
    %107 = vector.extract_strided_slice %106 {offsets = [0, 0], sizes = [4, 256], strides = [1, 1]} : vector<4x1024xf32> to vector<4x256xf32>
    %108 = arith.negf %107 : vector<4x256xf32>
    %109 = math.exp %108 : vector<4x256xf32>
    %cst_38 = arith.constant 1.000000e+00 : f32
    %110 = vector.broadcast %cst_38 : f32 to vector<4x256xf32>
    %111 = arith.addf %110, %109 : vector<4x256xf32>
    %112 = arith.divf %110, %111 : vector<4x256xf32>
    %113 = vector.extract_strided_slice %106 {offsets = [0, 256], sizes = [4, 256], strides = [1, 1]} : vector<4x1024xf32> to vector<4x256xf32>
    %114 = arith.negf %113 : vector<4x256xf32>
    %115 = math.exp %114 : vector<4x256xf32>
    %cst_39 = arith.constant 1.000000e+00 : f32
    %116 = vector.broadcast %cst_39 : f32 to vector<4x256xf32>
    %117 = arith.addf %116, %115 : vector<4x256xf32>
    %118 = arith.divf %116, %117 : vector<4x256xf32>
    %119 = vector.extract_strided_slice %106 {offsets = [0, 512], sizes = [4, 256], strides = [1, 1]} : vector<4x1024xf32> to vector<4x256xf32>
    %120 = math.tanh %119 : vector<4x256xf32>
    %121 = vector.extract_strided_slice %106 {offsets = [0, 768], sizes = [4, 256], strides = [1, 1]} : vector<4x1024xf32> to vector<4x256xf32>
    %122 = arith.negf %121 : vector<4x256xf32>
    %123 = math.exp %122 : vector<4x256xf32>
    %cst_40 = arith.constant 1.000000e+00 : f32
    %124 = vector.broadcast %cst_40 : f32 to vector<4x256xf32>
    %125 = arith.addf %124, %123 : vector<4x256xf32>
    %126 = arith.divf %124, %125 : vector<4x256xf32>
    %127 = arith.mulf %118, %99 : vector<4x256xf32>
    %128 = arith.mulf %112, %120 : vector<4x256xf32>
    %129 = arith.addf %127, %128 : vector<4x256xf32>
    %130 = math.tanh %129 : vector<4x256xf32>
    %131 = arith.mulf %126, %130 : vector<4x256xf32>
    %132 = vector.extract_strided_slice %131 {offsets = [3, 0], sizes = [1, 256], strides = [1, 1]} : vector<4x256xf32> to vector<1x256xf32>
    %c3 = arith.constant 3 : index
    %c0_41 = arith.constant 0 : index
    %133 = vector.load %arg10[%c3, %c0_41] : memref<8x256xf32, #tpu.memory_space<vmem>>, vector<1x256xf32>
    tpu.vector_store %arg10[%c3, %c0_41], %132 {strides = array<i32>} : memref<8x256xf32, #tpu.memory_space<vmem>>, vector<1x256xf32>,
    %c16 = arith.constant 16 : index
    %c0_42 = arith.constant 0 : index
    %134 = vector.load %arg9[%c16, %c0_42] : memref<32x1024xf32, #tpu.memory_space<vmem>>, vector<4x1024xf32>
    %cst_43 = arith.constant dense<0.000000e+00> : vector<4x1024xf32>
    %135 = tpu.matmul %131, %11, %cst_43 {dimension_numbers = #tpu.dot_dimension_numbers<[1], [0], [0], [1], [0, 0, 1, 1], [], []>} : vector<4x256xf32>, vector<256x1024xf32>, vector<4x1024xf32> -> vector<4x1024xf32>
    %136 = arith.addf %134, %135 : vector<4x1024xf32>
    %137 = vector.extract_strided_slice %136 {offsets = [0, 0], sizes = [4, 256], strides = [1, 1]} : vector<4x1024xf32> to vector<4x256xf32>
    %138 = arith.negf %137 : vector<4x256xf32>
    %139 = math.exp %138 : vector<4x256xf32>
    %cst_44 = arith.constant 1.000000e+00 : f32
    %140 = vector.broadcast %cst_44 : f32 to vector<4x256xf32>
    %141 = arith.addf %140, %139 : vector<4x256xf32>
    %142 = arith.divf %140, %141 : vector<4x256xf32>
    %143 = vector.extract_strided_slice %136 {offsets = [0, 256], sizes = [4, 256], strides = [1, 1]} : vector<4x1024xf32> to vector<4x256xf32>
    %144 = arith.negf %143 : vector<4x256xf32>
    %145 = math.exp %144 : vector<4x256xf32>
    %cst_45 = arith.constant 1.000000e+00 : f32
    %146 = vector.broadcast %cst_45 : f32 to vector<4x256xf32>
    %147 = arith.addf %146, %145 : vector<4x256xf32>
    %148 = arith.divf %146, %147 : vector<4x256xf32>
    %149 = vector.extract_strided_slice %136 {offsets = [0, 512], sizes = [4, 256], strides = [1, 1]} : vector<4x1024xf32> to vector<4x256xf32>
    %150 = math.tanh %149 : vector<4x256xf32>
    %151 = vector.extract_strided_slice %136 {offsets = [0, 768], sizes = [4, 256], strides = [1, 1]} : vector<4x1024xf32> to vector<4x256xf32>
    %152 = arith.negf %151 : vector<4x256xf32>
    %153 = math.exp %152 : vector<4x256xf32>
    %cst_46 = arith.constant 1.000000e+00 : f32
    %154 = vector.broadcast %cst_46 : f32 to vector<4x256xf32>
    %155 = arith.addf %154, %153 : vector<4x256xf32>
    %156 = arith.divf %154, %155 : vector<4x256xf32>
    %157 = arith.mulf %148, %129 : vector<4x256xf32>
    %158 = arith.mulf %142, %150 : vector<4x256xf32>
    %159 = arith.addf %157, %158 : vector<4x256xf32>
    %160 = math.tanh %159 : vector<4x256xf32>
    %161 = arith.mulf %156, %160 : vector<4x256xf32>
    %162 = vector.extract_strided_slice %161 {offsets = [3, 0], sizes = [1, 256], strides = [1, 1]} : vector<4x256xf32> to vector<1x256xf32>
    %c4_47 = arith.constant 4 : index
    %c0_48 = arith.constant 0 : index
    %163 = vector.load %arg10[%c4_47, %c0_48] : memref<8x256xf32, #tpu.memory_space<vmem>>, vector<1x256xf32>
    tpu.vector_store %arg10[%c4_47, %c0_48], %162 {strides = array<i32>} : memref<8x256xf32, #tpu.memory_space<vmem>>, vector<1x256xf32>,
    %c20 = arith.constant 20 : index
    %c0_49 = arith.constant 0 : index
    %164 = vector.load %arg9[%c20, %c0_49] : memref<32x1024xf32, #tpu.memory_space<vmem>>, vector<4x1024xf32>
    %cst_50 = arith.constant dense<0.000000e+00> : vector<4x1024xf32>
    %165 = tpu.matmul %161, %11, %cst_50 {dimension_numbers = #tpu.dot_dimension_numbers<[1], [0], [0], [1], [0, 0, 1, 1], [], []>} : vector<4x256xf32>, vector<256x1024xf32>, vector<4x1024xf32> -> vector<4x1024xf32>
    %166 = arith.addf %164, %165 : vector<4x1024xf32>
    %167 = vector.extract_strided_slice %166 {offsets = [0, 0], sizes = [4, 256], strides = [1, 1]} : vector<4x1024xf32> to vector<4x256xf32>
    %168 = arith.negf %167 : vector<4x256xf32>
    %169 = math.exp %168 : vector<4x256xf32>
    %cst_51 = arith.constant 1.000000e+00 : f32
    %170 = vector.broadcast %cst_51 : f32 to vector<4x256xf32>
    %171 = arith.addf %170, %169 : vector<4x256xf32>
    %172 = arith.divf %170, %171 : vector<4x256xf32>
    %173 = vector.extract_strided_slice %166 {offsets = [0, 256], sizes = [4, 256], strides = [1, 1]} : vector<4x1024xf32> to vector<4x256xf32>
    %174 = arith.negf %173 : vector<4x256xf32>
    %175 = math.exp %174 : vector<4x256xf32>
    %cst_52 = arith.constant 1.000000e+00 : f32
    %176 = vector.broadcast %cst_52 : f32 to vector<4x256xf32>
    %177 = arith.addf %176, %175 : vector<4x256xf32>
    %178 = arith.divf %176, %177 : vector<4x256xf32>
    %179 = vector.extract_strided_slice %166 {offsets = [0, 512], sizes = [4, 256], strides = [1, 1]} : vector<4x1024xf32> to vector<4x256xf32>
    %180 = math.tanh %179 : vector<4x256xf32>
    %181 = vector.extract_strided_slice %166 {offsets = [0, 768], sizes = [4, 256], strides = [1, 1]} : vector<4x1024xf32> to vector<4x256xf32>
    %182 = arith.negf %181 : vector<4x256xf32>
    %183 = math.exp %182 : vector<4x256xf32>
    %cst_53 = arith.constant 1.000000e+00 : f32
    %184 = vector.broadcast %cst_53 : f32 to vector<4x256xf32>
    %185 = arith.addf %184, %183 : vector<4x256xf32>
    %186 = arith.divf %184, %185 : vector<4x256xf32>
    %187 = arith.mulf %178, %159 : vector<4x256xf32>
    %188 = arith.mulf %172, %180 : vector<4x256xf32>
    %189 = arith.addf %187, %188 : vector<4x256xf32>
    %190 = math.tanh %189 : vector<4x256xf32>
    %191 = arith.mulf %186, %190 : vector<4x256xf32>
    %192 = vector.extract_strided_slice %191 {offsets = [3, 0], sizes = [1, 256], strides = [1, 1]} : vector<4x256xf32> to vector<1x256xf32>
    %c5 = arith.constant 5 : index
    %c0_54 = arith.constant 0 : index
    %193 = vector.load %arg10[%c5, %c0_54] : memref<8x256xf32, #tpu.memory_space<vmem>>, vector<1x256xf32>
    tpu.vector_store %arg10[%c5, %c0_54], %192 {strides = array<i32>} : memref<8x256xf32, #tpu.memory_space<vmem>>, vector<1x256xf32>,
    %c24 = arith.constant 24 : index
    %c0_55 = arith.constant 0 : index
    %194 = vector.load %arg9[%c24, %c0_55] : memref<32x1024xf32, #tpu.memory_space<vmem>>, vector<4x1024xf32>
    %cst_56 = arith.constant dense<0.000000e+00> : vector<4x1024xf32>
    %195 = tpu.matmul %191, %11, %cst_56 {dimension_numbers = #tpu.dot_dimension_numbers<[1], [0], [0], [1], [0, 0, 1, 1], [], []>} : vector<4x256xf32>, vector<256x1024xf32>, vector<4x1024xf32> -> vector<4x1024xf32>
    %196 = arith.addf %194, %195 : vector<4x1024xf32>
    %197 = vector.extract_strided_slice %196 {offsets = [0, 0], sizes = [4, 256], strides = [1, 1]} : vector<4x1024xf32> to vector<4x256xf32>
    %198 = arith.negf %197 : vector<4x256xf32>
    %199 = math.exp %198 : vector<4x256xf32>
    %cst_57 = arith.constant 1.000000e+00 : f32
    %200 = vector.broadcast %cst_57 : f32 to vector<4x256xf32>
    %201 = arith.addf %200, %199 : vector<4x256xf32>
    %202 = arith.divf %200, %201 : vector<4x256xf32>
    %203 = vector.extract_strided_slice %196 {offsets = [0, 256], sizes = [4, 256], strides = [1, 1]} : vector<4x1024xf32> to vector<4x256xf32>
    %204 = arith.negf %203 : vector<4x256xf32>
    %205 = math.exp %204 : vector<4x256xf32>
    %cst_58 = arith.constant 1.000000e+00 : f32
    %206 = vector.broadcast %cst_58 : f32 to vector<4x256xf32>
    %207 = arith.addf %206, %205 : vector<4x256xf32>
    %208 = arith.divf %206, %207 : vector<4x256xf32>
    %209 = vector.extract_strided_slice %196 {offsets = [0, 512], sizes = [4, 256], strides = [1, 1]} : vector<4x1024xf32> to vector<4x256xf32>
    %210 = math.tanh %209 : vector<4x256xf32>
    %211 = vector.extract_strided_slice %196 {offsets = [0, 768], sizes = [4, 256], strides = [1, 1]} : vector<4x1024xf32> to vector<4x256xf32>
    %212 = arith.negf %211 : vector<4x256xf32>
    %213 = math.exp %212 : vector<4x256xf32>
    %cst_59 = arith.constant 1.000000e+00 : f32
    %214 = vector.broadcast %cst_59 : f32 to vector<4x256xf32>
    %215 = arith.addf %214, %213 : vector<4x256xf32>
    %216 = arith.divf %214, %215 : vector<4x256xf32>
    %217 = arith.mulf %208, %189 : vector<4x256xf32>
    %218 = arith.mulf %202, %210 : vector<4x256xf32>
    %219 = arith.addf %217, %218 : vector<4x256xf32>
    %220 = math.tanh %219 : vector<4x256xf32>
    %221 = arith.mulf %216, %220 : vector<4x256xf32>
    %222 = vector.extract_strided_slice %221 {offsets = [3, 0], sizes = [1, 256], strides = [1, 1]} : vector<4x256xf32> to vector<1x256xf32>
    %c6 = arith.constant 6 : index
    %c0_60 = arith.constant 0 : index
    %223 = vector.load %arg10[%c6, %c0_60] : memref<8x256xf32, #tpu.memory_space<vmem>>, vector<1x256xf32>
    tpu.vector_store %arg10[%c6, %c0_60], %222 {strides = array<i32>} : memref<8x256xf32, #tpu.memory_space<vmem>>, vector<1x256xf32>,
    %c28 = arith.constant 28 : index
    %c0_61 = arith.constant 0 : index
    %224 = vector.load %arg9[%c28, %c0_61] : memref<32x1024xf32, #tpu.memory_space<vmem>>, vector<4x1024xf32>
    %cst_62 = arith.constant dense<0.000000e+00> : vector<4x1024xf32>
    %225 = tpu.matmul %221, %11, %cst_62 {dimension_numbers = #tpu.dot_dimension_numbers<[1], [0], [0], [1], [0, 0, 1, 1], [], []>} : vector<4x256xf32>, vector<256x1024xf32>, vector<4x1024xf32> -> vector<4x1024xf32>
    %226 = arith.addf %224, %225 : vector<4x1024xf32>
    %227 = vector.extract_strided_slice %226 {offsets = [0, 0], sizes = [4, 256], strides = [1, 1]} : vector<4x1024xf32> to vector<4x256xf32>
    %228 = arith.negf %227 : vector<4x256xf32>
    %229 = math.exp %228 : vector<4x256xf32>
    %cst_63 = arith.constant 1.000000e+00 : f32
    %230 = vector.broadcast %cst_63 : f32 to vector<4x256xf32>
    %231 = arith.addf %230, %229 : vector<4x256xf32>
    %232 = arith.divf %230, %231 : vector<4x256xf32>
    %233 = vector.extract_strided_slice %226 {offsets = [0, 256], sizes = [4, 256], strides = [1, 1]} : vector<4x1024xf32> to vector<4x256xf32>
    %234 = arith.negf %233 : vector<4x256xf32>
    %235 = math.exp %234 : vector<4x256xf32>
    %cst_64 = arith.constant 1.000000e+00 : f32
    %236 = vector.broadcast %cst_64 : f32 to vector<4x256xf32>
    %237 = arith.addf %236, %235 : vector<4x256xf32>
    %238 = arith.divf %236, %237 : vector<4x256xf32>
    %239 = vector.extract_strided_slice %226 {offsets = [0, 512], sizes = [4, 256], strides = [1, 1]} : vector<4x1024xf32> to vector<4x256xf32>
    %240 = math.tanh %239 : vector<4x256xf32>
    %241 = vector.extract_strided_slice %226 {offsets = [0, 768], sizes = [4, 256], strides = [1, 1]} : vector<4x1024xf32> to vector<4x256xf32>
    %242 = arith.negf %241 : vector<4x256xf32>
    %243 = math.exp %242 : vector<4x256xf32>
    %cst_65 = arith.constant 1.000000e+00 : f32
    %244 = vector.broadcast %cst_65 : f32 to vector<4x256xf32>
    %245 = arith.addf %244, %243 : vector<4x256xf32>
    %246 = arith.divf %244, %245 : vector<4x256xf32>
    %247 = arith.mulf %238, %219 : vector<4x256xf32>
    %248 = arith.mulf %232, %240 : vector<4x256xf32>
    %249 = arith.addf %247, %248 : vector<4x256xf32>
    %250 = math.tanh %249 : vector<4x256xf32>
    %251 = arith.mulf %246, %250 : vector<4x256xf32>
    %252 = vector.extract_strided_slice %251 {offsets = [3, 0], sizes = [1, 256], strides = [1, 1]} : vector<4x256xf32> to vector<1x256xf32>
    %c7 = arith.constant 7 : index
    %c0_66 = arith.constant 0 : index
    %253 = vector.load %arg10[%c7, %c0_66] : memref<8x256xf32, #tpu.memory_space<vmem>>, vector<1x256xf32>
    tpu.vector_store %arg10[%c7, %c0_66], %252 {strides = array<i32>} : memref<8x256xf32, #tpu.memory_space<vmem>>, vector<1x256xf32>,
    %c0_67 = arith.constant 0 : index
    %c0_68 = arith.constant 0 : index
    %254 = vector.load %arg10[%c0_67, %c0_68] : memref<8x256xf32, #tpu.memory_space<vmem>>, vector<8x256xf32>
    %c0_69 = arith.constant 0 : index
    %c0_70 = arith.constant 0 : index
    %255 = vector.load %arg6[%c0_69, %c0_70] : memref<256x2xf32, #tpu.memory_space<vmem>>, vector<256x2xf32>
    %cst_71 = arith.constant dense<0.000000e+00> : vector<8x2xf32>
    %256 = tpu.matmul %254, %255, %cst_71 {dimension_numbers = #tpu.dot_dimension_numbers<[1], [0], [0], [1], [0, 0, 1, 1], [], []>} : vector<8x256xf32>, vector<256x2xf32>, vector<8x2xf32> -> vector<8x2xf32>
    %c0_72 = arith.constant 0 : index
    %c0_73 = arith.constant 0 : index
    %257 = vector.load %arg7[%c0_72, %c0_73] : memref<1x2xf32, #tpu.memory_space<vmem>>, vector<1x2xf32>
    %258 = vector.broadcast %257 : vector<1x2xf32> to vector<8x2xf32>
    %259 = arith.addf %256, %258 : vector<8x2xf32>
    %260 = arith.negf %259 : vector<8x2xf32>
    %261 = math.exp %260 : vector<8x2xf32>
    %cst_74 = arith.constant 1.000000e+00 : f32
    %262 = vector.broadcast %cst_74 : f32 to vector<8x2xf32>
    %263 = arith.addf %262, %261 : vector<8x2xf32>
    %264 = arith.divf %262, %263 : vector<8x2xf32>
    %c0_75 = arith.constant 0 : index
    %c0_76 = arith.constant 0 : index
    %265 = vector.load %arg8[%c0_75, %c0_76] : memref<8x2xf32, #tpu.memory_space<vmem>>, vector<8x2xf32>
    tpu.vector_store %arg8[%c0_75, %c0_76], %264 {strides = array<i32>} : memref<8x2xf32, #tpu.memory_space<vmem>>, vector<8x2xf32>,
    return
  }
}

</mosaic_0001>

<llo_original>
// kernel: temporal_model_forward.1
$region0: #{temporal_model_forward.1}
  #allocation0 [shape = 'u32[]', space=smem, size = 0x4, offset = 0x4, fixed_abs, tag = 'smem constant byte address 0x4 - core index']
  #allocation1 [shape = 'u32[72,128]{1,0:T(1,128)}', space=vmem, size = 0x9000, scoped, tag = 'internal scratch']
  #allocation2 [shape = 'f32[32,1024]{1,0:T(8,128)}', space=vmem, size = 0x20000, scoped, tag = 'scratch operand']
  #allocation3 [shape = 'f32[8,256]{1,0:T(8,128)}', space=vmem, size = 0x2000, scoped, tag = 'scratch operand']
  %s0 = inlined_call_operand.vmem [shape: f32[32,256], index: 0, kind: input, shape index: {}]
  %s1 = inlined_call_operand.vmem [shape: f32[32,256], index: 1, kind: input, shape index: {}]
  %s2 = inlined_call_operand.hbm [shape: f32[256,1024], index: 2, kind: input, shape index: {}]
  %s3 = inlined_call_operand.hbm [shape: f32[256,1024], index: 3, kind: input, shape index: {}]
  %s4 = inlined_call_operand.hbm [shape: f32[256,1024], index: 4, kind: input, shape index: {}]
  %s5 = inlined_call_operand.vmem [shape: f32[1,1024], index: 5, kind: input, shape index: {}]
  %s6 = inlined_call_operand.vmem [shape: f32[256,2], index: 6, kind: input, shape index: {}]
  %s7 = inlined_call_operand.vmem [shape: f32[1,2], index: 7, kind: input, shape index: {}]
  %s8 = inlined_call_operand.vmem [shape: f32[8,2], index: 8, kind: output, shape index: {}]
  %s9 = sld [smem:[#allocation0]]
  $region54: #{temporal_model_forward.1} parent=0
    _
  %s11 = ssub.s32 1, %s9
  %s12 = scalar_select 0, %s11, %s9
  $region1: #{temporal_model_forward.1} parent=0
    #allocation4 [shape = 'u8[1048576]{0}', space=vmem, size = 0x100000, scoped, tag = 'input window, operand 2, single buffered']
    #allocation5 [shape = 's32[1]{0}', space=sflag, size = 0x4, scoped, tag = 'scoped memory for temporal_model_forward.1']
    #allocation6 [shape = 'u8[1048576]{0}', space=vmem, size = 0x100000, scoped, tag = 'input window, operand 3, single buffered']
    #allocation7 [shape = 's32[1]{0}', space=sflag, size = 0x4, scoped, tag = 'scoped memory for temporal_model_forward.1']
    #allocation8 [shape = 'u8[1048576]{0}', space=vmem, size = 0x100000, scoped, tag = 'input window, operand 4, single buffered']
    %13 = vsyncpa [#allocation5], 0
    %14 = vsyncpa [#allocation7], 0
    // Predicated region
    $region2: #{temporal_model_forward.1} parent=1 // pred_check
      _
    $region3: #{temporal_model_forward.1} parent=1 // pred_check_branch
      %16 = sbr.rel (0) target = $region5
    $region4: #{temporal_model_forward.1} parent=1 // pred_region
      _
    $region5: #{temporal_model_forward.1} parent=1 // pred_fallthru
      _
    // Predicated region
    $region6: #{temporal_model_forward.1} parent=1 // pred_check
      _
    $region7: #{temporal_model_forward.1} parent=1 // pred_check_branch
      %18 = sbr.rel (0) target = $region9
    $region8: #{temporal_model_forward.1} parent=1 // pred_region
      _
    $region9: #{temporal_model_forward.1} parent=1 // pred_fallthru
      _
    // Predicated region
    $region10: #{temporal_model_forward.1} parent=1 // pred_check
      _
    $region11: #{temporal_model_forward.1} parent=1 // pred_check_branch
      %20 = sbr.rel (0) target = $region13
    $region12: #{temporal_model_forward.1} parent=1 // pred_region
      %22 = vsyncadd [#allocation5], 0
      %s23 = sshll.u32 %s2, 4
      %s24 = int_to_ptr.hbm [resolvable:$true] %s23
      %s25 = sshll.u32 [#allocation4], 4
      %s26 = int_to_ptr.vmem [resolvable:$true] %s25
      %31 = dma.hbm_to_vmem [thread:$0]  %s24, 32768, %s26, [#allocation5], 1024, 1024, 64
    $region13: #{temporal_model_forward.1} parent=1 // pred_fallthru
      _
    // Predicated region
    $region14: #{temporal_model_forward.1} parent=1 // pred_check
      _
    $region15: #{temporal_model_forward.1} parent=1 // pred_check_branch
      %33 = sbr.rel (0) target = $region17
    $region16: #{temporal_model_forward.1} parent=1 // pred_region
      %35 = vsyncadd [#allocation7], 0
      %s36 = sshll.u32 %s3, 4
      %s37 = int_to_ptr.hbm [resolvable:$true] %s36
      %s38 = sshll.u32 [#allocation6], 4
      %s39 = int_to_ptr.vmem [resolvable:$true] %s38
      %44 = dma.hbm_to_vmem [thread:$0]  %s37, 32768, %s39, [#allocation7], 1024, 1024, 64
    $region17: #{temporal_model_forward.1} parent=1 // pred_fallthru
      _
    // Predicated region
    $region18: #{temporal_model_forward.1} parent=1 // pred_check
      _
    $region19: #{temporal_model_forward.1} parent=1 // pred_check_branch
      %46 = sbr.rel (0) target = $region21
    $region20: #{temporal_model_forward.1} parent=1 // pred_region
      %48 = vsyncadd [#allocation7], 0
      %s49 = sshll.u32 %s4, 4
      %s50 = int_to_ptr.hbm [resolvable:$true] %s49
      %s51 = sshll.u32 [#allocation8], 4
      %s52 = int_to_ptr.vmem [resolvable:$true] %s51
      %57 = dma.hbm_to_vmem [thread:$0]  %s50, 32768, %s52, [#allocation7], 1024, 1024, 64
    $region21: #{temporal_model_forward.1} parent=1 // pred_fallthru
      _
    // Predicated region
    $region22: #{temporal_model_forward.1} parent=1 // pred_check
      _
    $region23: #{temporal_model_forward.1} parent=1 // pred_check_branch
      %59 = sbr.rel (0) target = $region25
    $region24: #{temporal_model_forward.1} parent=1 // pred_region
      _
    $region25: #{temporal_model_forward.1} parent=1 // pred_fallthru
      _
    // Predicated region
    $region26: #{temporal_model_forward.1} parent=1 // pred_check
      _
    $region27: #{temporal_model_forward.1} parent=1 // pred_check_branch
      %61 = sbr.rel (0) target = $region29
    $region28: #{temporal_model_forward.1} parent=1 // pred_region
      _
    $region29: #{temporal_model_forward.1} parent=1 // pred_fallthru
      _
    // Predicated region
    $region30: #{temporal_model_forward.1} parent=1 // pred_check
      _
    $region31: #{temporal_model_forward.1} parent=1 // pred_check_branch
      %63 = sbr.rel (0) target = $region33
    $region32: #{temporal_model_forward.1} parent=1 // pred_region
      _
    $region33: #{temporal_model_forward.1} parent=1 // pred_fallthru
      _
    // Predicated region
    $region34: #{temporal_model_forward.1} parent=1 // pred_check
      _
    $region35: #{temporal_model_forward.1} parent=1 // pred_check_branch
      %65 = sbr.rel (0) target = $region37
    $region36: #{temporal_model_forward.1} parent=1 // pred_region
      %67 = dma.done [#allocation5], 32768
    $region37: #{temporal_model_forward.1} parent=1 // pred_fallthru
      _
    // Predicated region
    $region38: #{temporal_model_forward.1} parent=1 // pred_check
      _
    $region39: #{temporal_model_forward.1} parent=1 // pred_check_branch
      %69 = sbr.rel (0) target = $region41
    $region40: #{temporal_model_forward.1} parent=1 // pred_region
      %71 = dma.done [#allocation7], 32768
    $region41: #{temporal_model_forward.1} parent=1 // pred_fallthru
      _
    // Predicated region
    $region42: #{temporal_model_forward.1} parent=1 // pred_check
      _
    $region43: #{temporal_model_forward.1} parent=1 // pred_check_branch
      %73 = sbr.rel (0) target = $region45
    $region44: #{temporal_model_forward.1} parent=1 // pred_region
      %75 = dma.done [#allocation7], 32768
    $region45: #{temporal_model_forward.1} parent=1 // pred_fallthru
      _
    %v76 = vld [vmem:[%s0] sm:$0xff]
    %v77 = vld [vmem:[%s0 + $0x8] sm:$0xff]
    %v78 = vld [vmem:[%s0 + $0x10] sm:$0xff]
    %v79 = vld [vmem:[%s0 + $0x18] sm:$0xff]
    %v80 = vld [vmem:[%s0 + $0x20] sm:$0xff]
    %v81 = vld [vmem:[%s0 + $0x28] sm:$0xff]
    %v82 = vld [vmem:[%s0 + $0x30] sm:$0xff]
    %v83 = vld [vmem:[%s0 + $0x38] sm:$0xff]
    %v84 = vld [vmem:[#allocation4] sm:$0xff]
    %v85 = vld [vmem:[#allocation4 + $0x8] sm:$0xff]
    %v86 = vld [vmem:[#allocation4 + $0x10] sm:$0xff]
    %v87 = vld [vmem:[#allocation4 + $0x18] sm:$0xff]
    %v88 = vld [vmem:[#allocation4 + $0x20] sm:$0xff]
    %v89 = vld [vmem:[#allocation4 + $0x28] sm:$0xff]
    %v90 = vld [vmem:[#allocation4 + $0x30] sm:$0xff]
    %v91 = vld [vmem:[#allocation4 + $0x38] sm:$0xff]
    %v92 = vld [vmem:[#allocation4 + $0x40] sm:$0xff]
    %v93 = vld [vmem:[#allocation4 + $0x48] sm:$0xff]
    %v94 = vld [vmem:[#allocation4 + $0x50] sm:$0xff]
    %v95 = vld [vmem:[#allocation4 + $0x58] sm:$0xff]
    %v96 = vld [vmem:[#allocation4 + $0x60] sm:$0xff]
    %v97 = vld [vmem:[#allocation4 + $0x68] sm:$0xff]
    %v98 = vld [vmem:[#allocation4 + $0x70] sm:$0xff]
    %v99 = vld [vmem:[#allocation4 + $0x78] sm:$0xff]
    %v100 = vld [vmem:[#allocation4 + $0x80] sm:$0xff]
    %v101 = vld [vmem:[#allocation4 + $0x88] sm:$0xff]
    %v102 = vld [vmem:[#allocation4 + $0x90] sm:$0xff]
    %v103 = vld [vmem:[#allocation4 + $0x98] sm:$0xff]
    %v104 = vld [vmem:[#allocation4 + $0xa0] sm:$0xff]
    %v105 = vld [vmem:[#allocation4 + $0xa8] sm:$0xff]
    %v106 = vld [vmem:[#allocation4 + $0xb0] sm:$0xff]
    %v107 = vld [vmem:[#allocation4 + $0xb8] sm:$0xff]
    %v108 = vld [vmem:[#allocation4 + $0xc0] sm:$0xff]
    %v109 = vld [vmem:[#allocation4 + $0xc8] sm:$0xff]
    %v110 = vld [vmem:[#allocation4 + $0xd0] sm:$0xff]
    %v111 = vld [vmem:[#allocation4 + $0xd8] sm:$0xff]
    %v112 = vld [vmem:[#allocation4 + $0xe0] sm:$0xff]
    %v113 = vld [vmem:[#allocation4 + $0xe8] sm:$0xff]
    %v114 = vld [vmem:[#allocation4 + $0xf0] sm:$0xff]
    %v115 = vld [vmem:[#allocation4 + $0xf8] sm:$0xff]
    %v116 = vld [vmem:[#allocation4 + $0x100] sm:$0xff]
    %v117 = vld [vmem:[#allocation4 + $0x108] sm:$0xff]
    %v118 = vld [vmem:[#allocation4 + $0x110] sm:$0xff]
    %v119 = vld [vmem:[#allocation4 + $0x118] sm:$0xff]
    %v120 = vld [vmem:[#allocation4 + $0x120] sm:$0xff]
    %v121 = vld [vmem:[#allocation4 + $0x128] sm:$0xff]
    %v122 = vld [vmem:[#allocation4 + $0x130] sm:$0xff]
    %v123 = vld [vmem:[#allocation4 + $0x138] sm:$0xff]
    %v124 = vld [vmem:[#allocation4 + $0x140] sm:$0xff]
    %v125 = vld [vmem:[#allocation4 + $0x148] sm:$0xff]
    %v126 = vld [vmem:[#allocation4 + $0x150] sm:$0xff]
    %v127 = vld [vmem:[#allocation4 + $0x158] sm:$0xff]
    %v128 = vld [vmem:[#allocation4 + $0x160] sm:$0xff]
    %v129 = vld [vmem:[#allocation4 + $0x168] sm:$0xff]
    %v130 = vld [vmem:[#allocation4 + $0x170] sm:$0xff]
    %v131 = vld [vmem:[#allocation4 + $0x178] sm:$0xff]
    %v132 = vld [vmem:[#allocation4 + $0x180] sm:$0xff]
    %v133 = vld [vmem:[#allocation4 + $0x188] sm:$0xff]
    %v134 = vld [vmem:[#allocation4 + $0x190] sm:$0xff]
    %v135 = vld [vmem:[#allocation4 + $0x198] sm:$0xff]
    %v136 = vld [vmem:[#allocation4 + $0x1a0] sm:$0xff]
    %v137 = vld [vmem:[#allocation4 + $0x1a8] sm:$0xff]
    %v138 = vld [vmem:[#allocation4 + $0x1b0] sm:$0xff]
    %v139 = vld [vmem:[#allocation4 + $0x1b8] sm:$0xff]
    %v140 = vld [vmem:[#allocation4 + $0x1c0] sm:$0xff]
    %v141 = vld [vmem:[#allocation4 + $0x1c8] sm:$0xff]
    %v142 = vld [vmem:[#allocation4 + $0x1d0] sm:$0xff]
    %v143 = vld [vmem:[#allocation4 + $0x1d8] sm:$0xff]
    %v144 = vld [vmem:[#allocation4 + $0x1e0] sm:$0xff]
    %v145 = vld [vmem:[#allocation4 + $0x1e8] sm:$0xff]
    %v146 = vld [vmem:[#allocation4 + $0x1f0] sm:$0xff]
    %v147 = vld [vmem:[#allocation4 + $0x1f8] sm:$0xff]
    %v148 = vld [vmem:[#allocation4 + $0x200] sm:$0xff]
    %v149 = vld [vmem:[#allocation4 + $0x208] sm:$0xff]
    %v150 = vld [vmem:[#allocation4 + $0x210] sm:$0xff]
    %v151 = vld [vmem:[#allocation4 + $0x218] sm:$0xff]
    %v152 = vld [vmem:[#allocation4 + $0x220] sm:$0xff]
    %v153 = vld [vmem:[#allocation4 + $0x228] sm:$0xff]
    %v154 = vld [vmem:[#allocation4 + $0x230] sm:$0xff]
    %v155 = vld [vmem:[#allocation4 + $0x238] sm:$0xff]
    %v156 = vld [vmem:[#allocation4 + $0x240] sm:$0xff]
    %v157 = vld [vmem:[#allocation4 + $0x248] sm:$0xff]
    %v158 = vld [vmem:[#allocation4 + $0x250] sm:$0xff]
    %v159 = vld [vmem:[#allocation4 + $0x258] sm:$0xff]
    %v160 = vld [vmem:[#allocation4 + $0x260] sm:$0xff]
    %v161 = vld [vmem:[#allocation4 + $0x268] sm:$0xff]
    %v162 = vld [vmem:[#allocation4 + $0x270] sm:$0xff]
    %v163 = vld [vmem:[#allocation4 + $0x278] sm:$0xff]
    %v164 = vld [vmem:[#allocation4 + $0x280] sm:$0xff]
    %v165 = vld [vmem:[#allocation4 + $0x288] sm:$0xff]
    %v166 = vld [vmem:[#allocation4 + $0x290] sm:$0xff]
    %v167 = vld [vmem:[#allocation4 + $0x298] sm:$0xff]
    %v168 = vld [vmem:[#allocation4 + $0x2a0] sm:$0xff]
    %v169 = vld [vmem:[#allocation4 + $0x2a8] sm:$0xff]
    %v170 = vld [vmem:[#allocation4 + $0x2b0] sm:$0xff]
    %v171 = vld [vmem:[#allocation4 + $0x2b8] sm:$0xff]
    %v172 = vld [vmem:[#allocation4 + $0x2c0] sm:$0xff]
    %v173 = vld [vmem:[#allocation4 + $0x2c8] sm:$0xff]
    %v174 = vld [vmem:[#allocation4 + $0x2d0] sm:$0xff]
    %v175 = vld [vmem:[#allocation4 + $0x2d8] sm:$0xff]
    %v176 = vld [vmem:[#allocation4 + $0x2e0] sm:$0xff]
    %v177 = vld [vmem:[#allocation4 + $0x2e8] sm:$0xff]
    %v178 = vld [vmem:[#allocation4 + $0x2f0] sm:$0xff]
    %v179 = vld [vmem:[#allocation4 + $0x2f8] sm:$0xff]
    %v180 = vld [vmem:[#allocation4 + $0x300] sm:$0xff]
    %v181 = vld [vmem:[#allocation4 + $0x308] sm:$0xff]
    %v182 = vld [vmem:[#allocation4 + $0x310] sm:$0xff]
    %v183 = vld [vmem:[#allocation4 + $0x318] sm:$0xff]
    %v184 = vld [vmem:[#allocation4 + $0x320] sm:$0xff]
    %v185 = vld [vmem:[#allocation4 + $0x328] sm:$0xff]
    %v186 = vld [vmem:[#allocation4 + $0x330] sm:$0xff]
    %v187 = vld [vmem:[#allocation4 + $0x338] sm:$0xff]
    %v188 = vld [vmem:[#allocation4 + $0x340] sm:$0xff]
    %v189 = vld [vmem:[#allocation4 + $0x348] sm:$0xff]
    %v190 = vld [vmem:[#allocation4 + $0x350] sm:$0xff]
    %v191 = vld [vmem:[#allocation4 + $0x358] sm:$0xff]
    %v192 = vld [vmem:[#allocation4 + $0x360] sm:$0xff]
    %v193 = vld [vmem:[#allocation4 + $0x368] sm:$0xff]
    %v194 = vld [vmem:[#allocation4 + $0x370] sm:$0xff]
    %v195 = vld [vmem:[#allocation4 + $0x378] sm:$0xff]
    %v196 = vld [vmem:[#allocation4 + $0x380] sm:$0xff]
    %v197 = vld [vmem:[#allocation4 + $0x388] sm:$0xff]
    %v198 = vld [vmem:[#allocation4 + $0x390] sm:$0xff]
    %v199 = vld [vmem:[#allocation4 + $0x398] sm:$0xff]
    %v200 = vld [vmem:[#allocation4 + $0x3a0] sm:$0xff]
    %v201 = vld [vmem:[#allocation4 + $0x3a8] sm:$0xff]
    %v202 = vld [vmem:[#allocation4 + $0x3b0] sm:$0xff]
    %v203 = vld [vmem:[#allocation4 + $0x3b8] sm:$0xff]
    %v204 = vld [vmem:[#allocation4 + $0x3c0] sm:$0xff]
    %v205 = vld [vmem:[#allocation4 + $0x3c8] sm:$0xff]
    %v206 = vld [vmem:[#allocation4 + $0x3d0] sm:$0xff]
    %v207 = vld [vmem:[#allocation4 + $0x3d8] sm:$0xff]
    %v208 = vld [vmem:[#allocation4 + $0x3e0] sm:$0xff]
    %v209 = vld [vmem:[#allocation4 + $0x3e8] sm:$0xff]
    %v210 = vld [vmem:[#allocation4 + $0x3f0] sm:$0xff]
    %v211 = vld [vmem:[#allocation4 + $0x3f8] sm:$0xff]
    %v212 = vld [vmem:[#allocation4 + $0x400] sm:$0xff]
    %v213 = vld [vmem:[#allocation4 + $0x408] sm:$0xff]
    %v214 = vld [vmem:[#allocation4 + $0x410] sm:$0xff]
    %v215 = vld [vmem:[#allocation4 + $0x418] sm:$0xff]
    %v216 = vld [vmem:[#allocation4 + $0x420] sm:$0xff]
    %v217 = vld [vmem:[#allocation4 + $0x428] sm:$0xff]
    %v218 = vld [vmem:[#allocation4 + $0x430] sm:$0xff]
    %v219 = vld [vmem:[#allocation4 + $0x438] sm:$0xff]
    %v220 = vld [vmem:[#allocation4 + $0x440] sm:$0xff]
    %v221 = vld [vmem:[#allocation4 + $0x448] sm:$0xff]
    %v222 = vld [vmem:[#allocation4 + $0x450] sm:$0xff]
    %v223 = vld [vmem:[#allocation4 + $0x458] sm:$0xff]
    %v224 = vld [vmem:[#allocation4 + $0x460] sm:$0xff]
    %v225 = vld [vmem:[#allocation4 + $0x468] sm:$0xff]
    %v226 = vld [vmem:[#allocation4 + $0x470] sm:$0xff]
    %v227 = vld [vmem:[#allocation4 + $0x478] sm:$0xff]
    %v228 = vld [vmem:[#allocation4 + $0x480] sm:$0xff]
    %v229 = vld [vmem:[#allocation4 + $0x488] sm:$0xff]
    %v230 = vld [vmem:[#allocation4 + $0x490] sm:$0xff]
    %v231 = vld [vmem:[#allocation4 + $0x498] sm:$0xff]
    %v232 = vld [vmem:[#allocation4 + $0x4a0] sm:$0xff]
    %v233 = vld [vmem:[#allocation4 + $0x4a8] sm:$0xff]
    %v234 = vld [vmem:[#allocation4 + $0x4b0] sm:$0xff]
    %v235 = vld [vmem:[#allocation4 + $0x4b8] sm:$0xff]
    %v236 = vld [vmem:[#allocation4 + $0x4c0] sm:$0xff]
    %v237 = vld [vmem:[#allocation4 + $0x4c8] sm:$0xff]
    %v238 = vld [vmem:[#allocation4 + $0x4d0] sm:$0xff]
    %v239 = vld [vmem:[#allocation4 + $0x4d8] sm:$0xff]
    %v240 = vld [vmem:[#allocation4 + $0x4e0] sm:$0xff]
    %v241 = vld [vmem:[#allocation4 + $0x4e8] sm:$0xff]
    %v242 = vld [vmem:[#allocation4 + $0x4f0] sm:$0xff]
    %v243 = vld [vmem:[#allocation4 + $0x4f8] sm:$0xff]
    %v244 = vld [vmem:[#allocation4 + $0x500] sm:$0xff]
    %v245 = vld [vmem:[#allocation4 + $0x508] sm:$0xff]
    %v246 = vld [vmem:[#allocation4 + $0x510] sm:$0xff]
    %v247 = vld [vmem:[#allocation4 + $0x518] sm:$0xff]
    %v248 = vld [vmem:[#allocation4 + $0x520] sm:$0xff]
    %v249 = vld [vmem:[#allocation4 + $0x528] sm:$0xff]
    %v250 = vld [vmem:[#allocation4 + $0x530] sm:$0xff]
    %v251 = vld [vmem:[#allocation4 + $0x538] sm:$0xff]
    %v252 = vld [vmem:[#allocation4 + $0x540] sm:$0xff]
    %v253 = vld [vmem:[#allocation4 + $0x548] sm:$0xff]
    %v254 = vld [vmem:[#allocation4 + $0x550] sm:$0xff]
    %v255 = vld [vmem:[#allocation4 + $0x558] sm:$0xff]
    %v256 = vld [vmem:[#allocation4 + $0x560] sm:$0xff]
    %v257 = vld [vmem:[#allocation4 + $0x568] sm:$0xff]
    %v258 = vld [vmem:[#allocation4 + $0x570] sm:$0xff]
    %v259 = vld [vmem:[#allocation4 + $0x578] sm:$0xff]
    %v260 = vld [vmem:[#allocation4 + $0x580] sm:$0xff]
    %v261 = vld [vmem:[#allocation4 + $0x588] sm:$0xff]
    %v262 = vld [vmem:[#allocation4 + $0x590] sm:$0xff]
    %v263 = vld [vmem:[#allocation4 + $0x598] sm:$0xff]
    %v264 = vld [vmem:[#allocation4 + $0x5a0] sm:$0xff]
    %v265 = vld [vmem:[#allocation4 + $0x5a8] sm:$0xff]
    %v266 = vld [vmem:[#allocation4 + $0x5b0] sm:$0xff]
    %v267 = vld [vmem:[#allocation4 + $0x5b8] sm:$0xff]
    %v268 = vld [vmem:[#allocation4 + $0x5c0] sm:$0xff]
    %v269 = vld [vmem:[#allocation4 + $0x5c8] sm:$0xff]
    %v270 = vld [vmem:[#allocation4 + $0x5d0] sm:$0xff]
    %v271 = vld [vmem:[#allocation4 + $0x5d8] sm:$0xff]
    %v272 = vld [vmem:[#allocation4 + $0x5e0] sm:$0xff]
    %v273 = vld [vmem:[#allocation4 + $0x5e8] sm:$0xff]
    %v274 = vld [vmem:[#allocation4 + $0x5f0] sm:$0xff]
    %v275 = vld [vmem:[#allocation4 + $0x5f8] sm:$0xff]
    %v276 = vld [vmem:[#allocation4 + $0x600] sm:$0xff]
    %v277 = vld [vmem:[#allocation4 + $0x608] sm:$0xff]
    %v278 = vld [vmem:[#allocation4 + $0x610] sm:$0xff]
    %v279 = vld [vmem:[#allocation4 + $0x618] sm:$0xff]
    %v280 = vld [vmem:[#allocation4 + $0x620] sm:$0xff]
    %v281 = vld [vmem:[#allocation4 + $0x628] sm:$0xff]
    %v282 = vld [vmem:[#allocation4 + $0x630] sm:$0xff]
    %v283 = vld [vmem:[#allocation4 + $0x638] sm:$0xff]
    %v284 = vld [vmem:[#allocation4 + $0x640] sm:$0xff]
    %v285 = vld [vmem:[#allocation4 + $0x648] sm:$0xff]
    %v286 = vld [vmem:[#allocation4 + $0x650] sm:$0xff]
    %v287 = vld [vmem:[#allocation4 + $0x658] sm:$0xff]
    %v288 = vld [vmem:[#allocation4 + $0x660] sm:$0xff]
    %v289 = vld [vmem:[#allocation4 + $0x668] sm:$0xff]
    %v290 = vld [vmem:[#allocation4 + $0x670] sm:$0xff]
    %v291 = vld [vmem:[#allocation4 + $0x678] sm:$0xff]
    %v292 = vld [vmem:[#allocation4 + $0x680] sm:$0xff]
    %v293 = vld [vmem:[#allocation4 + $0x688] sm:$0xff]
    %v294 = vld [vmem:[#allocation4 + $0x690] sm:$0xff]
    %v295 = vld [vmem:[#allocation4 + $0x698] sm:$0xff]
    %v296 = vld [vmem:[#allocation4 + $0x6a0] sm:$0xff]
    %v297 = vld [vmem:[#allocation4 + $0x6a8] sm:$0xff]
    %v298 = vld [vmem:[#allocation4 + $0x6b0] sm:$0xff]
    %v299 = vld [vmem:[#allocation4 + $0x6b8] sm:$0xff]
    %v300 = vld [vmem:[#allocation4 + $0x6c0] sm:$0xff]
    %v301 = vld [vmem:[#allocation4 + $0x6c8] sm:$0xff]
    %v302 = vld [vmem:[#allocation4 + $0x6d0] sm:$0xff]
    %v303 = vld [vmem:[#allocation4 + $0x6d8] sm:$0xff]
    %v304 = vld [vmem:[#allocation4 + $0x6e0] sm:$0xff]
    %v305 = vld [vmem:[#allocation4 + $0x6e8] sm:$0xff]
    %v306 = vld [vmem:[#allocation4 + $0x6f0] sm:$0xff]
    %v307 = vld [vmem:[#allocation4 + $0x6f8] sm:$0xff]
    %v308 = vld [vmem:[#allocation4 + $0x700] sm:$0xff]
    %v309 = vld [vmem:[#allocation4 + $0x708] sm:$0xff]
    %v310 = vld [vmem:[#allocation4 + $0x710] sm:$0xff]
    %v311 = vld [vmem:[#allocation4 + $0x718] sm:$0xff]
    %v312 = vld [vmem:[#allocation4 + $0x720] sm:$0xff]
    %v313 = vld [vmem:[#allocation4 + $0x728] sm:$0xff]
    %v314 = vld [vmem:[#allocation4 + $0x730] sm:$0xff]
    %v315 = vld [vmem:[#allocation4 + $0x738] sm:$0xff]
    %v316 = vld [vmem:[#allocation4 + $0x740] sm:$0xff]
    %v317 = vld [vmem:[#allocation4 + $0x748] sm:$0xff]
    %v318 = vld [vmem:[#allocation4 + $0x750] sm:$0xff]
    %v319 = vld [vmem:[#allocation4 + $0x758] sm:$0xff]
    %v320 = vld [vmem:[#allocation4 + $0x760] sm:$0xff]
    %v321 = vld [vmem:[#allocation4 + $0x768] sm:$0xff]
    %v322 = vld [vmem:[#allocation4 + $0x770] sm:$0xff]
    %v323 = vld [vmem:[#allocation4 + $0x778] sm:$0xff]
    %v324 = vld [vmem:[#allocation4 + $0x780] sm:$0xff]
    %v325 = vld [vmem:[#allocation4 + $0x788] sm:$0xff]
    %v326 = vld [vmem:[#allocation4 + $0x790] sm:$0xff]
    %v327 = vld [vmem:[#allocation4 + $0x798] sm:$0xff]
    %v328 = vld [vmem:[#allocation4 + $0x7a0] sm:$0xff]
    %v329 = vld [vmem:[#allocation4 + $0x7a8] sm:$0xff]
    %v330 = vld [vmem:[#allocation4 + $0x7b0] sm:$0xff]
    %v331 = vld [vmem:[#allocation4 + $0x7b8] sm:$0xff]
    %v332 = vld [vmem:[#allocation4 + $0x7c0] sm:$0xff]
    %v333 = vld [vmem:[#allocation4 + $0x7c8] sm:$0xff]
    %v334 = vld [vmem:[#allocation4 + $0x7d0] sm:$0xff]
    %v335 = vld [vmem:[#allocation4 + $0x7d8] sm:$0xff]
    %v336 = vld [vmem:[#allocation4 + $0x7e0] sm:$0xff]
    %v337 = vld [vmem:[#allocation4 + $0x7e8] sm:$0xff]
    %v338 = vld [vmem:[#allocation4 + $0x7f0] sm:$0xff]
    %v339 = vld [vmem:[#allocation4 + $0x7f8] sm:$0xff]
    %v340 = vld [vmem:[%s1] sm:$0xff]
    %v341 = vld [vmem:[%s1 + $0x8] sm:$0xff]
    %v342 = vld [vmem:[%s1 + $0x10] sm:$0xff]
    %v343 = vld [vmem:[%s1 + $0x18] sm:$0xff]
    %v344 = vld [vmem:[%s1 + $0x20] sm:$0xff]
    %v345 = vld [vmem:[%s1 + $0x28] sm:$0xff]
    %v346 = vld [vmem:[%s1 + $0x30] sm:$0xff]
    %v347 = vld [vmem:[%s1 + $0x38] sm:$0xff]
    %v348 = vld [vmem:[#allocation6] sm:$0xff]
    %v349 = vld [vmem:[#allocation6 + $0x8] sm:$0xff]
    %v350 = vld [vmem:[#allocation6 + $0x10] sm:$0xff]
    %v351 = vld [vmem:[#allocation6 + $0x18] sm:$0xff]
    %v352 = vld [vmem:[#allocation6 + $0x20] sm:$0xff]
    %v353 = vld [vmem:[#allocation6 + $0x28] sm:$0xff]
    %v354 = vld [vmem:[#allocation6 + $0x30] sm:$0xff]
    %v355 = vld [vmem:[#allocation6 + $0x38] sm:$0xff]
    %v356 = vld [vmem:[#allocation6 + $0x40] sm:$0xff]
    %v357 = vld [vmem:[#allocation6 + $0x48] sm:$0xff]
    %v358 = vld [vmem:[#allocation6 + $0x50] sm:$0xff]
    %v359 = vld [vmem:[#allocation6 + $0x58] sm:$0xff]
    %v360 = vld [vmem:[#allocation6 + $0x60] sm:$0xff]
    %v361 = vld [vmem:[#allocation6 + $0x68] sm:$0xff]
    %v362 = vld [vmem:[#allocation6 + $0x70] sm:$0xff]
    %v363 = vld [vmem:[#allocation6 + $0x78] sm:$0xff]
    %v364 = vld [vmem:[#allocation6 + $0x80] sm:$0xff]
    %v365 = vld [vmem:[#allocation6 + $0x88] sm:$0xff]
    %v366 = vld [vmem:[#allocation6 + $0x90] sm:$0xff]
    %v367 = vld [vmem:[#allocation6 + $0x98] sm:$0xff]
    %v368 = vld [vmem:[#allocation6 + $0xa0] sm:$0xff]
    %v369 = vld [vmem:[#allocation6 + $0xa8] sm:$0xff]
    %v370 = vld [vmem:[#allocation6 + $0xb0] sm:$0xff]
    %v371 = vld [vmem:[#allocation6 + $0xb8] sm:$0xff]
    %v372 = vld [vmem:[#allocation6 + $0xc0] sm:$0xff]
    %v373 = vld [vmem:[#allocation6 + $0xc8] sm:$0xff]
    %v374 = vld [vmem:[#allocation6 + $0xd0] sm:$0xff]
    %v375 = vld [vmem:[#allocation6 + $0xd8] sm:$0xff]
    %v376 = vld [vmem:[#allocation6 + $0xe0] sm:$0xff]
    %v377 = vld [vmem:[#allocation6 + $0xe8] sm:$0xff]
    %v378 = vld [vmem:[#allocation6 + $0xf0] sm:$0xff]
    %v379 = vld [vmem:[#allocation6 + $0xf8] sm:$0xff]
    %v380 = vld [vmem:[#allocation6 + $0x100] sm:$0xff]
    %v381 = vld [vmem:[#allocation6 + $0x108] sm:$0xff]
    %v382 = vld [vmem:[#allocation6 + $0x110] sm:$0xff]
    %v383 = vld [vmem:[#allocation6 + $0x118] sm:$0xff]
    %v384 = vld [vmem:[#allocation6 + $0x120] sm:$0xff]
    %v385 = vld [vmem:[#allocation6 + $0x128] sm:$0xff]
    %v386 = vld [vmem:[#allocation6 + $0x130] sm:$0xff]
    %v387 = vld [vmem:[#allocation6 + $0x138] sm:$0xff]
    %v388 = vld [vmem:[#allocation6 + $0x140] sm:$0xff]
    %v389 = vld [vmem:[#allocation6 + $0x148] sm:$0xff]
    %v390 = vld [vmem:[#allocation6 + $0x150] sm:$0xff]
    %v391 = vld [vmem:[#allocation6 + $0x158] sm:$0xff]
    %v392 = vld [vmem:[#allocation6 + $0x160] sm:$0xff]
    %v393 = vld [vmem:[#allocation6 + $0x168] sm:$0xff]
    %v394 = vld [vmem:[#allocation6 + $0x170] sm:$0xff]
    %v395 = vld [vmem:[#allocation6 + $0x178] sm:$0xff]
    %v396 = vld [vmem:[#allocation6 + $0x180] sm:$0xff]
    %v397 = vld [vmem:[#allocation6 + $0x188] sm:$0xff]
    %v398 = vld [vmem:[#allocation6 + $0x190] sm:$0xff]
    %v399 = vld [vmem:[#allocation6 + $0x198] sm:$0xff]
    %v400 = vld [vmem:[#allocation6 + $0x1a0] sm:$0xff]
    %v401 = vld [vmem:[#allocation6 + $0x1a8] sm:$0xff]
    %v402 = vld [vmem:[#allocation6 + $0x1b0] sm:$0xff]
    %v403 = vld [vmem:[#allocation6 + $0x1b8] sm:$0xff]
    %v404 = vld [vmem:[#allocation6 + $0x1c0] sm:$0xff]
    %v405 = vld [vmem:[#allocation6 + $0x1c8] sm:$0xff]
    %v406 = vld [vmem:[#allocation6 + $0x1d0] sm:$0xff]
    %v407 = vld [vmem:[#allocation6 + $0x1d8] sm:$0xff]
    %v408 = vld [vmem:[#allocation6 + $0x1e0] sm:$0xff]
    %v409 = vld [vmem:[#allocation6 + $0x1e8] sm:$0xff]
    %v410 = vld [vmem:[#allocation6 + $0x1f0] sm:$0xff]
    %v411 = vld [vmem:[#allocation6 + $0x1f8] sm:$0xff]
    %v412 = vld [vmem:[#allocation6 + $0x200] sm:$0xff]
    %v413 = vld [vmem:[#allocation6 + $0x208] sm:$0xff]
    %v414 = vld [vmem:[#allocation6 + $0x210] sm:$0xff]
    %v415 = vld [vmem:[#allocation6 + $0x218] sm:$0xff]
    %v416 = vld [vmem:[#allocation6 + $0x220] sm:$0xff]
    %v417 = vld [vmem:[#allocation6 + $0x228] sm:$0xff]
    %v418 = vld [vmem:[#allocation6 + $0x230] sm:$0xff]
    %v419 = vld [vmem:[#allocation6 + $0x238] sm:$0xff]
    %v420 = vld [vmem:[#allocation6 + $0x240] sm:$0xff]
    %v421 = vld [vmem:[#allocation6 + $0x248] sm:$0xff]
    %v422 = vld [vmem:[#allocation6 + $0x250] sm:$0xff]
    %v423 = vld [vmem:[#allocation6 + $0x258] sm:$0xff]
    %v424 = vld [vmem:[#allocation6 + $0x260] sm:$0xff]
    %v425 = vld [vmem:[#allocation6 + $0x268] sm:$0xff]
    %v426 = vld [vmem:[#allocation6 + $0x270] sm:$0xff]
    %v427 = vld [vmem:[#allocation6 + $0x278] sm:$0xff]
    %v428 = vld [vmem:[#allocation6 + $0x280] sm:$0xff]
    %v429 = vld [vmem:[#allocation6 + $0x288] sm:$0xff]
    %v430 = vld [vmem:[#allocation6 + $0x290] sm:$0xff]
    %v431 = vld [vmem:[#allocation6 + $0x298] sm:$0xff]
    %v432 = vld [vmem:[#allocation6 + $0x2a0] sm:$0xff]
    %v433 = vld [vmem:[#allocation6 + $0x2a8] sm:$0xff]
    %v434 = vld [vmem:[#allocation6 + $0x2b0] sm:$0xff]
    %v435 = vld [vmem:[#allocation6 + $0x2b8] sm:$0xff]
    %v436 = vld [vmem:[#allocation6 + $0x2c0] sm:$0xff]
    %v437 = vld [vmem:[#allocation6 + $0x2c8] sm:$0xff]
    %v438 = vld [vmem:[#allocation6 + $0x2d0] sm:$0xff]
    %v439 = vld [vmem:[#allocation6 + $0x2d8] sm:$0xff]
    %v440 = vld [vmem:[#allocation6 + $0x2e0] sm:$0xff]
    %v441 = vld [vmem:[#allocation6 + $0x2e8] sm:$0xff]
    %v442 = vld [vmem:[#allocation6 + $0x2f0] sm:$0xff]
    %v443 = vld [vmem:[#allocation6 + $0x2f8] sm:$0xff]
    %v444 = vld [vmem:[#allocation6 + $0x300] sm:$0xff]
    %v445 = vld [vmem:[#allocation6 + $0x308] sm:$0xff]
    %v446 = vld [vmem:[#allocation6 + $0x310] sm:$0xff]
    %v447 = vld [vmem:[#allocation6 + $0x318] sm:$0xff]
    %v448 = vld [vmem:[#allocation6 + $0x320] sm:$0xff]
    %v449 = vld [vmem:[#allocation6 + $0x328] sm:$0xff]
    %v450 = vld [vmem:[#allocation6 + $0x330] sm:$0xff]
    %v451 = vld [vmem:[#allocation6 + $0x338] sm:$0xff]
    %v452 = vld [vmem:[#allocation6 + $0x340] sm:$0xff]
    %v453 = vld [vmem:[#allocation6 + $0x348] sm:$0xff]
    %v454 = vld [vmem:[#allocation6 + $0x350] sm:$0xff]
    %v455 = vld [vmem:[#allocation6 + $0x358] sm:$0xff]
    %v456 = vld [vmem:[#allocation6 + $0x360] sm:$0xff]
    %v457 = vld [vmem:[#allocation6 + $0x368] sm:$0xff]
    %v458 = vld [vmem:[#allocation6 + $0x370] sm:$0xff]
    %v459 = vld [vmem:[#allocation6 + $0x378] sm:$0xff]
    %v460 = vld [vmem:[#allocation6 + $0x380] sm:$0xff]
    %v461 = vld [vmem:[#allocation6 + $0x388] sm:$0xff]
    %v462 = vld [vmem:[#allocation6 + $0x390] sm:$0xff]
    %v463 = vld [vmem:[#allocation6 + $0x398] sm:$0xff]
    %v464 = vld [vmem:[#allocation6 + $0x3a0] sm:$0xff]
    %v465 = vld [vmem:[#allocation6 + $0x3a8] sm:$0xff]
    %v466 = vld [vmem:[#allocation6 + $0x3b0] sm:$0xff]
    %v467 = vld [vmem:[#allocation6 + $0x3b8] sm:$0xff]
    %v468 = vld [vmem:[#allocation6 + $0x3c0] sm:$0xff]
    %v469 = vld [vmem:[#allocation6 + $0x3c8] sm:$0xff]
    %v470 = vld [vmem:[#allocation6 + $0x3d0] sm:$0xff]
    %v471 = vld [vmem:[#allocation6 + $0x3d8] sm:$0xff]
    %v472 = vld [vmem:[#allocation6 + $0x3e0] sm:$0xff]
    %v473 = vld [vmem:[#allocation6 + $0x3e8] sm:$0xff]
    %v474 = vld [vmem:[#allocation6 + $0x3f0] sm:$0xff]
    %v475 = vld [vmem:[#allocation6 + $0x3f8] sm:$0xff]
    %v476 = vld [vmem:[#allocation6 + $0x400] sm:$0xff]
    %v477 = vld [vmem:[#allocation6 + $0x408] sm:$0xff]
    %v478 = vld [vmem:[#allocation6 + $0x410] sm:$0xff]
    %v479 = vld [vmem:[#allocation6 + $0x418] sm:$0xff]
    %v480 = vld [vmem:[#allocation6 + $0x420] sm:$0xff]
    %v481 = vld [vmem:[#allocation6 + $0x428] sm:$0xff]
    %v482 = vld [vmem:[#allocation6 + $0x430] sm:$0xff]
    %v483 = vld [vmem:[#allocation6 + $0x438] sm:$0xff]
    %v484 = vld [vmem:[#allocation6 + $0x440] sm:$0xff]
    %v485 = vld [vmem:[#allocation6 + $0x448] sm:$0xff]
    %v486 = vld [vmem:[#allocation6 + $0x450] sm:$0xff]
    %v487 = vld [vmem:[#allocation6 + $0x458] sm:$0xff]
    %v488 = vld [vmem:[#allocation6 + $0x460] sm:$0xff]
    %v489 = vld [vmem:[#allocation6 + $0x468] sm:$0xff]
    %v490 = vld [vmem:[#allocation6 + $0x470] sm:$0xff]
    %v491 = vld [vmem:[#allocation6 + $0x478] sm:$0xff]
    %v492 = vld [vmem:[#allocation6 + $0x480] sm:$0xff]
    %v493 = vld [vmem:[#allocation6 + $0x488] sm:$0xff]
    %v494 = vld [vmem:[#allocation6 + $0x490] sm:$0xff]
    %v495 = vld [vmem:[#allocation6 + $0x498] sm:$0xff]
    %v496 = vld [vmem:[#allocation6 + $0x4a0] sm:$0xff]
    %v497 = vld [vmem:[#allocation6 + $0x4a8] sm:$0xff]
    %v498 = vld [vmem:[#allocation6 + $0x4b0] sm:$0xff]
    %v499 = vld [vmem:[#allocation6 + $0x4b8] sm:$0xff]
    %v500 = vld [vmem:[#allocation6 + $0x4c0] sm:$0xff]
    %v501 = vld [vmem:[#allocation6 + $0x4c8] sm:$0xff]
    %v502 = vld [vmem:[#allocation6 + $0x4d0] sm:$0xff]
    %v503 = vld [vmem:[#allocation6 + $0x4d8] sm:$0xff]
    %v504 = vld [vmem:[#allocation6 + $0x4e0] sm:$0xff]
    %v505 = vld [vmem:[#allocation6 + $0x4e8] sm:$0xff]
    %v506 = vld [vmem:[#allocation6 + $0x4f0] sm:$0xff]
    %v507 = vld [vmem:[#allocation6 + $0x4f8] sm:$0xff]
    %v508 = vld [vmem:[#allocation6 + $0x500] sm:$0xff]
    %v509 = vld [vmem:[#allocation6 + $0x508] sm:$0xff]
    %v510 = vld [vmem:[#allocation6 + $0x510] sm:$0xff]
    %v511 = vld [vmem:[#allocation6 + $0x518] sm:$0xff]
    %v512 = vld [vmem:[#allocation6 + $0x520] sm:$0xff]
    %v513 = vld [vmem:[#allocation6 + $0x528] sm:$0xff]
    %v514 = vld [vmem:[#allocation6 + $0x530] sm:$0xff]
    %v515 = vld [vmem:[#allocation6 + $0x538] sm:$0xff]
    %v516 = vld [vmem:[#allocation6 + $0x540] sm:$0xff]
    %v517 = vld [vmem:[#allocation6 + $0x548] sm:$0xff]
    %v518 = vld [vmem:[#allocation6 + $0x550] sm:$0xff]
    %v519 = vld [vmem:[#allocation6 + $0x558] sm:$0xff]
    %v520 = vld [vmem:[#allocation6 + $0x560] sm:$0xff]
    %v521 = vld [vmem:[#allocation6 + $0x568] sm:$0xff]
    %v522 = vld [vmem:[#allocation6 + $0x570] sm:$0xff]
    %v523 = vld [vmem:[#allocation6 + $0x578] sm:$0xff]
    %v524 = vld [vmem:[#allocation6 + $0x580] sm:$0xff]
    %v525 = vld [vmem:[#allocation6 + $0x588] sm:$0xff]
    %v526 = vld [vmem:[#allocation6 + $0x590] sm:$0xff]
    %v527 = vld [vmem:[#allocation6 + $0x598] sm:$0xff]
    %v528 = vld [vmem:[#allocation6 + $0x5a0] sm:$0xff]
    %v529 = vld [vmem:[#allocation6 + $0x5a8] sm:$0xff]
    %v530 = vld [vmem:[#allocation6 + $0x5b0] sm:$0xff]
    %v531 = vld [vmem:[#allocation6 + $0x5b8] sm:$0xff]
    %v532 = vld [vmem:[#allocation6 + $0x5c0] sm:$0xff]
    %v533 = vld [vmem:[#allocation6 + $0x5c8] sm:$0xff]
    %v534 = vld [vmem:[#allocation6 + $0x5d0] sm:$0xff]
    %v535 = vld [vmem:[#allocation6 + $0x5d8] sm:$0xff]
    %v536 = vld [vmem:[#allocation6 + $0x5e0] sm:$0xff]
    %v537 = vld [vmem:[#allocation6 + $0x5e8] sm:$0xff]
    %v538 = vld [vmem:[#allocation6 + $0x5f0] sm:$0xff]
    %v539 = vld [vmem:[#allocation6 + $0x5f8] sm:$0xff]
    %v540 = vld [vmem:[#allocation6 + $0x600] sm:$0xff]
    %v541 = vld [vmem:[#allocation6 + $0x608] sm:$0xff]
    %v542 = vld [vmem:[#allocation6 + $0x610] sm:$0xff]
    %v543 = vld [vmem:[#allocation6 + $0x618] sm:$0xff]
    %v544 = vld [vmem:[#allocation6 + $0x620] sm:$0xff]
    %v545 = vld [vmem:[#allocation6 + $0x628] sm:$0xff]
    %v546 = vld [vmem:[#allocation6 + $0x630] sm:$0xff]
    %v547 = vld [vmem:[#allocation6 + $0x638] sm:$0xff]
    %v548 = vld [vmem:[#allocation6 + $0x640] sm:$0xff]
    %v549 = vld [vmem:[#allocation6 + $0x648] sm:$0xff]
    %v550 = vld [vmem:[#allocation6 + $0x650] sm:$0xff]
    %v551 = vld [vmem:[#allocation6 + $0x658] sm:$0xff]
    %v552 = vld [vmem:[#allocation6 + $0x660] sm:$0xff]
    %v553 = vld [vmem:[#allocation6 + $0x668] sm:$0xff]
    %v554 = vld [vmem:[#allocation6 + $0x670] sm:$0xff]
    %v555 = vld [vmem:[#allocation6 + $0x678] sm:$0xff]
    %v556 = vld [vmem:[#allocation6 + $0x680] sm:$0xff]
    %v557 = vld [vmem:[#allocation6 + $0x688] sm:$0xff]
    %v558 = vld [vmem:[#allocation6 + $0x690] sm:$0xff]
    %v559 = vld [vmem:[#allocation6 + $0x698] sm:$0xff]
    %v560 = vld [vmem:[#allocation6 + $0x6a0] sm:$0xff]
    %v561 = vld [vmem:[#allocation6 + $0x6a8] sm:$0xff]
    %v562 = vld [vmem:[#allocation6 + $0x6b0] sm:$0xff]
    %v563 = vld [vmem:[#allocation6 + $0x6b8] sm:$0xff]
    %v564 = vld [vmem:[#allocation6 + $0x6c0] sm:$0xff]
    %v565 = vld [vmem:[#allocation6 + $0x6c8] sm:$0xff]
    %v566 = vld [vmem:[#allocation6 + $0x6d0] sm:$0xff]
    %v567 = vld [vmem:[#allocation6 + $0x6d8] sm:$0xff]
    %v568 = vld [vmem:[#allocation6 + $0x6e0] sm:$0xff]
    %v569 = vld [vmem:[#allocation6 + $0x6e8] sm:$0xff]
    %v570 = vld [vmem:[#allocation6 + $0x6f0] sm:$0xff]
    %v571 = vld [vmem:[#allocation6 + $0x6f8] sm:$0xff]
    %v572 = vld [vmem:[#allocation6 + $0x700] sm:$0xff]
    %v573 = vld [vmem:[#allocation6 + $0x708] sm:$0xff]
    %v574 = vld [vmem:[#allocation6 + $0x710] sm:$0xff]
    %v575 = vld [vmem:[#allocation6 + $0x718] sm:$0xff]
    %v576 = vld [vmem:[#allocation6 + $0x720] sm:$0xff]
    %v577 = vld [vmem:[#allocation6 + $0x728] sm:$0xff]
    %v578 = vld [vmem:[#allocation6 + $0x730] sm:$0xff]
    %v579 = vld [vmem:[#allocation6 + $0x738] sm:$0xff]
    %v580 = vld [vmem:[#allocation6 + $0x740] sm:$0xff]
    %v581 = vld [vmem:[#allocation6 + $0x748] sm:$0xff]
    %v582 = vld [vmem:[#allocation6 + $0x750] sm:$0xff]
    %v583 = vld [vmem:[#allocation6 + $0x758] sm:$0xff]
    %v584 = vld [vmem:[#allocation6 + $0x760] sm:$0xff]
    %v585 = vld [vmem:[#allocation6 + $0x768] sm:$0xff]
    %v586 = vld [vmem:[#allocation6 + $0x770] sm:$0xff]
    %v587 = vld [vmem:[#allocation6 + $0x778] sm:$0xff]
    %v588 = vld [vmem:[#allocation6 + $0x780] sm:$0xff]
    %v589 = vld [vmem:[#allocation6 + $0x788] sm:$0xff]
    %v590 = vld [vmem:[#allocation6 + $0x790] sm:$0xff]
    %v591 = vld [vmem:[#allocation6 + $0x798] sm:$0xff]
    %v592 = vld [vmem:[#allocation6 + $0x7a0] sm:$0xff]
    %v593 = vld [vmem:[#allocation6 + $0x7a8] sm:$0xff]
    %v594 = vld [vmem:[#allocation6 + $0x7b0] sm:$0xff]
    %v595 = vld [vmem:[#allocation6 + $0x7b8] sm:$0xff]
    %v596 = vld [vmem:[#allocation6 + $0x7c0] sm:$0xff]
    %v597 = vld [vmem:[#allocation6 + $0x7c8] sm:$0xff]
    %v598 = vld [vmem:[#allocation6 + $0x7d0] sm:$0xff]
    %v599 = vld [vmem:[#allocation6 + $0x7d8] sm:$0xff]
    %v600 = vld [vmem:[#allocation6 + $0x7e0] sm:$0xff]
    %v601 = vld [vmem:[#allocation6 + $0x7e8] sm:$0xff]
    %v602 = vld [vmem:[#allocation6 + $0x7f0] sm:$0xff]
    %v603 = vld [vmem:[#allocation6 + $0x7f8] sm:$0xff]
    %604 = vmatpush.msra.mxu0 %v468
    %605 = vmatpush.msra.mxu0 %v460
    %606 = vmatpush.msra.mxu0 %v452
    %607 = vmatpush.msra.mxu0 %v444
    %608 = vmatpush.msra.mxu0 %v436
    %609 = vmatpush.msra.mxu0 %v428
    %610 = vmatpush.msra.mxu0 %v420
    %611 = vmatpush.msra.mxu0 %v412
    %612 = vmatpush.msra.mxu0 %v404
    %613 = vmatpush.msra.mxu0 %v396
    %614 = vmatpush.msra.mxu0 %v388
    %615 = vmatpush.msra.mxu0 %v380
    %616 = vmatpush.msra.mxu0 %v372
    %617 = vmatpush.msra.mxu0 %v364
    %618 = vmatpush.msra.mxu0 %v356
    %619 = vmatpush.msra.mxu0 %v348
    %620 = vmatmul.f32.gmra.mxu0 %v340
    %v621 = vpop.f32.mrf.mxu0
    %v622 = vadd.f32 0.0, %v621
    %623 = vmatmul.f32.gmra.mxu0 %v342
    %v624 = vpop.f32.mrf.mxu0
    %v625 = vadd.f32 0.0, %v624
    %626 = vmatmul.f32.gmra.mxu0 %v344
    %v627 = vpop.f32.mrf.mxu0
    %v628 = vadd.f32 0.0, %v627
    %629 = vmatmul.f32.gmra.mxu0 %v346
    %v630 = vpop.f32.mrf.mxu0
    %v631 = vadd.f32 0.0, %v630
    %632 = vdwg.mxu0
    %633 = vmatpush.msra.mxu0 %v596
    %634 = vmatpush.msra.mxu0 %v588
    %635 = vmatpush.msra.mxu0 %v580
    %636 = vmatpush.msra.mxu0 %v572
    %637 = vmatpush.msra.mxu0 %v564
    %638 = vmatpush.msra.mxu0 %v556
    %639 = vmatpush.msra.mxu0 %v548
    %640 = vmatpush.msra.mxu0 %v540
    %641 = vmatpush.msra.mxu0 %v532
    %642 = vmatpush.msra.mxu0 %v524
    %643 = vmatpush.msra.mxu0 %v516
    %644 = vmatpush.msra.mxu0 %v508
    %645 = vmatpush.msra.mxu0 %v500
    %646 = vmatpush.msra.mxu0 %v492
    %647 = vmatpush.msra.mxu0 %v484
    %648 = vmatpush.msra.mxu0 %v476
    %649 = vmatmul.f32.gmra.mxu0 %v341
    %v650 = vpop.f32.mrf.mxu0
    %v651 = vadd.f32 %v622, %v650
    %652 = vmatmul.f32.gmra.mxu0 %v343
    %v653 = vpop.f32.mrf.mxu0
    %v654 = vadd.f32 %v625, %v653
    %655 = vmatmul.f32.gmra.mxu0 %v345
    %v656 = vpop.f32.mrf.mxu0
    %v657 = vadd.f32 %v628, %v656
    %658 = vmatmul.f32.gmra.mxu0 %v347
    %v659 = vpop.f32.mrf.mxu0
    %v660 = vadd.f32 %v631, %v659
    %661 = vdwg.mxu0
    %662 = vmatpush.msra.mxu0 %v469
    %663 = vmatpush.msra.mxu0 %v461
    %664 = vmatpush.msra.mxu0 %v453
    %665 = vmatpush.msra.mxu0 %v445
    %666 = vmatpush.msra.mxu0 %v437
    %667 = vmatpush.msra.mxu0 %v429
    %668 = vmatpush.msra.mxu0 %v421
    %669 = vmatpush.msra.mxu0 %v413
    %670 = vmatpush.msra.mxu0 %v405
    %671 = vmatpush.msra.mxu0 %v397
    %672 = vmatpush.msra.mxu0 %v389
    %673 = vmatpush.msra.mxu0 %v381
    %674 = vmatpush.msra.mxu0 %v373
    %675 = vmatpush.msra.mxu0 %v365
    %676 = vmatpush.msra.mxu0 %v357
    %677 = vmatpush.msra.mxu0 %v349
    %678 = vmatmul.f32.gmra.mxu0 %v340
    %v679 = vpop.f32.mrf.mxu0
    %v680 = vadd.f32 0.0, %v679
    %681 = vmatmul.f32.gmra.mxu0 %v342
    %v682 = vpop.f32.mrf.mxu0
    %v683 = vadd.f32 0.0, %v682
    %684 = vmatmul.f32.gmra.mxu0 %v344
    %v685 = vpop.f32.mrf.mxu0
    %v686 = vadd.f32 0.0, %v685
    %687 = vmatmul.f32.gmra.mxu0 %v346
    %v688 = vpop.f32.mrf.mxu0
    %v689 = vadd.f32 0.0, %v688
    %690 = vdwg.mxu0
    %691 = vmatpush.msra.mxu0 %v597
    %692 = vmatpush.msra.mxu0 %v589
    %693 = vmatpush.msra.mxu0 %v581
    %694 = vmatpush.msra.mxu0 %v573
    %695 = vmatpush.msra.mxu0 %v565
    %696 = vmatpush.msra.mxu0 %v557
    %697 = vmatpush.msra.mxu0 %v549
    %698 = vmatpush.msra.mxu0 %v541
    %699 = vmatpush.msra.mxu0 %v533
    %700 = vmatpush.msra.mxu0 %v525
    %701 = vmatpush.msra.mxu0 %v517
    %702 = vmatpush.msra.mxu0 %v509
    %703 = vmatpush.msra.mxu0 %v501
    %704 = vmatpush.msra.mxu0 %v493
    %705 = vmatpush.msra.mxu0 %v485
    %706 = vmatpush.msra.mxu0 %v477
    %707 = vmatmul.f32.gmra.mxu0 %v341
    %v708 = vpop.f32.mrf.mxu0
    %v709 = vadd.f32 %v680, %v708
    %710 = vmatmul.f32.gmra.mxu0 %v343
    %v711 = vpop.f32.mrf.mxu0
    %v712 = vadd.f32 %v683, %v711
    %713 = vmatmul.f32.gmra.mxu0 %v345
    %v714 = vpop.f32.mrf.mxu0
    %v715 = vadd.f32 %v686, %v714
    %716 = vmatmul.f32.gmra.mxu0 %v347
    %v717 = vpop.f32.mrf.mxu0
    %v718 = vadd.f32 %v689, %v717
    %719 = vdwg.mxu0
    %720 = vmatpush.msra.mxu0 %v470
    %721 = vmatpush.msra.mxu0 %v462
    %722 = vmatpush.msra.mxu0 %v454
    %723 = vmatpush.msra.mxu0 %v446
    %724 = vmatpush.msra.mxu0 %v438
    %725 = vmatpush.msra.mxu0 %v430
    %726 = vmatpush.msra.mxu0 %v422
    %727 = vmatpush.msra.mxu0 %v414
    %728 = vmatpush.msra.mxu0 %v406
    %729 = vmatpush.msra.mxu0 %v398
    %730 = vmatpush.msra.mxu0 %v390
    %731 = vmatpush.msra.mxu0 %v382
    %732 = vmatpush.msra.mxu0 %v374
    %733 = vmatpush.msra.mxu0 %v366
    %734 = vmatpush.msra.mxu0 %v358
    %735 = vmatpush.msra.mxu0 %v350
    %736 = vmatmul.f32.gmra.mxu0 %v340
    %v737 = vpop.f32.mrf.mxu0
    %v738 = vadd.f32 0.0, %v737
    %739 = vmatmul.f32.gmra.mxu0 %v342
    %v740 = vpop.f32.mrf.mxu0
    %v741 = vadd.f32 0.0, %v740
    %742 = vmatmul.f32.gmra.mxu0 %v344
    %v743 = vpop.f32.mrf.mxu0
    %v744 = vadd.f32 0.0, %v743
    %745 = vmatmul.f32.gmra.mxu0 %v346
    %v746 = vpop.f32.mrf.mxu0
    %v747 = vadd.f32 0.0, %v746
    %748 = vdwg.mxu0
    %749 = vmatpush.msra.mxu0 %v598
    %750 = vmatpush.msra.mxu0 %v590
    %751 = vmatpush.msra.mxu0 %v582
    %752 = vmatpush.msra.mxu0 %v574
    %753 = vmatpush.msra.mxu0 %v566
    %754 = vmatpush.msra.mxu0 %v558
    %755 = vmatpush.msra.mxu0 %v550
    %756 = vmatpush.msra.mxu0 %v542
    %757 = vmatpush.msra.mxu0 %v534
    %758 = vmatpush.msra.mxu0 %v526
    %759 = vmatpush.msra.mxu0 %v518
    %760 = vmatpush.msra.mxu0 %v510
    %761 = vmatpush.msra.mxu0 %v502
    %762 = vmatpush.msra.mxu0 %v494
    %763 = vmatpush.msra.mxu0 %v486
    %764 = vmatpush.msra.mxu0 %v478
    %765 = vmatmul.f32.gmra.mxu0 %v341
    %v766 = vpop.f32.mrf.mxu0
    %v767 = vadd.f32 %v738, %v766
    %768 = vmatmul.f32.gmra.mxu0 %v343
    %v769 = vpop.f32.mrf.mxu0
    %v770 = vadd.f32 %v741, %v769
    %771 = vmatmul.f32.gmra.mxu0 %v345
    %v772 = vpop.f32.mrf.mxu0
    %v773 = vadd.f32 %v744, %v772
    %774 = vmatmul.f32.gmra.mxu0 %v347
    %v775 = vpop.f32.mrf.mxu0
    %v776 = vadd.f32 %v747, %v775
    %777 = vdwg.mxu0
    %778 = vmatpush.msra.mxu0 %v471
    %779 = vmatpush.msra.mxu0 %v463
    %780 = vmatpush.msra.mxu0 %v455
    %781 = vmatpush.msra.mxu0 %v447
    %782 = vmatpush.msra.mxu0 %v439
    %783 = vmatpush.msra.mxu0 %v431
    %784 = vmatpush.msra.mxu0 %v423
    %785 = vmatpush.msra.mxu0 %v415
    %786 = vmatpush.msra.mxu0 %v407
    %787 = vmatpush.msra.mxu0 %v399
    %788 = vmatpush.msra.mxu0 %v391
    %789 = vmatpush.msra.mxu0 %v383
    %790 = vmatpush.msra.mxu0 %v375
    %791 = vmatpush.msra.mxu0 %v367
    %792 = vmatpush.msra.mxu0 %v359
    %793 = vmatpush.msra.mxu0 %v351
    %794 = vmatmul.f32.gmra.mxu0 %v340
    %v795 = vpop.f32.mrf.mxu0
    %v796 = vadd.f32 0.0, %v795
    %797 = vmatmul.f32.gmra.mxu0 %v342
    %v798 = vpop.f32.mrf.mxu0
    %v799 = vadd.f32 0.0, %v798
    %800 = vmatmul.f32.gmra.mxu0 %v344
    %v801 = vpop.f32.mrf.mxu0
    %v802 = vadd.f32 0.0, %v801
    %803 = vmatmul.f32.gmra.mxu0 %v346
    %v804 = vpop.f32.mrf.mxu0
    %v805 = vadd.f32 0.0, %v804
    %806 = vdwg.mxu0
    %807 = vmatpush.msra.mxu0 %v599
    %808 = vmatpush.msra.mxu0 %v591
    %809 = vmatpush.msra.mxu0 %v583
    %810 = vmatpush.msra.mxu0 %v575
    %811 = vmatpush.msra.mxu0 %v567
    %812 = vmatpush.msra.mxu0 %v559
    %813 = vmatpush.msra.mxu0 %v551
    %814 = vmatpush.msra.mxu0 %v543
    %815 = vmatpush.msra.mxu0 %v535
    %816 = vmatpush.msra.mxu0 %v527
    %817 = vmatpush.msra.mxu0 %v519
    %818 = vmatpush.msra.mxu0 %v511
    %819 = vmatpush.msra.mxu0 %v503
    %820 = vmatpush.msra.mxu0 %v495
    %821 = vmatpush.msra.mxu0 %v487
    %822 = vmatpush.msra.mxu0 %v479
    %823 = vmatmul.f32.gmra.mxu0 %v341
    %v824 = vpop.f32.mrf.mxu0
    %v825 = vadd.f32 %v796, %v824
    %826 = vmatmul.f32.gmra.mxu0 %v343
    %v827 = vpop.f32.mrf.mxu0
    %v828 = vadd.f32 %v799, %v827
    %829 = vmatmul.f32.gmra.mxu0 %v345
    %v830 = vpop.f32.mrf.mxu0
    %v831 = vadd.f32 %v802, %v830
    %832 = vmatmul.f32.gmra.mxu0 %v347
    %v833 = vpop.f32.mrf.mxu0
    %v834 = vadd.f32 %v805, %v833
    %835 = vdwg.mxu0
    %836 = vmatpush.msra.mxu0 %v472
    %837 = vmatpush.msra.mxu0 %v464
    %838 = vmatpush.msra.mxu0 %v456
    %839 = vmatpush.msra.mxu0 %v448
    %840 = vmatpush.msra.mxu0 %v440
    %841 = vmatpush.msra.mxu0 %v432
    %842 = vmatpush.msra.mxu0 %v424
    %843 = vmatpush.msra.mxu0 %v416
    %844 = vmatpush.msra.mxu0 %v408
    %845 = vmatpush.msra.mxu0 %v400
    %846 = vmatpush.msra.mxu0 %v392
    %847 = vmatpush.msra.mxu0 %v384
    %848 = vmatpush.msra.mxu0 %v376
    %849 = vmatpush.msra.mxu0 %v368
    %850 = vmatpush.msra.mxu0 %v360
    %851 = vmatpush.msra.mxu0 %v352
    %852 = vmatmul.f32.gmra.mxu0 %v340
    %v853 = vpop.f32.mrf.mxu0
    %v854 = vadd.f32 0.0, %v853
    %855 = vmatmul.f32.gmra.mxu0 %v342
    %v856 = vpop.f32.mrf.mxu0
    %v857 = vadd.f32 0.0, %v856
    %858 = vmatmul.f32.gmra.mxu0 %v344
    %v859 = vpop.f32.mrf.mxu0
    %v860 = vadd.f32 0.0, %v859
    %861 = vmatmul.f32.gmra.mxu0 %v346
    %v862 = vpop.f32.mrf.mxu0
    %v863 = vadd.f32 0.0, %v862
    %864 = vdwg.mxu0
    %865 = vmatpush.msra.mxu0 %v600
    %866 = vmatpush.msra.mxu0 %v592
    %867 = vmatpush.msra.mxu0 %v584
    %868 = vmatpush.msra.mxu0 %v576
    %869 = vmatpush.msra.mxu0 %v568
    %870 = vmatpush.msra.mxu0 %v560
    %871 = vmatpush.msra.mxu0 %v552
    %872 = vmatpush.msra.mxu0 %v544
    %873 = vmatpush.msra.mxu0 %v536
    %874 = vmatpush.msra.mxu0 %v528
    %875 = vmatpush.msra.mxu0 %v520
    %876 = vmatpush.msra.mxu0 %v512
    %877 = vmatpush.msra.mxu0 %v504
    %878 = vmatpush.msra.mxu0 %v496
    %879 = vmatpush.msra.mxu0 %v488
    %880 = vmatpush.msra.mxu0 %v480
    %881 = vmatmul.f32.gmra.mxu0 %v341
    %v882 = vpop.f32.mrf.mxu0
    %v883 = vadd.f32 %v854, %v882
    %884 = vmatmul.f32.gmra.mxu0 %v343
    %v885 = vpop.f32.mrf.mxu0
    %v886 = vadd.f32 %v857, %v885
    %887 = vmatmul.f32.gmra.mxu0 %v345
    %v888 = vpop.f32.mrf.mxu0
    %v889 = vadd.f32 %v860, %v888
    %890 = vmatmul.f32.gmra.mxu0 %v347
    %v891 = vpop.f32.mrf.mxu0
    %v892 = vadd.f32 %v863, %v891
    %893 = vdwg.mxu0
    %894 = vmatpush.msra.mxu0 %v473
    %895 = vmatpush.msra.mxu0 %v465
    %896 = vmatpush.msra.mxu0 %v457
    %897 = vmatpush.msra.mxu0 %v449
    %898 = vmatpush.msra.mxu0 %v441
    %899 = vmatpush.msra.mxu0 %v433
    %900 = vmatpush.msra.mxu0 %v425
    %901 = vmatpush.msra.mxu0 %v417
    %902 = vmatpush.msra.mxu0 %v409
    %903 = vmatpush.msra.mxu0 %v401
    %904 = vmatpush.msra.mxu0 %v393
    %905 = vmatpush.msra.mxu0 %v385
    %906 = vmatpush.msra.mxu0 %v377
    %907 = vmatpush.msra.mxu0 %v369
    %908 = vmatpush.msra.mxu0 %v361
    %909 = vmatpush.msra.mxu0 %v353
    %910 = vmatmul.f32.gmra.mxu0 %v340
    %v911 = vpop.f32.mrf.mxu0
    %v912 = vadd.f32 0.0, %v911
    %913 = vmatmul.f32.gmra.mxu0 %v342
    %v914 = vpop.f32.mrf.mxu0
    %v915 = vadd.f32 0.0, %v914
    %916 = vmatmul.f32.gmra.mxu0 %v344
    %v917 = vpop.f32.mrf.mxu0
    %v918 = vadd.f32 0.0, %v917
    %919 = vmatmul.f32.gmra.mxu0 %v346
    %v920 = vpop.f32.mrf.mxu0
    %v921 = vadd.f32 0.0, %v920
    %922 = vdwg.mxu0
    %923 = vmatpush.msra.mxu0 %v601
    %924 = vmatpush.msra.mxu0 %v593
    %925 = vmatpush.msra.mxu0 %v585
    %926 = vmatpush.msra.mxu0 %v577
    %927 = vmatpush.msra.mxu0 %v569
    %928 = vmatpush.msra.mxu0 %v561
    %929 = vmatpush.msra.mxu0 %v553
    %930 = vmatpush.msra.mxu0 %v545
    %931 = vmatpush.msra.mxu0 %v537
    %932 = vmatpush.msra.mxu0 %v529
    %933 = vmatpush.msra.mxu0 %v521
    %934 = vmatpush.msra.mxu0 %v513
    %935 = vmatpush.msra.mxu0 %v505
    %936 = vmatpush.msra.mxu0 %v497
    %937 = vmatpush.msra.mxu0 %v489
    %938 = vmatpush.msra.mxu0 %v481
    %939 = vmatmul.f32.gmra.mxu0 %v341
    %v940 = vpop.f32.mrf.mxu0
    %v941 = vadd.f32 %v912, %v940
    %942 = vmatmul.f32.gmra.mxu0 %v343
    %v943 = vpop.f32.mrf.mxu0
    %v944 = vadd.f32 %v915, %v943
    %945 = vmatmul.f32.gmra.mxu0 %v345
    %v946 = vpop.f32.mrf.mxu0
    %v947 = vadd.f32 %v918, %v946
    %948 = vmatmul.f32.gmra.mxu0 %v347
    %v949 = vpop.f32.mrf.mxu0
    %v950 = vadd.f32 %v921, %v949
    %951 = vdwg.mxu0
    %952 = vmatpush.msra.mxu0 %v474
    %953 = vmatpush.msra.mxu0 %v466
    %954 = vmatpush.msra.mxu0 %v458
    %955 = vmatpush.msra.mxu0 %v450
    %956 = vmatpush.msra.mxu0 %v442
    %957 = vmatpush.msra.mxu0 %v434
    %958 = vmatpush.msra.mxu0 %v426
    %959 = vmatpush.msra.mxu0 %v418
    %960 = vmatpush.msra.mxu0 %v410
    %961 = vmatpush.msra.mxu0 %v402
    %962 = vmatpush.msra.mxu0 %v394
    %963 = vmatpush.msra.mxu0 %v386
    %964 = vmatpush.msra.mxu0 %v378
    %965 = vmatpush.msra.mxu0 %v370
    %966 = vmatpush.msra.mxu0 %v362
    %967 = vmatpush.msra.mxu0 %v354
    %968 = vmatmul.f32.gmra.mxu0 %v340
    %v969 = vpop.f32.mrf.mxu0
    %v970 = vadd.f32 0.0, %v969
    %971 = vmatmul.f32.gmra.mxu0 %v342
    %v972 = vpop.f32.mrf.mxu0
    %v973 = vadd.f32 0.0, %v972
    %974 = vmatmul.f32.gmra.mxu0 %v344
    %v975 = vpop.f32.mrf.mxu0
    %v976 = vadd.f32 0.0, %v975
    %977 = vmatmul.f32.gmra.mxu0 %v346
    %v978 = vpop.f32.mrf.mxu0
    %v979 = vadd.f32 0.0, %v978
    %980 = vdwg.mxu0
    %981 = vmatpush.msra.mxu0 %v602
    %982 = vmatpush.msra.mxu0 %v594
    %983 = vmatpush.msra.mxu0 %v586
    %984 = vmatpush.msra.mxu0 %v578
    %985 = vmatpush.msra.mxu0 %v570
    %986 = vmatpush.msra.mxu0 %v562
    %987 = vmatpush.msra.mxu0 %v554
    %988 = vmatpush.msra.mxu0 %v546
    %989 = vmatpush.msra.mxu0 %v538
    %990 = vmatpush.msra.mxu0 %v530
    %991 = vmatpush.msra.mxu0 %v522
    %992 = vmatpush.msra.mxu0 %v514
    %993 = vmatpush.msra.mxu0 %v506
    %994 = vmatpush.msra.mxu0 %v498
    %995 = vmatpush.msra.mxu0 %v490
    %996 = vmatpush.msra.mxu0 %v482
    %997 = vmatmul.f32.gmra.mxu0 %v341
    %v998 = vpop.f32.mrf.mxu0
    %v999 = vadd.f32 %v970, %v998
    %1000 = vmatmul.f32.gmra.mxu0 %v343
    %v1001 = vpop.f32.mrf.mxu0
    %v1002 = vadd.f32 %v973, %v1001
    %1003 = vmatmul.f32.gmra.mxu0 %v345
    %v1004 = vpop.f32.mrf.mxu0
    %v1005 = vadd.f32 %v976, %v1004
    %1006 = vmatmul.f32.gmra.mxu0 %v347
    %v1007 = vpop.f32.mrf.mxu0
    %v1008 = vadd.f32 %v979, %v1007
    %1009 = vdwg.mxu0
    %1010 = vmatpush.msra.mxu0 %v475
    %1011 = vmatpush.msra.mxu0 %v467
    %1012 = vmatpush.msra.mxu0 %v459
    %1013 = vmatpush.msra.mxu0 %v451
    %1014 = vmatpush.msra.mxu0 %v443
    %1015 = vmatpush.msra.mxu0 %v435
    %1016 = vmatpush.msra.mxu0 %v427
    %1017 = vmatpush.msra.mxu0 %v419
    %1018 = vmatpush.msra.mxu0 %v411
    %1019 = vmatpush.msra.mxu0 %v403
    %1020 = vmatpush.msra.mxu0 %v395
    %1021 = vmatpush.msra.mxu0 %v387
    %1022 = vmatpush.msra.mxu0 %v379
    %1023 = vmatpush.msra.mxu0 %v371
    %1024 = vmatpush.msra.mxu0 %v363
    %1025 = vmatpush.msra.mxu0 %v355
    %1026 = vmatmul.f32.gmra.mxu0 %v340
    %v1027 = vpop.f32.mrf.mxu0
    %v1028 = vadd.f32 0.0, %v1027
    %1029 = vmatmul.f32.gmra.mxu0 %v342
    %v1030 = vpop.f32.mrf.mxu0
    %v1031 = vadd.f32 0.0, %v1030
    %1032 = vmatmul.f32.gmra.mxu0 %v344
    %v1033 = vpop.f32.mrf.mxu0
    %v1034 = vadd.f32 0.0, %v1033
    %1035 = vmatmul.f32.gmra.mxu0 %v346
    %v1036 = vpop.f32.mrf.mxu0
    %v1037 = vadd.f32 0.0, %v1036
    %1038 = vdwg.mxu0
    %1039 = vmatpush.msra.mxu0 %v603
    %1040 = vmatpush.msra.mxu0 %v595
    %1041 = vmatpush.msra.mxu0 %v587
    %1042 = vmatpush.msra.mxu0 %v579
    %1043 = vmatpush.msra.mxu0 %v571
    %1044 = vmatpush.msra.mxu0 %v563
    %1045 = vmatpush.msra.mxu0 %v555
    %1046 = vmatpush.msra.mxu0 %v547
    %1047 = vmatpush.msra.mxu0 %v539
    %1048 = vmatpush.msra.mxu0 %v531
    %1049 = vmatpush.msra.mxu0 %v523
    %1050 = vmatpush.msra.mxu0 %v515
    %1051 = vmatpush.msra.mxu0 %v507
    %1052 = vmatpush.msra.mxu0 %v499
    %1053 = vmatpush.msra.mxu0 %v491
    %1054 = vmatpush.msra.mxu0 %v483
    %1055 = vmatmul.f32.gmra.mxu0 %v341
    %v1056 = vpop.f32.mrf.mxu0
    %v1057 = vadd.f32 %v1028, %v1056
    %1058 = vmatmul.f32.gmra.mxu0 %v343
    %v1059 = vpop.f32.mrf.mxu0
    %v1060 = vadd.f32 %v1031, %v1059
    %1061 = vmatmul.f32.gmra.mxu0 %v345
    %v1062 = vpop.f32.mrf.mxu0
    %v1063 = vadd.f32 %v1034, %v1062
    %1064 = vmatmul.f32.gmra.mxu0 %v347
    %v1065 = vpop.f32.mrf.mxu0
    %v1066 = vadd.f32 %v1037, %v1065
    %1067 = vdwg.mxu0
    %1068 = vmatpush.msra.mxu0 %v204
    %1069 = vmatpush.msra.mxu0 %v196
    %1070 = vmatpush.msra.mxu0 %v188
    %1071 = vmatpush.msra.mxu0 %v180
    %1072 = vmatpush.msra.mxu0 %v172
    %1073 = vmatpush.msra.mxu0 %v164
    %1074 = vmatpush.msra.mxu0 %v156
    %1075 = vmatpush.msra.mxu0 %v148
    %1076 = vmatpush.msra.mxu0 %v140
    %1077 = vmatpush.msra.mxu0 %v132
    %1078 = vmatpush.msra.mxu0 %v124
    %1079 = vmatpush.msra.mxu0 %v116
    %1080 = vmatpush.msra.mxu0 %v108
    %1081 = vmatpush.msra.mxu0 %v100
    %1082 = vmatpush.msra.mxu0 %v92
    %1083 = vmatpush.msra.mxu0 %v84
    %1084 = vmatmul.f32.gmra.mxu0 %v76
    %v1085 = vpop.f32.mrf.mxu0
    %v1086 = vadd.f32 %v651, %v1085
    %1087 = vmatmul.f32.gmra.mxu0 %v78
    %v1088 = vpop.f32.mrf.mxu0
    %v1089 = vadd.f32 %v654, %v1088
    %1090 = vmatmul.f32.gmra.mxu0 %v80
    %v1091 = vpop.f32.mrf.mxu0
    %v1092 = vadd.f32 %v657, %v1091
    %1093 = vmatmul.f32.gmra.mxu0 %v82
    %v1094 = vpop.f32.mrf.mxu0
    %v1095 = vadd.f32 %v660, %v1094
    %1096 = vdwg.mxu0
    %1097 = vmatpush.msra.mxu0 %v332
    %1098 = vmatpush.msra.mxu0 %v324
    %1099 = vmatpush.msra.mxu0 %v316
    %1100 = vmatpush.msra.mxu0 %v308
    %1101 = vmatpush.msra.mxu0 %v300
    %1102 = vmatpush.msra.mxu0 %v292
    %1103 = vmatpush.msra.mxu0 %v284
    %1104 = vmatpush.msra.mxu0 %v276
    %1105 = vmatpush.msra.mxu0 %v268
    %1106 = vmatpush.msra.mxu0 %v260
    %1107 = vmatpush.msra.mxu0 %v252
    %1108 = vmatpush.msra.mxu0 %v244
    %1109 = vmatpush.msra.mxu0 %v236
    %1110 = vmatpush.msra.mxu0 %v228
    %1111 = vmatpush.msra.mxu0 %v220
    %1112 = vmatpush.msra.mxu0 %v212
    %1113 = vmatmul.f32.gmra.mxu0 %v77
    %v1114 = vpop.f32.mrf.mxu0
    %v1115 = vadd.f32 %v1086, %v1114
    %1116 = vmatmul.f32.gmra.mxu0 %v79
    %v1117 = vpop.f32.mrf.mxu0
    %v1118 = vadd.f32 %v1089, %v1117
    %1119 = vmatmul.f32.gmra.mxu0 %v81
    %v1120 = vpop.f32.mrf.mxu0
    %v1121 = vadd.f32 %v1092, %v1120
    %1122 = vmatmul.f32.gmra.mxu0 %v83
    %v1123 = vpop.f32.mrf.mxu0
    %v1124 = vadd.f32 %v1095, %v1123
    %1125 = vdwg.mxu0
    %1126 = vmatpush.msra.mxu0 %v205
    %1127 = vmatpush.msra.mxu0 %v197
    %1128 = vmatpush.msra.mxu0 %v189
    %1129 = vmatpush.msra.mxu0 %v181
    %1130 = vmatpush.msra.mxu0 %v173
    %1131 = vmatpush.msra.mxu0 %v165
    %1132 = vmatpush.msra.mxu0 %v157
    %1133 = vmatpush.msra.mxu0 %v149
    %1134 = vmatpush.msra.mxu0 %v141
    %1135 = vmatpush.msra.mxu0 %v133
    %1136 = vmatpush.msra.mxu0 %v125
    %1137 = vmatpush.msra.mxu0 %v117
    %1138 = vmatpush.msra.mxu0 %v109
    %1139 = vmatpush.msra.mxu0 %v101
    %1140 = vmatpush.msra.mxu0 %v93
    %1141 = vmatpush.msra.mxu0 %v85
    %1142 = vmatmul.f32.gmra.mxu0 %v76
    %v1143 = vpop.f32.mrf.mxu0
    %v1144 = vadd.f32 %v709, %v1143
    %1145 = vmatmul.f32.gmra.mxu0 %v78
    %v1146 = vpop.f32.mrf.mxu0
    %v1147 = vadd.f32 %v712, %v1146
    %1148 = vmatmul.f32.gmra.mxu0 %v80
    %v1149 = vpop.f32.mrf.mxu0
    %v1150 = vadd.f32 %v715, %v1149
    %1151 = vmatmul.f32.gmra.mxu0 %v82
    %v1152 = vpop.f32.mrf.mxu0
    %v1153 = vadd.f32 %v718, %v1152
    %1154 = vdwg.mxu0
    %1155 = vmatpush.msra.mxu0 %v333
    %1156 = vmatpush.msra.mxu0 %v325
    %1157 = vmatpush.msra.mxu0 %v317
    %1158 = vmatpush.msra.mxu0 %v309
    %1159 = vmatpush.msra.mxu0 %v301
    %1160 = vmatpush.msra.mxu0 %v293
    %1161 = vmatpush.msra.mxu0 %v285
    %1162 = vmatpush.msra.mxu0 %v277
    %1163 = vmatpush.msra.mxu0 %v269
    %1164 = vmatpush.msra.mxu0 %v261
    %1165 = vmatpush.msra.mxu0 %v253
    %1166 = vmatpush.msra.mxu0 %v245
    %1167 = vmatpush.msra.mxu0 %v237
    %1168 = vmatpush.msra.mxu0 %v229
    %1169 = vmatpush.msra.mxu0 %v221
    %1170 = vmatpush.msra.mxu0 %v213
    %1171 = vmatmul.f32.gmra.mxu0 %v77
    %v1172 = vpop.f32.mrf.mxu0
    %v1173 = vadd.f32 %v1144, %v1172
    %1174 = vmatmul.f32.gmra.mxu0 %v79
    %v1175 = vpop.f32.mrf.mxu0
    %v1176 = vadd.f32 %v1147, %v1175
    %1177 = vmatmul.f32.gmra.mxu0 %v81
    %v1178 = vpop.f32.mrf.mxu0
    %v1179 = vadd.f32 %v1150, %v1178
    %1180 = vmatmul.f32.gmra.mxu0 %v83
    %v1181 = vpop.f32.mrf.mxu0
    %v1182 = vadd.f32 %v1153, %v1181
    %1183 = vdwg.mxu0
    %1184 = vmatpush.msra.mxu0 %v206
    %1185 = vmatpush.msra.mxu0 %v198
    %1186 = vmatpush.msra.mxu0 %v190
    %1187 = vmatpush.msra.mxu0 %v182
    %1188 = vmatpush.msra.mxu0 %v174
    %1189 = vmatpush.msra.mxu0 %v166
    %1190 = vmatpush.msra.mxu0 %v158
    %1191 = vmatpush.msra.mxu0 %v150
    %1192 = vmatpush.msra.mxu0 %v142
    %1193 = vmatpush.msra.mxu0 %v134
    %1194 = vmatpush.msra.mxu0 %v126
    %1195 = vmatpush.msra.mxu0 %v118
    %1196 = vmatpush.msra.mxu0 %v110
    %1197 = vmatpush.msra.mxu0 %v102
    %1198 = vmatpush.msra.mxu0 %v94
    %1199 = vmatpush.msra.mxu0 %v86
    %1200 = vmatmul.f32.gmra.mxu0 %v76
    %v1201 = vpop.f32.mrf.mxu0
    %v1202 = vadd.f32 %v767, %v1201
    %1203 = vmatmul.f32.gmra.mxu0 %v78
    %v1204 = vpop.f32.mrf.mxu0
    %v1205 = vadd.f32 %v770, %v1204
    %1206 = vmatmul.f32.gmra.mxu0 %v80
    %v1207 = vpop.f32.mrf.mxu0
    %v1208 = vadd.f32 %v773, %v1207
    %1209 = vmatmul.f32.gmra.mxu0 %v82
    %v1210 = vpop.f32.mrf.mxu0
    %v1211 = vadd.f32 %v776, %v1210
    %1212 = vdwg.mxu0
    %1213 = vmatpush.msra.mxu0 %v334
    %1214 = vmatpush.msra.mxu0 %v326
    %1215 = vmatpush.msra.mxu0 %v318
    %1216 = vmatpush.msra.mxu0 %v310
    %1217 = vmatpush.msra.mxu0 %v302
    %1218 = vmatpush.msra.mxu0 %v294
    %1219 = vmatpush.msra.mxu0 %v286
    %1220 = vmatpush.msra.mxu0 %v278
    %1221 = vmatpush.msra.mxu0 %v270
    %1222 = vmatpush.msra.mxu0 %v262
    %1223 = vmatpush.msra.mxu0 %v254
    %1224 = vmatpush.msra.mxu0 %v246
    %1225 = vmatpush.msra.mxu0 %v238
    %1226 = vmatpush.msra.mxu0 %v230
    %1227 = vmatpush.msra.mxu0 %v222
    %1228 = vmatpush.msra.mxu0 %v214
    %1229 = vmatmul.f32.gmra.mxu0 %v77
    %v1230 = vpop.f32.mrf.mxu0
    %v1231 = vadd.f32 %v1202, %v1230
    %1232 = vmatmul.f32.gmra.mxu0 %v79
    %v1233 = vpop.f32.mrf.mxu0
    %v1234 = vadd.f32 %v1205, %v1233
    %1235 = vmatmul.f32.gmra.mxu0 %v81
    %v1236 = vpop.f32.mrf.mxu0
    %v1237 = vadd.f32 %v1208, %v1236
    %1238 = vmatmul.f32.gmra.mxu0 %v83
    %v1239 = vpop.f32.mrf.mxu0
    %v1240 = vadd.f32 %v1211, %v1239
    %1241 = vdwg.mxu0
    %1242 = vmatpush.msra.mxu0 %v207
    %1243 = vmatpush.msra.mxu0 %v199
    %1244 = vmatpush.msra.mxu0 %v191
    %1245 = vmatpush.msra.mxu0 %v183
    %1246 = vmatpush.msra.mxu0 %v175
    %1247 = vmatpush.msra.mxu0 %v167
    %1248 = vmatpush.msra.mxu0 %v159
    %1249 = vmatpush.msra.mxu0 %v151
    %1250 = vmatpush.msra.mxu0 %v143
    %1251 = vmatpush.msra.mxu0 %v135
    %1252 = vmatpush.msra.mxu0 %v127
    %1253 = vmatpush.msra.mxu0 %v119
    %1254 = vmatpush.msra.mxu0 %v111
    %1255 = vmatpush.msra.mxu0 %v103
    %1256 = vmatpush.msra.mxu0 %v95
    %1257 = vmatpush.msra.mxu0 %v87
    %1258 = vmatmul.f32.gmra.mxu0 %v76
    %v1259 = vpop.f32.mrf.mxu0
    %v1260 = vadd.f32 %v825, %v1259
    %1261 = vmatmul.f32.gmra.mxu0 %v78
    %v1262 = vpop.f32.mrf.mxu0
    %v1263 = vadd.f32 %v828, %v1262
    %1264 = vmatmul.f32.gmra.mxu0 %v80
    %v1265 = vpop.f32.mrf.mxu0
    %v1266 = vadd.f32 %v831, %v1265
    %1267 = vmatmul.f32.gmra.mxu0 %v82
    %v1268 = vpop.f32.mrf.mxu0
    %v1269 = vadd.f32 %v834, %v1268
    %1270 = vdwg.mxu0
    %1271 = vmatpush.msra.mxu0 %v335
    %1272 = vmatpush.msra.mxu0 %v327
    %1273 = vmatpush.msra.mxu0 %v319
    %1274 = vmatpush.msra.mxu0 %v311
    %1275 = vmatpush.msra.mxu0 %v303
    %1276 = vmatpush.msra.mxu0 %v295
    %1277 = vmatpush.msra.mxu0 %v287
    %1278 = vmatpush.msra.mxu0 %v279
    %1279 = vmatpush.msra.mxu0 %v271
    %1280 = vmatpush.msra.mxu0 %v263
    %1281 = vmatpush.msra.mxu0 %v255
    %1282 = vmatpush.msra.mxu0 %v247
    %1283 = vmatpush.msra.mxu0 %v239
    %1284 = vmatpush.msra.mxu0 %v231
    %1285 = vmatpush.msra.mxu0 %v223
    %1286 = vmatpush.msra.mxu0 %v215
    %1287 = vmatmul.f32.gmra.mxu0 %v77
    %v1288 = vpop.f32.mrf.mxu0
    %v1289 = vadd.f32 %v1260, %v1288
    %1290 = vmatmul.f32.gmra.mxu0 %v79
    %v1291 = vpop.f32.mrf.mxu0
    %v1292 = vadd.f32 %v1263, %v1291
    %1293 = vmatmul.f32.gmra.mxu0 %v81
    %v1294 = vpop.f32.mrf.mxu0
    %v1295 = vadd.f32 %v1266, %v1294
    %1296 = vmatmul.f32.gmra.mxu0 %v83
    %v1297 = vpop.f32.mrf.mxu0
    %v1298 = vadd.f32 %v1269, %v1297
    %1299 = vdwg.mxu0
    %1300 = vmatpush.msra.mxu0 %v208
    %1301 = vmatpush.msra.mxu0 %v200
    %1302 = vmatpush.msra.mxu0 %v192
    %1303 = vmatpush.msra.mxu0 %v184
    %1304 = vmatpush.msra.mxu0 %v176
    %1305 = vmatpush.msra.mxu0 %v168
    %1306 = vmatpush.msra.mxu0 %v160
    %1307 = vmatpush.msra.mxu0 %v152
    %1308 = vmatpush.msra.mxu0 %v144
    %1309 = vmatpush.msra.mxu0 %v136
    %1310 = vmatpush.msra.mxu0 %v128
    %1311 = vmatpush.msra.mxu0 %v120
    %1312 = vmatpush.msra.mxu0 %v112
    %1313 = vmatpush.msra.mxu0 %v104
    %1314 = vmatpush.msra.mxu0 %v96
    %1315 = vmatpush.msra.mxu0 %v88
    %1316 = vmatmul.f32.gmra.mxu0 %v76
    %v1317 = vpop.f32.mrf.mxu0
    %v1318 = vadd.f32 %v883, %v1317
    %1319 = vmatmul.f32.gmra.mxu0 %v78
    %v1320 = vpop.f32.mrf.mxu0
    %v1321 = vadd.f32 %v886, %v1320
    %1322 = vmatmul.f32.gmra.mxu0 %v80
    %v1323 = vpop.f32.mrf.mxu0
    %v1324 = vadd.f32 %v889, %v1323
    %1325 = vmatmul.f32.gmra.mxu0 %v82
    %v1326 = vpop.f32.mrf.mxu0
    %v1327 = vadd.f32 %v892, %v1326
    %1328 = vdwg.mxu0
    %1329 = vmatpush.msra.mxu0 %v336
    %1330 = vmatpush.msra.mxu0 %v328
    %1331 = vmatpush.msra.mxu0 %v320
    %1332 = vmatpush.msra.mxu0 %v312
    %1333 = vmatpush.msra.mxu0 %v304
    %1334 = vmatpush.msra.mxu0 %v296
    %1335 = vmatpush.msra.mxu0 %v288
    %1336 = vmatpush.msra.mxu0 %v280
    %1337 = vmatpush.msra.mxu0 %v272
    %1338 = vmatpush.msra.mxu0 %v264
    %1339 = vmatpush.msra.mxu0 %v256
    %1340 = vmatpush.msra.mxu0 %v248
    %1341 = vmatpush.msra.mxu0 %v240
    %1342 = vmatpush.msra.mxu0 %v232
    %1343 = vmatpush.msra.mxu0 %v224
    %1344 = vmatpush.msra.mxu0 %v216
    %1345 = vmatmul.f32.gmra.mxu0 %v77
    %v1346 = vpop.f32.mrf.mxu0
    %v1347 = vadd.f32 %v1318, %v1346
    %1348 = vmatmul.f32.gmra.mxu0 %v79
    %v1349 = vpop.f32.mrf.mxu0
    %v1350 = vadd.f32 %v1321, %v1349
    %1351 = vmatmul.f32.gmra.mxu0 %v81
    %v1352 = vpop.f32.mrf.mxu0
    %v1353 = vadd.f32 %v1324, %v1352
    %1354 = vmatmul.f32.gmra.mxu0 %v83
    %v1355 = vpop.f32.mrf.mxu0
    %v1356 = vadd.f32 %v1327, %v1355
    %1357 = vdwg.mxu0
    %1358 = vmatpush.msra.mxu0 %v209
    %1359 = vmatpush.msra.mxu0 %v201
    %1360 = vmatpush.msra.mxu0 %v193
    %1361 = vmatpush.msra.mxu0 %v185
    %1362 = vmatpush.msra.mxu0 %v177
    %1363 = vmatpush.msra.mxu0 %v169
    %1364 = vmatpush.msra.mxu0 %v161
    %1365 = vmatpush.msra.mxu0 %v153
    %1366 = vmatpush.msra.mxu0 %v145
    %1367 = vmatpush.msra.mxu0 %v137
    %1368 = vmatpush.msra.mxu0 %v129
    %1369 = vmatpush.msra.mxu0 %v121
    %1370 = vmatpush.msra.mxu0 %v113
    %1371 = vmatpush.msra.mxu0 %v105
    %1372 = vmatpush.msra.mxu0 %v97
    %1373 = vmatpush.msra.mxu0 %v89
    %1374 = vmatmul.f32.gmra.mxu0 %v76
    %v1375 = vpop.f32.mrf.mxu0
    %v1376 = vadd.f32 %v941, %v1375
    %1377 = vmatmul.f32.gmra.mxu0 %v78
    %v1378 = vpop.f32.mrf.mxu0
    %v1379 = vadd.f32 %v944, %v1378
    %1380 = vmatmul.f32.gmra.mxu0 %v80
    %v1381 = vpop.f32.mrf.mxu0
    %v1382 = vadd.f32 %v947, %v1381
    %1383 = vmatmul.f32.gmra.mxu0 %v82
    %v1384 = vpop.f32.mrf.mxu0
    %v1385 = vadd.f32 %v950, %v1384
    %1386 = vdwg.mxu0
    %1387 = vmatpush.msra.mxu0 %v337
    %1388 = vmatpush.msra.mxu0 %v329
    %1389 = vmatpush.msra.mxu0 %v321
    %1390 = vmatpush.msra.mxu0 %v313
    %1391 = vmatpush.msra.mxu0 %v305
    %1392 = vmatpush.msra.mxu0 %v297
    %1393 = vmatpush.msra.mxu0 %v289
    %1394 = vmatpush.msra.mxu0 %v281
    %1395 = vmatpush.msra.mxu0 %v273
    %1396 = vmatpush.msra.mxu0 %v265
    %1397 = vmatpush.msra.mxu0 %v257
    %1398 = vmatpush.msra.mxu0 %v249
    %1399 = vmatpush.msra.mxu0 %v241
    %1400 = vmatpush.msra.mxu0 %v233
    %1401 = vmatpush.msra.mxu0 %v225
    %1402 = vmatpush.msra.mxu0 %v217
    %1403 = vmatmul.f32.gmra.mxu0 %v77
    %v1404 = vpop.f32.mrf.mxu0
    %v1405 = vadd.f32 %v1376, %v1404
    %1406 = vmatmul.f32.gmra.mxu0 %v79
    %v1407 = vpop.f32.mrf.mxu0
    %v1408 = vadd.f32 %v1379, %v1407
    %1409 = vmatmul.f32.gmra.mxu0 %v81
    %v1410 = vpop.f32.mrf.mxu0
    %v1411 = vadd.f32 %v1382, %v1410
    %1412 = vmatmul.f32.gmra.mxu0 %v83
    %v1413 = vpop.f32.mrf.mxu0
    %v1414 = vadd.f32 %v1385, %v1413
    %1415 = vdwg.mxu0
    %1416 = vmatpush.msra.mxu0 %v210
    %1417 = vmatpush.msra.mxu0 %v202
    %1418 = vmatpush.msra.mxu0 %v194
    %1419 = vmatpush.msra.mxu0 %v186
    %1420 = vmatpush.msra.mxu0 %v178
    %1421 = vmatpush.msra.mxu0 %v170
    %1422 = vmatpush.msra.mxu0 %v162
    %1423 = vmatpush.msra.mxu0 %v154
    %1424 = vmatpush.msra.mxu0 %v146
    %1425 = vmatpush.msra.mxu0 %v138
    %1426 = vmatpush.msra.mxu0 %v130
    %1427 = vmatpush.msra.mxu0 %v122
    %1428 = vmatpush.msra.mxu0 %v114
    %1429 = vmatpush.msra.mxu0 %v106
    %1430 = vmatpush.msra.mxu0 %v98
    %1431 = vmatpush.msra.mxu0 %v90
    %1432 = vmatmul.f32.gmra.mxu0 %v76
    %v1433 = vpop.f32.mrf.mxu0
    %v1434 = vadd.f32 %v999, %v1433
    %1435 = vmatmul.f32.gmra.mxu0 %v78
    %v1436 = vpop.f32.mrf.mxu0
    %v1437 = vadd.f32 %v1002, %v1436
    %1438 = vmatmul.f32.gmra.mxu0 %v80
    %v1439 = vpop.f32.mrf.mxu0
    %v1440 = vadd.f32 %v1005, %v1439
    %1441 = vmatmul.f32.gmra.mxu0 %v82
    %v1442 = vpop.f32.mrf.mxu0
    %v1443 = vadd.f32 %v1008, %v1442
    %1444 = vdwg.mxu0
    %1445 = vmatpush.msra.mxu0 %v338
    %1446 = vmatpush.msra.mxu0 %v330
    %1447 = vmatpush.msra.mxu0 %v322
    %1448 = vmatpush.msra.mxu0 %v314
    %1449 = vmatpush.msra.mxu0 %v306
    %1450 = vmatpush.msra.mxu0 %v298
    %1451 = vmatpush.msra.mxu0 %v290
    %1452 = vmatpush.msra.mxu0 %v282
    %1453 = vmatpush.msra.mxu0 %v274
    %1454 = vmatpush.msra.mxu0 %v266
    %1455 = vmatpush.msra.mxu0 %v258
    %1456 = vmatpush.msra.mxu0 %v250
    %1457 = vmatpush.msra.mxu0 %v242
    %1458 = vmatpush.msra.mxu0 %v234
    %1459 = vmatpush.msra.mxu0 %v226
    %1460 = vmatpush.msra.mxu0 %v218
    %1461 = vmatmul.f32.gmra.mxu0 %v77
    %v1462 = vpop.f32.mrf.mxu0
    %v1463 = vadd.f32 %v1434, %v1462
    %1464 = vmatmul.f32.gmra.mxu0 %v79
    %v1465 = vpop.f32.mrf.mxu0
    %v1466 = vadd.f32 %v1437, %v1465
    %1467 = vmatmul.f32.gmra.mxu0 %v81
    %v1468 = vpop.f32.mrf.mxu0
    %v1469 = vadd.f32 %v1440, %v1468
    %1470 = vmatmul.f32.gmra.mxu0 %v83
    %v1471 = vpop.f32.mrf.mxu0
    %v1472 = vadd.f32 %v1443, %v1471
    %1473 = vdwg.mxu0
    %1474 = vmatpush.msra.mxu0 %v211
    %1475 = vmatpush.msra.mxu0 %v203
    %1476 = vmatpush.msra.mxu0 %v195
    %1477 = vmatpush.msra.mxu0 %v187
    %1478 = vmatpush.msra.mxu0 %v179
    %1479 = vmatpush.msra.mxu0 %v171
    %1480 = vmatpush.msra.mxu0 %v163
    %1481 = vmatpush.msra.mxu0 %v155
    %1482 = vmatpush.msra.mxu0 %v147
    %1483 = vmatpush.msra.mxu0 %v139
    %1484 = vmatpush.msra.mxu0 %v131
    %1485 = vmatpush.msra.mxu0 %v123
    %1486 = vmatpush.msra.mxu0 %v115
    %1487 = vmatpush.msra.mxu0 %v107
    %1488 = vmatpush.msra.mxu0 %v99
    %1489 = vmatpush.msra.mxu0 %v91
    %1490 = vmatmul.f32.gmra.mxu0 %v76
    %v1491 = vpop.f32.mrf.mxu0
    %v1492 = vadd.f32 %v1057, %v1491
    %1493 = vmatmul.f32.gmra.mxu0 %v78
    %v1494 = vpop.f32.mrf.mxu0
    %v1495 = vadd.f32 %v1060, %v1494
    %1496 = vmatmul.f32.gmra.mxu0 %v80
    %v1497 = vpop.f32.mrf.mxu0
    %v1498 = vadd.f32 %v1063, %v1497
    %1499 = vmatmul.f32.gmra.mxu0 %v82
    %v1500 = vpop.f32.mrf.mxu0
    %v1501 = vadd.f32 %v1066, %v1500
    %1502 = vdwg.mxu0
    %1503 = vmatpush.msra.mxu0 %v339
    %1504 = vmatpush.msra.mxu0 %v331
    %1505 = vmatpush.msra.mxu0 %v323
    %1506 = vmatpush.msra.mxu0 %v315
    %1507 = vmatpush.msra.mxu0 %v307
    %1508 = vmatpush.msra.mxu0 %v299
    %1509 = vmatpush.msra.mxu0 %v291
    %1510 = vmatpush.msra.mxu0 %v283
    %1511 = vmatpush.msra.mxu0 %v275
    %1512 = vmatpush.msra.mxu0 %v267
    %1513 = vmatpush.msra.mxu0 %v259
    %1514 = vmatpush.msra.mxu0 %v251
    %1515 = vmatpush.msra.mxu0 %v243
    %1516 = vmatpush.msra.mxu0 %v235
    %1517 = vmatpush.msra.mxu0 %v227
    %1518 = vmatpush.msra.mxu0 %v219
    %1519 = vmatmul.f32.gmra.mxu0 %v77
    %v1520 = vpop.f32.mrf.mxu0
    %v1521 = vadd.f32 %v1492, %v1520
    %1522 = vmatmul.f32.gmra.mxu0 %v79
    %v1523 = vpop.f32.mrf.mxu0
    %v1524 = vadd.f32 %v1495, %v1523
    %1525 = vmatmul.f32.gmra.mxu0 %v81
    %v1526 = vpop.f32.mrf.mxu0
    %v1527 = vadd.f32 %v1498, %v1526
    %1528 = vmatmul.f32.gmra.mxu0 %v83
    %v1529 = vpop.f32.mrf.mxu0
    %v1530 = vadd.f32 %v1501, %v1529
    %1531 = vdwg.mxu0
    %v1532 = vld [vmem:[%s5] sm:$0xff]
    %v1534 = vperm.slane %v1532, 0
    %v1535 = vperm.slane %v1532, 1
    %v1536 = vperm.slane %v1532, 2
    %v1537 = vperm.slane %v1532, 3
    %v1538 = vperm.slane %v1532, 4
    %v1539 = vperm.slane %v1532, 5
    %v1540 = vperm.slane %v1532, 6
    %v1541 = vperm.slane %v1532, 7
    %v1550 = vadd.f32 %v1115, %v1534
    %v1551 = vadd.f32 %v1173, %v1535
    %v1552 = vadd.f32 %v1231, %v1536
    %v1553 = vadd.f32 %v1289, %v1537
    %v1554 = vadd.f32 %v1347, %v1538
    %v1555 = vadd.f32 %v1405, %v1539
    %v1556 = vadd.f32 %v1463, %v1540
    %v1557 = vadd.f32 %v1521, %v1541
    %v1558 = vadd.f32 %v1118, %v1534
    %v1559 = vadd.f32 %v1176, %v1535
    %v1560 = vadd.f32 %v1234, %v1536
    %v1561 = vadd.f32 %v1292, %v1537
    %v1562 = vadd.f32 %v1350, %v1538
    %v1563 = vadd.f32 %v1408, %v1539
    %v1564 = vadd.f32 %v1466, %v1540
    %v1565 = vadd.f32 %v1524, %v1541
    %v1566 = vadd.f32 %v1121, %v1534
    %v1567 = vadd.f32 %v1179, %v1535
    %v1568 = vadd.f32 %v1237, %v1536
    %v1569 = vadd.f32 %v1295, %v1537
    %v1570 = vadd.f32 %v1353, %v1538
    %v1571 = vadd.f32 %v1411, %v1539
    %v1572 = vadd.f32 %v1469, %v1540
    %v1573 = vadd.f32 %v1527, %v1541
    %v1574 = vadd.f32 %v1124, %v1534
    %v1575 = vadd.f32 %v1182, %v1535
    %v1576 = vadd.f32 %v1240, %v1536
    %v1577 = vadd.f32 %v1298, %v1537
    %v1578 = vadd.f32 %v1356, %v1538
    %v1579 = vadd.f32 %v1414, %v1539
    %v1580 = vadd.f32 %v1472, %v1540
    %v1581 = vadd.f32 %v1530, %v1541
    %1582 = vst [vmem:[#allocation2] sm:$0xff] %v1550
    %1583 = vst [vmem:[#allocation2 + $0x8] sm:$0xff] %v1551
    %1584 = vst [vmem:[#allocation2 + $0x10] sm:$0xff] %v1552
    %1585 = vst [vmem:[#allocation2 + $0x18] sm:$0xff] %v1553
    %1586 = vst [vmem:[#allocation2 + $0x20] sm:$0xff] %v1554
    %1587 = vst [vmem:[#allocation2 + $0x28] sm:$0xff] %v1555
    %1588 = vst [vmem:[#allocation2 + $0x30] sm:$0xff] %v1556
    %1589 = vst [vmem:[#allocation2 + $0x38] sm:$0xff] %v1557
    %1590 = vst [vmem:[#allocation2 + $0x40] sm:$0xff] %v1558
    %1591 = vst [vmem:[#allocation2 + $0x48] sm:$0xff] %v1559
    %1592 = vst [vmem:[#allocation2 + $0x50] sm:$0xff] %v1560
    %1593 = vst [vmem:[#allocation2 + $0x58] sm:$0xff] %v1561
    %1594 = vst [vmem:[#allocation2 + $0x60] sm:$0xff] %v1562
    %1595 = vst [vmem:[#allocation2 + $0x68] sm:$0xff] %v1563
    %1596 = vst [vmem:[#allocation2 + $0x70] sm:$0xff] %v1564
    %1597 = vst [vmem:[#allocation2 + $0x78] sm:$0xff] %v1565
    %1598 = vst [vmem:[#allocation2 + $0x80] sm:$0xff] %v1566
    %1599 = vst [vmem:[#allocation2 + $0x88] sm:$0xff] %v1567
    %1600 = vst [vmem:[#allocation2 + $0x90] sm:$0xff] %v1568
    %1601 = vst [vmem:[#allocation2 + $0x98] sm:$0xff] %v1569
    %1602 = vst [vmem:[#allocation2 + $0xa0] sm:$0xff] %v1570
    %1603 = vst [vmem:[#allocation2 + $0xa8] sm:$0xff] %v1571
    %1604 = vst [vmem:[#allocation2 + $0xb0] sm:$0xff] %v1572
    %1605 = vst [vmem:[#allocation2 + $0xb8] sm:$0xff] %v1573
    %1606 = vst [vmem:[#allocation2 + $0xc0] sm:$0xff] %v1574
    %1607 = vst [vmem:[#allocation2 + $0xc8] sm:$0xff] %v1575
    %1608 = vst [vmem:[#allocation2 + $0xd0] sm:$0xff] %v1576
    %1609 = vst [vmem:[#allocation2 + $0xd8] sm:$0xff] %v1577
    %1610 = vst [vmem:[#allocation2 + $0xe0] sm:$0xff] %v1578
    %1611 = vst [vmem:[#allocation2 + $0xe8] sm:$0xff] %v1579
    %1612 = vst [vmem:[#allocation2 + $0xf0] sm:$0xff] %v1580
    %1613 = vst [vmem:[#allocation2 + $0xf8] sm:$0xff] %v1581
    %v1614 = vld [vmem:[#allocation8] sm:$0xff]
    %v1615 = vld [vmem:[#allocation8 + $0x8] sm:$0xff]
    %v1616 = vld [vmem:[#allocation8 + $0x10] sm:$0xff]
    %v1617 = vld [vmem:[#allocation8 + $0x18] sm:$0xff]
    %v1618 = vld [vmem:[#allocation8 + $0x20] sm:$0xff]
    %v1619 = vld [vmem:[#allocation8 + $0x28] sm:$0xff]
    %v1620 = vld [vmem:[#allocation8 + $0x30] sm:$0xff]
    %v1621 = vld [vmem:[#allocation8 + $0x38] sm:$0xff]
    %v1622 = vld [vmem:[#allocation8 + $0x40] sm:$0xff]
    %v1623 = vld [vmem:[#allocation8 + $0x48] sm:$0xff]
    %v1624 = vld [vmem:[#allocation8 + $0x50] sm:$0xff]
    %v1625 = vld [vmem:[#allocation8 + $0x58] sm:$0xff]
    %v1626 = vld [vmem:[#allocation8 + $0x60] sm:$0xff]
    %v1627 = vld [vmem:[#allocation8 + $0x68] sm:$0xff]
    %v1628 = vld [vmem:[#allocation8 + $0x70] sm:$0xff]
    %v1629 = vld [vmem:[#allocation8 + $0x78] sm:$0xff]
    %v1630 = vld [vmem:[#allocation8 + $0x80] sm:$0xff]
    %v1631 = vld [vmem:[#allocation8 + $0x88] sm:$0xff]
    %v1632 = vld [vmem:[#allocation8 + $0x90] sm:$0xff]
    %v1633 = vld [vmem:[#allocation8 + $0x98] sm:$0xff]
    %v1634 = vld [vmem:[#allocation8 + $0xa0] sm:$0xff]
    %v1635 = vld [vmem:[#allocation8 + $0xa8] sm:$0xff]
    %v1636 = vld [vmem:[#allocation8 + $0xb0] sm:$0xff]
    %v1637 = vld [vmem:[#allocation8 + $0xb8] sm:$0xff]
    %v1638 = vld [vmem:[#allocation8 + $0xc0] sm:$0xff]
    %v1639 = vld [vmem:[#allocation8 + $0xc8] sm:$0xff]
    %v1640 = vld [vmem:[#allocation8 + $0xd0] sm:$0xff]
    %v1641 = vld [vmem:[#allocation8 + $0xd8] sm:$0xff]
    %v1642 = vld [vmem:[#allocation8 + $0xe0] sm:$0xff]
    %v1643 = vld [vmem:[#allocation8 + $0xe8] sm:$0xff]
    %v1644 = vld [vmem:[#allocation8 + $0xf0] sm:$0xff]
    %v1645 = vld [vmem:[#allocation8 + $0xf8] sm:$0xff]
    %v1646 = vld [vmem:[#allocation8 + $0x100] sm:$0xff]
    %v1647 = vld [vmem:[#allocation8 + $0x108] sm:$0xff]
    %v1648 = vld [vmem:[#allocation8 + $0x110] sm:$0xff]
    %v1649 = vld [vmem:[#allocation8 + $0x118] sm:$0xff]
    %v1650 = vld [vmem:[#allocation8 + $0x120] sm:$0xff]
    %v1651 = vld [vmem:[#allocation8 + $0x128] sm:$0xff]
    %v1652 = vld [vmem:[#allocation8 + $0x130] sm:$0xff]
    %v1653 = vld [vmem:[#allocation8 + $0x138] sm:$0xff]
    %v1654 = vld [vmem:[#allocation8 + $0x140] sm:$0xff]
    %v1655 = vld [vmem:[#allocation8 + $0x148] sm:$0xff]
    %v1656 = vld [vmem:[#allocation8 + $0x150] sm:$0xff]
    %v1657 = vld [vmem:[#allocation8 + $0x158] sm:$0xff]
    %v1658 = vld [vmem:[#allocation8 + $0x160] sm:$0xff]
    %v1659 = vld [vmem:[#allocation8 + $0x168] sm:$0xff]
    %v1660 = vld [vmem:[#allocation8 + $0x170] sm:$0xff]
    %v1661 = vld [vmem:[#allocation8 + $0x178] sm:$0xff]
    %v1662 = vld [vmem:[#allocation8 + $0x180] sm:$0xff]
    %v1663 = vld [vmem:[#allocation8 + $0x188] sm:$0xff]
    %v1664 = vld [vmem:[#allocation8 + $0x190] sm:$0xff]
    %v1665 = vld [vmem:[#allocation8 + $0x198] sm:$0xff]
    %v1666 = vld [vmem:[#allocation8 + $0x1a0] sm:$0xff]
    %v1667 = vld [vmem:[#allocation8 + $0x1a8] sm:$0xff]
    %v1668 = vld [vmem:[#allocation8 + $0x1b0] sm:$0xff]
    %v1669 = vld [vmem:[#allocation8 + $0x1b8] sm:$0xff]
    %v1670 = vld [vmem:[#allocation8 + $0x1c0] sm:$0xff]
    %v1671 = vld [vmem:[#allocation8 + $0x1c8] sm:$0xff]
    %v1672 = vld [vmem:[#allocation8 + $0x1d0] sm:$0xff]
    %v1673 = vld [vmem:[#allocation8 + $0x1d8] sm:$0xff]
    %v1674 = vld [vmem:[#allocation8 + $0x1e0] sm:$0xff]
    %v1675 = vld [vmem:[#allocation8 + $0x1e8] sm:$0xff]
    %v1676 = vld [vmem:[#allocation8 + $0x1f0] sm:$0xff]
    %v1677 = vld [vmem:[#allocation8 + $0x1f8] sm:$0xff]
    %v1678 = vld [vmem:[#allocation8 + $0x200] sm:$0xff]
    %v1679 = vld [vmem:[#allocation8 + $0x208] sm:$0xff]
    %v1680 = vld [vmem:[#allocation8 + $0x210] sm:$0xff]
    %v1681 = vld [vmem:[#allocation8 + $0x218] sm:$0xff]
    %v1682 = vld [vmem:[#allocation8 + $0x220] sm:$0xff]
    %v1683 = vld [vmem:[#allocation8 + $0x228] sm:$0xff]
    %v1684 = vld [vmem:[#allocation8 + $0x230] sm:$0xff]
    %v1685 = vld [vmem:[#allocation8 + $0x238] sm:$0xff]
    %v1686 = vld [vmem:[#allocation8 + $0x240] sm:$0xff]
    %v1687 = vld [vmem:[#allocation8 + $0x248] sm:$0xff]
    %v1688 = vld [vmem:[#allocation8 + $0x250] sm:$0xff]
    %v1689 = vld [vmem:[#allocation8 + $0x258] sm:$0xff]
    %v1690 = vld [vmem:[#allocation8 + $0x260] sm:$0xff]
    %v1691 = vld [vmem:[#allocation8 + $0x268] sm:$0xff]
    %v1692 = vld [vmem:[#allocation8 + $0x270] sm:$0xff]
    %v1693 = vld [vmem:[#allocation8 + $0x278] sm:$0xff]
    %v1694 = vld [vmem:[#allocation8 + $0x280] sm:$0xff]
    %v1695 = vld [vmem:[#allocation8 + $0x288] sm:$0xff]
    %v1696 = vld [vmem:[#allocation8 + $0x290] sm:$0xff]
    %v1697 = vld [vmem:[#allocation8 + $0x298] sm:$0xff]
    %v1698 = vld [vmem:[#allocation8 + $0x2a0] sm:$0xff]
    %v1699 = vld [vmem:[#allocation8 + $0x2a8] sm:$0xff]
    %v1700 = vld [vmem:[#allocation8 + $0x2b0] sm:$0xff]
    %v1701 = vld [vmem:[#allocation8 + $0x2b8] sm:$0xff]
    %v1702 = vld [vmem:[#allocation8 + $0x2c0] sm:$0xff]
    %v1703 = vld [vmem:[#allocation8 + $0x2c8] sm:$0xff]
    %v1704 = vld [vmem:[#allocation8 + $0x2d0] sm:$0xff]
    %v1705 = vld [vmem:[#allocation8 + $0x2d8] sm:$0xff]
    %v1706 = vld [vmem:[#allocation8 + $0x2e0] sm:$0xff]
    %v1707 = vld [vmem:[#allocation8 + $0x2e8] sm:$0xff]
    %v1708 = vld [vmem:[#allocation8 + $0x2f0] sm:$0xff]
    %v1709 = vld [vmem:[#allocation8 + $0x2f8] sm:$0xff]
    %v1710 = vld [vmem:[#allocation8 + $0x300] sm:$0xff]
    %v1711 = vld [vmem:[#allocation8 + $0x308] sm:$0xff]
    %v1712 = vld [vmem:[#allocation8 + $0x310] sm:$0xff]
    %v1713 = vld [vmem:[#allocation8 + $0x318] sm:$0xff]
    %v1714 = vld [vmem:[#allocation8 + $0x320] sm:$0xff]
    %v1715 = vld [vmem:[#allocation8 + $0x328] sm:$0xff]
    %v1716 = vld [vmem:[#allocation8 + $0x330] sm:$0xff]
    %v1717 = vld [vmem:[#allocation8 + $0x338] sm:$0xff]
    %v1718 = vld [vmem:[#allocation8 + $0x340] sm:$0xff]
    %v1719 = vld [vmem:[#allocation8 + $0x348] sm:$0xff]
    %v1720 = vld [vmem:[#allocation8 + $0x350] sm:$0xff]
    %v1721 = vld [vmem:[#allocation8 + $0x358] sm:$0xff]
    %v1722 = vld [vmem:[#allocation8 + $0x360] sm:$0xff]
    %v1723 = vld [vmem:[#allocation8 + $0x368] sm:$0xff]
    %v1724 = vld [vmem:[#allocation8 + $0x370] sm:$0xff]
    %v1725 = vld [vmem:[#allocation8 + $0x378] sm:$0xff]
    %v1726 = vld [vmem:[#allocation8 + $0x380] sm:$0xff]
    %v1727 = vld [vmem:[#allocation8 + $0x388] sm:$0xff]
    %v1728 = vld [vmem:[#allocation8 + $0x390] sm:$0xff]
    %v1729 = vld [vmem:[#allocation8 + $0x398] sm:$0xff]
    %v1730 = vld [vmem:[#allocation8 + $0x3a0] sm:$0xff]
    %v1731 = vld [vmem:[#allocation8 + $0x3a8] sm:$0xff]
    %v1732 = vld [vmem:[#allocation8 + $0x3b0] sm:$0xff]
    %v1733 = vld [vmem:[#allocation8 + $0x3b8] sm:$0xff]
    %v1734 = vld [vmem:[#allocation8 + $0x3c0] sm:$0xff]
    %v1735 = vld [vmem:[#allocation8 + $0x3c8] sm:$0xff]
    %v1736 = vld [vmem:[#allocation8 + $0x3d0] sm:$0xff]
    %v1737 = vld [vmem:[#allocation8 + $0x3d8] sm:$0xff]
    %v1738 = vld [vmem:[#allocation8 + $0x3e0] sm:$0xff]
    %v1739 = vld [vmem:[#allocation8 + $0x3e8] sm:$0xff]
    %v1740 = vld [vmem:[#allocation8 + $0x3f0] sm:$0xff]
    %v1741 = vld [vmem:[#allocation8 + $0x3f8] sm:$0xff]
    %v1742 = vld [vmem:[#allocation8 + $0x400] sm:$0xff]
    %v1743 = vld [vmem:[#allocation8 + $0x408] sm:$0xff]
    %v1744 = vld [vmem:[#allocation8 + $0x410] sm:$0xff]
    %v1745 = vld [vmem:[#allocation8 + $0x418] sm:$0xff]
    %v1746 = vld [vmem:[#allocation8 + $0x420] sm:$0xff]
    %v1747 = vld [vmem:[#allocation8 + $0x428] sm:$0xff]
    %v1748 = vld [vmem:[#allocation8 + $0x430] sm:$0xff]
    %v1749 = vld [vmem:[#allocation8 + $0x438] sm:$0xff]
    %v1750 = vld [vmem:[#allocation8 + $0x440] sm:$0xff]
    %v1751 = vld [vmem:[#allocation8 + $0x448] sm:$0xff]
    %v1752 = vld [vmem:[#allocation8 + $0x450] sm:$0xff]
    %v1753 = vld [vmem:[#allocation8 + $0x458] sm:$0xff]
    %v1754 = vld [vmem:[#allocation8 + $0x460] sm:$0xff]
    %v1755 = vld [vmem:[#allocation8 + $0x468] sm:$0xff]
    %v1756 = vld [vmem:[#allocation8 + $0x470] sm:$0xff]
    %v1757 = vld [vmem:[#allocation8 + $0x478] sm:$0xff]
    %v1758 = vld [vmem:[#allocation8 + $0x480] sm:$0xff]
    %v1759 = vld [vmem:[#allocation8 + $0x488] sm:$0xff]
    %v1760 = vld [vmem:[#allocation8 + $0x490] sm:$0xff]
    %v1761 = vld [vmem:[#allocation8 + $0x498] sm:$0xff]
    %v1762 = vld [vmem:[#allocation8 + $0x4a0] sm:$0xff]
    %v1763 = vld [vmem:[#allocation8 + $0x4a8] sm:$0xff]
    %v1764 = vld [vmem:[#allocation8 + $0x4b0] sm:$0xff]
    %v1765 = vld [vmem:[#allocation8 + $0x4b8] sm:$0xff]
    %v1766 = vld [vmem:[#allocation8 + $0x4c0] sm:$0xff]
    %v1767 = vld [vmem:[#allocation8 + $0x4c8] sm:$0xff]
    %v1768 = vld [vmem:[#allocation8 + $0x4d0] sm:$0xff]
    %v1769 = vld [vmem:[#allocation8 + $0x4d8] sm:$0xff]
    %v1770 = vld [vmem:[#allocation8 + $0x4e0] sm:$0xff]
    %v1771 = vld [vmem:[#allocation8 + $0x4e8] sm:$0xff]
    %v1772 = vld [vmem:[#allocation8 + $0x4f0] sm:$0xff]
    %v1773 = vld [vmem:[#allocation8 + $0x4f8] sm:$0xff]
    %v1774 = vld [vmem:[#allocation8 + $0x500] sm:$0xff]
    %v1775 = vld [vmem:[#allocation8 + $0x508] sm:$0xff]
    %v1776 = vld [vmem:[#allocation8 + $0x510] sm:$0xff]
    %v1777 = vld [vmem:[#allocation8 + $0x518] sm:$0xff]
    %v1778 = vld [vmem:[#allocation8 + $0x520] sm:$0xff]
    %v1779 = vld [vmem:[#allocation8 + $0x528] sm:$0xff]
    %v1780 = vld [vmem:[#allocation8 + $0x530] sm:$0xff]
    %v1781 = vld [vmem:[#allocation8 + $0x538] sm:$0xff]
    %v1782 = vld [vmem:[#allocation8 + $0x540] sm:$0xff]
    %v1783 = vld [vmem:[#allocation8 + $0x548] sm:$0xff]
    %v1784 = vld [vmem:[#allocation8 + $0x550] sm:$0xff]
    %v1785 = vld [vmem:[#allocation8 + $0x558] sm:$0xff]
    %v1786 = vld [vmem:[#allocation8 + $0x560] sm:$0xff]
    %v1787 = vld [vmem:[#allocation8 + $0x568] sm:$0xff]
    %v1788 = vld [vmem:[#allocation8 + $0x570] sm:$0xff]
    %v1789 = vld [vmem:[#allocation8 + $0x578] sm:$0xff]
    %v1790 = vld [vmem:[#allocation8 + $0x580] sm:$0xff]
    %v1791 = vld [vmem:[#allocation8 + $0x588] sm:$0xff]
    %v1792 = vld [vmem:[#allocation8 + $0x590] sm:$0xff]
    %v1793 = vld [vmem:[#allocation8 + $0x598] sm:$0xff]
    %v1794 = vld [vmem:[#allocation8 + $0x5a0] sm:$0xff]
    %v1795 = vld [vmem:[#allocation8 + $0x5a8] sm:$0xff]
    %v1796 = vld [vmem:[#allocation8 + $0x5b0] sm:$0xff]
    %v1797 = vld [vmem:[#allocation8 + $0x5b8] sm:$0xff]
    %v1798 = vld [vmem:[#allocation8 + $0x5c0] sm:$0xff]
    %v1799 = vld [vmem:[#allocation8 + $0x5c8] sm:$0xff]
    %v1800 = vld [vmem:[#allocation8 + $0x5d0] sm:$0xff]
    %v1801 = vld [vmem:[#allocation8 + $0x5d8] sm:$0xff]
    %v1802 = vld [vmem:[#allocation8 + $0x5e0] sm:$0xff]
    %v1803 = vld [vmem:[#allocation8 + $0x5e8] sm:$0xff]
    %v1804 = vld [vmem:[#allocation8 + $0x5f0] sm:$0xff]
    %v1805 = vld [vmem:[#allocation8 + $0x5f8] sm:$0xff]
    %v1806 = vld [vmem:[#allocation8 + $0x600] sm:$0xff]
    %v1807 = vld [vmem:[#allocation8 + $0x608] sm:$0xff]
    %v1808 = vld [vmem:[#allocation8 + $0x610] sm:$0xff]
    %v1809 = vld [vmem:[#allocation8 + $0x618] sm:$0xff]
    %v1810 = vld [vmem:[#allocation8 + $0x620] sm:$0xff]
    %v1811 = vld [vmem:[#allocation8 + $0x628] sm:$0xff]
    %v1812 = vld [vmem:[#allocation8 + $0x630] sm:$0xff]
    %v1813 = vld [vmem:[#allocation8 + $0x638] sm:$0xff]
    %v1814 = vld [vmem:[#allocation8 + $0x640] sm:$0xff]
    %v1815 = vld [vmem:[#allocation8 + $0x648] sm:$0xff]
    %v1816 = vld [vmem:[#allocation8 + $0x650] sm:$0xff]
    %v1817 = vld [vmem:[#allocation8 + $0x658] sm:$0xff]
    %v1818 = vld [vmem:[#allocation8 + $0x660] sm:$0xff]
    %v1819 = vld [vmem:[#allocation8 + $0x668] sm:$0xff]
    %v1820 = vld [vmem:[#allocation8 + $0x670] sm:$0xff]
    %v1821 = vld [vmem:[#allocation8 + $0x678] sm:$0xff]
    %v1822 = vld [vmem:[#allocation8 + $0x680] sm:$0xff]
    %v1823 = vld [vmem:[#allocation8 + $0x688] sm:$0xff]
    %v1824 = vld [vmem:[#allocation8 + $0x690] sm:$0xff]
    %v1825 = vld [vmem:[#allocation8 + $0x698] sm:$0xff]
    %v1826 = vld [vmem:[#allocation8 + $0x6a0] sm:$0xff]
    %v1827 = vld [vmem:[#allocation8 + $0x6a8] sm:$0xff]
    %v1828 = vld [vmem:[#allocation8 + $0x6b0] sm:$0xff]
    %v1829 = vld [vmem:[#allocation8 + $0x6b8] sm:$0xff]
    %v1830 = vld [vmem:[#allocation8 + $0x6c0] sm:$0xff]
    %v1831 = vld [vmem:[#allocation8 + $0x6c8] sm:$0xff]
    %v1832 = vld [vmem:[#allocation8 + $0x6d0] sm:$0xff]
    %v1833 = vld [vmem:[#allocation8 + $0x6d8] sm:$0xff]
    %v1834 = vld [vmem:[#allocation8 + $0x6e0] sm:$0xff]
    %v1835 = vld [vmem:[#allocation8 + $0x6e8] sm:$0xff]
    %v1836 = vld [vmem:[#allocation8 + $0x6f0] sm:$0xff]
    %v1837 = vld [vmem:[#allocation8 + $0x6f8] sm:$0xff]
    %v1838 = vld [vmem:[#allocation8 + $0x700] sm:$0xff]
    %v1839 = vld [vmem:[#allocation8 + $0x708] sm:$0xff]
    %v1840 = vld [vmem:[#allocation8 + $0x710] sm:$0xff]
    %v1841 = vld [vmem:[#allocation8 + $0x718] sm:$0xff]
    %v1842 = vld [vmem:[#allocation8 + $0x720] sm:$0xff]
    %v1843 = vld [vmem:[#allocation8 + $0x728] sm:$0xff]
    %v1844 = vld [vmem:[#allocation8 + $0x730] sm:$0xff]
    %v1845 = vld [vmem:[#allocation8 + $0x738] sm:$0xff]
    %v1846 = vld [vmem:[#allocation8 + $0x740] sm:$0xff]
    %v1847 = vld [vmem:[#allocation8 + $0x748] sm:$0xff]
    %v1848 = vld [vmem:[#allocation8 + $0x750] sm:$0xff]
    %v1849 = vld [vmem:[#allocation8 + $0x758] sm:$0xff]
    %v1850 = vld [vmem:[#allocation8 + $0x760] sm:$0xff]
    %v1851 = vld [vmem:[#allocation8 + $0x768] sm:$0xff]
    %v1852 = vld [vmem:[#allocation8 + $0x770] sm:$0xff]
    %v1853 = vld [vmem:[#allocation8 + $0x778] sm:$0xff]
    %v1854 = vld [vmem:[#allocation8 + $0x780] sm:$0xff]
    %v1855 = vld [vmem:[#allocation8 + $0x788] sm:$0xff]
    %v1856 = vld [vmem:[#allocation8 + $0x790] sm:$0xff]
    %v1857 = vld [vmem:[#allocation8 + $0x798] sm:$0xff]
    %v1858 = vld [vmem:[#allocation8 + $0x7a0] sm:$0xff]
    %v1859 = vld [vmem:[#allocation8 + $0x7a8] sm:$0xff]
    %v1860 = vld [vmem:[#allocation8 + $0x7b0] sm:$0xff]
    %v1861 = vld [vmem:[#allocation8 + $0x7b8] sm:$0xff]
    %v1862 = vld [vmem:[#allocation8 + $0x7c0] sm:$0xff]
    %v1863 = vld [vmem:[#allocation8 + $0x7c8] sm:$0xff]
    %v1864 = vld [vmem:[#allocation8 + $0x7d0] sm:$0xff]
    %v1865 = vld [vmem:[#allocation8 + $0x7d8] sm:$0xff]
    %v1866 = vld [vmem:[#allocation8 + $0x7e0] sm:$0xff]
    %v1867 = vld [vmem:[#allocation8 + $0x7e8] sm:$0xff]
    %v1868 = vld [vmem:[#allocation8 + $0x7f0] sm:$0xff]
    %v1869 = vld [vmem:[#allocation8 + $0x7f8] sm:$0xff]
    %v1870 = vld [vmem:[#allocation2] sm:$0xf]
    %v1871 = vld [vmem:[#allocation2 + $0x8] sm:$0xf]
    %v1872 = vld [vmem:[#allocation2 + $0x10] sm:$0xf]
    %v1873 = vld [vmem:[#allocation2 + $0x18] sm:$0xf]
    %v1874 = vld [vmem:[#allocation2 + $0x20] sm:$0xf]
    %v1875 = vld [vmem:[#allocation2 + $0x28] sm:$0xf]
    %v1876 = vld [vmem:[#allocation2 + $0x30] sm:$0xf]
    %v1877 = vld [vmem:[#allocation2 + $0x38] sm:$0xf]
    %1878 = vmatpush.msra.mxu0 %v1734
    %1879 = vmatpush.msra.mxu0 %v1726
    %1880 = vmatpush.msra.mxu0 %v1718
    %1881 = vmatpush.msra.mxu0 %v1710
    %1882 = vmatpush.msra.mxu0 %v1702
    %1883 = vmatpush.msra.mxu0 %v1694
    %1884 = vmatpush.msra.mxu0 %v1686
    %1885 = vmatpush.msra.mxu0 %v1678
    %1886 = vmatpush.msra.mxu0 %v1670
    %1887 = vmatpush.msra.mxu0 %v1662
    %1888 = vmatpush.msra.mxu0 %v1654
    %1889 = vmatpush.msra.mxu0 %v1646
    %1890 = vmatpush.msra.mxu0 %v1638
    %1891 = vmatpush.msra.mxu0 %v1630
    %1892 = vmatpush.msra.mxu0 %v1622
    %1893 = vmatpush.msra.mxu0 %v1614
    %1894 = vmatmul.f32.gmra.mxu0 0.0
    %v1895 = vpop.f32.mrf.mxu0
    %v1896 = vadd.f32 0.0, %v1895
    %1897 = vdwg.mxu0
    %1898 = vmatpush.msra.mxu0 %v1862
    %1899 = vmatpush.msra.mxu0 %v1854
    %1900 = vmatpush.msra.mxu0 %v1846
    %1901 = vmatpush.msra.mxu0 %v1838
    %1902 = vmatpush.msra.mxu0 %v1830
    %1903 = vmatpush.msra.mxu0 %v1822
    %1904 = vmatpush.msra.mxu0 %v1814
    %1905 = vmatpush.msra.mxu0 %v1806
    %1906 = vmatpush.msra.mxu0 %v1798
    %1907 = vmatpush.msra.mxu0 %v1790
    %1908 = vmatpush.msra.mxu0 %v1782
    %1909 = vmatpush.msra.mxu0 %v1774
    %1910 = vmatpush.msra.mxu0 %v1766
    %1911 = vmatpush.msra.mxu0 %v1758
    %1912 = vmatpush.msra.mxu0 %v1750
    %1913 = vmatpush.msra.mxu0 %v1742
    %1914 = vmatmul.f32.gmra.mxu0 0.0
    %v1915 = vpop.f32.mrf.mxu0
    %v1916 = vadd.f32 %v1896, %v1915
    %1917 = vdwg.mxu0
    %1918 = vmatpush.msra.mxu0 %v1735
    %1919 = vmatpush.msra.mxu0 %v1727
    %1920 = vmatpush.msra.mxu0 %v1719
    %1921 = vmatpush.msra.mxu0 %v1711
    %1922 = vmatpush.msra.mxu0 %v1703
    %1923 = vmatpush.msra.mxu0 %v1695
    %1924 = vmatpush.msra.mxu0 %v1687
    %1925 = vmatpush.msra.mxu0 %v1679
    %1926 = vmatpush.msra.mxu0 %v1671
    %1927 = vmatpush.msra.mxu0 %v1663
    %1928 = vmatpush.msra.mxu0 %v1655
    %1929 = vmatpush.msra.mxu0 %v1647
    %1930 = vmatpush.msra.mxu0 %v1639
    %1931 = vmatpush.msra.mxu0 %v1631
    %1932 = vmatpush.msra.mxu0 %v1623
    %1933 = vmatpush.msra.mxu0 %v1615
    %1934 = vmatmul.f32.gmra.mxu0 0.0
    %v1935 = vpop.f32.mrf.mxu0
    %v1936 = vadd.f32 0.0, %v1935
    %1937 = vdwg.mxu0
    %1938 = vmatpush.msra.mxu0 %v1863
    %1939 = vmatpush.msra.mxu0 %v1855
    %1940 = vmatpush.msra.mxu0 %v1847
    %1941 = vmatpush.msra.mxu0 %v1839
    %1942 = vmatpush.msra.mxu0 %v1831
    %1943 = vmatpush.msra.mxu0 %v1823
    %1944 = vmatpush.msra.mxu0 %v1815
    %1945 = vmatpush.msra.mxu0 %v1807
    %1946 = vmatpush.msra.mxu0 %v1799
    %1947 = vmatpush.msra.mxu0 %v1791
    %1948 = vmatpush.msra.mxu0 %v1783
    %1949 = vmatpush.msra.mxu0 %v1775
    %1950 = vmatpush.msra.mxu0 %v1767
    %1951 = vmatpush.msra.mxu0 %v1759
    %1952 = vmatpush.msra.mxu0 %v1751
    %1953 = vmatpush.msra.mxu0 %v1743
    %1954 = vmatmul.f32.gmra.mxu0 0.0
    %v1955 = vpop.f32.mrf.mxu0
    %v1956 = vadd.f32 %v1936, %v1955
    %1957 = vdwg.mxu0
    %1958 = vmatpush.msra.mxu0 %v1736
    %1959 = vmatpush.msra.mxu0 %v1728
    %1960 = vmatpush.msra.mxu0 %v1720
    %1961 = vmatpush.msra.mxu0 %v1712
    %1962 = vmatpush.msra.mxu0 %v1704
    %1963 = vmatpush.msra.mxu0 %v1696
    %1964 = vmatpush.msra.mxu0 %v1688
    %1965 = vmatpush.msra.mxu0 %v1680
    %1966 = vmatpush.msra.mxu0 %v1672
    %1967 = vmatpush.msra.mxu0 %v1664
    %1968 = vmatpush.msra.mxu0 %v1656
    %1969 = vmatpush.msra.mxu0 %v1648
    %1970 = vmatpush.msra.mxu0 %v1640
    %1971 = vmatpush.msra.mxu0 %v1632
    %1972 = vmatpush.msra.mxu0 %v1624
    %1973 = vmatpush.msra.mxu0 %v1616
    %1974 = vmatmul.f32.gmra.mxu0 0.0
    %v1975 = vpop.f32.mrf.mxu0
    %v1976 = vadd.f32 0.0, %v1975
    %1977 = vdwg.mxu0
    %1978 = vmatpush.msra.mxu0 %v1864
    %1979 = vmatpush.msra.mxu0 %v1856
    %1980 = vmatpush.msra.mxu0 %v1848
    %1981 = vmatpush.msra.mxu0 %v1840
    %1982 = vmatpush.msra.mxu0 %v1832
    %1983 = vmatpush.msra.mxu0 %v1824
    %1984 = vmatpush.msra.mxu0 %v1816
    %1985 = vmatpush.msra.mxu0 %v1808
    %1986 = vmatpush.msra.mxu0 %v1800
    %1987 = vmatpush.msra.mxu0 %v1792
    %1988 = vmatpush.msra.mxu0 %v1784
    %1989 = vmatpush.msra.mxu0 %v1776
    %1990 = vmatpush.msra.mxu0 %v1768
    %1991 = vmatpush.msra.mxu0 %v1760
    %1992 = vmatpush.msra.mxu0 %v1752
    %1993 = vmatpush.msra.mxu0 %v1744
    %1994 = vmatmul.f32.gmra.mxu0 0.0
    %v1995 = vpop.f32.mrf.mxu0
    %v1996 = vadd.f32 %v1976, %v1995
    %1997 = vdwg.mxu0
    %1998 = vmatpush.msra.mxu0 %v1737
    %1999 = vmatpush.msra.mxu0 %v1729
    %2000 = vmatpush.msra.mxu0 %v1721
    %2001 = vmatpush.msra.mxu0 %v1713
    %2002 = vmatpush.msra.mxu0 %v1705
    %2003 = vmatpush.msra.mxu0 %v1697
    %2004 = vmatpush.msra.mxu0 %v1689
    %2005 = vmatpush.msra.mxu0 %v1681
    %2006 = vmatpush.msra.mxu0 %v1673
    %2007 = vmatpush.msra.mxu0 %v1665
    %2008 = vmatpush.msra.mxu0 %v1657
    %2009 = vmatpush.msra.mxu0 %v1649
    %2010 = vmatpush.msra.mxu0 %v1641
    %2011 = vmatpush.msra.mxu0 %v1633
    %2012 = vmatpush.msra.mxu0 %v1625
    %2013 = vmatpush.msra.mxu0 %v1617
    %2014 = vmatmul.f32.gmra.mxu0 0.0
    %v2015 = vpop.f32.mrf.mxu0
    %v2016 = vadd.f32 0.0, %v2015
    %2017 = vdwg.mxu0
    %2018 = vmatpush.msra.mxu0 %v1865
    %2019 = vmatpush.msra.mxu0 %v1857
    %2020 = vmatpush.msra.mxu0 %v1849
    %2021 = vmatpush.msra.mxu0 %v1841
    %2022 = vmatpush.msra.mxu0 %v1833
    %2023 = vmatpush.msra.mxu0 %v1825
    %2024 = vmatpush.msra.mxu0 %v1817
    %2025 = vmatpush.msra.mxu0 %v1809
    %2026 = vmatpush.msra.mxu0 %v1801
    %2027 = vmatpush.msra.mxu0 %v1793
    %2028 = vmatpush.msra.mxu0 %v1785
    %2029 = vmatpush.msra.mxu0 %v1777
    %2030 = vmatpush.msra.mxu0 %v1769
    %2031 = vmatpush.msra.mxu0 %v1761
    %2032 = vmatpush.msra.mxu0 %v1753
    %2033 = vmatpush.msra.mxu0 %v1745
    %2034 = vmatmul.f32.gmra.mxu0 0.0
    %v2035 = vpop.f32.mrf.mxu0
    %v2036 = vadd.f32 %v2016, %v2035
    %2037 = vdwg.mxu0
    %2038 = vmatpush.msra.mxu0 %v1738
    %2039 = vmatpush.msra.mxu0 %v1730
    %2040 = vmatpush.msra.mxu0 %v1722
    %2041 = vmatpush.msra.mxu0 %v1714
    %2042 = vmatpush.msra.mxu0 %v1706
    %2043 = vmatpush.msra.mxu0 %v1698
    %2044 = vmatpush.msra.mxu0 %v1690
    %2045 = vmatpush.msra.mxu0 %v1682
    %2046 = vmatpush.msra.mxu0 %v1674
    %2047 = vmatpush.msra.mxu0 %v1666
    %2048 = vmatpush.msra.mxu0 %v1658
    %2049 = vmatpush.msra.mxu0 %v1650
    %2050 = vmatpush.msra.mxu0 %v1642
    %2051 = vmatpush.msra.mxu0 %v1634
    %2052 = vmatpush.msra.mxu0 %v1626
    %2053 = vmatpush.msra.mxu0 %v1618
    %2054 = vmatmul.f32.gmra.mxu0 0.0
    %v2055 = vpop.f32.mrf.mxu0
    %v2056 = vadd.f32 0.0, %v2055
    %2057 = vdwg.mxu0
    %2058 = vmatpush.msra.mxu0 %v1866
    %2059 = vmatpush.msra.mxu0 %v1858
    %2060 = vmatpush.msra.mxu0 %v1850
    %2061 = vmatpush.msra.mxu0 %v1842
    %2062 = vmatpush.msra.mxu0 %v1834
    %2063 = vmatpush.msra.mxu0 %v1826
    %2064 = vmatpush.msra.mxu0 %v1818
    %2065 = vmatpush.msra.mxu0 %v1810
    %2066 = vmatpush.msra.mxu0 %v1802
    %2067 = vmatpush.msra.mxu0 %v1794
    %2068 = vmatpush.msra.mxu0 %v1786
    %2069 = vmatpush.msra.mxu0 %v1778
    %2070 = vmatpush.msra.mxu0 %v1770
    %2071 = vmatpush.msra.mxu0 %v1762
    %2072 = vmatpush.msra.mxu0 %v1754
    %2073 = vmatpush.msra.mxu0 %v1746
    %2074 = vmatmul.f32.gmra.mxu0 0.0
    %v2075 = vpop.f32.mrf.mxu0
    %v2076 = vadd.f32 %v2056, %v2075
    %2077 = vdwg.mxu0
    %2078 = vmatpush.msra.mxu0 %v1739
    %2079 = vmatpush.msra.mxu0 %v1731
    %2080 = vmatpush.msra.mxu0 %v1723
    %2081 = vmatpush.msra.mxu0 %v1715
    %2082 = vmatpush.msra.mxu0 %v1707
    %2083 = vmatpush.msra.mxu0 %v1699
    %2084 = vmatpush.msra.mxu0 %v1691
    %2085 = vmatpush.msra.mxu0 %v1683
    %2086 = vmatpush.msra.mxu0 %v1675
    %2087 = vmatpush.msra.mxu0 %v1667
    %2088 = vmatpush.msra.mxu0 %v1659
    %2089 = vmatpush.msra.mxu0 %v1651
    %2090 = vmatpush.msra.mxu0 %v1643
    %2091 = vmatpush.msra.mxu0 %v1635
    %2092 = vmatpush.msra.mxu0 %v1627
    %2093 = vmatpush.msra.mxu0 %v1619
    %2094 = vmatmul.f32.gmra.mxu0 0.0
    %v2095 = vpop.f32.mrf.mxu0
    %v2096 = vadd.f32 0.0, %v2095
    %2097 = vdwg.mxu0
    %2098 = vmatpush.msra.mxu0 %v1867
    %2099 = vmatpush.msra.mxu0 %v1859
    %2100 = vmatpush.msra.mxu0 %v1851
    %2101 = vmatpush.msra.mxu0 %v1843
    %2102 = vmatpush.msra.mxu0 %v1835
    %2103 = vmatpush.msra.mxu0 %v1827
    %2104 = vmatpush.msra.mxu0 %v1819
    %2105 = vmatpush.msra.mxu0 %v1811
    %2106 = vmatpush.msra.mxu0 %v1803
    %2107 = vmatpush.msra.mxu0 %v1795
    %2108 = vmatpush.msra.mxu0 %v1787
    %2109 = vmatpush.msra.mxu0 %v1779
    %2110 = vmatpush.msra.mxu0 %v1771
    %2111 = vmatpush.msra.mxu0 %v1763
    %2112 = vmatpush.msra.mxu0 %v1755
    %2113 = vmatpush.msra.mxu0 %v1747
    %2114 = vmatmul.f32.gmra.mxu0 0.0
    %v2115 = vpop.f32.mrf.mxu0
    %v2116 = vadd.f32 %v2096, %v2115
    %2117 = vdwg.mxu0
    %2118 = vmatpush.msra.mxu0 %v1740
    %2119 = vmatpush.msra.mxu0 %v1732
    %2120 = vmatpush.msra.mxu0 %v1724
    %2121 = vmatpush.msra.mxu0 %v1716
    %2122 = vmatpush.msra.mxu0 %v1708
    %2123 = vmatpush.msra.mxu0 %v1700
    %2124 = vmatpush.msra.mxu0 %v1692
    %2125 = vmatpush.msra.mxu0 %v1684
    %2126 = vmatpush.msra.mxu0 %v1676
    %2127 = vmatpush.msra.mxu0 %v1668
    %2128 = vmatpush.msra.mxu0 %v1660
    %2129 = vmatpush.msra.mxu0 %v1652
    %2130 = vmatpush.msra.mxu0 %v1644
    %2131 = vmatpush.msra.mxu0 %v1636
    %2132 = vmatpush.msra.mxu0 %v1628
    %2133 = vmatpush.msra.mxu0 %v1620
    %2134 = vmatmul.f32.gmra.mxu0 0.0
    %v2135 = vpop.f32.mrf.mxu0
    %v2136 = vadd.f32 0.0, %v2135
    %2137 = vdwg.mxu0
    %2138 = vmatpush.msra.mxu0 %v1868
    %2139 = vmatpush.msra.mxu0 %v1860
    %2140 = vmatpush.msra.mxu0 %v1852
    %2141 = vmatpush.msra.mxu0 %v1844
    %2142 = vmatpush.msra.mxu0 %v1836
    %2143 = vmatpush.msra.mxu0 %v1828
    %2144 = vmatpush.msra.mxu0 %v1820
    %2145 = vmatpush.msra.mxu0 %v1812
    %2146 = vmatpush.msra.mxu0 %v1804
    %2147 = vmatpush.msra.mxu0 %v1796
    %2148 = vmatpush.msra.mxu0 %v1788
    %2149 = vmatpush.msra.mxu0 %v1780
    %2150 = vmatpush.msra.mxu0 %v1772
    %2151 = vmatpush.msra.mxu0 %v1764
    %2152 = vmatpush.msra.mxu0 %v1756
    %2153 = vmatpush.msra.mxu0 %v1748
    %2154 = vmatmul.f32.gmra.mxu0 0.0
    %v2155 = vpop.f32.mrf.mxu0
    %v2156 = vadd.f32 %v2136, %v2155
    %2157 = vdwg.mxu0
    %2158 = vmatpush.msra.mxu0 %v1741
    %2159 = vmatpush.msra.mxu0 %v1733
    %2160 = vmatpush.msra.mxu0 %v1725
    %2161 = vmatpush.msra.mxu0 %v1717
    %2162 = vmatpush.msra.mxu0 %v1709
    %2163 = vmatpush.msra.mxu0 %v1701
    %2164 = vmatpush.msra.mxu0 %v1693
    %2165 = vmatpush.msra.mxu0 %v1685
    %2166 = vmatpush.msra.mxu0 %v1677
    %2167 = vmatpush.msra.mxu0 %v1669
    %2168 = vmatpush.msra.mxu0 %v1661
    %2169 = vmatpush.msra.mxu0 %v1653
    %2170 = vmatpush.msra.mxu0 %v1645
    %2171 = vmatpush.msra.mxu0 %v1637
    %2172 = vmatpush.msra.mxu0 %v1629
    %2173 = vmatpush.msra.mxu0 %v1621
    %2174 = vmatmul.f32.gmra.mxu0 0.0
    %v2175 = vpop.f32.mrf.mxu0
    %v2176 = vadd.f32 0.0, %v2175
    %2177 = vdwg.mxu0
    %2178 = vmatpush.msra.mxu0 %v1869
    %2179 = vmatpush.msra.mxu0 %v1861
    %2180 = vmatpush.msra.mxu0 %v1853
    %2181 = vmatpush.msra.mxu0 %v1845
    %2182 = vmatpush.msra.mxu0 %v1837
    %2183 = vmatpush.msra.mxu0 %v1829
    %2184 = vmatpush.msra.mxu0 %v1821
    %2185 = vmatpush.msra.mxu0 %v1813
    %2186 = vmatpush.msra.mxu0 %v1805
    %2187 = vmatpush.msra.mxu0 %v1797
    %2188 = vmatpush.msra.mxu0 %v1789
    %2189 = vmatpush.msra.mxu0 %v1781
    %2190 = vmatpush.msra.mxu0 %v1773
    %2191 = vmatpush.msra.mxu0 %v1765
    %2192 = vmatpush.msra.mxu0 %v1757
    %2193 = vmatpush.msra.mxu0 %v1749
    %2194 = vmatmul.f32.gmra.mxu0 0.0
    %v2195 = vpop.f32.mrf.mxu0
    %v2196 = vadd.f32 %v2176, %v2195
    %2197 = vdwg.mxu0
    %v2198 = vadd.f32 %v1870, %v1916
    %v2199 = vadd.f32 %v1871, %v1956
    %v2200 = vadd.f32 %v1872, %v1996
    %v2201 = vadd.f32 %v1873, %v2036
    %v2202 = vadd.f32 %v1874, %v2076
    %v2203 = vadd.f32 %v1875, %v2116
    %v2204 = vadd.f32 %v1876, %v2156
    %v2205 = vadd.f32 %v1877, %v2196
    %v2206 = vxor.u32 %v2198, 2147483648
    %v2207 = vxor.u32 %v2199, 2147483648
    %v2208 = vmul.f32 %v2206, 1.442695
    %v2209 = vpow.pop %v2208
    %v2210 = vmul.f32 %v2207, 1.442695
    %v2211 = vpow.pop %v2210
    %v2212 = vadd.f32 %v2209, 1.0
    %v2213 = vadd.f32 %v2211, 1.0
    %v2214 = vrcp.pop %v2212
    %v2215 = vmul.f32 %v2212, %v2214
    %v2216 = vsub.f32 1.0, %v2215
    %v2217 = vmul.f32 %v2214, %v2216
    %v2218 = vadd.f32 %v2214, %v2217
    %vm2219 = vweird.f32 %v2212
    %vm2220 = vweird.f32 %v2214
    %vm2221 = vmor %vm2219, %vm2220
    %v2222 = vsel %vm2221, %v2214, %v2218
    %v2223 = vand.u32 2147483647, %v2212
    %vm2224 = vcmp.eq.f32.partialorder %v2223, 8.507059e+37
    %v2225 = vand.u32 %v2212, 2147483648
    %v2226 = vor.u32 1.1754944e-38, %v2225
    %v2227 = vsel %vm2224, %v2226, %v2222
    %v2228 = vmul.f32 1.0, %v2227
    %v2229 = vrcp.pop %v2213
    %v2230 = vmul.f32 %v2213, %v2229
    %v2231 = vsub.f32 1.0, %v2230
    %v2232 = vmul.f32 %v2229, %v2231
    %v2233 = vadd.f32 %v2229, %v2232
    %vm2234 = vweird.f32 %v2213
    %vm2235 = vweird.f32 %v2229
    %vm2236 = vmor %vm2234, %vm2235
    %v2237 = vsel %vm2236, %v2229, %v2233
    %v2238 = vand.u32 2147483647, %v2213
    %vm2239 = vcmp.eq.f32.partialorder %v2238, 8.507059e+37
    %v2240 = vand.u32 %v2213, 2147483648
    %v2241 = vor.u32 1.1754944e-38, %v2240
    %v2242 = vsel %vm2239, %v2241, %v2237
    %v2243 = vmul.f32 1.0, %v2242
    %v2244 = vxor.u32 %v2200, 2147483648
    %v2245 = vxor.u32 %v2201, 2147483648
    %v2246 = vmul.f32 %v2244, 1.442695
    %v2247 = vpow.pop %v2246
    %v2248 = vmul.f32 %v2245, 1.442695
    %v2249 = vpow.pop %v2248
    %v2250 = vadd.f32 %v2247, 1.0
    %v2251 = vadd.f32 %v2249, 1.0
    %v2252 = vrcp.pop %v2250
    %v2253 = vmul.f32 %v2250, %v2252
    %v2254 = vsub.f32 1.0, %v2253
    %v2255 = vmul.f32 %v2252, %v2254
    %v2256 = vadd.f32 %v2252, %v2255
    %vm2257 = vweird.f32 %v2250
    %vm2258 = vweird.f32 %v2252
    %vm2259 = vmor %vm2257, %vm2258
    %v2260 = vsel %vm2259, %v2252, %v2256
    %v2261 = vand.u32 2147483647, %v2250
    %vm2262 = vcmp.eq.f32.partialorder %v2261, 8.507059e+37
    %v2263 = vand.u32 %v2250, 2147483648
    %v2264 = vor.u32 1.1754944e-38, %v2263
    %v2265 = vsel %vm2262, %v2264, %v2260
    %v2266 = vmul.f32 1.0, %v2265
    %v2267 = vrcp.pop %v2251
    %v2268 = vmul.f32 %v2251, %v2267
    %v2269 = vsub.f32 1.0, %v2268
    %v2270 = vmul.f32 %v2267, %v2269
    %v2271 = vadd.f32 %v2267, %v2270
    %vm2272 = vweird.f32 %v2251
    %vm2273 = vweird.f32 %v2267
    %vm2274 = vmor %vm2272, %vm2273
    %v2275 = vsel %vm2274, %v2267, %v2271
    %v2276 = vand.u32 2147483647, %v2251
    %vm2277 = vcmp.eq.f32.partialorder %v2276, 8.507059e+37
    %v2278 = vand.u32 %v2251, 2147483648
    %v2279 = vor.u32 1.1754944e-38, %v2278
    %v2280 = vsel %vm2277, %v2279, %v2275
    %v2281 = vmul.f32 1.0, %v2280
    %v2282 = vtanh.pop %v2202
    %v2283 = vtanh.pop %v2203
    %v2284 = vxor.u32 %v2204, 2147483648
    %v2285 = vxor.u32 %v2205, 2147483648
    %v2286 = vmul.f32 %v2284, 1.442695
    %v2287 = vpow.pop %v2286
    %v2288 = vmul.f32 %v2285, 1.442695
    %v2289 = vpow.pop %v2288
    %v2290 = vadd.f32 %v2287, 1.0
    %v2291 = vadd.f32 %v2289, 1.0
    %v2292 = vrcp.pop %v2290
    %v2293 = vmul.f32 %v2290, %v2292
    %v2294 = vsub.f32 1.0, %v2293
    %v2295 = vmul.f32 %v2292, %v2294
    %v2296 = vadd.f32 %v2292, %v2295
    %vm2297 = vweird.f32 %v2290
    %vm2298 = vweird.f32 %v2292
    %vm2299 = vmor %vm2297, %vm2298
    %v2300 = vsel %vm2299, %v2292, %v2296
    %v2301 = vand.u32 2147483647, %v2290
    %vm2302 = vcmp.eq.f32.partialorder %v2301, 8.507059e+37
    %v2303 = vand.u32 %v2290, 2147483648
    %v2304 = vor.u32 1.1754944e-38, %v2303
    %v2305 = vsel %vm2302, %v2304, %v2300
    %v2306 = vmul.f32 1.0, %v2305
    %v2307 = vrcp.pop %v2291
    %v2308 = vmul.f32 %v2291, %v2307
    %v2309 = vsub.f32 1.0, %v2308
    %v2310 = vmul.f32 %v2307, %v2309
    %v2311 = vadd.f32 %v2307, %v2310
    %vm2312 = vweird.f32 %v2291
    %vm2313 = vweird.f32 %v2307
    %vm2314 = vmor %vm2312, %vm2313
    %v2315 = vsel %vm2314, %v2307, %v2311
    %v2316 = vand.u32 2147483647, %v2291
    %vm2317 = vcmp.eq.f32.partialorder %v2316, 8.507059e+37
    %v2318 = vand.u32 %v2291, 2147483648
    %v2319 = vor.u32 1.1754944e-38, %v2318
    %v2320 = vsel %vm2317, %v2319, %v2315
    %v2321 = vmul.f32 1.0, %v2320
    %v2322 = vmul.f32 %v2266, 0.0
    %v2323 = vmul.f32 %v2281, 0.0
    %v2324 = vmul.f32 %v2228, %v2282
    %v2325 = vmul.f32 %v2243, %v2283
    %v2326 = vadd.f32 %v2322, %v2324
    %v2327 = vadd.f32 %v2323, %v2325
    %v2328 = vtanh.pop %v2326
    %v2329 = vtanh.pop %v2327
    %v2330 = vmul.f32 %v2306, %v2328
    %v2331 = vmul.f32 %v2321, %v2329
    %2334 = vst [vmem:[#allocation1] sm:$0xff] %v2330
    %2335 = vst [vmem:[#allocation1 + $0x9] sm:$0xff] %v2331
    %s2336 = scalar_lea.vmem [#allocation1], 3
    %v2337 = vld [vmem:[%s2336] ss:$9 sm:$0xff]
    %v2339 = vlaneseq
    %vm2340 = vcmp.ge.s32.totalorder %v2339, 0
    %vm2341 = vcmp.lt.s32.totalorder %v2339, 256
    %vm2342 = vmand %vm2340, %vm2341
    %2343 = vst.msk [vmem:[#allocation3] ss:$8 sm:$0x3] %vm2342, %v2337
    %2344 = vst.msk [vmem:[#allocation3] ss:$8 sm:$0x0] %vm2342, %v2337
    %v2345 = vld [vmem:[#allocation2] sm:$0xf0]
    %v2346 = vld [vmem:[#allocation2 + $0x8] sm:$0xf0]
    %v2347 = vld [vmem:[#allocation2 + $0x10] sm:$0xf0]
    %v2348 = vld [vmem:[#allocation2 + $0x18] sm:$0xf0]
    %v2349 = vld [vmem:[#allocation2 + $0x20] sm:$0xf0]
    %v2350 = vld [vmem:[#allocation2 + $0x28] sm:$0xf0]
    %v2351 = vld [vmem:[#allocation2 + $0x30] sm:$0xf0]
    %v2352 = vld [vmem:[#allocation2 + $0x38] sm:$0xf0]
    %2353 = vmatpush.msra.mxu0 %v1734
    %2354 = vmatpush.msra.mxu0 %v1726
    %2355 = vmatpush.msra.mxu0 %v1718
    %2356 = vmatpush.msra.mxu0 %v1710
    %2357 = vmatpush.msra.mxu0 %v1702
    %2358 = vmatpush.msra.mxu0 %v1694
    %2359 = vmatpush.msra.mxu0 %v1686
    %2360 = vmatpush.msra.mxu0 %v1678
    %2361 = vmatpush.msra.mxu0 %v1670
    %2362 = vmatpush.msra.mxu0 %v1662
    %2363 = vmatpush.msra.mxu0 %v1654
    %2364 = vmatpush.msra.mxu0 %v1646
    %2365 = vmatpush.msra.mxu0 %v1638
    %2366 = vmatpush.msra.mxu0 %v1630
    %2367 = vmatpush.msra.mxu0 %v1622
    %2368 = vmatpush.msra.mxu0 %v1614
    %2369 = vmatmul.f32.gmra.mxu0 %v2330
    %v2370 = vpop.f32.mrf.mxu0
    %v2371 = vadd.f32 0.0, %v2370
    %2372 = vdwg.mxu0
    %2373 = vmatpush.msra.mxu0 %v1862
    %2374 = vmatpush.msra.mxu0 %v1854
    %2375 = vmatpush.msra.mxu0 %v1846
    %2376 = vmatpush.msra.mxu0 %v1838
    %2377 = vmatpush.msra.mxu0 %v1830
    %2378 = vmatpush.msra.mxu0 %v1822
    %2379 = vmatpush.msra.mxu0 %v1814
    %2380 = vmatpush.msra.mxu0 %v1806
    %2381 = vmatpush.msra.mxu0 %v1798
    %2382 = vmatpush.msra.mxu0 %v1790
    %2383 = vmatpush.msra.mxu0 %v1782
    %2384 = vmatpush.msra.mxu0 %v1774
    %2385 = vmatpush.msra.mxu0 %v1766
    %2386 = vmatpush.msra.mxu0 %v1758
    %2387 = vmatpush.msra.mxu0 %v1750
    %2388 = vmatpush.msra.mxu0 %v1742
    %2389 = vmatmul.f32.gmra.mxu0 %v2331
    %v2390 = vpop.f32.mrf.mxu0
    %v2391 = vadd.f32 %v2371, %v2390
    %2392 = vdwg.mxu0
    %2393 = vmatpush.msra.mxu0 %v1735
    %2394 = vmatpush.msra.mxu0 %v1727
    %2395 = vmatpush.msra.mxu0 %v1719
    %2396 = vmatpush.msra.mxu0 %v1711
    %2397 = vmatpush.msra.mxu0 %v1703
    %2398 = vmatpush.msra.mxu0 %v1695
    %2399 = vmatpush.msra.mxu0 %v1687
    %2400 = vmatpush.msra.mxu0 %v1679
    %2401 = vmatpush.msra.mxu0 %v1671
    %2402 = vmatpush.msra.mxu0 %v1663
    %2403 = vmatpush.msra.mxu0 %v1655
    %2404 = vmatpush.msra.mxu0 %v1647
    %2405 = vmatpush.msra.mxu0 %v1639
    %2406 = vmatpush.msra.mxu0 %v1631
    %2407 = vmatpush.msra.mxu0 %v1623
    %2408 = vmatpush.msra.mxu0 %v1615
    %2409 = vmatmul.f32.gmra.mxu0 %v2330
    %v2410 = vpop.f32.mrf.mxu0
    %v2411 = vadd.f32 0.0, %v2410
    %2412 = vdwg.mxu0
    %2413 = vmatpush.msra.mxu0 %v1863
    %2414 = vmatpush.msra.mxu0 %v1855
    %2415 = vmatpush.msra.mxu0 %v1847
    %2416 = vmatpush.msra.mxu0 %v1839
    %2417 = vmatpush.msra.mxu0 %v1831
    %2418 = vmatpush.msra.mxu0 %v1823
    %2419 = vmatpush.msra.mxu0 %v1815
    %2420 = vmatpush.msra.mxu0 %v1807
    %2421 = vmatpush.msra.mxu0 %v1799
    %2422 = vmatpush.msra.mxu0 %v1791
    %2423 = vmatpush.msra.mxu0 %v1783
    %2424 = vmatpush.msra.mxu0 %v1775
    %2425 = vmatpush.msra.mxu0 %v1767
    %2426 = vmatpush.msra.mxu0 %v1759
    %2427 = vmatpush.msra.mxu0 %v1751
    %2428 = vmatpush.msra.mxu0 %v1743
    %2429 = vmatmul.f32.gmra.mxu0 %v2331
    %v2430 = vpop.f32.mrf.mxu0
    %v2431 = vadd.f32 %v2411, %v2430
    %2432 = vdwg.mxu0
    %2433 = vmatpush.msra.mxu0 %v1736
    %2434 = vmatpush.msra.mxu0 %v1728
    %2435 = vmatpush.msra.mxu0 %v1720
    %2436 = vmatpush.msra.mxu0 %v1712
    %2437 = vmatpush.msra.mxu0 %v1704
    %2438 = vmatpush.msra.mxu0 %v1696
    %2439 = vmatpush.msra.mxu0 %v1688
    %2440 = vmatpush.msra.mxu0 %v1680
    %2441 = vmatpush.msra.mxu0 %v1672
    %2442 = vmatpush.msra.mxu0 %v1664
    %2443 = vmatpush.msra.mxu0 %v1656
    %2444 = vmatpush.msra.mxu0 %v1648
    %2445 = vmatpush.msra.mxu0 %v1640
    %2446 = vmatpush.msra.mxu0 %v1632
    %2447 = vmatpush.msra.mxu0 %v1624
    %2448 = vmatpush.msra.mxu0 %v1616
    %2449 = vmatmul.f32.gmra.mxu0 %v2330
    %v2450 = vpop.f32.mrf.mxu0
    %v2451 = vadd.f32 0.0, %v2450
    %2452 = vdwg.mxu0
    %2453 = vmatpush.msra.mxu0 %v1864
    %2454 = vmatpush.msra.mxu0 %v1856
    %2455 = vmatpush.msra.mxu0 %v1848
    %2456 = vmatpush.msra.mxu0 %v1840
    %2457 = vmatpush.msra.mxu0 %v1832
    %2458 = vmatpush.msra.mxu0 %v1824
    %2459 = vmatpush.msra.mxu0 %v1816
    %2460 = vmatpush.msra.mxu0 %v1808
    %2461 = vmatpush.msra.mxu0 %v1800
    %2462 = vmatpush.msra.mxu0 %v1792
    %2463 = vmatpush.msra.mxu0 %v1784
    %2464 = vmatpush.msra.mxu0 %v1776
    %2465 = vmatpush.msra.mxu0 %v1768
    %2466 = vmatpush.msra.mxu0 %v1760
    %2467 = vmatpush.msra.mxu0 %v1752
    %2468 = vmatpush.msra.mxu0 %v1744
    %2469 = vmatmul.f32.gmra.mxu0 %v2331
    %v2470 = vpop.f32.mrf.mxu0
    %v2471 = vadd.f32 %v2451, %v2470
    %2472 = vdwg.mxu0
    %2473 = vmatpush.msra.mxu0 %v1737
    %2474 = vmatpush.msra.mxu0 %v1729
    %2475 = vmatpush.msra.mxu0 %v1721
    %2476 = vmatpush.msra.mxu0 %v1713
    %2477 = vmatpush.msra.mxu0 %v1705
    %2478 = vmatpush.msra.mxu0 %v1697
    %2479 = vmatpush.msra.mxu0 %v1689
    %2480 = vmatpush.msra.mxu0 %v1681
    %2481 = vmatpush.msra.mxu0 %v1673
    %2482 = vmatpush.msra.mxu0 %v1665
    %2483 = vmatpush.msra.mxu0 %v1657
    %2484 = vmatpush.msra.mxu0 %v1649
    %2485 = vmatpush.msra.mxu0 %v1641
    %2486 = vmatpush.msra.mxu0 %v1633
    %2487 = vmatpush.msra.mxu0 %v1625
    %2488 = vmatpush.msra.mxu0 %v1617
    %2489 = vmatmul.f32.gmra.mxu0 %v2330
    %v2490 = vpop.f32.mrf.mxu0
    %v2491 = vadd.f32 0.0, %v2490
    %2492 = vdwg.mxu0
    %2493 = vmatpush.msra.mxu0 %v1865
    %2494 = vmatpush.msra.mxu0 %v1857
    %2495 = vmatpush.msra.mxu0 %v1849
    %2496 = vmatpush.msra.mxu0 %v1841
    %2497 = vmatpush.msra.mxu0 %v1833
    %2498 = vmatpush.msra.mxu0 %v1825
    %2499 = vmatpush.msra.mxu0 %v1817
    %2500 = vmatpush.msra.mxu0 %v1809
    %2501 = vmatpush.msra.mxu0 %v1801
    %2502 = vmatpush.msra.mxu0 %v1793
    %2503 = vmatpush.msra.mxu0 %v1785
    %2504 = vmatpush.msra.mxu0 %v1777
    %2505 = vmatpush.msra.mxu0 %v1769
    %2506 = vmatpush.msra.mxu0 %v1761
    %2507 = vmatpush.msra.mxu0 %v1753
    %2508 = vmatpush.msra.mxu0 %v1745
    %2509 = vmatmul.f32.gmra.mxu0 %v2331
    %v2510 = vpop.f32.mrf.mxu0
    %v2511 = vadd.f32 %v2491, %v2510
    %2512 = vdwg.mxu0
    %2513 = vmatpush.msra.mxu0 %v1738
    %2514 = vmatpush.msra.mxu0 %v1730
    %2515 = vmatpush.msra.mxu0 %v1722
    %2516 = vmatpush.msra.mxu0 %v1714
    %2517 = vmatpush.msra.mxu0 %v1706
    %2518 = vmatpush.msra.mxu0 %v1698
    %2519 = vmatpush.msra.mxu0 %v1690
    %2520 = vmatpush.msra.mxu0 %v1682
    %2521 = vmatpush.msra.mxu0 %v1674
    %2522 = vmatpush.msra.mxu0 %v1666
    %2523 = vmatpush.msra.mxu0 %v1658
    %2524 = vmatpush.msra.mxu0 %v1650
    %2525 = vmatpush.msra.mxu0 %v1642
    %2526 = vmatpush.msra.mxu0 %v1634
    %2527 = vmatpush.msra.mxu0 %v1626
    %2528 = vmatpush.msra.mxu0 %v1618
    %2529 = vmatmul.f32.gmra.mxu0 %v2330
    %v2530 = vpop.f32.mrf.mxu0
    %v2531 = vadd.f32 0.0, %v2530
    %2532 = vdwg.mxu0
    %2533 = vmatpush.msra.mxu0 %v1866
    %2534 = vmatpush.msra.mxu0 %v1858
    %2535 = vmatpush.msra.mxu0 %v1850
    %2536 = vmatpush.msra.mxu0 %v1842
    %2537 = vmatpush.msra.mxu0 %v1834
    %2538 = vmatpush.msra.mxu0 %v1826
    %2539 = vmatpush.msra.mxu0 %v1818
    %2540 = vmatpush.msra.mxu0 %v1810
    %2541 = vmatpush.msra.mxu0 %v1802
    %2542 = vmatpush.msra.mxu0 %v1794
    %2543 = vmatpush.msra.mxu0 %v1786
    %2544 = vmatpush.msra.mxu0 %v1778
    %2545 = vmatpush.msra.mxu0 %v1770
    %2546 = vmatpush.msra.mxu0 %v1762
    %2547 = vmatpush.msra.mxu0 %v1754
    %2548 = vmatpush.msra.mxu0 %v1746
    %2549 = vmatmul.f32.gmra.mxu0 %v2331
    %v2550 = vpop.f32.mrf.mxu0
    %v2551 = vadd.f32 %v2531, %v2550
    %2552 = vdwg.mxu0
    %2553 = vmatpush.msra.mxu0 %v1739
    %2554 = vmatpush.msra.mxu0 %v1731
    %2555 = vmatpush.msra.mxu0 %v1723
    %2556 = vmatpush.msra.mxu0 %v1715
    %2557 = vmatpush.msra.mxu0 %v1707
    %2558 = vmatpush.msra.mxu0 %v1699
    %2559 = vmatpush.msra.mxu0 %v1691
    %2560 = vmatpush.msra.mxu0 %v1683
    %2561 = vmatpush.msra.mxu0 %v1675
    %2562 = vmatpush.msra.mxu0 %v1667
    %2563 = vmatpush.msra.mxu0 %v1659
    %2564 = vmatpush.msra.mxu0 %v1651
    %2565 = vmatpush.msra.mxu0 %v1643
    %2566 = vmatpush.msra.mxu0 %v1635
    %2567 = vmatpush.msra.mxu0 %v1627
    %2568 = vmatpush.msra.mxu0 %v1619
    %2569 = vmatmul.f32.gmra.mxu0 %v2330
    %v2570 = vpop.f32.mrf.mxu0
    %v2571 = vadd.f32 0.0, %v2570
    %2572 = vdwg.mxu0
    %2573 = vmatpush.msra.mxu0 %v1867
    %2574 = vmatpush.msra.mxu0 %v1859
    %2575 = vmatpush.msra.mxu0 %v1851
    %2576 = vmatpush.msra.mxu0 %v1843
    %2577 = vmatpush.msra.mxu0 %v1835
    %2578 = vmatpush.msra.mxu0 %v1827
    %2579 = vmatpush.msra.mxu0 %v1819
    %2580 = vmatpush.msra.mxu0 %v1811
    %2581 = vmatpush.msra.mxu0 %v1803
    %2582 = vmatpush.msra.mxu0 %v1795
    %2583 = vmatpush.msra.mxu0 %v1787
    %2584 = vmatpush.msra.mxu0 %v1779
    %2585 = vmatpush.msra.mxu0 %v1771
    %2586 = vmatpush.msra.mxu0 %v1763
    %2587 = vmatpush.msra.mxu0 %v1755
    %2588 = vmatpush.msra.mxu0 %v1747
    %2589 = vmatmul.f32.gmra.mxu0 %v2331
    %v2590 = vpop.f32.mrf.mxu0
    %v2591 = vadd.f32 %v2571, %v2590
    %2592 = vdwg.mxu0
    %2593 = vmatpush.msra.mxu0 %v1740
    %2594 = vmatpush.msra.mxu0 %v1732
    %2595 = vmatpush.msra.mxu0 %v1724
    %2596 = vmatpush.msra.mxu0 %v1716
    %2597 = vmatpush.msra.mxu0 %v1708
    %2598 = vmatpush.msra.mxu0 %v1700
    %2599 = vmatpush.msra.mxu0 %v1692
    %2600 = vmatpush.msra.mxu0 %v1684
    %2601 = vmatpush.msra.mxu0 %v1676
    %2602 = vmatpush.msra.mxu0 %v1668
    %2603 = vmatpush.msra.mxu0 %v1660
    %2604 = vmatpush.msra.mxu0 %v1652
    %2605 = vmatpush.msra.mxu0 %v1644
    %2606 = vmatpush.msra.mxu0 %v1636
    %2607 = vmatpush.msra.mxu0 %v1628
    %2608 = vmatpush.msra.mxu0 %v1620
    %2609 = vmatmul.f32.gmra.mxu0 %v2330
    %v2610 = vpop.f32.mrf.mxu0
    %v2611 = vadd.f32 0.0, %v2610
    %2612 = vdwg.mxu0
    %2613 = vmatpush.msra.mxu0 %v1868
    %2614 = vmatpush.msra.mxu0 %v1860
    %2615 = vmatpush.msra.mxu0 %v1852
    %2616 = vmatpush.msra.mxu0 %v1844
    %2617 = vmatpush.msra.mxu0 %v1836
    %2618 = vmatpush.msra.mxu0 %v1828
    %2619 = vmatpush.msra.mxu0 %v1820
    %2620 = vmatpush.msra.mxu0 %v1812
    %2621 = vmatpush.msra.mxu0 %v1804
    %2622 = vmatpush.msra.mxu0 %v1796
    %2623 = vmatpush.msra.mxu0 %v1788
    %2624 = vmatpush.msra.mxu0 %v1780
    %2625 = vmatpush.msra.mxu0 %v1772
    %2626 = vmatpush.msra.mxu0 %v1764
    %2627 = vmatpush.msra.mxu0 %v1756
    %2628 = vmatpush.msra.mxu0 %v1748
    %2629 = vmatmul.f32.gmra.mxu0 %v2331
    %v2630 = vpop.f32.mrf.mxu0
    %v2631 = vadd.f32 %v2611, %v2630
    %2632 = vdwg.mxu0
    %2633 = vmatpush.msra.mxu0 %v1741
    %2634 = vmatpush.msra.mxu0 %v1733
    %2635 = vmatpush.msra.mxu0 %v1725
    %2636 = vmatpush.msra.mxu0 %v1717
    %2637 = vmatpush.msra.mxu0 %v1709
    %2638 = vmatpush.msra.mxu0 %v1701
    %2639 = vmatpush.msra.mxu0 %v1693
    %2640 = vmatpush.msra.mxu0 %v1685
    %2641 = vmatpush.msra.mxu0 %v1677
    %2642 = vmatpush.msra.mxu0 %v1669
    %2643 = vmatpush.msra.mxu0 %v1661
    %2644 = vmatpush.msra.mxu0 %v1653
    %2645 = vmatpush.msra.mxu0 %v1645
    %2646 = vmatpush.msra.mxu0 %v1637
    %2647 = vmatpush.msra.mxu0 %v1629
    %2648 = vmatpush.msra.mxu0 %v1621
    %2649 = vmatmul.f32.gmra.mxu0 %v2330
    %v2650 = vpop.f32.mrf.mxu0
    %v2651 = vadd.f32 0.0, %v2650
    %2652 = vdwg.mxu0
    %2653 = vmatpush.msra.mxu0 %v1869
    %2654 = vmatpush.msra.mxu0 %v1861
    %2655 = vmatpush.msra.mxu0 %v1853
    %2656 = vmatpush.msra.mxu0 %v1845
    %2657 = vmatpush.msra.mxu0 %v1837
    %2658 = vmatpush.msra.mxu0 %v1829
    %2659 = vmatpush.msra.mxu0 %v1821
    %2660 = vmatpush.msra.mxu0 %v1813
    %2661 = vmatpush.msra.mxu0 %v1805
    %2662 = vmatpush.msra.mxu0 %v1797
    %2663 = vmatpush.msra.mxu0 %v1789
    %2664 = vmatpush.msra.mxu0 %v1781
    %2665 = vmatpush.msra.mxu0 %v1773
    %2666 = vmatpush.msra.mxu0 %v1765
    %2667 = vmatpush.msra.mxu0 %v1757
    %2668 = vmatpush.msra.mxu0 %v1749
    %2669 = vmatmul.f32.gmra.mxu0 %v2331
    %v2670 = vpop.f32.mrf.mxu0
    %v2671 = vadd.f32 %v2651, %v2670
    %2672 = vdwg.mxu0
    %v2681 = vrot.slane %v2391, 4
    %v2682 = vrot.slane %v2431, 4
    %v2683 = vrot.slane %v2471, 4
    %v2684 = vrot.slane %v2511, 4
    %v2685 = vrot.slane %v2551, 4
    %v2686 = vrot.slane %v2591, 4
    %v2687 = vrot.slane %v2631, 4
    %v2688 = vrot.slane %v2671, 4
    %v2697 = vadd.f32 %v2345, %v2681
    %v2698 = vadd.f32 %v2346, %v2682
    %v2699 = vadd.f32 %v2347, %v2683
    %v2700 = vadd.f32 %v2348, %v2684
    %v2701 = vadd.f32 %v2349, %v2685
    %v2702 = vadd.f32 %v2350, %v2686
    %v2703 = vadd.f32 %v2351, %v2687
    %v2704 = vadd.f32 %v2352, %v2688
    %v2705 = vxor.u32 %v2697, 2147483648
    %v2706 = vxor.u32 %v2698, 2147483648
    %v2707 = vmul.f32 %v2705, 1.442695
    %v2708 = vpow.pop %v2707
    %v2709 = vmul.f32 %v2706, 1.442695
    %v2710 = vpow.pop %v2709
    %v2711 = vadd.f32 %v2708, 1.0
    %v2712 = vadd.f32 %v2710, 1.0
    %v2713 = vrcp.pop %v2711
    %v2714 = vmul.f32 %v2711, %v2713
    %v2715 = vsub.f32 1.0, %v2714
    %v2716 = vmul.f32 %v2713, %v2715
    %v2717 = vadd.f32 %v2713, %v2716
    %vm2718 = vweird.f32 %v2711
    %vm2719 = vweird.f32 %v2713
    %vm2720 = vmor %vm2718, %vm2719
    %v2721 = vsel %vm2720, %v2713, %v2717
    %v2722 = vand.u32 2147483647, %v2711
    %vm2723 = vcmp.eq.f32.partialorder %v2722, 8.507059e+37
    %v2724 = vand.u32 %v2711, 2147483648
    %v2725 = vor.u32 1.1754944e-38, %v2724
    %v2726 = vsel %vm2723, %v2725, %v2721
    %v2727 = vmul.f32 1.0, %v2726
    %v2728 = vrcp.pop %v2712
    %v2729 = vmul.f32 %v2712, %v2728
    %v2730 = vsub.f32 1.0, %v2729
    %v2731 = vmul.f32 %v2728, %v2730
    %v2732 = vadd.f32 %v2728, %v2731
    %vm2733 = vweird.f32 %v2712
    %vm2734 = vweird.f32 %v2728
    %vm2735 = vmor %vm2733, %vm2734
    %v2736 = vsel %vm2735, %v2728, %v2732
    %v2737 = vand.u32 2147483647, %v2712
    %vm2738 = vcmp.eq.f32.partialorder %v2737, 8.507059e+37
    %v2739 = vand.u32 %v2712, 2147483648
    %v2740 = vor.u32 1.1754944e-38, %v2739
    %v2741 = vsel %vm2738, %v2740, %v2736
    %v2742 = vmul.f32 1.0, %v2741
    %v2743 = vxor.u32 %v2699, 2147483648
    %v2744 = vxor.u32 %v2700, 2147483648
    %v2745 = vmul.f32 %v2743, 1.442695
    %v2746 = vpow.pop %v2745
    %v2747 = vmul.f32 %v2744, 1.442695
    %v2748 = vpow.pop %v2747
    %v2749 = vadd.f32 %v2746, 1.0
    %v2750 = vadd.f32 %v2748, 1.0
    %v2751 = vrcp.pop %v2749
    %v2752 = vmul.f32 %v2749, %v2751
    %v2753 = vsub.f32 1.0, %v2752
    %v2754 = vmul.f32 %v2751, %v2753
    %v2755 = vadd.f32 %v2751, %v2754
    %vm2756 = vweird.f32 %v2749
    %vm2757 = vweird.f32 %v2751
    %vm2758 = vmor %vm2756, %vm2757
    %v2759 = vsel %vm2758, %v2751, %v2755
    %v2760 = vand.u32 2147483647, %v2749
    %vm2761 = vcmp.eq.f32.partialorder %v2760, 8.507059e+37
    %v2762 = vand.u32 %v2749, 2147483648
    %v2763 = vor.u32 1.1754944e-38, %v2762
    %v2764 = vsel %vm2761, %v2763, %v2759
    %v2765 = vmul.f32 1.0, %v2764
    %v2766 = vrcp.pop %v2750
    %v2767 = vmul.f32 %v2750, %v2766
    %v2768 = vsub.f32 1.0, %v2767
    %v2769 = vmul.f32 %v2766, %v2768
    %v2770 = vadd.f32 %v2766, %v2769
    %vm2771 = vweird.f32 %v2750
    %vm2772 = vweird.f32 %v2766
    %vm2773 = vmor %vm2771, %vm2772
    %v2774 = vsel %vm2773, %v2766, %v2770
    %v2775 = vand.u32 2147483647, %v2750
    %vm2776 = vcmp.eq.f32.partialorder %v2775, 8.507059e+37
    %v2777 = vand.u32 %v2750, 2147483648
    %v2778 = vor.u32 1.1754944e-38, %v2777
    %v2779 = vsel %vm2776, %v2778, %v2774
    %v2780 = vmul.f32 1.0, %v2779
    %v2781 = vtanh.pop %v2701
    %v2782 = vtanh.pop %v2702
    %v2783 = vxor.u32 %v2703, 2147483648
    %v2784 = vxor.u32 %v2704, 2147483648
    %v2785 = vmul.f32 %v2783, 1.442695
    %v2786 = vpow.pop %v2785
    %v2787 = vmul.f32 %v2784, 1.442695
    %v2788 = vpow.pop %v2787
    %v2789 = vadd.f32 %v2786, 1.0
    %v2790 = vadd.f32 %v2788, 1.0
    %v2791 = vrcp.pop %v2789
    %v2792 = vmul.f32 %v2789, %v2791
    %v2793 = vsub.f32 1.0, %v2792
    %v2794 = vmul.f32 %v2791, %v2793
    %v2795 = vadd.f32 %v2791, %v2794
    %vm2796 = vweird.f32 %v2789
    %vm2797 = vweird.f32 %v2791
    %vm2798 = vmor %vm2796, %vm2797
    %v2799 = vsel %vm2798, %v2791, %v2795
    %v2800 = vand.u32 2147483647, %v2789
    %vm2801 = vcmp.eq.f32.partialorder %v2800, 8.507059e+37
    %v2802 = vand.u32 %v2789, 2147483648
    %v2803 = vor.u32 1.1754944e-38, %v2802
    %v2804 = vsel %vm2801, %v2803, %v2799
    %v2805 = vmul.f32 1.0, %v2804
    %v2806 = vrcp.pop %v2790
    %v2807 = vmul.f32 %v2790, %v2806
    %v2808 = vsub.f32 1.0, %v2807
    %v2809 = vmul.f32 %v2806, %v2808
    %v2810 = vadd.f32 %v2806, %v2809
    %vm2811 = vweird.f32 %v2790
    %vm2812 = vweird.f32 %v2806
    %vm2813 = vmor %vm2811, %vm2812
    %v2814 = vsel %vm2813, %v2806, %v2810
    %v2815 = vand.u32 2147483647, %v2790
    %vm2816 = vcmp.eq.f32.partialorder %v2815, 8.507059e+37
    %v2817 = vand.u32 %v2790, 2147483648
    %v2818 = vor.u32 1.1754944e-38, %v2817
    %v2819 = vsel %vm2816, %v2818, %v2814
    %v2820 = vmul.f32 1.0, %v2819
    %v2823 = vrot.slane %v2326, 4
    %v2824 = vrot.slane %v2327, 4
    %v2827 = vmul.f32 %v2765, %v2823
    %v2828 = vmul.f32 %v2780, %v2824
    %v2829 = vmul.f32 %v2727, %v2781
    %v2830 = vmul.f32 %v2742, %v2782
    %v2831 = vadd.f32 %v2827, %v2829
    %v2832 = vadd.f32 %v2828, %v2830
    %v2833 = vtanh.pop %v2831
    %v2834 = vtanh.pop %v2832
    %v2835 = vmul.f32 %v2805, %v2833
    %v2836 = vmul.f32 %v2820, %v2834
    %2839 = vst [vmem:[#allocation1] sm:$0xff] %v2835
    %2840 = vst [vmem:[#allocation1 + $0x9] sm:$0xff] %v2836
    %s2841 = scalar_lea.vmem [#allocation1], 7
    %v2842 = vld [vmem:[%s2841] ss:$9 sm:$0xff]
    %s2844 = scalar_lea.vmem [#allocation3], 1
    %2845 = vst.msk [vmem:[%s2844] ss:$8 sm:$0x3] %vm2342, %v2842
    %2846 = vst.msk [vmem:[%s2844] ss:$8 sm:$0x0] %vm2342, %v2842
    %v2847 = vld [vmem:[#allocation2 + $0x40] sm:$0xf]
    %v2848 = vld [vmem:[#allocation2 + $0x48] sm:$0xf]
    %v2849 = vld [vmem:[#allocation2 + $0x50] sm:$0xf]
    %v2850 = vld [vmem:[#allocation2 + $0x58] sm:$0xf]
    %v2851 = vld [vmem:[#allocation2 + $0x60] sm:$0xf]
    %v2852 = vld [vmem:[#allocation2 + $0x68] sm:$0xf]
    %v2853 = vld [vmem:[#allocation2 + $0x70] sm:$0xf]
    %v2854 = vld [vmem:[#allocation2 + $0x78] sm:$0xf]
    %v2855 = vrot.slane %v2835, 4
    %v2856 = vrot.slane %v2836, 4
    %2859 = vmatpush.msra.mxu0 %v1734
    %2860 = vmatpush.msra.mxu0 %v1726
    %2861 = vmatpush.msra.mxu0 %v1718
    %2862 = vmatpush.msra.mxu0 %v1710
    %2863 = vmatpush.msra.mxu0 %v1702
    %2864 = vmatpush.msra.mxu0 %v1694
    %2865 = vmatpush.msra.mxu0 %v1686
    %2866 = vmatpush.msra.mxu0 %v1678
    %2867 = vmatpush.msra.mxu0 %v1670
    %2868 = vmatpush.msra.mxu0 %v1662
    %2869 = vmatpush.msra.mxu0 %v1654
    %2870 = vmatpush.msra.mxu0 %v1646
    %2871 = vmatpush.msra.mxu0 %v1638
    %2872 = vmatpush.msra.mxu0 %v1630
    %2873 = vmatpush.msra.mxu0 %v1622
    %2874 = vmatpush.msra.mxu0 %v1614
    %2875 = vmatmul.f32.gmra.mxu0 %v2855
    %v2876 = vpop.f32.mrf.mxu0
    %v2877 = vadd.f32 0.0, %v2876
    %2878 = vdwg.mxu0
    %2879 = vmatpush.msra.mxu0 %v1862
    %2880 = vmatpush.msra.mxu0 %v1854
    %2881 = vmatpush.msra.mxu0 %v1846
    %2882 = vmatpush.msra.mxu0 %v1838
    %2883 = vmatpush.msra.mxu0 %v1830
    %2884 = vmatpush.msra.mxu0 %v1822
    %2885 = vmatpush.msra.mxu0 %v1814
    %2886 = vmatpush.msra.mxu0 %v1806
    %2887 = vmatpush.msra.mxu0 %v1798
    %2888 = vmatpush.msra.mxu0 %v1790
    %2889 = vmatpush.msra.mxu0 %v1782
    %2890 = vmatpush.msra.mxu0 %v1774
    %2891 = vmatpush.msra.mxu0 %v1766
    %2892 = vmatpush.msra.mxu0 %v1758
    %2893 = vmatpush.msra.mxu0 %v1750
    %2894 = vmatpush.msra.mxu0 %v1742
    %2895 = vmatmul.f32.gmra.mxu0 %v2856
    %v2896 = vpop.f32.mrf.mxu0
    %v2897 = vadd.f32 %v2877, %v2896
    %2898 = vdwg.mxu0
    %2899 = vmatpush.msra.mxu0 %v1735
    %2900 = vmatpush.msra.mxu0 %v1727
    %2901 = vmatpush.msra.mxu0 %v1719
    %2902 = vmatpush.msra.mxu0 %v1711
    %2903 = vmatpush.msra.mxu0 %v1703
    %2904 = vmatpush.msra.mxu0 %v1695
    %2905 = vmatpush.msra.mxu0 %v1687
    %2906 = vmatpush.msra.mxu0 %v1679
    %2907 = vmatpush.msra.mxu0 %v1671
    %2908 = vmatpush.msra.mxu0 %v1663
    %2909 = vmatpush.msra.mxu0 %v1655
    %2910 = vmatpush.msra.mxu0 %v1647
    %2911 = vmatpush.msra.mxu0 %v1639
    %2912 = vmatpush.msra.mxu0 %v1631
    %2913 = vmatpush.msra.mxu0 %v1623
    %2914 = vmatpush.msra.mxu0 %v1615
    %2915 = vmatmul.f32.gmra.mxu0 %v2855
    %v2916 = vpop.f32.mrf.mxu0
    %v2917 = vadd.f32 0.0, %v2916
    %2918 = vdwg.mxu0
    %2919 = vmatpush.msra.mxu0 %v1863
    %2920 = vmatpush.msra.mxu0 %v1855
    %2921 = vmatpush.msra.mxu0 %v1847
    %2922 = vmatpush.msra.mxu0 %v1839
    %2923 = vmatpush.msra.mxu0 %v1831
    %2924 = vmatpush.msra.mxu0 %v1823
    %2925 = vmatpush.msra.mxu0 %v1815
    %2926 = vmatpush.msra.mxu0 %v1807
    %2927 = vmatpush.msra.mxu0 %v1799
    %2928 = vmatpush.msra.mxu0 %v1791
    %2929 = vmatpush.msra.mxu0 %v1783
    %2930 = vmatpush.msra.mxu0 %v1775
    %2931 = vmatpush.msra.mxu0 %v1767
    %2932 = vmatpush.msra.mxu0 %v1759
    %2933 = vmatpush.msra.mxu0 %v1751
    %2934 = vmatpush.msra.mxu0 %v1743
    %2935 = vmatmul.f32.gmra.mxu0 %v2856
    %v2936 = vpop.f32.mrf.mxu0
    %v2937 = vadd.f32 %v2917, %v2936
    %2938 = vdwg.mxu0
    %2939 = vmatpush.msra.mxu0 %v1736
    %2940 = vmatpush.msra.mxu0 %v1728
    %2941 = vmatpush.msra.mxu0 %v1720
    %2942 = vmatpush.msra.mxu0 %v1712
    %2943 = vmatpush.msra.mxu0 %v1704
    %2944 = vmatpush.msra.mxu0 %v1696
    %2945 = vmatpush.msra.mxu0 %v1688
    %2946 = vmatpush.msra.mxu0 %v1680
    %2947 = vmatpush.msra.mxu0 %v1672
    %2948 = vmatpush.msra.mxu0 %v1664
    %2949 = vmatpush.msra.mxu0 %v1656
    %2950 = vmatpush.msra.mxu0 %v1648
    %2951 = vmatpush.msra.mxu0 %v1640
    %2952 = vmatpush.msra.mxu0 %v1632
    %2953 = vmatpush.msra.mxu0 %v1624
    %2954 = vmatpush.msra.mxu0 %v1616
    %2955 = vmatmul.f32.gmra.mxu0 %v2855
    %v2956 = vpop.f32.mrf.mxu0
    %v2957 = vadd.f32 0.0, %v2956
    %2958 = vdwg.mxu0
    %2959 = vmatpush.msra.mxu0 %v1864
    %2960 = vmatpush.msra.mxu0 %v1856
    %2961 = vmatpush.msra.mxu0 %v1848
    %2962 = vmatpush.msra.mxu0 %v1840
    %2963 = vmatpush.msra.mxu0 %v1832
    %2964 = vmatpush.msra.mxu0 %v1824
    %2965 = vmatpush.msra.mxu0 %v1816
    %2966 = vmatpush.msra.mxu0 %v1808
    %2967 = vmatpush.msra.mxu0 %v1800
    %2968 = vmatpush.msra.mxu0 %v1792
    %2969 = vmatpush.msra.mxu0 %v1784
    %2970 = vmatpush.msra.mxu0 %v1776
    %2971 = vmatpush.msra.mxu0 %v1768
    %2972 = vmatpush.msra.mxu0 %v1760
    %2973 = vmatpush.msra.mxu0 %v1752
    %2974 = vmatpush.msra.mxu0 %v1744
    %2975 = vmatmul.f32.gmra.mxu0 %v2856
    %v2976 = vpop.f32.mrf.mxu0
    %v2977 = vadd.f32 %v2957, %v2976
    %2978 = vdwg.mxu0
    %2979 = vmatpush.msra.mxu0 %v1737
    %2980 = vmatpush.msra.mxu0 %v1729
    %2981 = vmatpush.msra.mxu0 %v1721
    %2982 = vmatpush.msra.mxu0 %v1713
    %2983 = vmatpush.msra.mxu0 %v1705
    %2984 = vmatpush.msra.mxu0 %v1697
    %2985 = vmatpush.msra.mxu0 %v1689
    %2986 = vmatpush.msra.mxu0 %v1681
    %2987 = vmatpush.msra.mxu0 %v1673
    %2988 = vmatpush.msra.mxu0 %v1665
    %2989 = vmatpush.msra.mxu0 %v1657
    %2990 = vmatpush.msra.mxu0 %v1649
    %2991 = vmatpush.msra.mxu0 %v1641
    %2992 = vmatpush.msra.mxu0 %v1633
    %2993 = vmatpush.msra.mxu0 %v1625
    %2994 = vmatpush.msra.mxu0 %v1617
    %2995 = vmatmul.f32.gmra.mxu0 %v2855
    %v2996 = vpop.f32.mrf.mxu0
    %v2997 = vadd.f32 0.0, %v2996
    %2998 = vdwg.mxu0
    %2999 = vmatpush.msra.mxu0 %v1865
    %3000 = vmatpush.msra.mxu0 %v1857
    %3001 = vmatpush.msra.mxu0 %v1849
    %3002 = vmatpush.msra.mxu0 %v1841
    %3003 = vmatpush.msra.mxu0 %v1833
    %3004 = vmatpush.msra.mxu0 %v1825
    %3005 = vmatpush.msra.mxu0 %v1817
    %3006 = vmatpush.msra.mxu0 %v1809
    %3007 = vmatpush.msra.mxu0 %v1801
    %3008 = vmatpush.msra.mxu0 %v1793
    %3009 = vmatpush.msra.mxu0 %v1785
    %3010 = vmatpush.msra.mxu0 %v1777
    %3011 = vmatpush.msra.mxu0 %v1769
    %3012 = vmatpush.msra.mxu0 %v1761
    %3013 = vmatpush.msra.mxu0 %v1753
    %3014 = vmatpush.msra.mxu0 %v1745
    %3015 = vmatmul.f32.gmra.mxu0 %v2856
    %v3016 = vpop.f32.mrf.mxu0
    %v3017 = vadd.f32 %v2997, %v3016
    %3018 = vdwg.mxu0
    %3019 = vmatpush.msra.mxu0 %v1738
    %3020 = vmatpush.msra.mxu0 %v1730
    %3021 = vmatpush.msra.mxu0 %v1722
    %3022 = vmatpush.msra.mxu0 %v1714
    %3023 = vmatpush.msra.mxu0 %v1706
    %3024 = vmatpush.msra.mxu0 %v1698
    %3025 = vmatpush.msra.mxu0 %v1690
    %3026 = vmatpush.msra.mxu0 %v1682
    %3027 = vmatpush.msra.mxu0 %v1674
    %3028 = vmatpush.msra.mxu0 %v1666
    %3029 = vmatpush.msra.mxu0 %v1658
    %3030 = vmatpush.msra.mxu0 %v1650
    %3031 = vmatpush.msra.mxu0 %v1642
    %3032 = vmatpush.msra.mxu0 %v1634
    %3033 = vmatpush.msra.mxu0 %v1626
    %3034 = vmatpush.msra.mxu0 %v1618
    %3035 = vmatmul.f32.gmra.mxu0 %v2855
    %v3036 = vpop.f32.mrf.mxu0
    %v3037 = vadd.f32 0.0, %v3036
    %3038 = vdwg.mxu0
    %3039 = vmatpush.msra.mxu0 %v1866
    %3040 = vmatpush.msra.mxu0 %v1858
    %3041 = vmatpush.msra.mxu0 %v1850
    %3042 = vmatpush.msra.mxu0 %v1842
    %3043 = vmatpush.msra.mxu0 %v1834
    %3044 = vmatpush.msra.mxu0 %v1826
    %3045 = vmatpush.msra.mxu0 %v1818
    %3046 = vmatpush.msra.mxu0 %v1810
    %3047 = vmatpush.msra.mxu0 %v1802
    %3048 = vmatpush.msra.mxu0 %v1794
    %3049 = vmatpush.msra.mxu0 %v1786
    %3050 = vmatpush.msra.mxu0 %v1778
    %3051 = vmatpush.msra.mxu0 %v1770
    %3052 = vmatpush.msra.mxu0 %v1762
    %3053 = vmatpush.msra.mxu0 %v1754
    %3054 = vmatpush.msra.mxu0 %v1746
    %3055 = vmatmul.f32.gmra.mxu0 %v2856
    %v3056 = vpop.f32.mrf.mxu0
    %v3057 = vadd.f32 %v3037, %v3056
    %3058 = vdwg.mxu0
    %3059 = vmatpush.msra.mxu0 %v1739
    %3060 = vmatpush.msra.mxu0 %v1731
    %3061 = vmatpush.msra.mxu0 %v1723
    %3062 = vmatpush.msra.mxu0 %v1715
    %3063 = vmatpush.msra.mxu0 %v1707
    %3064 = vmatpush.msra.mxu0 %v1699
    %3065 = vmatpush.msra.mxu0 %v1691
    %3066 = vmatpush.msra.mxu0 %v1683
    %3067 = vmatpush.msra.mxu0 %v1675
    %3068 = vmatpush.msra.mxu0 %v1667
    %3069 = vmatpush.msra.mxu0 %v1659
    %3070 = vmatpush.msra.mxu0 %v1651
    %3071 = vmatpush.msra.mxu0 %v1643
    %3072 = vmatpush.msra.mxu0 %v1635
    %3073 = vmatpush.msra.mxu0 %v1627
    %3074 = vmatpush.msra.mxu0 %v1619
    %3075 = vmatmul.f32.gmra.mxu0 %v2855
    %v3076 = vpop.f32.mrf.mxu0
    %v3077 = vadd.f32 0.0, %v3076
    %3078 = vdwg.mxu0
    %3079 = vmatpush.msra.mxu0 %v1867
    %3080 = vmatpush.msra.mxu0 %v1859
    %3081 = vmatpush.msra.mxu0 %v1851
    %3082 = vmatpush.msra.mxu0 %v1843
    %3083 = vmatpush.msra.mxu0 %v1835
    %3084 = vmatpush.msra.mxu0 %v1827
    %3085 = vmatpush.msra.mxu0 %v1819
    %3086 = vmatpush.msra.mxu0 %v1811
    %3087 = vmatpush.msra.mxu0 %v1803
    %3088 = vmatpush.msra.mxu0 %v1795
    %3089 = vmatpush.msra.mxu0 %v1787
    %3090 = vmatpush.msra.mxu0 %v1779
    %3091 = vmatpush.msra.mxu0 %v1771
    %3092 = vmatpush.msra.mxu0 %v1763
    %3093 = vmatpush.msra.mxu0 %v1755
    %3094 = vmatpush.msra.mxu0 %v1747
    %3095 = vmatmul.f32.gmra.mxu0 %v2856
    %v3096 = vpop.f32.mrf.mxu0
    %v3097 = vadd.f32 %v3077, %v3096
    %3098 = vdwg.mxu0
    %3099 = vmatpush.msra.mxu0 %v1740
    %3100 = vmatpush.msra.mxu0 %v1732
    %3101 = vmatpush.msra.mxu0 %v1724
    %3102 = vmatpush.msra.mxu0 %v1716
    %3103 = vmatpush.msra.mxu0 %v1708
    %3104 = vmatpush.msra.mxu0 %v1700
    %3105 = vmatpush.msra.mxu0 %v1692
    %3106 = vmatpush.msra.mxu0 %v1684
    %3107 = vmatpush.msra.mxu0 %v1676
    %3108 = vmatpush.msra.mxu0 %v1668
    %3109 = vmatpush.msra.mxu0 %v1660
    %3110 = vmatpush.msra.mxu0 %v1652
    %3111 = vmatpush.msra.mxu0 %v1644
    %3112 = vmatpush.msra.mxu0 %v1636
    %3113 = vmatpush.msra.mxu0 %v1628
    %3114 = vmatpush.msra.mxu0 %v1620
    %3115 = vmatmul.f32.gmra.mxu0 %v2855
    %v3116 = vpop.f32.mrf.mxu0
    %v3117 = vadd.f32 0.0, %v3116
    %3118 = vdwg.mxu0
    %3119 = vmatpush.msra.mxu0 %v1868
    %3120 = vmatpush.msra.mxu0 %v1860
    %3121 = vmatpush.msra.mxu0 %v1852
    %3122 = vmatpush.msra.mxu0 %v1844
    %3123 = vmatpush.msra.mxu0 %v1836
    %3124 = vmatpush.msra.mxu0 %v1828
    %3125 = vmatpush.msra.mxu0 %v1820
    %3126 = vmatpush.msra.mxu0 %v1812
    %3127 = vmatpush.msra.mxu0 %v1804
    %3128 = vmatpush.msra.mxu0 %v1796
    %3129 = vmatpush.msra.mxu0 %v1788
    %3130 = vmatpush.msra.mxu0 %v1780
    %3131 = vmatpush.msra.mxu0 %v1772
    %3132 = vmatpush.msra.mxu0 %v1764
    %3133 = vmatpush.msra.mxu0 %v1756
    %3134 = vmatpush.msra.mxu0 %v1748
    %3135 = vmatmul.f32.gmra.mxu0 %v2856
    %v3136 = vpop.f32.mrf.mxu0
    %v3137 = vadd.f32 %v3117, %v3136
    %3138 = vdwg.mxu0
    %3139 = vmatpush.msra.mxu0 %v1741
    %3140 = vmatpush.msra.mxu0 %v1733
    %3141 = vmatpush.msra.mxu0 %v1725
    %3142 = vmatpush.msra.mxu0 %v1717
    %3143 = vmatpush.msra.mxu0 %v1709
    %3144 = vmatpush.msra.mxu0 %v1701
    %3145 = vmatpush.msra.mxu0 %v1693
    %3146 = vmatpush.msra.mxu0 %v1685
    %3147 = vmatpush.msra.mxu0 %v1677
    %3148 = vmatpush.msra.mxu0 %v1669
    %3149 = vmatpush.msra.mxu0 %v1661
    %3150 = vmatpush.msra.mxu0 %v1653
    %3151 = vmatpush.msra.mxu0 %v1645
    %3152 = vmatpush.msra.mxu0 %v1637
    %3153 = vmatpush.msra.mxu0 %v1629
    %3154 = vmatpush.msra.mxu0 %v1621
    %3155 = vmatmul.f32.gmra.mxu0 %v2855
    %v3156 = vpop.f32.mrf.mxu0
    %v3157 = vadd.f32 0.0, %v3156
    %3158 = vdwg.mxu0
    %3159 = vmatpush.msra.mxu0 %v1869
    %3160 = vmatpush.msra.mxu0 %v1861
    %3161 = vmatpush.msra.mxu0 %v1853
    %3162 = vmatpush.msra.mxu0 %v1845
    %3163 = vmatpush.msra.mxu0 %v1837
    %3164 = vmatpush.msra.mxu0 %v1829
    %3165 = vmatpush.msra.mxu0 %v1821
    %3166 = vmatpush.msra.mxu0 %v1813
    %3167 = vmatpush.msra.mxu0 %v1805
    %3168 = vmatpush.msra.mxu0 %v1797
    %3169 = vmatpush.msra.mxu0 %v1789
    %3170 = vmatpush.msra.mxu0 %v1781
    %3171 = vmatpush.msra.mxu0 %v1773
    %3172 = vmatpush.msra.mxu0 %v1765
    %3173 = vmatpush.msra.mxu0 %v1757
    %3174 = vmatpush.msra.mxu0 %v1749
    %3175 = vmatmul.f32.gmra.mxu0 %v2856
    %v3176 = vpop.f32.mrf.mxu0
    %v3177 = vadd.f32 %v3157, %v3176
    %3178 = vdwg.mxu0
    %v3179 = vadd.f32 %v2847, %v2897
    %v3180 = vadd.f32 %v2848, %v2937
    %v3181 = vadd.f32 %v2849, %v2977
    %v3182 = vadd.f32 %v2850, %v3017
    %v3183 = vadd.f32 %v2851, %v3057
    %v3184 = vadd.f32 %v2852, %v3097
    %v3185 = vadd.f32 %v2853, %v3137
    %v3186 = vadd.f32 %v2854, %v3177
    %v3187 = vxor.u32 %v3179, 2147483648
    %v3188 = vxor.u32 %v3180, 2147483648
    %v3189 = vmul.f32 %v3187, 1.442695
    %v3190 = vpow.pop %v3189
    %v3191 = vmul.f32 %v3188, 1.442695
    %v3192 = vpow.pop %v3191
    %v3193 = vadd.f32 %v3190, 1.0
    %v3194 = vadd.f32 %v3192, 1.0
    %v3195 = vrcp.pop %v3193
    %v3196 = vmul.f32 %v3193, %v3195
    %v3197 = vsub.f32 1.0, %v3196
    %v3198 = vmul.f32 %v3195, %v3197
    %v3199 = vadd.f32 %v3195, %v3198
    %vm3200 = vweird.f32 %v3193
    %vm3201 = vweird.f32 %v3195
    %vm3202 = vmor %vm3200, %vm3201
    %v3203 = vsel %vm3202, %v3195, %v3199
    %v3204 = vand.u32 2147483647, %v3193
    %vm3205 = vcmp.eq.f32.partialorder %v3204, 8.507059e+37
    %v3206 = vand.u32 %v3193, 2147483648
    %v3207 = vor.u32 1.1754944e-38, %v3206
    %v3208 = vsel %vm3205, %v3207, %v3203
    %v3209 = vmul.f32 1.0, %v3208
    %v3210 = vrcp.pop %v3194
    %v3211 = vmul.f32 %v3194, %v3210
    %v3212 = vsub.f32 1.0, %v3211
    %v3213 = vmul.f32 %v3210, %v3212
    %v3214 = vadd.f32 %v3210, %v3213
    %vm3215 = vweird.f32 %v3194
    %vm3216 = vweird.f32 %v3210
    %vm3217 = vmor %vm3215, %vm3216
    %v3218 = vsel %vm3217, %v3210, %v3214
    %v3219 = vand.u32 2147483647, %v3194
    %vm3220 = vcmp.eq.f32.partialorder %v3219, 8.507059e+37
    %v3221 = vand.u32 %v3194, 2147483648
    %v3222 = vor.u32 1.1754944e-38, %v3221
    %v3223 = vsel %vm3220, %v3222, %v3218
    %v3224 = vmul.f32 1.0, %v3223
    %v3225 = vxor.u32 %v3181, 2147483648
    %v3226 = vxor.u32 %v3182, 2147483648
    %v3227 = vmul.f32 %v3225, 1.442695
    %v3228 = vpow.pop %v3227
    %v3229 = vmul.f32 %v3226, 1.442695
    %v3230 = vpow.pop %v3229
    %v3231 = vadd.f32 %v3228, 1.0
    %v3232 = vadd.f32 %v3230, 1.0
    %v3233 = vrcp.pop %v3231
    %v3234 = vmul.f32 %v3231, %v3233
    %v3235 = vsub.f32 1.0, %v3234
    %v3236 = vmul.f32 %v3233, %v3235
    %v3237 = vadd.f32 %v3233, %v3236
    %vm3238 = vweird.f32 %v3231
    %vm3239 = vweird.f32 %v3233
    %vm3240 = vmor %vm3238, %vm3239
    %v3241 = vsel %vm3240, %v3233, %v3237
    %v3242 = vand.u32 2147483647, %v3231
    %vm3243 = vcmp.eq.f32.partialorder %v3242, 8.507059e+37
    %v3244 = vand.u32 %v3231, 2147483648
    %v3245 = vor.u32 1.1754944e-38, %v3244
    %v3246 = vsel %vm3243, %v3245, %v3241
    %v3247 = vmul.f32 1.0, %v3246
    %v3248 = vrcp.pop %v3232
    %v3249 = vmul.f32 %v3232, %v3248
    %v3250 = vsub.f32 1.0, %v3249
    %v3251 = vmul.f32 %v3248, %v3250
    %v3252 = vadd.f32 %v3248, %v3251
    %vm3253 = vweird.f32 %v3232
    %vm3254 = vweird.f32 %v3248
    %vm3255 = vmor %vm3253, %vm3254
    %v3256 = vsel %vm3255, %v3248, %v3252
    %v3257 = vand.u32 2147483647, %v3232
    %vm3258 = vcmp.eq.f32.partialorder %v3257, 8.507059e+37
    %v3259 = vand.u32 %v3232, 2147483648
    %v3260 = vor.u32 1.1754944e-38, %v3259
    %v3261 = vsel %vm3258, %v3260, %v3256
    %v3262 = vmul.f32 1.0, %v3261
    %v3263 = vtanh.pop %v3183
    %v3264 = vtanh.pop %v3184
    %v3265 = vxor.u32 %v3185, 2147483648
    %v3266 = vxor.u32 %v3186, 2147483648
    %v3267 = vmul.f32 %v3265, 1.442695
    %v3268 = vpow.pop %v3267
    %v3269 = vmul.f32 %v3266, 1.442695
    %v3270 = vpow.pop %v3269
    %v3271 = vadd.f32 %v3268, 1.0
    %v3272 = vadd.f32 %v3270, 1.0
    %v3273 = vrcp.pop %v3271
    %v3274 = vmul.f32 %v3271, %v3273
    %v3275 = vsub.f32 1.0, %v3274
    %v3276 = vmul.f32 %v3273, %v3275
    %v3277 = vadd.f32 %v3273, %v3276
    %vm3278 = vweird.f32 %v3271
    %vm3279 = vweird.f32 %v3273
    %vm3280 = vmor %vm3278, %vm3279
    %v3281 = vsel %vm3280, %v3273, %v3277
    %v3282 = vand.u32 2147483647, %v3271
    %vm3283 = vcmp.eq.f32.partialorder %v3282, 8.507059e+37
    %v3284 = vand.u32 %v3271, 2147483648
    %v3285 = vor.u32 1.1754944e-38, %v3284
    %v3286 = vsel %vm3283, %v3285, %v3281
    %v3287 = vmul.f32 1.0, %v3286
    %v3288 = vrcp.pop %v3272
    %v3289 = vmul.f32 %v3272, %v3288
    %v3290 = vsub.f32 1.0, %v3289
    %v3291 = vmul.f32 %v3288, %v3290
    %v3292 = vadd.f32 %v3288, %v3291
    %vm3293 = vweird.f32 %v3272
    %vm3294 = vweird.f32 %v3288
    %vm3295 = vmor %vm3293, %vm3294
    %v3296 = vsel %vm3295, %v3288, %v3292
    %v3297 = vand.u32 2147483647, %v3272
    %vm3298 = vcmp.eq.f32.partialorder %v3297, 8.507059e+37
    %v3299 = vand.u32 %v3272, 2147483648
    %v3300 = vor.u32 1.1754944e-38, %v3299
    %v3301 = vsel %vm3298, %v3300, %v3296
    %v3302 = vmul.f32 1.0, %v3301
    %v3305 = vrot.slane %v2831, 4
    %v3306 = vrot.slane %v2832, 4
    %v3309 = vmul.f32 %v3247, %v3305
    %v3310 = vmul.f32 %v3262, %v3306
    %v3311 = vmul.f32 %v3209, %v3263
    %v3312 = vmul.f32 %v3224, %v3264
    %v3313 = vadd.f32 %v3309, %v3311
    %v3314 = vadd.f32 %v3310, %v3312
    %v3315 = vtanh.pop %v3313
    %v3316 = vtanh.pop %v3314
    %v3317 = vmul.f32 %v3287, %v3315
    %v3318 = vmul.f32 %v3302, %v3316
    %3321 = vst [vmem:[#allocation1] sm:$0xff] %v3317
    %3322 = vst [vmem:[#allocation1 + $0x9] sm:$0xff] %v3318
    %s3323 = scalar_lea.vmem [#allocation1], 3
    %v3324 = vld [vmem:[%s3323] ss:$9 sm:$0xff]
    %s3326 = scalar_lea.vmem [#allocation3], 2
    %3327 = vst.msk [vmem:[%s3326] ss:$8 sm:$0x3] %vm2342, %v3324
    %3328 = vst.msk [vmem:[%s3326] ss:$8 sm:$0x0] %vm2342, %v3324
    %v3329 = vld [vmem:[#allocation2 + $0x40] sm:$0xf0]
    %v3330 = vld [vmem:[#allocation2 + $0x48] sm:$0xf0]
    %v3331 = vld [vmem:[#allocation2 + $0x50] sm:$0xf0]
    %v3332 = vld [vmem:[#allocation2 + $0x58] sm:$0xf0]
    %v3333 = vld [vmem:[#allocation2 + $0x60] sm:$0xf0]
    %v3334 = vld [vmem:[#allocation2 + $0x68] sm:$0xf0]
    %v3335 = vld [vmem:[#allocation2 + $0x70] sm:$0xf0]
    %v3336 = vld [vmem:[#allocation2 + $0x78] sm:$0xf0]
    %3337 = vmatpush.msra.mxu0 %v1734
    %3338 = vmatpush.msra.mxu0 %v1726
    %3339 = vmatpush.msra.mxu0 %v1718
    %3340 = vmatpush.msra.mxu0 %v1710
    %3341 = vmatpush.msra.mxu0 %v1702
    %3342 = vmatpush.msra.mxu0 %v1694
    %3343 = vmatpush.msra.mxu0 %v1686
    %3344 = vmatpush.msra.mxu0 %v1678
    %3345 = vmatpush.msra.mxu0 %v1670
    %3346 = vmatpush.msra.mxu0 %v1662
    %3347 = vmatpush.msra.mxu0 %v1654
    %3348 = vmatpush.msra.mxu0 %v1646
    %3349 = vmatpush.msra.mxu0 %v1638
    %3350 = vmatpush.msra.mxu0 %v1630
    %3351 = vmatpush.msra.mxu0 %v1622
    %3352 = vmatpush.msra.mxu0 %v1614
    %3353 = vmatmul.f32.gmra.mxu0 %v3317
    %v3354 = vpop.f32.mrf.mxu0
    %v3355 = vadd.f32 0.0, %v3354
    %3356 = vdwg.mxu0
    %3357 = vmatpush.msra.mxu0 %v1862
    %3358 = vmatpush.msra.mxu0 %v1854
    %3359 = vmatpush.msra.mxu0 %v1846
    %3360 = vmatpush.msra.mxu0 %v1838
    %3361 = vmatpush.msra.mxu0 %v1830
    %3362 = vmatpush.msra.mxu0 %v1822
    %3363 = vmatpush.msra.mxu0 %v1814
    %3364 = vmatpush.msra.mxu0 %v1806
    %3365 = vmatpush.msra.mxu0 %v1798
    %3366 = vmatpush.msra.mxu0 %v1790
    %3367 = vmatpush.msra.mxu0 %v1782
    %3368 = vmatpush.msra.mxu0 %v1774
    %3369 = vmatpush.msra.mxu0 %v1766
    %3370 = vmatpush.msra.mxu0 %v1758
    %3371 = vmatpush.msra.mxu0 %v1750
    %3372 = vmatpush.msra.mxu0 %v1742
    %3373 = vmatmul.f32.gmra.mxu0 %v3318
    %v3374 = vpop.f32.mrf.mxu0
    %v3375 = vadd.f32 %v3355, %v3374
    %3376 = vdwg.mxu0
    %3377 = vmatpush.msra.mxu0 %v1735
    %3378 = vmatpush.msra.mxu0 %v1727
    %3379 = vmatpush.msra.mxu0 %v1719
    %3380 = vmatpush.msra.mxu0 %v1711
    %3381 = vmatpush.msra.mxu0 %v1703
    %3382 = vmatpush.msra.mxu0 %v1695
    %3383 = vmatpush.msra.mxu0 %v1687
    %3384 = vmatpush.msra.mxu0 %v1679
    %3385 = vmatpush.msra.mxu0 %v1671
    %3386 = vmatpush.msra.mxu0 %v1663
    %3387 = vmatpush.msra.mxu0 %v1655
    %3388 = vmatpush.msra.mxu0 %v1647
    %3389 = vmatpush.msra.mxu0 %v1639
    %3390 = vmatpush.msra.mxu0 %v1631
    %3391 = vmatpush.msra.mxu0 %v1623
    %3392 = vmatpush.msra.mxu0 %v1615
    %3393 = vmatmul.f32.gmra.mxu0 %v3317
    %v3394 = vpop.f32.mrf.mxu0
    %v3395 = vadd.f32 0.0, %v3394
    %3396 = vdwg.mxu0
    %3397 = vmatpush.msra.mxu0 %v1863
    %3398 = vmatpush.msra.mxu0 %v1855
    %3399 = vmatpush.msra.mxu0 %v1847
    %3400 = vmatpush.msra.mxu0 %v1839
    %3401 = vmatpush.msra.mxu0 %v1831
    %3402 = vmatpush.msra.mxu0 %v1823
    %3403 = vmatpush.msra.mxu0 %v1815
    %3404 = vmatpush.msra.mxu0 %v1807
    %3405 = vmatpush.msra.mxu0 %v1799
    %3406 = vmatpush.msra.mxu0 %v1791
    %3407 = vmatpush.msra.mxu0 %v1783
    %3408 = vmatpush.msra.mxu0 %v1775
    %3409 = vmatpush.msra.mxu0 %v1767
    %3410 = vmatpush.msra.mxu0 %v1759
    %3411 = vmatpush.msra.mxu0 %v1751
    %3412 = vmatpush.msra.mxu0 %v1743
    %3413 = vmatmul.f32.gmra.mxu0 %v3318
    %v3414 = vpop.f32.mrf.mxu0
    %v3415 = vadd.f32 %v3395, %v3414
    %3416 = vdwg.mxu0
    %3417 = vmatpush.msra.mxu0 %v1736
    %3418 = vmatpush.msra.mxu0 %v1728
    %3419 = vmatpush.msra.mxu0 %v1720
    %3420 = vmatpush.msra.mxu0 %v1712
    %3421 = vmatpush.msra.mxu0 %v1704
    %3422 = vmatpush.msra.mxu0 %v1696
    %3423 = vmatpush.msra.mxu0 %v1688
    %3424 = vmatpush.msra.mxu0 %v1680
    %3425 = vmatpush.msra.mxu0 %v1672
    %3426 = vmatpush.msra.mxu0 %v1664
    %3427 = vmatpush.msra.mxu0 %v1656
    %3428 = vmatpush.msra.mxu0 %v1648
    %3429 = vmatpush.msra.mxu0 %v1640
    %3430 = vmatpush.msra.mxu0 %v1632
    %3431 = vmatpush.msra.mxu0 %v1624
    %3432 = vmatpush.msra.mxu0 %v1616
    %3433 = vmatmul.f32.gmra.mxu0 %v3317
    %v3434 = vpop.f32.mrf.mxu0
    %v3435 = vadd.f32 0.0, %v3434
    %3436 = vdwg.mxu0
    %3437 = vmatpush.msra.mxu0 %v1864
    %3438 = vmatpush.msra.mxu0 %v1856
    %3439 = vmatpush.msra.mxu0 %v1848
    %3440 = vmatpush.msra.mxu0 %v1840
    %3441 = vmatpush.msra.mxu0 %v1832
    %3442 = vmatpush.msra.mxu0 %v1824
    %3443 = vmatpush.msra.mxu0 %v1816
    %3444 = vmatpush.msra.mxu0 %v1808
    %3445 = vmatpush.msra.mxu0 %v1800
    %3446 = vmatpush.msra.mxu0 %v1792
    %3447 = vmatpush.msra.mxu0 %v1784
    %3448 = vmatpush.msra.mxu0 %v1776
    %3449 = vmatpush.msra.mxu0 %v1768
    %3450 = vmatpush.msra.mxu0 %v1760
    %3451 = vmatpush.msra.mxu0 %v1752
    %3452 = vmatpush.msra.mxu0 %v1744
    %3453 = vmatmul.f32.gmra.mxu0 %v3318
    %v3454 = vpop.f32.mrf.mxu0
    %v3455 = vadd.f32 %v3435, %v3454
    %3456 = vdwg.mxu0
    %3457 = vmatpush.msra.mxu0 %v1737
    %3458 = vmatpush.msra.mxu0 %v1729
    %3459 = vmatpush.msra.mxu0 %v1721
    %3460 = vmatpush.msra.mxu0 %v1713
    %3461 = vmatpush.msra.mxu0 %v1705
    %3462 = vmatpush.msra.mxu0 %v1697
    %3463 = vmatpush.msra.mxu0 %v1689
    %3464 = vmatpush.msra.mxu0 %v1681
    %3465 = vmatpush.msra.mxu0 %v1673
    %3466 = vmatpush.msra.mxu0 %v1665
    %3467 = vmatpush.msra.mxu0 %v1657
    %3468 = vmatpush.msra.mxu0 %v1649
    %3469 = vmatpush.msra.mxu0 %v1641
    %3470 = vmatpush.msra.mxu0 %v1633
    %3471 = vmatpush.msra.mxu0 %v1625
    %3472 = vmatpush.msra.mxu0 %v1617
    %3473 = vmatmul.f32.gmra.mxu0 %v3317
    %v3474 = vpop.f32.mrf.mxu0
    %v3475 = vadd.f32 0.0, %v3474
    %3476 = vdwg.mxu0
    %3477 = vmatpush.msra.mxu0 %v1865
    %3478 = vmatpush.msra.mxu0 %v1857
    %3479 = vmatpush.msra.mxu0 %v1849
    %3480 = vmatpush.msra.mxu0 %v1841
    %3481 = vmatpush.msra.mxu0 %v1833
    %3482 = vmatpush.msra.mxu0 %v1825
    %3483 = vmatpush.msra.mxu0 %v1817
    %3484 = vmatpush.msra.mxu0 %v1809
    %3485 = vmatpush.msra.mxu0 %v1801
    %3486 = vmatpush.msra.mxu0 %v1793
    %3487 = vmatpush.msra.mxu0 %v1785
    %3488 = vmatpush.msra.mxu0 %v1777
    %3489 = vmatpush.msra.mxu0 %v1769
    %3490 = vmatpush.msra.mxu0 %v1761
    %3491 = vmatpush.msra.mxu0 %v1753
    %3492 = vmatpush.msra.mxu0 %v1745
    %3493 = vmatmul.f32.gmra.mxu0 %v3318
    %v3494 = vpop.f32.mrf.mxu0
    %v3495 = vadd.f32 %v3475, %v3494
    %3496 = vdwg.mxu0
    %3497 = vmatpush.msra.mxu0 %v1738
    %3498 = vmatpush.msra.mxu0 %v1730
    %3499 = vmatpush.msra.mxu0 %v1722
    %3500 = vmatpush.msra.mxu0 %v1714
    %3501 = vmatpush.msra.mxu0 %v1706
    %3502 = vmatpush.msra.mxu0 %v1698
    %3503 = vmatpush.msra.mxu0 %v1690
    %3504 = vmatpush.msra.mxu0 %v1682
    %3505 = vmatpush.msra.mxu0 %v1674
    %3506 = vmatpush.msra.mxu0 %v1666
    %3507 = vmatpush.msra.mxu0 %v1658
    %3508 = vmatpush.msra.mxu0 %v1650
    %3509 = vmatpush.msra.mxu0 %v1642
    %3510 = vmatpush.msra.mxu0 %v1634
    %3511 = vmatpush.msra.mxu0 %v1626
    %3512 = vmatpush.msra.mxu0 %v1618
    %3513 = vmatmul.f32.gmra.mxu0 %v3317
    %v3514 = vpop.f32.mrf.mxu0
    %v3515 = vadd.f32 0.0, %v3514
    %3516 = vdwg.mxu0
    %3517 = vmatpush.msra.mxu0 %v1866
    %3518 = vmatpush.msra.mxu0 %v1858
    %3519 = vmatpush.msra.mxu0 %v1850
    %3520 = vmatpush.msra.mxu0 %v1842
    %3521 = vmatpush.msra.mxu0 %v1834
    %3522 = vmatpush.msra.mxu0 %v1826
    %3523 = vmatpush.msra.mxu0 %v1818
    %3524 = vmatpush.msra.mxu0 %v1810
    %3525 = vmatpush.msra.mxu0 %v1802
    %3526 = vmatpush.msra.mxu0 %v1794
    %3527 = vmatpush.msra.mxu0 %v1786
    %3528 = vmatpush.msra.mxu0 %v1778
    %3529 = vmatpush.msra.mxu0 %v1770
    %3530 = vmatpush.msra.mxu0 %v1762
    %3531 = vmatpush.msra.mxu0 %v1754
    %3532 = vmatpush.msra.mxu0 %v1746
    %3533 = vmatmul.f32.gmra.mxu0 %v3318
    %v3534 = vpop.f32.mrf.mxu0
    %v3535 = vadd.f32 %v3515, %v3534
    %3536 = vdwg.mxu0
    %3537 = vmatpush.msra.mxu0 %v1739
    %3538 = vmatpush.msra.mxu0 %v1731
    %3539 = vmatpush.msra.mxu0 %v1723
    %3540 = vmatpush.msra.mxu0 %v1715
    %3541 = vmatpush.msra.mxu0 %v1707
    %3542 = vmatpush.msra.mxu0 %v1699
    %3543 = vmatpush.msra.mxu0 %v1691
    %3544 = vmatpush.msra.mxu0 %v1683
    %3545 = vmatpush.msra.mxu0 %v1675
    %3546 = vmatpush.msra.mxu0 %v1667
    %3547 = vmatpush.msra.mxu0 %v1659
    %3548 = vmatpush.msra.mxu0 %v1651
    %3549 = vmatpush.msra.mxu0 %v1643
    %3550 = vmatpush.msra.mxu0 %v1635
    %3551 = vmatpush.msra.mxu0 %v1627
    %3552 = vmatpush.msra.mxu0 %v1619
    %3553 = vmatmul.f32.gmra.mxu0 %v3317
    %v3554 = vpop.f32.mrf.mxu0
    %v3555 = vadd.f32 0.0, %v3554
    %3556 = vdwg.mxu0
    %3557 = vmatpush.msra.mxu0 %v1867
    %3558 = vmatpush.msra.mxu0 %v1859
    %3559 = vmatpush.msra.mxu0 %v1851
    %3560 = vmatpush.msra.mxu0 %v1843
    %3561 = vmatpush.msra.mxu0 %v1835
    %3562 = vmatpush.msra.mxu0 %v1827
    %3563 = vmatpush.msra.mxu0 %v1819
    %3564 = vmatpush.msra.mxu0 %v1811
    %3565 = vmatpush.msra.mxu0 %v1803
    %3566 = vmatpush.msra.mxu0 %v1795
    %3567 = vmatpush.msra.mxu0 %v1787
    %3568 = vmatpush.msra.mxu0 %v1779
    %3569 = vmatpush.msra.mxu0 %v1771
    %3570 = vmatpush.msra.mxu0 %v1763
    %3571 = vmatpush.msra.mxu0 %v1755
    %3572 = vmatpush.msra.mxu0 %v1747
    %3573 = vmatmul.f32.gmra.mxu0 %v3318
    %v3574 = vpop.f32.mrf.mxu0
    %v3575 = vadd.f32 %v3555, %v3574
    %3576 = vdwg.mxu0
    %3577 = vmatpush.msra.mxu0 %v1740
    %3578 = vmatpush.msra.mxu0 %v1732
    %3579 = vmatpush.msra.mxu0 %v1724
    %3580 = vmatpush.msra.mxu0 %v1716
    %3581 = vmatpush.msra.mxu0 %v1708
    %3582 = vmatpush.msra.mxu0 %v1700
    %3583 = vmatpush.msra.mxu0 %v1692
    %3584 = vmatpush.msra.mxu0 %v1684
    %3585 = vmatpush.msra.mxu0 %v1676
    %3586 = vmatpush.msra.mxu0 %v1668
    %3587 = vmatpush.msra.mxu0 %v1660
    %3588 = vmatpush.msra.mxu0 %v1652
    %3589 = vmatpush.msra.mxu0 %v1644
    %3590 = vmatpush.msra.mxu0 %v1636
    %3591 = vmatpush.msra.mxu0 %v1628
    %3592 = vmatpush.msra.mxu0 %v1620
    %3593 = vmatmul.f32.gmra.mxu0 %v3317
    %v3594 = vpop.f32.mrf.mxu0
    %v3595 = vadd.f32 0.0, %v3594
    %3596 = vdwg.mxu0
    %3597 = vmatpush.msra.mxu0 %v1868
    %3598 = vmatpush.msra.mxu0 %v1860
    %3599 = vmatpush.msra.mxu0 %v1852
    %3600 = vmatpush.msra.mxu0 %v1844
    %3601 = vmatpush.msra.mxu0 %v1836
    %3602 = vmatpush.msra.mxu0 %v1828
    %3603 = vmatpush.msra.mxu0 %v1820
    %3604 = vmatpush.msra.mxu0 %v1812
    %3605 = vmatpush.msra.mxu0 %v1804
    %3606 = vmatpush.msra.mxu0 %v1796
    %3607 = vmatpush.msra.mxu0 %v1788
    %3608 = vmatpush.msra.mxu0 %v1780
    %3609 = vmatpush.msra.mxu0 %v1772
    %3610 = vmatpush.msra.mxu0 %v1764
    %3611 = vmatpush.msra.mxu0 %v1756
    %3612 = vmatpush.msra.mxu0 %v1748
    %3613 = vmatmul.f32.gmra.mxu0 %v3318
    %v3614 = vpop.f32.mrf.mxu0
    %v3615 = vadd.f32 %v3595, %v3614
    %3616 = vdwg.mxu0
    %3617 = vmatpush.msra.mxu0 %v1741
    %3618 = vmatpush.msra.mxu0 %v1733
    %3619 = vmatpush.msra.mxu0 %v1725
    %3620 = vmatpush.msra.mxu0 %v1717
    %3621 = vmatpush.msra.mxu0 %v1709
    %3622 = vmatpush.msra.mxu0 %v1701
    %3623 = vmatpush.msra.mxu0 %v1693
    %3624 = vmatpush.msra.mxu0 %v1685
    %3625 = vmatpush.msra.mxu0 %v1677
    %3626 = vmatpush.msra.mxu0 %v1669
    %3627 = vmatpush.msra.mxu0 %v1661
    %3628 = vmatpush.msra.mxu0 %v1653
    %3629 = vmatpush.msra.mxu0 %v1645
    %3630 = vmatpush.msra.mxu0 %v1637
    %3631 = vmatpush.msra.mxu0 %v1629
    %3632 = vmatpush.msra.mxu0 %v1621
    %3633 = vmatmul.f32.gmra.mxu0 %v3317
    %v3634 = vpop.f32.mrf.mxu0
    %v3635 = vadd.f32 0.0, %v3634
    %3636 = vdwg.mxu0
    %3637 = vmatpush.msra.mxu0 %v1869
    %3638 = vmatpush.msra.mxu0 %v1861
    %3639 = vmatpush.msra.mxu0 %v1853
    %3640 = vmatpush.msra.mxu0 %v1845
    %3641 = vmatpush.msra.mxu0 %v1837
    %3642 = vmatpush.msra.mxu0 %v1829
    %3643 = vmatpush.msra.mxu0 %v1821
    %3644 = vmatpush.msra.mxu0 %v1813
    %3645 = vmatpush.msra.mxu0 %v1805
    %3646 = vmatpush.msra.mxu0 %v1797
    %3647 = vmatpush.msra.mxu0 %v1789
    %3648 = vmatpush.msra.mxu0 %v1781
    %3649 = vmatpush.msra.mxu0 %v1773
    %3650 = vmatpush.msra.mxu0 %v1765
    %3651 = vmatpush.msra.mxu0 %v1757
    %3652 = vmatpush.msra.mxu0 %v1749
    %3653 = vmatmul.f32.gmra.mxu0 %v3318
    %v3654 = vpop.f32.mrf.mxu0
    %v3655 = vadd.f32 %v3635, %v3654
    %3656 = vdwg.mxu0
    %v3665 = vrot.slane %v3375, 4
    %v3666 = vrot.slane %v3415, 4
    %v3667 = vrot.slane %v3455, 4
    %v3668 = vrot.slane %v3495, 4
    %v3669 = vrot.slane %v3535, 4
    %v3670 = vrot.slane %v3575, 4
    %v3671 = vrot.slane %v3615, 4
    %v3672 = vrot.slane %v3655, 4
    %v3681 = vadd.f32 %v3329, %v3665
    %v3682 = vadd.f32 %v3330, %v3666
    %v3683 = vadd.f32 %v3331, %v3667
    %v3684 = vadd.f32 %v3332, %v3668
    %v3685 = vadd.f32 %v3333, %v3669
    %v3686 = vadd.f32 %v3334, %v3670
    %v3687 = vadd.f32 %v3335, %v3671
    %v3688 = vadd.f32 %v3336, %v3672
    %v3689 = vxor.u32 %v3681, 2147483648
    %v3690 = vxor.u32 %v3682, 2147483648
    %v3691 = vmul.f32 %v3689, 1.442695
    %v3692 = vpow.pop %v3691
    %v3693 = vmul.f32 %v3690, 1.442695
    %v3694 = vpow.pop %v3693
    %v3695 = vadd.f32 %v3692, 1.0
    %v3696 = vadd.f32 %v3694, 1.0
    %v3697 = vrcp.pop %v3695
    %v3698 = vmul.f32 %v3695, %v3697
    %v3699 = vsub.f32 1.0, %v3698
    %v3700 = vmul.f32 %v3697, %v3699
    %v3701 = vadd.f32 %v3697, %v3700
    %vm3702 = vweird.f32 %v3695
    %vm3703 = vweird.f32 %v3697
    %vm3704 = vmor %vm3702, %vm3703
    %v3705 = vsel %vm3704, %v3697, %v3701
    %v3706 = vand.u32 2147483647, %v3695
    %vm3707 = vcmp.eq.f32.partialorder %v3706, 8.507059e+37
    %v3708 = vand.u32 %v3695, 2147483648
    %v3709 = vor.u32 1.1754944e-38, %v3708
    %v3710 = vsel %vm3707, %v3709, %v3705
    %v3711 = vmul.f32 1.0, %v3710
    %v3712 = vrcp.pop %v3696
    %v3713 = vmul.f32 %v3696, %v3712
    %v3714 = vsub.f32 1.0, %v3713
    %v3715 = vmul.f32 %v3712, %v3714
    %v3716 = vadd.f32 %v3712, %v3715
    %vm3717 = vweird.f32 %v3696
    %vm3718 = vweird.f32 %v3712
    %vm3719 = vmor %vm3717, %vm3718
    %v3720 = vsel %vm3719, %v3712, %v3716
    %v3721 = vand.u32 2147483647, %v3696
    %vm3722 = vcmp.eq.f32.partialorder %v3721, 8.507059e+37
    %v3723 = vand.u32 %v3696, 2147483648
    %v3724 = vor.u32 1.1754944e-38, %v3723
    %v3725 = vsel %vm3722, %v3724, %v3720
    %v3726 = vmul.f32 1.0, %v3725
    %v3727 = vxor.u32 %v3683, 2147483648
    %v3728 = vxor.u32 %v3684, 2147483648
    %v3729 = vmul.f32 %v3727, 1.442695
    %v3730 = vpow.pop %v3729
    %v3731 = vmul.f32 %v3728, 1.442695
    %v3732 = vpow.pop %v3731
    %v3733 = vadd.f32 %v3730, 1.0
    %v3734 = vadd.f32 %v3732, 1.0
    %v3735 = vrcp.pop %v3733
    %v3736 = vmul.f32 %v3733, %v3735
    %v3737 = vsub.f32 1.0, %v3736
    %v3738 = vmul.f32 %v3735, %v3737
    %v3739 = vadd.f32 %v3735, %v3738
    %vm3740 = vweird.f32 %v3733
    %vm3741 = vweird.f32 %v3735
    %vm3742 = vmor %vm3740, %vm3741
    %v3743 = vsel %vm3742, %v3735, %v3739
    %v3744 = vand.u32 2147483647, %v3733
    %vm3745 = vcmp.eq.f32.partialorder %v3744, 8.507059e+37
    %v3746 = vand.u32 %v3733, 2147483648
    %v3747 = vor.u32 1.1754944e-38, %v3746
    %v3748 = vsel %vm3745, %v3747, %v3743
    %v3749 = vmul.f32 1.0, %v3748
    %v3750 = vrcp.pop %v3734
    %v3751 = vmul.f32 %v3734, %v3750
    %v3752 = vsub.f32 1.0, %v3751
    %v3753 = vmul.f32 %v3750, %v3752
    %v3754 = vadd.f32 %v3750, %v3753
    %vm3755 = vweird.f32 %v3734
    %vm3756 = vweird.f32 %v3750
    %vm3757 = vmor %vm3755, %vm3756
    %v3758 = vsel %vm3757, %v3750, %v3754
    %v3759 = vand.u32 2147483647, %v3734
    %vm3760 = vcmp.eq.f32.partialorder %v3759, 8.507059e+37
    %v3761 = vand.u32 %v3734, 2147483648
    %v3762 = vor.u32 1.1754944e-38, %v3761
    %v3763 = vsel %vm3760, %v3762, %v3758
    %v3764 = vmul.f32 1.0, %v3763
    %v3765 = vtanh.pop %v3685
    %v3766 = vtanh.pop %v3686
    %v3767 = vxor.u32 %v3687, 2147483648
    %v3768 = vxor.u32 %v3688, 2147483648
    %v3769 = vmul.f32 %v3767, 1.442695
    %v3770 = vpow.pop %v3769
    %v3771 = vmul.f32 %v3768, 1.442695
    %v3772 = vpow.pop %v3771
    %v3773 = vadd.f32 %v3770, 1.0
    %v3774 = vadd.f32 %v3772, 1.0
    %v3775 = vrcp.pop %v3773
    %v3776 = vmul.f32 %v3773, %v3775
    %v3777 = vsub.f32 1.0, %v3776
    %v3778 = vmul.f32 %v3775, %v3777
    %v3779 = vadd.f32 %v3775, %v3778
    %vm3780 = vweird.f32 %v3773
    %vm3781 = vweird.f32 %v3775
    %vm3782 = vmor %vm3780, %vm3781
    %v3783 = vsel %vm3782, %v3775, %v3779
    %v3784 = vand.u32 2147483647, %v3773
    %vm3785 = vcmp.eq.f32.partialorder %v3784, 8.507059e+37
    %v3786 = vand.u32 %v3773, 2147483648
    %v3787 = vor.u32 1.1754944e-38, %v3786
    %v3788 = vsel %vm3785, %v3787, %v3783
    %v3789 = vmul.f32 1.0, %v3788
    %v3790 = vrcp.pop %v3774
    %v3791 = vmul.f32 %v3774, %v3790
    %v3792 = vsub.f32 1.0, %v3791
    %v3793 = vmul.f32 %v3790, %v3792
    %v3794 = vadd.f32 %v3790, %v3793
    %vm3795 = vweird.f32 %v3774
    %vm3796 = vweird.f32 %v3790
    %vm3797 = vmor %vm3795, %vm3796
    %v3798 = vsel %vm3797, %v3790, %v3794
    %v3799 = vand.u32 2147483647, %v3774
    %vm3800 = vcmp.eq.f32.partialorder %v3799, 8.507059e+37
    %v3801 = vand.u32 %v3774, 2147483648
    %v3802 = vor.u32 1.1754944e-38, %v3801
    %v3803 = vsel %vm3800, %v3802, %v3798
    %v3804 = vmul.f32 1.0, %v3803
    %v3807 = vrot.slane %v3313, 4
    %v3808 = vrot.slane %v3314, 4
    %v3811 = vmul.f32 %v3749, %v3807
    %v3812 = vmul.f32 %v3764, %v3808
    %v3813 = vmul.f32 %v3711, %v3765
    %v3814 = vmul.f32 %v3726, %v3766
    %v3815 = vadd.f32 %v3811, %v3813
    %v3816 = vadd.f32 %v3812, %v3814
    %v3817 = vtanh.pop %v3815
    %v3818 = vtanh.pop %v3816
    %v3819 = vmul.f32 %v3789, %v3817
    %v3820 = vmul.f32 %v3804, %v3818
    %3823 = vst [vmem:[#allocation1] sm:$0xff] %v3819
    %3824 = vst [vmem:[#allocation1 + $0x9] sm:$0xff] %v3820
    %s3825 = scalar_lea.vmem [#allocation1], 7
    %v3826 = vld [vmem:[%s3825] ss:$9 sm:$0xff]
    %s3828 = scalar_lea.vmem [#allocation3], 3
    %3829 = vst.msk [vmem:[%s3828] ss:$8 sm:$0x3] %vm2342, %v3826
    %3830 = vst.msk [vmem:[%s3828] ss:$8 sm:$0x0] %vm2342, %v3826
    %v3831 = vld [vmem:[#allocation2 + $0x80] sm:$0xf]
    %v3832 = vld [vmem:[#allocation2 + $0x88] sm:$0xf]
    %v3833 = vld [vmem:[#allocation2 + $0x90] sm:$0xf]
    %v3834 = vld [vmem:[#allocation2 + $0x98] sm:$0xf]
    %v3835 = vld [vmem:[#allocation2 + $0xa0] sm:$0xf]
    %v3836 = vld [vmem:[#allocation2 + $0xa8] sm:$0xf]
    %v3837 = vld [vmem:[#allocation2 + $0xb0] sm:$0xf]
    %v3838 = vld [vmem:[#allocation2 + $0xb8] sm:$0xf]
    %v3839 = vrot.slane %v3819, 4
    %v3840 = vrot.slane %v3820, 4
    %3843 = vmatpush.msra.mxu0 %v1734
    %3844 = vmatpush.msra.mxu0 %v1726
    %3845 = vmatpush.msra.mxu0 %v1718
    %3846 = vmatpush.msra.mxu0 %v1710
    %3847 = vmatpush.msra.mxu0 %v1702
    %3848 = vmatpush.msra.mxu0 %v1694
    %3849 = vmatpush.msra.mxu0 %v1686
    %3850 = vmatpush.msra.mxu0 %v1678
    %3851 = vmatpush.msra.mxu0 %v1670
    %3852 = vmatpush.msra.mxu0 %v1662
    %3853 = vmatpush.msra.mxu0 %v1654
    %3854 = vmatpush.msra.mxu0 %v1646
    %3855 = vmatpush.msra.mxu0 %v1638
    %3856 = vmatpush.msra.mxu0 %v1630
    %3857 = vmatpush.msra.mxu0 %v1622
    %3858 = vmatpush.msra.mxu0 %v1614
    %3859 = vmatmul.f32.gmra.mxu0 %v3839
    %v3860 = vpop.f32.mrf.mxu0
    %v3861 = vadd.f32 0.0, %v3860
    %3862 = vdwg.mxu0
    %3863 = vmatpush.msra.mxu0 %v1862
    %3864 = vmatpush.msra.mxu0 %v1854
    %3865 = vmatpush.msra.mxu0 %v1846
    %3866 = vmatpush.msra.mxu0 %v1838
    %3867 = vmatpush.msra.mxu0 %v1830
    %3868 = vmatpush.msra.mxu0 %v1822
    %3869 = vmatpush.msra.mxu0 %v1814
    %3870 = vmatpush.msra.mxu0 %v1806
    %3871 = vmatpush.msra.mxu0 %v1798
    %3872 = vmatpush.msra.mxu0 %v1790
    %3873 = vmatpush.msra.mxu0 %v1782
    %3874 = vmatpush.msra.mxu0 %v1774
    %3875 = vmatpush.msra.mxu0 %v1766
    %3876 = vmatpush.msra.mxu0 %v1758
    %3877 = vmatpush.msra.mxu0 %v1750
    %3878 = vmatpush.msra.mxu0 %v1742
    %3879 = vmatmul.f32.gmra.mxu0 %v3840
    %v3880 = vpop.f32.mrf.mxu0
    %v3881 = vadd.f32 %v3861, %v3880
    %3882 = vdwg.mxu0
    %3883 = vmatpush.msra.mxu0 %v1735
    %3884 = vmatpush.msra.mxu0 %v1727
    %3885 = vmatpush.msra.mxu0 %v1719
    %3886 = vmatpush.msra.mxu0 %v1711
    %3887 = vmatpush.msra.mxu0 %v1703
    %3888 = vmatpush.msra.mxu0 %v1695
    %3889 = vmatpush.msra.mxu0 %v1687
    %3890 = vmatpush.msra.mxu0 %v1679
    %3891 = vmatpush.msra.mxu0 %v1671
    %3892 = vmatpush.msra.mxu0 %v1663
    %3893 = vmatpush.msra.mxu0 %v1655
    %3894 = vmatpush.msra.mxu0 %v1647
    %3895 = vmatpush.msra.mxu0 %v1639
    %3896 = vmatpush.msra.mxu0 %v1631
    %3897 = vmatpush.msra.mxu0 %v1623
    %3898 = vmatpush.msra.mxu0 %v1615
    %3899 = vmatmul.f32.gmra.mxu0 %v3839
    %v3900 = vpop.f32.mrf.mxu0
    %v3901 = vadd.f32 0.0, %v3900
    %3902 = vdwg.mxu0
    %3903 = vmatpush.msra.mxu0 %v1863
    %3904 = vmatpush.msra.mxu0 %v1855
    %3905 = vmatpush.msra.mxu0 %v1847
    %3906 = vmatpush.msra.mxu0 %v1839
    %3907 = vmatpush.msra.mxu0 %v1831
    %3908 = vmatpush.msra.mxu0 %v1823
    %3909 = vmatpush.msra.mxu0 %v1815
    %3910 = vmatpush.msra.mxu0 %v1807
    %3911 = vmatpush.msra.mxu0 %v1799
    %3912 = vmatpush.msra.mxu0 %v1791
    %3913 = vmatpush.msra.mxu0 %v1783
    %3914 = vmatpush.msra.mxu0 %v1775
    %3915 = vmatpush.msra.mxu0 %v1767
    %3916 = vmatpush.msra.mxu0 %v1759
    %3917 = vmatpush.msra.mxu0 %v1751
    %3918 = vmatpush.msra.mxu0 %v1743
    %3919 = vmatmul.f32.gmra.mxu0 %v3840
    %v3920 = vpop.f32.mrf.mxu0
    %v3921 = vadd.f32 %v3901, %v3920
    %3922 = vdwg.mxu0
    %3923 = vmatpush.msra.mxu0 %v1736
    %3924 = vmatpush.msra.mxu0 %v1728
    %3925 = vmatpush.msra.mxu0 %v1720
    %3926 = vmatpush.msra.mxu0 %v1712
    %3927 = vmatpush.msra.mxu0 %v1704
    %3928 = vmatpush.msra.mxu0 %v1696
    %3929 = vmatpush.msra.mxu0 %v1688
    %3930 = vmatpush.msra.mxu0 %v1680
    %3931 = vmatpush.msra.mxu0 %v1672
    %3932 = vmatpush.msra.mxu0 %v1664
    %3933 = vmatpush.msra.mxu0 %v1656
    %3934 = vmatpush.msra.mxu0 %v1648
    %3935 = vmatpush.msra.mxu0 %v1640
    %3936 = vmatpush.msra.mxu0 %v1632
    %3937 = vmatpush.msra.mxu0 %v1624
    %3938 = vmatpush.msra.mxu0 %v1616
    %3939 = vmatmul.f32.gmra.mxu0 %v3839
    %v3940 = vpop.f32.mrf.mxu0
    %v3941 = vadd.f32 0.0, %v3940
    %3942 = vdwg.mxu0
    %3943 = vmatpush.msra.mxu0 %v1864
    %3944 = vmatpush.msra.mxu0 %v1856
    %3945 = vmatpush.msra.mxu0 %v1848
    %3946 = vmatpush.msra.mxu0 %v1840
    %3947 = vmatpush.msra.mxu0 %v1832
    %3948 = vmatpush.msra.mxu0 %v1824
    %3949 = vmatpush.msra.mxu0 %v1816
    %3950 = vmatpush.msra.mxu0 %v1808
    %3951 = vmatpush.msra.mxu0 %v1800
    %3952 = vmatpush.msra.mxu0 %v1792
    %3953 = vmatpush.msra.mxu0 %v1784
    %3954 = vmatpush.msra.mxu0 %v1776
    %3955 = vmatpush.msra.mxu0 %v1768
    %3956 = vmatpush.msra.mxu0 %v1760
    %3957 = vmatpush.msra.mxu0 %v1752
    %3958 = vmatpush.msra.mxu0 %v1744
    %3959 = vmatmul.f32.gmra.mxu0 %v3840
    %v3960 = vpop.f32.mrf.mxu0
    %v3961 = vadd.f32 %v3941, %v3960
    %3962 = vdwg.mxu0
    %3963 = vmatpush.msra.mxu0 %v1737
    %3964 = vmatpush.msra.mxu0 %v1729
    %3965 = vmatpush.msra.mxu0 %v1721
    %3966 = vmatpush.msra.mxu0 %v1713
    %3967 = vmatpush.msra.mxu0 %v1705
    %3968 = vmatpush.msra.mxu0 %v1697
    %3969 = vmatpush.msra.mxu0 %v1689
    %3970 = vmatpush.msra.mxu0 %v1681
    %3971 = vmatpush.msra.mxu0 %v1673
    %3972 = vmatpush.msra.mxu0 %v1665
    %3973 = vmatpush.msra.mxu0 %v1657
    %3974 = vmatpush.msra.mxu0 %v1649
    %3975 = vmatpush.msra.mxu0 %v1641
    %3976 = vmatpush.msra.mxu0 %v1633
    %3977 = vmatpush.msra.mxu0 %v1625
    %3978 = vmatpush.msra.mxu0 %v1617
    %3979 = vmatmul.f32.gmra.mxu0 %v3839
    %v3980 = vpop.f32.mrf.mxu0
    %v3981 = vadd.f32 0.0, %v3980
    %3982 = vdwg.mxu0
    %3983 = vmatpush.msra.mxu0 %v1865
    %3984 = vmatpush.msra.mxu0 %v1857
    %3985 = vmatpush.msra.mxu0 %v1849
    %3986 = vmatpush.msra.mxu0 %v1841
    %3987 = vmatpush.msra.mxu0 %v1833
    %3988 = vmatpush.msra.mxu0 %v1825
    %3989 = vmatpush.msra.mxu0 %v1817
    %3990 = vmatpush.msra.mxu0 %v1809
    %3991 = vmatpush.msra.mxu0 %v1801
    %3992 = vmatpush.msra.mxu0 %v1793
    %3993 = vmatpush.msra.mxu0 %v1785
    %3994 = vmatpush.msra.mxu0 %v1777
    %3995 = vmatpush.msra.mxu0 %v1769
    %3996 = vmatpush.msra.mxu0 %v1761
    %3997 = vmatpush.msra.mxu0 %v1753
    %3998 = vmatpush.msra.mxu0 %v1745
    %3999 = vmatmul.f32.gmra.mxu0 %v3840
    %v4000 = vpop.f32.mrf.mxu0
    %v4001 = vadd.f32 %v3981, %v4000
    %4002 = vdwg.mxu0
    %4003 = vmatpush.msra.mxu0 %v1738
    %4004 = vmatpush.msra.mxu0 %v1730
    %4005 = vmatpush.msra.mxu0 %v1722
    %4006 = vmatpush.msra.mxu0 %v1714
    %4007 = vmatpush.msra.mxu0 %v1706
    %4008 = vmatpush.msra.mxu0 %v1698
    %4009 = vmatpush.msra.mxu0 %v1690
    %4010 = vmatpush.msra.mxu0 %v1682
    %4011 = vmatpush.msra.mxu0 %v1674
    %4012 = vmatpush.msra.mxu0 %v1666
    %4013 = vmatpush.msra.mxu0 %v1658
    %4014 = vmatpush.msra.mxu0 %v1650
    %4015 = vmatpush.msra.mxu0 %v1642
    %4016 = vmatpush.msra.mxu0 %v1634
    %4017 = vmatpush.msra.mxu0 %v1626
    %4018 = vmatpush.msra.mxu0 %v1618
    %4019 = vmatmul.f32.gmra.mxu0 %v3839
    %v4020 = vpop.f32.mrf.mxu0
    %v4021 = vadd.f32 0.0, %v4020
    %4022 = vdwg.mxu0
    %4023 = vmatpush.msra.mxu0 %v1866
    %4024 = vmatpush.msra.mxu0 %v1858
    %4025 = vmatpush.msra.mxu0 %v1850
    %4026 = vmatpush.msra.mxu0 %v1842
    %4027 = vmatpush.msra.mxu0 %v1834
    %4028 = vmatpush.msra.mxu0 %v1826
    %4029 = vmatpush.msra.mxu0 %v1818
    %4030 = vmatpush.msra.mxu0 %v1810
    %4031 = vmatpush.msra.mxu0 %v1802
    %4032 = vmatpush.msra.mxu0 %v1794
    %4033 = vmatpush.msra.mxu0 %v1786
    %4034 = vmatpush.msra.mxu0 %v1778
    %4035 = vmatpush.msra.mxu0 %v1770
    %4036 = vmatpush.msra.mxu0 %v1762
    %4037 = vmatpush.msra.mxu0 %v1754
    %4038 = vmatpush.msra.mxu0 %v1746
    %4039 = vmatmul.f32.gmra.mxu0 %v3840
    %v4040 = vpop.f32.mrf.mxu0
    %v4041 = vadd.f32 %v4021, %v4040
    %4042 = vdwg.mxu0
    %4043 = vmatpush.msra.mxu0 %v1739
    %4044 = vmatpush.msra.mxu0 %v1731
    %4045 = vmatpush.msra.mxu0 %v1723
    %4046 = vmatpush.msra.mxu0 %v1715
    %4047 = vmatpush.msra.mxu0 %v1707
    %4048 = vmatpush.msra.mxu0 %v1699
    %4049 = vmatpush.msra.mxu0 %v1691
    %4050 = vmatpush.msra.mxu0 %v1683
    %4051 = vmatpush.msra.mxu0 %v1675
    %4052 = vmatpush.msra.mxu0 %v1667
    %4053 = vmatpush.msra.mxu0 %v1659
    %4054 = vmatpush.msra.mxu0 %v1651
    %4055 = vmatpush.msra.mxu0 %v1643
    %4056 = vmatpush.msra.mxu0 %v1635
    %4057 = vmatpush.msra.mxu0 %v1627
    %4058 = vmatpush.msra.mxu0 %v1619
    %4059 = vmatmul.f32.gmra.mxu0 %v3839
    %v4060 = vpop.f32.mrf.mxu0
    %v4061 = vadd.f32 0.0, %v4060
    %4062 = vdwg.mxu0
    %4063 = vmatpush.msra.mxu0 %v1867
    %4064 = vmatpush.msra.mxu0 %v1859
    %4065 = vmatpush.msra.mxu0 %v1851
    %4066 = vmatpush.msra.mxu0 %v1843
    %4067 = vmatpush.msra.mxu0 %v1835
    %4068 = vmatpush.msra.mxu0 %v1827
    %4069 = vmatpush.msra.mxu0 %v1819
    %4070 = vmatpush.msra.mxu0 %v1811
    %4071 = vmatpush.msra.mxu0 %v1803
    %4072 = vmatpush.msra.mxu0 %v1795
    %4073 = vmatpush.msra.mxu0 %v1787
    %4074 = vmatpush.msra.mxu0 %v1779
    %4075 = vmatpush.msra.mxu0 %v1771
    %4076 = vmatpush.msra.mxu0 %v1763
    %4077 = vmatpush.msra.mxu0 %v1755
    %4078 = vmatpush.msra.mxu0 %v1747
    %4079 = vmatmul.f32.gmra.mxu0 %v3840
    %v4080 = vpop.f32.mrf.mxu0
    %v4081 = vadd.f32 %v4061, %v4080
    %4082 = vdwg.mxu0
    %4083 = vmatpush.msra.mxu0 %v1740
    %4084 = vmatpush.msra.mxu0 %v1732
    %4085 = vmatpush.msra.mxu0 %v1724
    %4086 = vmatpush.msra.mxu0 %v1716
    %4087 = vmatpush.msra.mxu0 %v1708
    %4088 = vmatpush.msra.mxu0 %v1700
    %4089 = vmatpush.msra.mxu0 %v1692
    %4090 = vmatpush.msra.mxu0 %v1684
    %4091 = vmatpush.msra.mxu0 %v1676
    %4092 = vmatpush.msra.mxu0 %v1668
    %4093 = vmatpush.msra.mxu0 %v1660
    %4094 = vmatpush.msra.mxu0 %v1652
    %4095 = vmatpush.msra.mxu0 %v1644
    %4096 = vmatpush.msra.mxu0 %v1636
    %4097 = vmatpush.msra.mxu0 %v1628
    %4098 = vmatpush.msra.mxu0 %v1620
    %4099 = vmatmul.f32.gmra.mxu0 %v3839
    %v4100 = vpop.f32.mrf.mxu0
    %v4101 = vadd.f32 0.0, %v4100
    %4102 = vdwg.mxu0
    %4103 = vmatpush.msra.mxu0 %v1868
    %4104 = vmatpush.msra.mxu0 %v1860
    %4105 = vmatpush.msra.mxu0 %v1852
    %4106 = vmatpush.msra.mxu0 %v1844
    %4107 = vmatpush.msra.mxu0 %v1836
    %4108 = vmatpush.msra.mxu0 %v1828
    %4109 = vmatpush.msra.mxu0 %v1820
    %4110 = vmatpush.msra.mxu0 %v1812
    %4111 = vmatpush.msra.mxu0 %v1804
    %4112 = vmatpush.msra.mxu0 %v1796
    %4113 = vmatpush.msra.mxu0 %v1788
    %4114 = vmatpush.msra.mxu0 %v1780
    %4115 = vmatpush.msra.mxu0 %v1772
    %4116 = vmatpush.msra.mxu0 %v1764
    %4117 = vmatpush.msra.mxu0 %v1756
    %4118 = vmatpush.msra.mxu0 %v1748
    %4119 = vmatmul.f32.gmra.mxu0 %v3840
    %v4120 = vpop.f32.mrf.mxu0
    %v4121 = vadd.f32 %v4101, %v4120
    %4122 = vdwg.mxu0
    %4123 = vmatpush.msra.mxu0 %v1741
    %4124 = vmatpush.msra.mxu0 %v1733
    %4125 = vmatpush.msra.mxu0 %v1725
    %4126 = vmatpush.msra.mxu0 %v1717
    %4127 = vmatpush.msra.mxu0 %v1709
    %4128 = vmatpush.msra.mxu0 %v1701
    %4129 = vmatpush.msra.mxu0 %v1693
    %4130 = vmatpush.msra.mxu0 %v1685
    %4131 = vmatpush.msra.mxu0 %v1677
    %4132 = vmatpush.msra.mxu0 %v1669
    %4133 = vmatpush.msra.mxu0 %v1661
    %4134 = vmatpush.msra.mxu0 %v1653
    %4135 = vmatpush.msra.mxu0 %v1645
    %4136 = vmatpush.msra.mxu0 %v1637
    %4137 = vmatpush.msra.mxu0 %v1629
    %4138 = vmatpush.msra.mxu0 %v1621
    %4139 = vmatmul.f32.gmra.mxu0 %v3839
    %v4140 = vpop.f32.mrf.mxu0
    %v4141 = vadd.f32 0.0, %v4140
    %4142 = vdwg.mxu0
    %4143 = vmatpush.msra.mxu0 %v1869
    %4144 = vmatpush.msra.mxu0 %v1861
    %4145 = vmatpush.msra.mxu0 %v1853
    %4146 = vmatpush.msra.mxu0 %v1845
    %4147 = vmatpush.msra.mxu0 %v1837
    %4148 = vmatpush.msra.mxu0 %v1829
    %4149 = vmatpush.msra.mxu0 %v1821
    %4150 = vmatpush.msra.mxu0 %v1813
    %4151 = vmatpush.msra.mxu0 %v1805
    %4152 = vmatpush.msra.mxu0 %v1797
    %4153 = vmatpush.msra.mxu0 %v1789
    %4154 = vmatpush.msra.mxu0 %v1781
    %4155 = vmatpush.msra.mxu0 %v1773
    %4156 = vmatpush.msra.mxu0 %v1765
    %4157 = vmatpush.msra.mxu0 %v1757
    %4158 = vmatpush.msra.mxu0 %v1749
    %4159 = vmatmul.f32.gmra.mxu0 %v3840
    %v4160 = vpop.f32.mrf.mxu0
    %v4161 = vadd.f32 %v4141, %v4160
    %4162 = vdwg.mxu0
    %v4163 = vadd.f32 %v3831, %v3881
    %v4164 = vadd.f32 %v3832, %v3921
    %v4165 = vadd.f32 %v3833, %v3961
    %v4166 = vadd.f32 %v3834, %v4001
    %v4167 = vadd.f32 %v3835, %v4041
    %v4168 = vadd.f32 %v3836, %v4081
    %v4169 = vadd.f32 %v3837, %v4121
    %v4170 = vadd.f32 %v3838, %v4161
    %v4171 = vxor.u32 %v4163, 2147483648
    %v4172 = vxor.u32 %v4164, 2147483648
    %v4173 = vmul.f32 %v4171, 1.442695
    %v4174 = vpow.pop %v4173
    %v4175 = vmul.f32 %v4172, 1.442695
    %v4176 = vpow.pop %v4175
    %v4177 = vadd.f32 %v4174, 1.0
    %v4178 = vadd.f32 %v4176, 1.0
    %v4179 = vrcp.pop %v4177
    %v4180 = vmul.f32 %v4177, %v4179
    %v4181 = vsub.f32 1.0, %v4180
    %v4182 = vmul.f32 %v4179, %v4181
    %v4183 = vadd.f32 %v4179, %v4182
    %vm4184 = vweird.f32 %v4177
    %vm4185 = vweird.f32 %v4179
    %vm4186 = vmor %vm4184, %vm4185
    %v4187 = vsel %vm4186, %v4179, %v4183
    %v4188 = vand.u32 2147483647, %v4177
    %vm4189 = vcmp.eq.f32.partialorder %v4188, 8.507059e+37
    %v4190 = vand.u32 %v4177, 2147483648
    %v4191 = vor.u32 1.1754944e-38, %v4190
    %v4192 = vsel %vm4189, %v4191, %v4187
    %v4193 = vmul.f32 1.0, %v4192
    %v4194 = vrcp.pop %v4178
    %v4195 = vmul.f32 %v4178, %v4194
    %v4196 = vsub.f32 1.0, %v4195
    %v4197 = vmul.f32 %v4194, %v4196
    %v4198 = vadd.f32 %v4194, %v4197
    %vm4199 = vweird.f32 %v4178
    %vm4200 = vweird.f32 %v4194
    %vm4201 = vmor %vm4199, %vm4200
    %v4202 = vsel %vm4201, %v4194, %v4198
    %v4203 = vand.u32 2147483647, %v4178
    %vm4204 = vcmp.eq.f32.partialorder %v4203, 8.507059e+37
    %v4205 = vand.u32 %v4178, 2147483648
    %v4206 = vor.u32 1.1754944e-38, %v4205
    %v4207 = vsel %vm4204, %v4206, %v4202
    %v4208 = vmul.f32 1.0, %v4207
    %v4209 = vxor.u32 %v4165, 2147483648
    %v4210 = vxor.u32 %v4166, 2147483648
    %v4211 = vmul.f32 %v4209, 1.442695
    %v4212 = vpow.pop %v4211
    %v4213 = vmul.f32 %v4210, 1.442695
    %v4214 = vpow.pop %v4213
    %v4215 = vadd.f32 %v4212, 1.0
    %v4216 = vadd.f32 %v4214, 1.0
    %v4217 = vrcp.pop %v4215
    %v4218 = vmul.f32 %v4215, %v4217
    %v4219 = vsub.f32 1.0, %v4218
    %v4220 = vmul.f32 %v4217, %v4219
    %v4221 = vadd.f32 %v4217, %v4220
    %vm4222 = vweird.f32 %v4215
    %vm4223 = vweird.f32 %v4217
    %vm4224 = vmor %vm4222, %vm4223
    %v4225 = vsel %vm4224, %v4217, %v4221
    %v4226 = vand.u32 2147483647, %v4215
    %vm4227 = vcmp.eq.f32.partialorder %v4226, 8.507059e+37
    %v4228 = vand.u32 %v4215, 2147483648
    %v4229 = vor.u32 1.1754944e-38, %v4228
    %v4230 = vsel %vm4227, %v4229, %v4225
    %v4231 = vmul.f32 1.0, %v4230
    %v4232 = vrcp.pop %v4216
    %v4233 = vmul.f32 %v4216, %v4232
    %v4234 = vsub.f32 1.0, %v4233
    %v4235 = vmul.f32 %v4232, %v4234
    %v4236 = vadd.f32 %v4232, %v4235
    %vm4237 = vweird.f32 %v4216
    %vm4238 = vweird.f32 %v4232
    %vm4239 = vmor %vm4237, %vm4238
    %v4240 = vsel %vm4239, %v4232, %v4236
    %v4241 = vand.u32 2147483647, %v4216
    %vm4242 = vcmp.eq.f32.partialorder %v4241, 8.507059e+37
    %v4243 = vand.u32 %v4216, 2147483648
    %v4244 = vor.u32 1.1754944e-38, %v4243
    %v4245 = vsel %vm4242, %v4244, %v4240
    %v4246 = vmul.f32 1.0, %v4245
    %v4247 = vtanh.pop %v4167
    %v4248 = vtanh.pop %v4168
    %v4249 = vxor.u32 %v4169, 2147483648
    %v4250 = vxor.u32 %v4170, 2147483648
    %v4251 = vmul.f32 %v4249, 1.442695
    %v4252 = vpow.pop %v4251
    %v4253 = vmul.f32 %v4250, 1.442695
    %v4254 = vpow.pop %v4253
    %v4255 = vadd.f32 %v4252, 1.0
    %v4256 = vadd.f32 %v4254, 1.0
    %v4257 = vrcp.pop %v4255
    %v4258 = vmul.f32 %v4255, %v4257
    %v4259 = vsub.f32 1.0, %v4258
    %v4260 = vmul.f32 %v4257, %v4259
    %v4261 = vadd.f32 %v4257, %v4260
    %vm4262 = vweird.f32 %v4255
    %vm4263 = vweird.f32 %v4257
    %vm4264 = vmor %vm4262, %vm4263
    %v4265 = vsel %vm4264, %v4257, %v4261
    %v4266 = vand.u32 2147483647, %v4255
    %vm4267 = vcmp.eq.f32.partialorder %v4266, 8.507059e+37
    %v4268 = vand.u32 %v4255, 2147483648
    %v4269 = vor.u32 1.1754944e-38, %v4268
    %v4270 = vsel %vm4267, %v4269, %v4265
    %v4271 = vmul.f32 1.0, %v4270
    %v4272 = vrcp.pop %v4256
    %v4273 = vmul.f32 %v4256, %v4272
    %v4274 = vsub.f32 1.0, %v4273
    %v4275 = vmul.f32 %v4272, %v4274
    %v4276 = vadd.f32 %v4272, %v4275
    %vm4277 = vweird.f32 %v4256
    %vm4278 = vweird.f32 %v4272
    %vm4279 = vmor %vm4277, %vm4278
    %v4280 = vsel %vm4279, %v4272, %v4276
    %v4281 = vand.u32 2147483647, %v4256
    %vm4282 = vcmp.eq.f32.partialorder %v4281, 8.507059e+37
    %v4283 = vand.u32 %v4256, 2147483648
    %v4284 = vor.u32 1.1754944e-38, %v4283
    %v4285 = vsel %vm4282, %v4284, %v4280
    %v4286 = vmul.f32 1.0, %v4285
    %v4289 = vrot.slane %v3815, 4
    %v4290 = vrot.slane %v3816, 4
    %v4293 = vmul.f32 %v4231, %v4289
    %v4294 = vmul.f32 %v4246, %v4290
    %v4295 = vmul.f32 %v4193, %v4247
    %v4296 = vmul.f32 %v4208, %v4248
    %v4297 = vadd.f32 %v4293, %v4295
    %v4298 = vadd.f32 %v4294, %v4296
    %v4299 = vtanh.pop %v4297
    %v4300 = vtanh.pop %v4298
    %v4301 = vmul.f32 %v4271, %v4299
    %v4302 = vmul.f32 %v4286, %v4300
    %4305 = vst [vmem:[#allocation1] sm:$0xff] %v4301
    %4306 = vst [vmem:[#allocation1 + $0x9] sm:$0xff] %v4302
    %s4307 = scalar_lea.vmem [#allocation1], 3
    %v4308 = vld [vmem:[%s4307] ss:$9 sm:$0xff]
    %s4310 = scalar_lea.vmem [#allocation3], 4
    %4311 = vst.msk [vmem:[%s4310] ss:$8 sm:$0x3] %vm2342, %v4308
    %4312 = vst.msk [vmem:[%s4310] ss:$8 sm:$0x0] %vm2342, %v4308
    %v4313 = vld [vmem:[#allocation2 + $0x80] sm:$0xf0]
    %v4314 = vld [vmem:[#allocation2 + $0x88] sm:$0xf0]
    %v4315 = vld [vmem:[#allocation2 + $0x90] sm:$0xf0]
    %v4316 = vld [vmem:[#allocation2 + $0x98] sm:$0xf0]
    %v4317 = vld [vmem:[#allocation2 + $0xa0] sm:$0xf0]
    %v4318 = vld [vmem:[#allocation2 + $0xa8] sm:$0xf0]
    %v4319 = vld [vmem:[#allocation2 + $0xb0] sm:$0xf0]
    %v4320 = vld [vmem:[#allocation2 + $0xb8] sm:$0xf0]
    %4321 = vmatpush.msra.mxu0 %v1734
    %4322 = vmatpush.msra.mxu0 %v1726
    %4323 = vmatpush.msra.mxu0 %v1718
    %4324 = vmatpush.msra.mxu0 %v1710
    %4325 = vmatpush.msra.mxu0 %v1702
    %4326 = vmatpush.msra.mxu0 %v1694
    %4327 = vmatpush.msra.mxu0 %v1686
    %4328 = vmatpush.msra.mxu0 %v1678
    %4329 = vmatpush.msra.mxu0 %v1670
    %4330 = vmatpush.msra.mxu0 %v1662
    %4331 = vmatpush.msra.mxu0 %v1654
    %4332 = vmatpush.msra.mxu0 %v1646
    %4333 = vmatpush.msra.mxu0 %v1638
    %4334 = vmatpush.msra.mxu0 %v1630
    %4335 = vmatpush.msra.mxu0 %v1622
    %4336 = vmatpush.msra.mxu0 %v1614
    %4337 = vmatmul.f32.gmra.mxu0 %v4301
    %v4338 = vpop.f32.mrf.mxu0
    %v4339 = vadd.f32 0.0, %v4338
    %4340 = vdwg.mxu0
    %4341 = vmatpush.msra.mxu0 %v1862
    %4342 = vmatpush.msra.mxu0 %v1854
    %4343 = vmatpush.msra.mxu0 %v1846
    %4344 = vmatpush.msra.mxu0 %v1838
    %4345 = vmatpush.msra.mxu0 %v1830
    %4346 = vmatpush.msra.mxu0 %v1822
    %4347 = vmatpush.msra.mxu0 %v1814
    %4348 = vmatpush.msra.mxu0 %v1806
    %4349 = vmatpush.msra.mxu0 %v1798
    %4350 = vmatpush.msra.mxu0 %v1790
    %4351 = vmatpush.msra.mxu0 %v1782
    %4352 = vmatpush.msra.mxu0 %v1774
    %4353 = vmatpush.msra.mxu0 %v1766
    %4354 = vmatpush.msra.mxu0 %v1758
    %4355 = vmatpush.msra.mxu0 %v1750
    %4356 = vmatpush.msra.mxu0 %v1742
    %4357 = vmatmul.f32.gmra.mxu0 %v4302
    %v4358 = vpop.f32.mrf.mxu0
    %v4359 = vadd.f32 %v4339, %v4358
    %4360 = vdwg.mxu0
    %4361 = vmatpush.msra.mxu0 %v1735
    %4362 = vmatpush.msra.mxu0 %v1727
    %4363 = vmatpush.msra.mxu0 %v1719
    %4364 = vmatpush.msra.mxu0 %v1711
    %4365 = vmatpush.msra.mxu0 %v1703
    %4366 = vmatpush.msra.mxu0 %v1695
    %4367 = vmatpush.msra.mxu0 %v1687
    %4368 = vmatpush.msra.mxu0 %v1679
    %4369 = vmatpush.msra.mxu0 %v1671
    %4370 = vmatpush.msra.mxu0 %v1663
    %4371 = vmatpush.msra.mxu0 %v1655
    %4372 = vmatpush.msra.mxu0 %v1647
    %4373 = vmatpush.msra.mxu0 %v1639
    %4374 = vmatpush.msra.mxu0 %v1631
    %4375 = vmatpush.msra.mxu0 %v1623
    %4376 = vmatpush.msra.mxu0 %v1615
    %4377 = vmatmul.f32.gmra.mxu0 %v4301
    %v4378 = vpop.f32.mrf.mxu0
    %v4379 = vadd.f32 0.0, %v4378
    %4380 = vdwg.mxu0
    %4381 = vmatpush.msra.mxu0 %v1863
    %4382 = vmatpush.msra.mxu0 %v1855
    %4383 = vmatpush.msra.mxu0 %v1847
    %4384 = vmatpush.msra.mxu0 %v1839
    %4385 = vmatpush.msra.mxu0 %v1831
    %4386 = vmatpush.msra.mxu0 %v1823
    %4387 = vmatpush.msra.mxu0 %v1815
    %4388 = vmatpush.msra.mxu0 %v1807
    %4389 = vmatpush.msra.mxu0 %v1799
    %4390 = vmatpush.msra.mxu0 %v1791
    %4391 = vmatpush.msra.mxu0 %v1783
    %4392 = vmatpush.msra.mxu0 %v1775
    %4393 = vmatpush.msra.mxu0 %v1767
    %4394 = vmatpush.msra.mxu0 %v1759
    %4395 = vmatpush.msra.mxu0 %v1751
    %4396 = vmatpush.msra.mxu0 %v1743
    %4397 = vmatmul.f32.gmra.mxu0 %v4302
    %v4398 = vpop.f32.mrf.mxu0
    %v4399 = vadd.f32 %v4379, %v4398
    %4400 = vdwg.mxu0
    %4401 = vmatpush.msra.mxu0 %v1736
    %4402 = vmatpush.msra.mxu0 %v1728
    %4403 = vmatpush.msra.mxu0 %v1720
    %4404 = vmatpush.msra.mxu0 %v1712
    %4405 = vmatpush.msra.mxu0 %v1704
    %4406 = vmatpush.msra.mxu0 %v1696
    %4407 = vmatpush.msra.mxu0 %v1688
    %4408 = vmatpush.msra.mxu0 %v1680
    %4409 = vmatpush.msra.mxu0 %v1672
    %4410 = vmatpush.msra.mxu0 %v1664
    %4411 = vmatpush.msra.mxu0 %v1656
    %4412 = vmatpush.msra.mxu0 %v1648
    %4413 = vmatpush.msra.mxu0 %v1640
    %4414 = vmatpush.msra.mxu0 %v1632
    %4415 = vmatpush.msra.mxu0 %v1624
    %4416 = vmatpush.msra.mxu0 %v1616
    %4417 = vmatmul.f32.gmra.mxu0 %v4301
    %v4418 = vpop.f32.mrf.mxu0
    %v4419 = vadd.f32 0.0, %v4418
    %4420 = vdwg.mxu0
    %4421 = vmatpush.msra.mxu0 %v1864
    %4422 = vmatpush.msra.mxu0 %v1856
    %4423 = vmatpush.msra.mxu0 %v1848
    %4424 = vmatpush.msra.mxu0 %v1840
    %4425 = vmatpush.msra.mxu0 %v1832
    %4426 = vmatpush.msra.mxu0 %v1824
    %4427 = vmatpush.msra.mxu0 %v1816
    %4428 = vmatpush.msra.mxu0 %v1808
    %4429 = vmatpush.msra.mxu0 %v1800
    %4430 = vmatpush.msra.mxu0 %v1792
    %4431 = vmatpush.msra.mxu0 %v1784
    %4432 = vmatpush.msra.mxu0 %v1776
    %4433 = vmatpush.msra.mxu0 %v1768
    %4434 = vmatpush.msra.mxu0 %v1760
    %4435 = vmatpush.msra.mxu0 %v1752
    %4436 = vmatpush.msra.mxu0 %v1744
    %4437 = vmatmul.f32.gmra.mxu0 %v4302
    %v4438 = vpop.f32.mrf.mxu0
    %v4439 = vadd.f32 %v4419, %v4438
    %4440 = vdwg.mxu0
    %4441 = vmatpush.msra.mxu0 %v1737
    %4442 = vmatpush.msra.mxu0 %v1729
    %4443 = vmatpush.msra.mxu0 %v1721
    %4444 = vmatpush.msra.mxu0 %v1713
    %4445 = vmatpush.msra.mxu0 %v1705
    %4446 = vmatpush.msra.mxu0 %v1697
    %4447 = vmatpush.msra.mxu0 %v1689
    %4448 = vmatpush.msra.mxu0 %v1681
    %4449 = vmatpush.msra.mxu0 %v1673
    %4450 = vmatpush.msra.mxu0 %v1665
    %4451 = vmatpush.msra.mxu0 %v1657
    %4452 = vmatpush.msra.mxu0 %v1649
    %4453 = vmatpush.msra.mxu0 %v1641
    %4454 = vmatpush.msra.mxu0 %v1633
    %4455 = vmatpush.msra.mxu0 %v1625
    %4456 = vmatpush.msra.mxu0 %v1617
    %4457 = vmatmul.f32.gmra.mxu0 %v4301
    %v4458 = vpop.f32.mrf.mxu0
    %v4459 = vadd.f32 0.0, %v4458
    %4460 = vdwg.mxu0
    %4461 = vmatpush.msra.mxu0 %v1865
    %4462 = vmatpush.msra.mxu0 %v1857
    %4463 = vmatpush.msra.mxu0 %v1849
    %4464 = vmatpush.msra.mxu0 %v1841
    %4465 = vmatpush.msra.mxu0 %v1833
    %4466 = vmatpush.msra.mxu0 %v1825
    %4467 = vmatpush.msra.mxu0 %v1817
    %4468 = vmatpush.msra.mxu0 %v1809
    %4469 = vmatpush.msra.mxu0 %v1801
    %4470 = vmatpush.msra.mxu0 %v1793
    %4471 = vmatpush.msra.mxu0 %v1785
    %4472 = vmatpush.msra.mxu0 %v1777
    %4473 = vmatpush.msra.mxu0 %v1769
    %4474 = vmatpush.msra.mxu0 %v1761
    %4475 = vmatpush.msra.mxu0 %v1753
    %4476 = vmatpush.msra.mxu0 %v1745
    %4477 = vmatmul.f32.gmra.mxu0 %v4302
    %v4478 = vpop.f32.mrf.mxu0
    %v4479 = vadd.f32 %v4459, %v4478
    %4480 = vdwg.mxu0
    %4481 = vmatpush.msra.mxu0 %v1738
    %4482 = vmatpush.msra.mxu0 %v1730
    %4483 = vmatpush.msra.mxu0 %v1722
    %4484 = vmatpush.msra.mxu0 %v1714
    %4485 = vmatpush.msra.mxu0 %v1706
    %4486 = vmatpush.msra.mxu0 %v1698
    %4487 = vmatpush.msra.mxu0 %v1690
    %4488 = vmatpush.msra.mxu0 %v1682
    %4489 = vmatpush.msra.mxu0 %v1674
    %4490 = vmatpush.msra.mxu0 %v1666
    %4491 = vmatpush.msra.mxu0 %v1658
    %4492 = vmatpush.msra.mxu0 %v1650
    %4493 = vmatpush.msra.mxu0 %v1642
    %4494 = vmatpush.msra.mxu0 %v1634
    %4495 = vmatpush.msra.mxu0 %v1626
    %4496 = vmatpush.msra.mxu0 %v1618
    %4497 = vmatmul.f32.gmra.mxu0 %v4301
    %v4498 = vpop.f32.mrf.mxu0
    %v4499 = vadd.f32 0.0, %v4498
    %4500 = vdwg.mxu0
    %4501 = vmatpush.msra.mxu0 %v1866
    %4502 = vmatpush.msra.mxu0 %v1858
    %4503 = vmatpush.msra.mxu0 %v1850
    %4504 = vmatpush.msra.mxu0 %v1842
    %4505 = vmatpush.msra.mxu0 %v1834
    %4506 = vmatpush.msra.mxu0 %v1826
    %4507 = vmatpush.msra.mxu0 %v1818
    %4508 = vmatpush.msra.mxu0 %v1810
    %4509 = vmatpush.msra.mxu0 %v1802
    %4510 = vmatpush.msra.mxu0 %v1794
    %4511 = vmatpush.msra.mxu0 %v1786
    %4512 = vmatpush.msra.mxu0 %v1778
    %4513 = vmatpush.msra.mxu0 %v1770
    %4514 = vmatpush.msra.mxu0 %v1762
    %4515 = vmatpush.msra.mxu0 %v1754
    %4516 = vmatpush.msra.mxu0 %v1746
    %4517 = vmatmul.f32.gmra.mxu0 %v4302
    %v4518 = vpop.f32.mrf.mxu0
    %v4519 = vadd.f32 %v4499, %v4518
    %4520 = vdwg.mxu0
    %4521 = vmatpush.msra.mxu0 %v1739
    %4522 = vmatpush.msra.mxu0 %v1731
    %4523 = vmatpush.msra.mxu0 %v1723
    %4524 = vmatpush.msra.mxu0 %v1715
    %4525 = vmatpush.msra.mxu0 %v1707
    %4526 = vmatpush.msra.mxu0 %v1699
    %4527 = vmatpush.msra.mxu0 %v1691
    %4528 = vmatpush.msra.mxu0 %v1683
    %4529 = vmatpush.msra.mxu0 %v1675
    %4530 = vmatpush.msra.mxu0 %v1667
    %4531 = vmatpush.msra.mxu0 %v1659
    %4532 = vmatpush.msra.mxu0 %v1651
    %4533 = vmatpush.msra.mxu0 %v1643
    %4534 = vmatpush.msra.mxu0 %v1635
    %4535 = vmatpush.msra.mxu0 %v1627
    %4536 = vmatpush.msra.mxu0 %v1619
    %4537 = vmatmul.f32.gmra.mxu0 %v4301
    %v4538 = vpop.f32.mrf.mxu0
    %v4539 = vadd.f32 0.0, %v4538
    %4540 = vdwg.mxu0
    %4541 = vmatpush.msra.mxu0 %v1867
    %4542 = vmatpush.msra.mxu0 %v1859
    %4543 = vmatpush.msra.mxu0 %v1851
    %4544 = vmatpush.msra.mxu0 %v1843
    %4545 = vmatpush.msra.mxu0 %v1835
    %4546 = vmatpush.msra.mxu0 %v1827
    %4547 = vmatpush.msra.mxu0 %v1819
    %4548 = vmatpush.msra.mxu0 %v1811
    %4549 = vmatpush.msra.mxu0 %v1803
    %4550 = vmatpush.msra.mxu0 %v1795
    %4551 = vmatpush.msra.mxu0 %v1787
    %4552 = vmatpush.msra.mxu0 %v1779
    %4553 = vmatpush.msra.mxu0 %v1771
    %4554 = vmatpush.msra.mxu0 %v1763
    %4555 = vmatpush.msra.mxu0 %v1755
    %4556 = vmatpush.msra.mxu0 %v1747
    %4557 = vmatmul.f32.gmra.mxu0 %v4302
    %v4558 = vpop.f32.mrf.mxu0
    %v4559 = vadd.f32 %v4539, %v4558
    %4560 = vdwg.mxu0
    %4561 = vmatpush.msra.mxu0 %v1740
    %4562 = vmatpush.msra.mxu0 %v1732
    %4563 = vmatpush.msra.mxu0 %v1724
    %4564 = vmatpush.msra.mxu0 %v1716
    %4565 = vmatpush.msra.mxu0 %v1708
    %4566 = vmatpush.msra.mxu0 %v1700
    %4567 = vmatpush.msra.mxu0 %v1692
    %4568 = vmatpush.msra.mxu0 %v1684
    %4569 = vmatpush.msra.mxu0 %v1676
    %4570 = vmatpush.msra.mxu0 %v1668
    %4571 = vmatpush.msra.mxu0 %v1660
    %4572 = vmatpush.msra.mxu0 %v1652
    %4573 = vmatpush.msra.mxu0 %v1644
    %4574 = vmatpush.msra.mxu0 %v1636
    %4575 = vmatpush.msra.mxu0 %v1628
    %4576 = vmatpush.msra.mxu0 %v1620
    %4577 = vmatmul.f32.gmra.mxu0 %v4301
    %v4578 = vpop.f32.mrf.mxu0
    %v4579 = vadd.f32 0.0, %v4578
    %4580 = vdwg.mxu0
    %4581 = vmatpush.msra.mxu0 %v1868
    %4582 = vmatpush.msra.mxu0 %v1860
    %4583 = vmatpush.msra.mxu0 %v1852
    %4584 = vmatpush.msra.mxu0 %v1844
    %4585 = vmatpush.msra.mxu0 %v1836
    %4586 = vmatpush.msra.mxu0 %v1828
    %4587 = vmatpush.msra.mxu0 %v1820
    %4588 = vmatpush.msra.mxu0 %v1812
    %4589 = vmatpush.msra.mxu0 %v1804
    %4590 = vmatpush.msra.mxu0 %v1796
    %4591 = vmatpush.msra.mxu0 %v1788
    %4592 = vmatpush.msra.mxu0 %v1780
    %4593 = vmatpush.msra.mxu0 %v1772
    %4594 = vmatpush.msra.mxu0 %v1764
    %4595 = vmatpush.msra.mxu0 %v1756
    %4596 = vmatpush.msra.mxu0 %v1748
    %4597 = vmatmul.f32.gmra.mxu0 %v4302
    %v4598 = vpop.f32.mrf.mxu0
    %v4599 = vadd.f32 %v4579, %v4598
    %4600 = vdwg.mxu0
    %4601 = vmatpush.msra.mxu0 %v1741
    %4602 = vmatpush.msra.mxu0 %v1733
    %4603 = vmatpush.msra.mxu0 %v1725
    %4604 = vmatpush.msra.mxu0 %v1717
    %4605 = vmatpush.msra.mxu0 %v1709
    %4606 = vmatpush.msra.mxu0 %v1701
    %4607 = vmatpush.msra.mxu0 %v1693
    %4608 = vmatpush.msra.mxu0 %v1685
    %4609 = vmatpush.msra.mxu0 %v1677
    %4610 = vmatpush.msra.mxu0 %v1669
    %4611 = vmatpush.msra.mxu0 %v1661
    %4612 = vmatpush.msra.mxu0 %v1653
    %4613 = vmatpush.msra.mxu0 %v1645
    %4614 = vmatpush.msra.mxu0 %v1637
    %4615 = vmatpush.msra.mxu0 %v1629
    %4616 = vmatpush.msra.mxu0 %v1621
    %4617 = vmatmul.f32.gmra.mxu0 %v4301
    %v4618 = vpop.f32.mrf.mxu0
    %v4619 = vadd.f32 0.0, %v4618
    %4620 = vdwg.mxu0
    %4621 = vmatpush.msra.mxu0 %v1869
    %4622 = vmatpush.msra.mxu0 %v1861
    %4623 = vmatpush.msra.mxu0 %v1853
    %4624 = vmatpush.msra.mxu0 %v1845
    %4625 = vmatpush.msra.mxu0 %v1837
    %4626 = vmatpush.msra.mxu0 %v1829
    %4627 = vmatpush.msra.mxu0 %v1821
    %4628 = vmatpush.msra.mxu0 %v1813
    %4629 = vmatpush.msra.mxu0 %v1805
    %4630 = vmatpush.msra.mxu0 %v1797
    %4631 = vmatpush.msra.mxu0 %v1789
    %4632 = vmatpush.msra.mxu0 %v1781
    %4633 = vmatpush.msra.mxu0 %v1773
    %4634 = vmatpush.msra.mxu0 %v1765
    %4635 = vmatpush.msra.mxu0 %v1757
    %4636 = vmatpush.msra.mxu0 %v1749
    %4637 = vmatmul.f32.gmra.mxu0 %v4302
    %v4638 = vpop.f32.mrf.mxu0
    %v4639 = vadd.f32 %v4619, %v4638
    %4640 = vdwg.mxu0
    %v4649 = vrot.slane %v4359, 4
    %v4650 = vrot.slane %v4399, 4
    %v4651 = vrot.slane %v4439, 4
    %v4652 = vrot.slane %v4479, 4
    %v4653 = vrot.slane %v4519, 4
    %v4654 = vrot.slane %v4559, 4
    %v4655 = vrot.slane %v4599, 4
    %v4656 = vrot.slane %v4639, 4
    %v4665 = vadd.f32 %v4313, %v4649
    %v4666 = vadd.f32 %v4314, %v4650
    %v4667 = vadd.f32 %v4315, %v4651
    %v4668 = vadd.f32 %v4316, %v4652
    %v4669 = vadd.f32 %v4317, %v4653
    %v4670 = vadd.f32 %v4318, %v4654
    %v4671 = vadd.f32 %v4319, %v4655
    %v4672 = vadd.f32 %v4320, %v4656
    %v4673 = vxor.u32 %v4665, 2147483648
    %v4674 = vxor.u32 %v4666, 2147483648
    %v4675 = vmul.f32 %v4673, 1.442695
    %v4676 = vpow.pop %v4675
    %v4677 = vmul.f32 %v4674, 1.442695
    %v4678 = vpow.pop %v4677
    %v4679 = vadd.f32 %v4676, 1.0
    %v4680 = vadd.f32 %v4678, 1.0
    %v4681 = vrcp.pop %v4679
    %v4682 = vmul.f32 %v4679, %v4681
    %v4683 = vsub.f32 1.0, %v4682
    %v4684 = vmul.f32 %v4681, %v4683
    %v4685 = vadd.f32 %v4681, %v4684
    %vm4686 = vweird.f32 %v4679
    %vm4687 = vweird.f32 %v4681
    %vm4688 = vmor %vm4686, %vm4687
    %v4689 = vsel %vm4688, %v4681, %v4685
    %v4690 = vand.u32 2147483647, %v4679
    %vm4691 = vcmp.eq.f32.partialorder %v4690, 8.507059e+37
    %v4692 = vand.u32 %v4679, 2147483648
    %v4693 = vor.u32 1.1754944e-38, %v4692
    %v4694 = vsel %vm4691, %v4693, %v4689
    %v4695 = vmul.f32 1.0, %v4694
    %v4696 = vrcp.pop %v4680
    %v4697 = vmul.f32 %v4680, %v4696
    %v4698 = vsub.f32 1.0, %v4697
    %v4699 = vmul.f32 %v4696, %v4698
    %v4700 = vadd.f32 %v4696, %v4699
    %vm4701 = vweird.f32 %v4680
    %vm4702 = vweird.f32 %v4696
    %vm4703 = vmor %vm4701, %vm4702
    %v4704 = vsel %vm4703, %v4696, %v4700
    %v4705 = vand.u32 2147483647, %v4680
    %vm4706 = vcmp.eq.f32.partialorder %v4705, 8.507059e+37
    %v4707 = vand.u32 %v4680, 2147483648
    %v4708 = vor.u32 1.1754944e-38, %v4707
    %v4709 = vsel %vm4706, %v4708, %v4704
    %v4710 = vmul.f32 1.0, %v4709
    %v4711 = vxor.u32 %v4667, 2147483648
    %v4712 = vxor.u32 %v4668, 2147483648
    %v4713 = vmul.f32 %v4711, 1.442695
    %v4714 = vpow.pop %v4713
    %v4715 = vmul.f32 %v4712, 1.442695
    %v4716 = vpow.pop %v4715
    %v4717 = vadd.f32 %v4714, 1.0
    %v4718 = vadd.f32 %v4716, 1.0
    %v4719 = vrcp.pop %v4717
    %v4720 = vmul.f32 %v4717, %v4719
    %v4721 = vsub.f32 1.0, %v4720
    %v4722 = vmul.f32 %v4719, %v4721
    %v4723 = vadd.f32 %v4719, %v4722
    %vm4724 = vweird.f32 %v4717
    %vm4725 = vweird.f32 %v4719
    %vm4726 = vmor %vm4724, %vm4725
    %v4727 = vsel %vm4726, %v4719, %v4723
    %v4728 = vand.u32 2147483647, %v4717
    %vm4729 = vcmp.eq.f32.partialorder %v4728, 8.507059e+37
    %v4730 = vand.u32 %v4717, 2147483648
    %v4731 = vor.u32 1.1754944e-38, %v4730
    %v4732 = vsel %vm4729, %v4731, %v4727
    %v4733 = vmul.f32 1.0, %v4732
    %v4734 = vrcp.pop %v4718
    %v4735 = vmul.f32 %v4718, %v4734
    %v4736 = vsub.f32 1.0, %v4735
    %v4737 = vmul.f32 %v4734, %v4736
    %v4738 = vadd.f32 %v4734, %v4737
    %vm4739 = vweird.f32 %v4718
    %vm4740 = vweird.f32 %v4734
    %vm4741 = vmor %vm4739, %vm4740
    %v4742 = vsel %vm4741, %v4734, %v4738
    %v4743 = vand.u32 2147483647, %v4718
    %vm4744 = vcmp.eq.f32.partialorder %v4743, 8.507059e+37
    %v4745 = vand.u32 %v4718, 2147483648
    %v4746 = vor.u32 1.1754944e-38, %v4745
    %v4747 = vsel %vm4744, %v4746, %v4742
    %v4748 = vmul.f32 1.0, %v4747
    %v4749 = vtanh.pop %v4669
    %v4750 = vtanh.pop %v4670
    %v4751 = vxor.u32 %v4671, 2147483648
    %v4752 = vxor.u32 %v4672, 2147483648
    %v4753 = vmul.f32 %v4751, 1.442695
    %v4754 = vpow.pop %v4753
    %v4755 = vmul.f32 %v4752, 1.442695
    %v4756 = vpow.pop %v4755
    %v4757 = vadd.f32 %v4754, 1.0
    %v4758 = vadd.f32 %v4756, 1.0
    %v4759 = vrcp.pop %v4757
    %v4760 = vmul.f32 %v4757, %v4759
    %v4761 = vsub.f32 1.0, %v4760
    %v4762 = vmul.f32 %v4759, %v4761
    %v4763 = vadd.f32 %v4759, %v4762
    %vm4764 = vweird.f32 %v4757
    %vm4765 = vweird.f32 %v4759
    %vm4766 = vmor %vm4764, %vm4765
    %v4767 = vsel %vm4766, %v4759, %v4763
    %v4768 = vand.u32 2147483647, %v4757
    %vm4769 = vcmp.eq.f32.partialorder %v4768, 8.507059e+37
    %v4770 = vand.u32 %v4757, 2147483648
    %v4771 = vor.u32 1.1754944e-38, %v4770
    %v4772 = vsel %vm4769, %v4771, %v4767
    %v4773 = vmul.f32 1.0, %v4772
    %v4774 = vrcp.pop %v4758
    %v4775 = vmul.f32 %v4758, %v4774
    %v4776 = vsub.f32 1.0, %v4775
    %v4777 = vmul.f32 %v4774, %v4776
    %v4778 = vadd.f32 %v4774, %v4777
    %vm4779 = vweird.f32 %v4758
    %vm4780 = vweird.f32 %v4774
    %vm4781 = vmor %vm4779, %vm4780
    %v4782 = vsel %vm4781, %v4774, %v4778
    %v4783 = vand.u32 2147483647, %v4758
    %vm4784 = vcmp.eq.f32.partialorder %v4783, 8.507059e+37
    %v4785 = vand.u32 %v4758, 2147483648
    %v4786 = vor.u32 1.1754944e-38, %v4785
    %v4787 = vsel %vm4784, %v4786, %v4782
    %v4788 = vmul.f32 1.0, %v4787
    %v4791 = vrot.slane %v4297, 4
    %v4792 = vrot.slane %v4298, 4
    %v4795 = vmul.f32 %v4733, %v4791
    %v4796 = vmul.f32 %v4748, %v4792
    %v4797 = vmul.f32 %v4695, %v4749
    %v4798 = vmul.f32 %v4710, %v4750
    %v4799 = vadd.f32 %v4795, %v4797
    %v4800 = vadd.f32 %v4796, %v4798
    %v4801 = vtanh.pop %v4799
    %v4802 = vtanh.pop %v4800
    %v4803 = vmul.f32 %v4773, %v4801
    %v4804 = vmul.f32 %v4788, %v4802
    %4807 = vst [vmem:[#allocation1] sm:$0xff] %v4803
    %4808 = vst [vmem:[#allocation1 + $0x9] sm:$0xff] %v4804
    %s4809 = scalar_lea.vmem [#allocation1], 7
    %v4810 = vld [vmem:[%s4809] ss:$9 sm:$0xff]
    %s4812 = scalar_lea.vmem [#allocation3], 5
    %4813 = vst.msk [vmem:[%s4812] ss:$8 sm:$0x3] %vm2342, %v4810
    %4814 = vst.msk [vmem:[%s4812] ss:$8 sm:$0x0] %vm2342, %v4810
    %v4815 = vld [vmem:[#allocation2 + $0xc0] sm:$0xf]
    %v4816 = vld [vmem:[#allocation2 + $0xc8] sm:$0xf]
    %v4817 = vld [vmem:[#allocation2 + $0xd0] sm:$0xf]
    %v4818 = vld [vmem:[#allocation2 + $0xd8] sm:$0xf]
    %v4819 = vld [vmem:[#allocation2 + $0xe0] sm:$0xf]
    %v4820 = vld [vmem:[#allocation2 + $0xe8] sm:$0xf]
    %v4821 = vld [vmem:[#allocation2 + $0xf0] sm:$0xf]
    %v4822 = vld [vmem:[#allocation2 + $0xf8] sm:$0xf]
    %v4823 = vrot.slane %v4803, 4
    %v4824 = vrot.slane %v4804, 4
    %4827 = vmatpush.msra.mxu0 %v1734
    %4828 = vmatpush.msra.mxu0 %v1726
    %4829 = vmatpush.msra.mxu0 %v1718
    %4830 = vmatpush.msra.mxu0 %v1710
    %4831 = vmatpush.msra.mxu0 %v1702
    %4832 = vmatpush.msra.mxu0 %v1694
    %4833 = vmatpush.msra.mxu0 %v1686
    %4834 = vmatpush.msra.mxu0 %v1678
    %4835 = vmatpush.msra.mxu0 %v1670
    %4836 = vmatpush.msra.mxu0 %v1662
    %4837 = vmatpush.msra.mxu0 %v1654
    %4838 = vmatpush.msra.mxu0 %v1646
    %4839 = vmatpush.msra.mxu0 %v1638
    %4840 = vmatpush.msra.mxu0 %v1630
    %4841 = vmatpush.msra.mxu0 %v1622
    %4842 = vmatpush.msra.mxu0 %v1614
    %4843 = vmatmul.f32.gmra.mxu0 %v4823
    %v4844 = vpop.f32.mrf.mxu0
    %v4845 = vadd.f32 0.0, %v4844
    %4846 = vdwg.mxu0
    %4847 = vmatpush.msra.mxu0 %v1862
    %4848 = vmatpush.msra.mxu0 %v1854
    %4849 = vmatpush.msra.mxu0 %v1846
    %4850 = vmatpush.msra.mxu0 %v1838
    %4851 = vmatpush.msra.mxu0 %v1830
    %4852 = vmatpush.msra.mxu0 %v1822
    %4853 = vmatpush.msra.mxu0 %v1814
    %4854 = vmatpush.msra.mxu0 %v1806
    %4855 = vmatpush.msra.mxu0 %v1798
    %4856 = vmatpush.msra.mxu0 %v1790
    %4857 = vmatpush.msra.mxu0 %v1782
    %4858 = vmatpush.msra.mxu0 %v1774
    %4859 = vmatpush.msra.mxu0 %v1766
    %4860 = vmatpush.msra.mxu0 %v1758
    %4861 = vmatpush.msra.mxu0 %v1750
    %4862 = vmatpush.msra.mxu0 %v1742
    %4863 = vmatmul.f32.gmra.mxu0 %v4824
    %v4864 = vpop.f32.mrf.mxu0
    %v4865 = vadd.f32 %v4845, %v4864
    %4866 = vdwg.mxu0
    %4867 = vmatpush.msra.mxu0 %v1735
    %4868 = vmatpush.msra.mxu0 %v1727
    %4869 = vmatpush.msra.mxu0 %v1719
    %4870 = vmatpush.msra.mxu0 %v1711
    %4871 = vmatpush.msra.mxu0 %v1703
    %4872 = vmatpush.msra.mxu0 %v1695
    %4873 = vmatpush.msra.mxu0 %v1687
    %4874 = vmatpush.msra.mxu0 %v1679
    %4875 = vmatpush.msra.mxu0 %v1671
    %4876 = vmatpush.msra.mxu0 %v1663
    %4877 = vmatpush.msra.mxu0 %v1655
    %4878 = vmatpush.msra.mxu0 %v1647
    %4879 = vmatpush.msra.mxu0 %v1639
    %4880 = vmatpush.msra.mxu0 %v1631
    %4881 = vmatpush.msra.mxu0 %v1623
    %4882 = vmatpush.msra.mxu0 %v1615
    %4883 = vmatmul.f32.gmra.mxu0 %v4823
    %v4884 = vpop.f32.mrf.mxu0
    %v4885 = vadd.f32 0.0, %v4884
    %4886 = vdwg.mxu0
    %4887 = vmatpush.msra.mxu0 %v1863
    %4888 = vmatpush.msra.mxu0 %v1855
    %4889 = vmatpush.msra.mxu0 %v1847
    %4890 = vmatpush.msra.mxu0 %v1839
    %4891 = vmatpush.msra.mxu0 %v1831
    %4892 = vmatpush.msra.mxu0 %v1823
    %4893 = vmatpush.msra.mxu0 %v1815
    %4894 = vmatpush.msra.mxu0 %v1807
    %4895 = vmatpush.msra.mxu0 %v1799
    %4896 = vmatpush.msra.mxu0 %v1791
    %4897 = vmatpush.msra.mxu0 %v1783
    %4898 = vmatpush.msra.mxu0 %v1775
    %4899 = vmatpush.msra.mxu0 %v1767
    %4900 = vmatpush.msra.mxu0 %v1759
    %4901 = vmatpush.msra.mxu0 %v1751
    %4902 = vmatpush.msra.mxu0 %v1743
    %4903 = vmatmul.f32.gmra.mxu0 %v4824
    %v4904 = vpop.f32.mrf.mxu0
    %v4905 = vadd.f32 %v4885, %v4904
    %4906 = vdwg.mxu0
    %4907 = vmatpush.msra.mxu0 %v1736
    %4908 = vmatpush.msra.mxu0 %v1728
    %4909 = vmatpush.msra.mxu0 %v1720
    %4910 = vmatpush.msra.mxu0 %v1712
    %4911 = vmatpush.msra.mxu0 %v1704
    %4912 = vmatpush.msra.mxu0 %v1696
    %4913 = vmatpush.msra.mxu0 %v1688
    %4914 = vmatpush.msra.mxu0 %v1680
    %4915 = vmatpush.msra.mxu0 %v1672
    %4916 = vmatpush.msra.mxu0 %v1664
    %4917 = vmatpush.msra.mxu0 %v1656
    %4918 = vmatpush.msra.mxu0 %v1648
    %4919 = vmatpush.msra.mxu0 %v1640
    %4920 = vmatpush.msra.mxu0 %v1632
    %4921 = vmatpush.msra.mxu0 %v1624
    %4922 = vmatpush.msra.mxu0 %v1616
    %4923 = vmatmul.f32.gmra.mxu0 %v4823
    %v4924 = vpop.f32.mrf.mxu0
    %v4925 = vadd.f32 0.0, %v4924
    %4926 = vdwg.mxu0
    %4927 = vmatpush.msra.mxu0 %v1864
    %4928 = vmatpush.msra.mxu0 %v1856
    %4929 = vmatpush.msra.mxu0 %v1848
    %4930 = vmatpush.msra.mxu0 %v1840
    %4931 = vmatpush.msra.mxu0 %v1832
    %4932 = vmatpush.msra.mxu0 %v1824
    %4933 = vmatpush.msra.mxu0 %v1816
    %4934 = vmatpush.msra.mxu0 %v1808
    %4935 = vmatpush.msra.mxu0 %v1800
    %4936 = vmatpush.msra.mxu0 %v1792
    %4937 = vmatpush.msra.mxu0 %v1784
    %4938 = vmatpush.msra.mxu0 %v1776
    %4939 = vmatpush.msra.mxu0 %v1768
    %4940 = vmatpush.msra.mxu0 %v1760
    %4941 = vmatpush.msra.mxu0 %v1752
    %4942 = vmatpush.msra.mxu0 %v1744
    %4943 = vmatmul.f32.gmra.mxu0 %v4824
    %v4944 = vpop.f32.mrf.mxu0
    %v4945 = vadd.f32 %v4925, %v4944
    %4946 = vdwg.mxu0
    %4947 = vmatpush.msra.mxu0 %v1737
    %4948 = vmatpush.msra.mxu0 %v1729
    %4949 = vmatpush.msra.mxu0 %v1721
    %4950 = vmatpush.msra.mxu0 %v1713
    %4951 = vmatpush.msra.mxu0 %v1705
    %4952 = vmatpush.msra.mxu0 %v1697
    %4953 = vmatpush.msra.mxu0 %v1689
    %4954 = vmatpush.msra.mxu0 %v1681
    %4955 = vmatpush.msra.mxu0 %v1673
    %4956 = vmatpush.msra.mxu0 %v1665
    %4957 = vmatpush.msra.mxu0 %v1657
    %4958 = vmatpush.msra.mxu0 %v1649
    %4959 = vmatpush.msra.mxu0 %v1641
    %4960 = vmatpush.msra.mxu0 %v1633
    %4961 = vmatpush.msra.mxu0 %v1625
    %4962 = vmatpush.msra.mxu0 %v1617
    %4963 = vmatmul.f32.gmra.mxu0 %v4823
    %v4964 = vpop.f32.mrf.mxu0
    %v4965 = vadd.f32 0.0, %v4964
    %4966 = vdwg.mxu0
    %4967 = vmatpush.msra.mxu0 %v1865
    %4968 = vmatpush.msra.mxu0 %v1857
    %4969 = vmatpush.msra.mxu0 %v1849
    %4970 = vmatpush.msra.mxu0 %v1841
    %4971 = vmatpush.msra.mxu0 %v1833
    %4972 = vmatpush.msra.mxu0 %v1825
    %4973 = vmatpush.msra.mxu0 %v1817
    %4974 = vmatpush.msra.mxu0 %v1809
    %4975 = vmatpush.msra.mxu0 %v1801
    %4976 = vmatpush.msra.mxu0 %v1793
    %4977 = vmatpush.msra.mxu0 %v1785
    %4978 = vmatpush.msra.mxu0 %v1777
    %4979 = vmatpush.msra.mxu0 %v1769
    %4980 = vmatpush.msra.mxu0 %v1761
    %4981 = vmatpush.msra.mxu0 %v1753
    %4982 = vmatpush.msra.mxu0 %v1745
    %4983 = vmatmul.f32.gmra.mxu0 %v4824
    %v4984 = vpop.f32.mrf.mxu0
    %v4985 = vadd.f32 %v4965, %v4984
    %4986 = vdwg.mxu0
    %4987 = vmatpush.msra.mxu0 %v1738
    %4988 = vmatpush.msra.mxu0 %v1730
    %4989 = vmatpush.msra.mxu0 %v1722
    %4990 = vmatpush.msra.mxu0 %v1714
    %4991 = vmatpush.msra.mxu0 %v1706
    %4992 = vmatpush.msra.mxu0 %v1698
    %4993 = vmatpush.msra.mxu0 %v1690
    %4994 = vmatpush.msra.mxu0 %v1682
    %4995 = vmatpush.msra.mxu0 %v1674
    %4996 = vmatpush.msra.mxu0 %v1666
    %4997 = vmatpush.msra.mxu0 %v1658
    %4998 = vmatpush.msra.mxu0 %v1650
    %4999 = vmatpush.msra.mxu0 %v1642
    %5000 = vmatpush.msra.mxu0 %v1634
    %5001 = vmatpush.msra.mxu0 %v1626
    %5002 = vmatpush.msra.mxu0 %v1618
    %5003 = vmatmul.f32.gmra.mxu0 %v4823
    %v5004 = vpop.f32.mrf.mxu0
    %v5005 = vadd.f32 0.0, %v5004
    %5006 = vdwg.mxu0
    %5007 = vmatpush.msra.mxu0 %v1866
    %5008 = vmatpush.msra.mxu0 %v1858
    %5009 = vmatpush.msra.mxu0 %v1850
    %5010 = vmatpush.msra.mxu0 %v1842
    %5011 = vmatpush.msra.mxu0 %v1834
    %5012 = vmatpush.msra.mxu0 %v1826
    %5013 = vmatpush.msra.mxu0 %v1818
    %5014 = vmatpush.msra.mxu0 %v1810
    %5015 = vmatpush.msra.mxu0 %v1802
    %5016 = vmatpush.msra.mxu0 %v1794
    %5017 = vmatpush.msra.mxu0 %v1786
    %5018 = vmatpush.msra.mxu0 %v1778
    %5019 = vmatpush.msra.mxu0 %v1770
    %5020 = vmatpush.msra.mxu0 %v1762
    %5021 = vmatpush.msra.mxu0 %v1754
    %5022 = vmatpush.msra.mxu0 %v1746
    %5023 = vmatmul.f32.gmra.mxu0 %v4824
    %v5024 = vpop.f32.mrf.mxu0
    %v5025 = vadd.f32 %v5005, %v5024
    %5026 = vdwg.mxu0
    %5027 = vmatpush.msra.mxu0 %v1739
    %5028 = vmatpush.msra.mxu0 %v1731
    %5029 = vmatpush.msra.mxu0 %v1723
    %5030 = vmatpush.msra.mxu0 %v1715
    %5031 = vmatpush.msra.mxu0 %v1707
    %5032 = vmatpush.msra.mxu0 %v1699
    %5033 = vmatpush.msra.mxu0 %v1691
    %5034 = vmatpush.msra.mxu0 %v1683
    %5035 = vmatpush.msra.mxu0 %v1675
    %5036 = vmatpush.msra.mxu0 %v1667
    %5037 = vmatpush.msra.mxu0 %v1659
    %5038 = vmatpush.msra.mxu0 %v1651
    %5039 = vmatpush.msra.mxu0 %v1643
    %5040 = vmatpush.msra.mxu0 %v1635
    %5041 = vmatpush.msra.mxu0 %v1627
    %5042 = vmatpush.msra.mxu0 %v1619
    %5043 = vmatmul.f32.gmra.mxu0 %v4823
    %v5044 = vpop.f32.mrf.mxu0
    %v5045 = vadd.f32 0.0, %v5044
    %5046 = vdwg.mxu0
    %5047 = vmatpush.msra.mxu0 %v1867
    %5048 = vmatpush.msra.mxu0 %v1859
    %5049 = vmatpush.msra.mxu0 %v1851
    %5050 = vmatpush.msra.mxu0 %v1843
    %5051 = vmatpush.msra.mxu0 %v1835
    %5052 = vmatpush.msra.mxu0 %v1827
    %5053 = vmatpush.msra.mxu0 %v1819
    %5054 = vmatpush.msra.mxu0 %v1811
    %5055 = vmatpush.msra.mxu0 %v1803
    %5056 = vmatpush.msra.mxu0 %v1795
    %5057 = vmatpush.msra.mxu0 %v1787
    %5058 = vmatpush.msra.mxu0 %v1779
    %5059 = vmatpush.msra.mxu0 %v1771
    %5060 = vmatpush.msra.mxu0 %v1763
    %5061 = vmatpush.msra.mxu0 %v1755
    %5062 = vmatpush.msra.mxu0 %v1747
    %5063 = vmatmul.f32.gmra.mxu0 %v4824
    %v5064 = vpop.f32.mrf.mxu0
    %v5065 = vadd.f32 %v5045, %v5064
    %5066 = vdwg.mxu0
    %5067 = vmatpush.msra.mxu0 %v1740
    %5068 = vmatpush.msra.mxu0 %v1732
    %5069 = vmatpush.msra.mxu0 %v1724
    %5070 = vmatpush.msra.mxu0 %v1716
    %5071 = vmatpush.msra.mxu0 %v1708
    %5072 = vmatpush.msra.mxu0 %v1700
    %5073 = vmatpush.msra.mxu0 %v1692
    %5074 = vmatpush.msra.mxu0 %v1684
    %5075 = vmatpush.msra.mxu0 %v1676
    %5076 = vmatpush.msra.mxu0 %v1668
    %5077 = vmatpush.msra.mxu0 %v1660
    %5078 = vmatpush.msra.mxu0 %v1652
    %5079 = vmatpush.msra.mxu0 %v1644
    %5080 = vmatpush.msra.mxu0 %v1636
    %5081 = vmatpush.msra.mxu0 %v1628
    %5082 = vmatpush.msra.mxu0 %v1620
    %5083 = vmatmul.f32.gmra.mxu0 %v4823
    %v5084 = vpop.f32.mrf.mxu0
    %v5085 = vadd.f32 0.0, %v5084
    %5086 = vdwg.mxu0
    %5087 = vmatpush.msra.mxu0 %v1868
    %5088 = vmatpush.msra.mxu0 %v1860
    %5089 = vmatpush.msra.mxu0 %v1852
    %5090 = vmatpush.msra.mxu0 %v1844
    %5091 = vmatpush.msra.mxu0 %v1836
    %5092 = vmatpush.msra.mxu0 %v1828
    %5093 = vmatpush.msra.mxu0 %v1820
    %5094 = vmatpush.msra.mxu0 %v1812
    %5095 = vmatpush.msra.mxu0 %v1804
    %5096 = vmatpush.msra.mxu0 %v1796
    %5097 = vmatpush.msra.mxu0 %v1788
    %5098 = vmatpush.msra.mxu0 %v1780
    %5099 = vmatpush.msra.mxu0 %v1772
    %5100 = vmatpush.msra.mxu0 %v1764
    %5101 = vmatpush.msra.mxu0 %v1756
    %5102 = vmatpush.msra.mxu0 %v1748
    %5103 = vmatmul.f32.gmra.mxu0 %v4824
    %v5104 = vpop.f32.mrf.mxu0
    %v5105 = vadd.f32 %v5085, %v5104
    %5106 = vdwg.mxu0
    %5107 = vmatpush.msra.mxu0 %v1741
    %5108 = vmatpush.msra.mxu0 %v1733
    %5109 = vmatpush.msra.mxu0 %v1725
    %5110 = vmatpush.msra.mxu0 %v1717
    %5111 = vmatpush.msra.mxu0 %v1709
    %5112 = vmatpush.msra.mxu0 %v1701
    %5113 = vmatpush.msra.mxu0 %v1693
    %5114 = vmatpush.msra.mxu0 %v1685
    %5115 = vmatpush.msra.mxu0 %v1677
    %5116 = vmatpush.msra.mxu0 %v1669
    %5117 = vmatpush.msra.mxu0 %v1661
    %5118 = vmatpush.msra.mxu0 %v1653
    %5119 = vmatpush.msra.mxu0 %v1645
    %5120 = vmatpush.msra.mxu0 %v1637
    %5121 = vmatpush.msra.mxu0 %v1629
    %5122 = vmatpush.msra.mxu0 %v1621
    %5123 = vmatmul.f32.gmra.mxu0 %v4823
    %v5124 = vpop.f32.mrf.mxu0
    %v5125 = vadd.f32 0.0, %v5124
    %5126 = vdwg.mxu0
    %5127 = vmatpush.msra.mxu0 %v1869
    %5128 = vmatpush.msra.mxu0 %v1861
    %5129 = vmatpush.msra.mxu0 %v1853
    %5130 = vmatpush.msra.mxu0 %v1845
    %5131 = vmatpush.msra.mxu0 %v1837
    %5132 = vmatpush.msra.mxu0 %v1829
    %5133 = vmatpush.msra.mxu0 %v1821
    %5134 = vmatpush.msra.mxu0 %v1813
    %5135 = vmatpush.msra.mxu0 %v1805
    %5136 = vmatpush.msra.mxu0 %v1797
    %5137 = vmatpush.msra.mxu0 %v1789
    %5138 = vmatpush.msra.mxu0 %v1781
    %5139 = vmatpush.msra.mxu0 %v1773
    %5140 = vmatpush.msra.mxu0 %v1765
    %5141 = vmatpush.msra.mxu0 %v1757
    %5142 = vmatpush.msra.mxu0 %v1749
    %5143 = vmatmul.f32.gmra.mxu0 %v4824
    %v5144 = vpop.f32.mrf.mxu0
    %v5145 = vadd.f32 %v5125, %v5144
    %5146 = vdwg.mxu0
    %v5147 = vadd.f32 %v4815, %v4865
    %v5148 = vadd.f32 %v4816, %v4905
    %v5149 = vadd.f32 %v4817, %v4945
    %v5150 = vadd.f32 %v4818, %v4985
    %v5151 = vadd.f32 %v4819, %v5025
    %v5152 = vadd.f32 %v4820, %v5065
    %v5153 = vadd.f32 %v4821, %v5105
    %v5154 = vadd.f32 %v4822, %v5145
    %v5155 = vxor.u32 %v5147, 2147483648
    %v5156 = vxor.u32 %v5148, 2147483648
    %v5157 = vmul.f32 %v5155, 1.442695
    %v5158 = vpow.pop %v5157
    %v5159 = vmul.f32 %v5156, 1.442695
    %v5160 = vpow.pop %v5159
    %v5161 = vadd.f32 %v5158, 1.0
    %v5162 = vadd.f32 %v5160, 1.0
    %v5163 = vrcp.pop %v5161
    %v5164 = vmul.f32 %v5161, %v5163
    %v5165 = vsub.f32 1.0, %v5164
    %v5166 = vmul.f32 %v5163, %v5165
    %v5167 = vadd.f32 %v5163, %v5166
    %vm5168 = vweird.f32 %v5161
    %vm5169 = vweird.f32 %v5163
    %vm5170 = vmor %vm5168, %vm5169
    %v5171 = vsel %vm5170, %v5163, %v5167
    %v5172 = vand.u32 2147483647, %v5161
    %vm5173 = vcmp.eq.f32.partialorder %v5172, 8.507059e+37
    %v5174 = vand.u32 %v5161, 2147483648
    %v5175 = vor.u32 1.1754944e-38, %v5174
    %v5176 = vsel %vm5173, %v5175, %v5171
    %v5177 = vmul.f32 1.0, %v5176
    %v5178 = vrcp.pop %v5162
    %v5179 = vmul.f32 %v5162, %v5178
    %v5180 = vsub.f32 1.0, %v5179
    %v5181 = vmul.f32 %v5178, %v5180
    %v5182 = vadd.f32 %v5178, %v5181
    %vm5183 = vweird.f32 %v5162
    %vm5184 = vweird.f32 %v5178
    %vm5185 = vmor %vm5183, %vm5184
    %v5186 = vsel %vm5185, %v5178, %v5182
    %v5187 = vand.u32 2147483647, %v5162
    %vm5188 = vcmp.eq.f32.partialorder %v5187, 8.507059e+37
    %v5189 = vand.u32 %v5162, 2147483648
    %v5190 = vor.u32 1.1754944e-38, %v5189
    %v5191 = vsel %vm5188, %v5190, %v5186
    %v5192 = vmul.f32 1.0, %v5191
    %v5193 = vxor.u32 %v5149, 2147483648
    %v5194 = vxor.u32 %v5150, 2147483648
    %v5195 = vmul.f32 %v5193, 1.442695
    %v5196 = vpow.pop %v5195
    %v5197 = vmul.f32 %v5194, 1.442695
    %v5198 = vpow.pop %v5197
    %v5199 = vadd.f32 %v5196, 1.0
    %v5200 = vadd.f32 %v5198, 1.0
    %v5201 = vrcp.pop %v5199
    %v5202 = vmul.f32 %v5199, %v5201
    %v5203 = vsub.f32 1.0, %v5202
    %v5204 = vmul.f32 %v5201, %v5203
    %v5205 = vadd.f32 %v5201, %v5204
    %vm5206 = vweird.f32 %v5199
    %vm5207 = vweird.f32 %v5201
    %vm5208 = vmor %vm5206, %vm5207
    %v5209 = vsel %vm5208, %v5201, %v5205
    %v5210 = vand.u32 2147483647, %v5199
    %vm5211 = vcmp.eq.f32.partialorder %v5210, 8.507059e+37
    %v5212 = vand.u32 %v5199, 2147483648
    %v5213 = vor.u32 1.1754944e-38, %v5212
    %v5214 = vsel %vm5211, %v5213, %v5209
    %v5215 = vmul.f32 1.0, %v5214
    %v5216 = vrcp.pop %v5200
    %v5217 = vmul.f32 %v5200, %v5216
    %v5218 = vsub.f32 1.0, %v5217
    %v5219 = vmul.f32 %v5216, %v5218
    %v5220 = vadd.f32 %v5216, %v5219
    %vm5221 = vweird.f32 %v5200
    %vm5222 = vweird.f32 %v5216
    %vm5223 = vmor %vm5221, %vm5222
    %v5224 = vsel %vm5223, %v5216, %v5220
    %v5225 = vand.u32 2147483647, %v5200
    %vm5226 = vcmp.eq.f32.partialorder %v5225, 8.507059e+37
    %v5227 = vand.u32 %v5200, 2147483648
    %v5228 = vor.u32 1.1754944e-38, %v5227
    %v5229 = vsel %vm5226, %v5228, %v5224
    %v5230 = vmul.f32 1.0, %v5229
    %v5231 = vtanh.pop %v5151
    %v5232 = vtanh.pop %v5152
    %v5233 = vxor.u32 %v5153, 2147483648
    %v5234 = vxor.u32 %v5154, 2147483648
    %v5235 = vmul.f32 %v5233, 1.442695
    %v5236 = vpow.pop %v5235
    %v5237 = vmul.f32 %v5234, 1.442695
    %v5238 = vpow.pop %v5237
    %v5239 = vadd.f32 %v5236, 1.0
    %v5240 = vadd.f32 %v5238, 1.0
    %v5241 = vrcp.pop %v5239
    %v5242 = vmul.f32 %v5239, %v5241
    %v5243 = vsub.f32 1.0, %v5242
    %v5244 = vmul.f32 %v5241, %v5243
    %v5245 = vadd.f32 %v5241, %v5244
    %vm5246 = vweird.f32 %v5239
    %vm5247 = vweird.f32 %v5241
    %vm5248 = vmor %vm5246, %vm5247
    %v5249 = vsel %vm5248, %v5241, %v5245
    %v5250 = vand.u32 2147483647, %v5239
    %vm5251 = vcmp.eq.f32.partialorder %v5250, 8.507059e+37
    %v5252 = vand.u32 %v5239, 2147483648
    %v5253 = vor.u32 1.1754944e-38, %v5252
    %v5254 = vsel %vm5251, %v5253, %v5249
    %v5255 = vmul.f32 1.0, %v5254
    %v5256 = vrcp.pop %v5240
    %v5257 = vmul.f32 %v5240, %v5256
    %v5258 = vsub.f32 1.0, %v5257
    %v5259 = vmul.f32 %v5256, %v5258
    %v5260 = vadd.f32 %v5256, %v5259
    %vm5261 = vweird.f32 %v5240
    %vm5262 = vweird.f32 %v5256
    %vm5263 = vmor %vm5261, %vm5262
    %v5264 = vsel %vm5263, %v5256, %v5260
    %v5265 = vand.u32 2147483647, %v5240
    %vm5266 = vcmp.eq.f32.partialorder %v5265, 8.507059e+37
    %v5267 = vand.u32 %v5240, 2147483648
    %v5268 = vor.u32 1.1754944e-38, %v5267
    %v5269 = vsel %vm5266, %v5268, %v5264
    %v5270 = vmul.f32 1.0, %v5269
    %v5273 = vrot.slane %v4799, 4
    %v5274 = vrot.slane %v4800, 4
    %v5277 = vmul.f32 %v5215, %v5273
    %v5278 = vmul.f32 %v5230, %v5274
    %v5279 = vmul.f32 %v5177, %v5231
    %v5280 = vmul.f32 %v5192, %v5232
    %v5281 = vadd.f32 %v5277, %v5279
    %v5282 = vadd.f32 %v5278, %v5280
    %v5283 = vtanh.pop %v5281
    %v5284 = vtanh.pop %v5282
    %v5285 = vmul.f32 %v5255, %v5283
    %v5286 = vmul.f32 %v5270, %v5284
    %5289 = vst [vmem:[#allocation1] sm:$0xff] %v5285
    %5290 = vst [vmem:[#allocation1 + $0x9] sm:$0xff] %v5286
    %s5291 = scalar_lea.vmem [#allocation1], 3
    %v5292 = vld [vmem:[%s5291] ss:$9 sm:$0xff]
    %s5294 = scalar_lea.vmem [#allocation3], 6
    %5295 = vst.msk [vmem:[%s5294] ss:$8 sm:$0x3] %vm2342, %v5292
    %5296 = vst.msk [vmem:[%s5294] ss:$8 sm:$0x0] %vm2342, %v5292
    %v5297 = vld [vmem:[#allocation2 + $0xc0] sm:$0xf0]
    %v5298 = vld [vmem:[#allocation2 + $0xc8] sm:$0xf0]
    %v5299 = vld [vmem:[#allocation2 + $0xd0] sm:$0xf0]
    %v5300 = vld [vmem:[#allocation2 + $0xd8] sm:$0xf0]
    %v5301 = vld [vmem:[#allocation2 + $0xe0] sm:$0xf0]
    %v5302 = vld [vmem:[#allocation2 + $0xe8] sm:$0xf0]
    %v5303 = vld [vmem:[#allocation2 + $0xf0] sm:$0xf0]
    %v5304 = vld [vmem:[#allocation2 + $0xf8] sm:$0xf0]
    %5305 = vmatpush.msra.mxu0 %v1734
    %5306 = vmatpush.msra.mxu0 %v1726
    %5307 = vmatpush.msra.mxu0 %v1718
    %5308 = vmatpush.msra.mxu0 %v1710
    %5309 = vmatpush.msra.mxu0 %v1702
    %5310 = vmatpush.msra.mxu0 %v1694
    %5311 = vmatpush.msra.mxu0 %v1686
    %5312 = vmatpush.msra.mxu0 %v1678
    %5313 = vmatpush.msra.mxu0 %v1670
    %5314 = vmatpush.msra.mxu0 %v1662
    %5315 = vmatpush.msra.mxu0 %v1654
    %5316 = vmatpush.msra.mxu0 %v1646
    %5317 = vmatpush.msra.mxu0 %v1638
    %5318 = vmatpush.msra.mxu0 %v1630
    %5319 = vmatpush.msra.mxu0 %v1622
    %5320 = vmatpush.msra.mxu0 %v1614
    %5321 = vmatmul.f32.gmra.mxu0 %v5285
    %v5322 = vpop.f32.mrf.mxu0
    %v5323 = vadd.f32 0.0, %v5322
    %5324 = vdwg.mxu0
    %5325 = vmatpush.msra.mxu0 %v1862
    %5326 = vmatpush.msra.mxu0 %v1854
    %5327 = vmatpush.msra.mxu0 %v1846
    %5328 = vmatpush.msra.mxu0 %v1838
    %5329 = vmatpush.msra.mxu0 %v1830
    %5330 = vmatpush.msra.mxu0 %v1822
    %5331 = vmatpush.msra.mxu0 %v1814
    %5332 = vmatpush.msra.mxu0 %v1806
    %5333 = vmatpush.msra.mxu0 %v1798
    %5334 = vmatpush.msra.mxu0 %v1790
    %5335 = vmatpush.msra.mxu0 %v1782
    %5336 = vmatpush.msra.mxu0 %v1774
    %5337 = vmatpush.msra.mxu0 %v1766
    %5338 = vmatpush.msra.mxu0 %v1758
    %5339 = vmatpush.msra.mxu0 %v1750
    %5340 = vmatpush.msra.mxu0 %v1742
    %5341 = vmatmul.f32.gmra.mxu0 %v5286
    %v5342 = vpop.f32.mrf.mxu0
    %v5343 = vadd.f32 %v5323, %v5342
    %5344 = vdwg.mxu0
    %5345 = vmatpush.msra.mxu0 %v1735
    %5346 = vmatpush.msra.mxu0 %v1727
    %5347 = vmatpush.msra.mxu0 %v1719
    %5348 = vmatpush.msra.mxu0 %v1711
    %5349 = vmatpush.msra.mxu0 %v1703
    %5350 = vmatpush.msra.mxu0 %v1695
    %5351 = vmatpush.msra.mxu0 %v1687
    %5352 = vmatpush.msra.mxu0 %v1679
    %5353 = vmatpush.msra.mxu0 %v1671
    %5354 = vmatpush.msra.mxu0 %v1663
    %5355 = vmatpush.msra.mxu0 %v1655
    %5356 = vmatpush.msra.mxu0 %v1647
    %5357 = vmatpush.msra.mxu0 %v1639
    %5358 = vmatpush.msra.mxu0 %v1631
    %5359 = vmatpush.msra.mxu0 %v1623
    %5360 = vmatpush.msra.mxu0 %v1615
    %5361 = vmatmul.f32.gmra.mxu0 %v5285
    %v5362 = vpop.f32.mrf.mxu0
    %v5363 = vadd.f32 0.0, %v5362
    %5364 = vdwg.mxu0
    %5365 = vmatpush.msra.mxu0 %v1863
    %5366 = vmatpush.msra.mxu0 %v1855
    %5367 = vmatpush.msra.mxu0 %v1847
    %5368 = vmatpush.msra.mxu0 %v1839
    %5369 = vmatpush.msra.mxu0 %v1831
    %5370 = vmatpush.msra.mxu0 %v1823
    %5371 = vmatpush.msra.mxu0 %v1815
    %5372 = vmatpush.msra.mxu0 %v1807
    %5373 = vmatpush.msra.mxu0 %v1799
    %5374 = vmatpush.msra.mxu0 %v1791
    %5375 = vmatpush.msra.mxu0 %v1783
    %5376 = vmatpush.msra.mxu0 %v1775
    %5377 = vmatpush.msra.mxu0 %v1767
    %5378 = vmatpush.msra.mxu0 %v1759
    %5379 = vmatpush.msra.mxu0 %v1751
    %5380 = vmatpush.msra.mxu0 %v1743
    %5381 = vmatmul.f32.gmra.mxu0 %v5286
    %v5382 = vpop.f32.mrf.mxu0
    %v5383 = vadd.f32 %v5363, %v5382
    %5384 = vdwg.mxu0
    %5385 = vmatpush.msra.mxu0 %v1736
    %5386 = vmatpush.msra.mxu0 %v1728
    %5387 = vmatpush.msra.mxu0 %v1720
    %5388 = vmatpush.msra.mxu0 %v1712
    %5389 = vmatpush.msra.mxu0 %v1704
    %5390 = vmatpush.msra.mxu0 %v1696
    %5391 = vmatpush.msra.mxu0 %v1688
    %5392 = vmatpush.msra.mxu0 %v1680
    %5393 = vmatpush.msra.mxu0 %v1672
    %5394 = vmatpush.msra.mxu0 %v1664
    %5395 = vmatpush.msra.mxu0 %v1656
    %5396 = vmatpush.msra.mxu0 %v1648
    %5397 = vmatpush.msra.mxu0 %v1640
    %5398 = vmatpush.msra.mxu0 %v1632
    %5399 = vmatpush.msra.mxu0 %v1624
    %5400 = vmatpush.msra.mxu0 %v1616
    %5401 = vmatmul.f32.gmra.mxu0 %v5285
    %v5402 = vpop.f32.mrf.mxu0
    %v5403 = vadd.f32 0.0, %v5402
    %5404 = vdwg.mxu0
    %5405 = vmatpush.msra.mxu0 %v1864
    %5406 = vmatpush.msra.mxu0 %v1856
    %5407 = vmatpush.msra.mxu0 %v1848
    %5408 = vmatpush.msra.mxu0 %v1840
    %5409 = vmatpush.msra.mxu0 %v1832
    %5410 = vmatpush.msra.mxu0 %v1824
    %5411 = vmatpush.msra.mxu0 %v1816
    %5412 = vmatpush.msra.mxu0 %v1808
    %5413 = vmatpush.msra.mxu0 %v1800
    %5414 = vmatpush.msra.mxu0 %v1792
    %5415 = vmatpush.msra.mxu0 %v1784
    %5416 = vmatpush.msra.mxu0 %v1776
    %5417 = vmatpush.msra.mxu0 %v1768
    %5418 = vmatpush.msra.mxu0 %v1760
    %5419 = vmatpush.msra.mxu0 %v1752
    %5420 = vmatpush.msra.mxu0 %v1744
    %5421 = vmatmul.f32.gmra.mxu0 %v5286
    %v5422 = vpop.f32.mrf.mxu0
    %v5423 = vadd.f32 %v5403, %v5422
    %5424 = vdwg.mxu0
    %5425 = vmatpush.msra.mxu0 %v1737
    %5426 = vmatpush.msra.mxu0 %v1729
    %5427 = vmatpush.msra.mxu0 %v1721
    %5428 = vmatpush.msra.mxu0 %v1713
    %5429 = vmatpush.msra.mxu0 %v1705
    %5430 = vmatpush.msra.mxu0 %v1697
    %5431 = vmatpush.msra.mxu0 %v1689
    %5432 = vmatpush.msra.mxu0 %v1681
    %5433 = vmatpush.msra.mxu0 %v1673
    %5434 = vmatpush.msra.mxu0 %v1665
    %5435 = vmatpush.msra.mxu0 %v1657
    %5436 = vmatpush.msra.mxu0 %v1649
    %5437 = vmatpush.msra.mxu0 %v1641
    %5438 = vmatpush.msra.mxu0 %v1633
    %5439 = vmatpush.msra.mxu0 %v1625
    %5440 = vmatpush.msra.mxu0 %v1617
    %5441 = vmatmul.f32.gmra.mxu0 %v5285
    %v5442 = vpop.f32.mrf.mxu0
    %v5443 = vadd.f32 0.0, %v5442
    %5444 = vdwg.mxu0
    %5445 = vmatpush.msra.mxu0 %v1865
    %5446 = vmatpush.msra.mxu0 %v1857
    %5447 = vmatpush.msra.mxu0 %v1849
    %5448 = vmatpush.msra.mxu0 %v1841
    %5449 = vmatpush.msra.mxu0 %v1833
    %5450 = vmatpush.msra.mxu0 %v1825
    %5451 = vmatpush.msra.mxu0 %v1817
    %5452 = vmatpush.msra.mxu0 %v1809
    %5453 = vmatpush.msra.mxu0 %v1801
    %5454 = vmatpush.msra.mxu0 %v1793
    %5455 = vmatpush.msra.mxu0 %v1785
    %5456 = vmatpush.msra.mxu0 %v1777
    %5457 = vmatpush.msra.mxu0 %v1769
    %5458 = vmatpush.msra.mxu0 %v1761
    %5459 = vmatpush.msra.mxu0 %v1753
    %5460 = vmatpush.msra.mxu0 %v1745
    %5461 = vmatmul.f32.gmra.mxu0 %v5286
    %v5462 = vpop.f32.mrf.mxu0
    %v5463 = vadd.f32 %v5443, %v5462
    %5464 = vdwg.mxu0
    %5465 = vmatpush.msra.mxu0 %v1738
    %5466 = vmatpush.msra.mxu0 %v1730
    %5467 = vmatpush.msra.mxu0 %v1722
    %5468 = vmatpush.msra.mxu0 %v1714
    %5469 = vmatpush.msra.mxu0 %v1706
    %5470 = vmatpush.msra.mxu0 %v1698
    %5471 = vmatpush.msra.mxu0 %v1690
    %5472 = vmatpush.msra.mxu0 %v1682
    %5473 = vmatpush.msra.mxu0 %v1674
    %5474 = vmatpush.msra.mxu0 %v1666
    %5475 = vmatpush.msra.mxu0 %v1658
    %5476 = vmatpush.msra.mxu0 %v1650
    %5477 = vmatpush.msra.mxu0 %v1642
    %5478 = vmatpush.msra.mxu0 %v1634
    %5479 = vmatpush.msra.mxu0 %v1626
    %5480 = vmatpush.msra.mxu0 %v1618
    %5481 = vmatmul.f32.gmra.mxu0 %v5285
    %v5482 = vpop.f32.mrf.mxu0
    %v5483 = vadd.f32 0.0, %v5482
    %5484 = vdwg.mxu0
    %5485 = vmatpush.msra.mxu0 %v1866
    %5486 = vmatpush.msra.mxu0 %v1858
    %5487 = vmatpush.msra.mxu0 %v1850
    %5488 = vmatpush.msra.mxu0 %v1842
    %5489 = vmatpush.msra.mxu0 %v1834
    %5490 = vmatpush.msra.mxu0 %v1826
    %5491 = vmatpush.msra.mxu0 %v1818
    %5492 = vmatpush.msra.mxu0 %v1810
    %5493 = vmatpush.msra.mxu0 %v1802
    %5494 = vmatpush.msra.mxu0 %v1794
    %5495 = vmatpush.msra.mxu0 %v1786
    %5496 = vmatpush.msra.mxu0 %v1778
    %5497 = vmatpush.msra.mxu0 %v1770
    %5498 = vmatpush.msra.mxu0 %v1762
    %5499 = vmatpush.msra.mxu0 %v1754
    %5500 = vmatpush.msra.mxu0 %v1746
    %5501 = vmatmul.f32.gmra.mxu0 %v5286
    %v5502 = vpop.f32.mrf.mxu0
    %v5503 = vadd.f32 %v5483, %v5502
    %5504 = vdwg.mxu0
    %5505 = vmatpush.msra.mxu0 %v1739
    %5506 = vmatpush.msra.mxu0 %v1731
    %5507 = vmatpush.msra.mxu0 %v1723
    %5508 = vmatpush.msra.mxu0 %v1715
    %5509 = vmatpush.msra.mxu0 %v1707
    %5510 = vmatpush.msra.mxu0 %v1699
    %5511 = vmatpush.msra.mxu0 %v1691
    %5512 = vmatpush.msra.mxu0 %v1683
    %5513 = vmatpush.msra.mxu0 %v1675
    %5514 = vmatpush.msra.mxu0 %v1667
    %5515 = vmatpush.msra.mxu0 %v1659
    %5516 = vmatpush.msra.mxu0 %v1651
    %5517 = vmatpush.msra.mxu0 %v1643
    %5518 = vmatpush.msra.mxu0 %v1635
    %5519 = vmatpush.msra.mxu0 %v1627
    %5520 = vmatpush.msra.mxu0 %v1619
    %5521 = vmatmul.f32.gmra.mxu0 %v5285
    %v5522 = vpop.f32.mrf.mxu0
    %v5523 = vadd.f32 0.0, %v5522
    %5524 = vdwg.mxu0
    %5525 = vmatpush.msra.mxu0 %v1867
    %5526 = vmatpush.msra.mxu0 %v1859
    %5527 = vmatpush.msra.mxu0 %v1851
    %5528 = vmatpush.msra.mxu0 %v1843
    %5529 = vmatpush.msra.mxu0 %v1835
    %5530 = vmatpush.msra.mxu0 %v1827
    %5531 = vmatpush.msra.mxu0 %v1819
    %5532 = vmatpush.msra.mxu0 %v1811
    %5533 = vmatpush.msra.mxu0 %v1803
    %5534 = vmatpush.msra.mxu0 %v1795
    %5535 = vmatpush.msra.mxu0 %v1787
    %5536 = vmatpush.msra.mxu0 %v1779
    %5537 = vmatpush.msra.mxu0 %v1771
    %5538 = vmatpush.msra.mxu0 %v1763
    %5539 = vmatpush.msra.mxu0 %v1755
    %5540 = vmatpush.msra.mxu0 %v1747
    %5541 = vmatmul.f32.gmra.mxu0 %v5286
    %v5542 = vpop.f32.mrf.mxu0
    %v5543 = vadd.f32 %v5523, %v5542
    %5544 = vdwg.mxu0
    %5545 = vmatpush.msra.mxu0 %v1740
    %5546 = vmatpush.msra.mxu0 %v1732
    %5547 = vmatpush.msra.mxu0 %v1724
    %5548 = vmatpush.msra.mxu0 %v1716
    %5549 = vmatpush.msra.mxu0 %v1708
    %5550 = vmatpush.msra.mxu0 %v1700
    %5551 = vmatpush.msra.mxu0 %v1692
    %5552 = vmatpush.msra.mxu0 %v1684
    %5553 = vmatpush.msra.mxu0 %v1676
    %5554 = vmatpush.msra.mxu0 %v1668
    %5555 = vmatpush.msra.mxu0 %v1660
    %5556 = vmatpush.msra.mxu0 %v1652
    %5557 = vmatpush.msra.mxu0 %v1644
    %5558 = vmatpush.msra.mxu0 %v1636
    %5559 = vmatpush.msra.mxu0 %v1628
    %5560 = vmatpush.msra.mxu0 %v1620
    %5561 = vmatmul.f32.gmra.mxu0 %v5285
    %v5562 = vpop.f32.mrf.mxu0
    %v5563 = vadd.f32 0.0, %v5562
    %5564 = vdwg.mxu0
    %5565 = vmatpush.msra.mxu0 %v1868
    %5566 = vmatpush.msra.mxu0 %v1860
    %5567 = vmatpush.msra.mxu0 %v1852
    %5568 = vmatpush.msra.mxu0 %v1844
    %5569 = vmatpush.msra.mxu0 %v1836
    %5570 = vmatpush.msra.mxu0 %v1828
    %5571 = vmatpush.msra.mxu0 %v1820
    %5572 = vmatpush.msra.mxu0 %v1812
    %5573 = vmatpush.msra.mxu0 %v1804
    %5574 = vmatpush.msra.mxu0 %v1796
    %5575 = vmatpush.msra.mxu0 %v1788
    %5576 = vmatpush.msra.mxu0 %v1780
    %5577 = vmatpush.msra.mxu0 %v1772
    %5578 = vmatpush.msra.mxu0 %v1764
    %5579 = vmatpush.msra.mxu0 %v1756
    %5580 = vmatpush.msra.mxu0 %v1748
    %5581 = vmatmul.f32.gmra.mxu0 %v5286
    %v5582 = vpop.f32.mrf.mxu0
    %v5583 = vadd.f32 %v5563, %v5582
    %5584 = vdwg.mxu0
    %5585 = vmatpush.msra.mxu0 %v1741
    %5586 = vmatpush.msra.mxu0 %v1733
    %5587 = vmatpush.msra.mxu0 %v1725
    %5588 = vmatpush.msra.mxu0 %v1717
    %5589 = vmatpush.msra.mxu0 %v1709
    %5590 = vmatpush.msra.mxu0 %v1701
    %5591 = vmatpush.msra.mxu0 %v1693
    %5592 = vmatpush.msra.mxu0 %v1685
    %5593 = vmatpush.msra.mxu0 %v1677
    %5594 = vmatpush.msra.mxu0 %v1669
    %5595 = vmatpush.msra.mxu0 %v1661
    %5596 = vmatpush.msra.mxu0 %v1653
    %5597 = vmatpush.msra.mxu0 %v1645
    %5598 = vmatpush.msra.mxu0 %v1637
    %5599 = vmatpush.msra.mxu0 %v1629
    %5600 = vmatpush.msra.mxu0 %v1621
    %5601 = vmatmul.f32.gmra.mxu0 %v5285
    %v5602 = vpop.f32.mrf.mxu0
    %v5603 = vadd.f32 0.0, %v5602
    %5604 = vdwg.mxu0
    %5605 = vmatpush.msra.mxu0 %v1869
    %5606 = vmatpush.msra.mxu0 %v1861
    %5607 = vmatpush.msra.mxu0 %v1853
    %5608 = vmatpush.msra.mxu0 %v1845
    %5609 = vmatpush.msra.mxu0 %v1837
    %5610 = vmatpush.msra.mxu0 %v1829
    %5611 = vmatpush.msra.mxu0 %v1821
    %5612 = vmatpush.msra.mxu0 %v1813
    %5613 = vmatpush.msra.mxu0 %v1805
    %5614 = vmatpush.msra.mxu0 %v1797
    %5615 = vmatpush.msra.mxu0 %v1789
    %5616 = vmatpush.msra.mxu0 %v1781
    %5617 = vmatpush.msra.mxu0 %v1773
    %5618 = vmatpush.msra.mxu0 %v1765
    %5619 = vmatpush.msra.mxu0 %v1757
    %5620 = vmatpush.msra.mxu0 %v1749
    %5621 = vmatmul.f32.gmra.mxu0 %v5286
    %v5622 = vpop.f32.mrf.mxu0
    %v5623 = vadd.f32 %v5603, %v5622
    %5624 = vdwg.mxu0
    %v5633 = vrot.slane %v5343, 4
    %v5634 = vrot.slane %v5383, 4
    %v5635 = vrot.slane %v5423, 4
    %v5636 = vrot.slane %v5463, 4
    %v5637 = vrot.slane %v5503, 4
    %v5638 = vrot.slane %v5543, 4
    %v5639 = vrot.slane %v5583, 4
    %v5640 = vrot.slane %v5623, 4
    %v5649 = vadd.f32 %v5297, %v5633
    %v5650 = vadd.f32 %v5298, %v5634
    %v5651 = vadd.f32 %v5299, %v5635
    %v5652 = vadd.f32 %v5300, %v5636
    %v5653 = vadd.f32 %v5301, %v5637
    %v5654 = vadd.f32 %v5302, %v5638
    %v5655 = vadd.f32 %v5303, %v5639
    %v5656 = vadd.f32 %v5304, %v5640
    %v5657 = vxor.u32 %v5649, 2147483648
    %v5658 = vxor.u32 %v5650, 2147483648
    %v5659 = vmul.f32 %v5657, 1.442695
    %v5660 = vpow.pop %v5659
    %v5661 = vmul.f32 %v5658, 1.442695
    %v5662 = vpow.pop %v5661
    %v5663 = vadd.f32 %v5660, 1.0
    %v5664 = vadd.f32 %v5662, 1.0
    %v5665 = vrcp.pop %v5663
    %v5666 = vmul.f32 %v5663, %v5665
    %v5667 = vsub.f32 1.0, %v5666
    %v5668 = vmul.f32 %v5665, %v5667
    %v5669 = vadd.f32 %v5665, %v5668
    %vm5670 = vweird.f32 %v5663
    %vm5671 = vweird.f32 %v5665
    %vm5672 = vmor %vm5670, %vm5671
    %v5673 = vsel %vm5672, %v5665, %v5669
    %v5674 = vand.u32 2147483647, %v5663
    %vm5675 = vcmp.eq.f32.partialorder %v5674, 8.507059e+37
    %v5676 = vand.u32 %v5663, 2147483648
    %v5677 = vor.u32 1.1754944e-38, %v5676
    %v5678 = vsel %vm5675, %v5677, %v5673
    %v5679 = vmul.f32 1.0, %v5678
    %v5680 = vrcp.pop %v5664
    %v5681 = vmul.f32 %v5664, %v5680
    %v5682 = vsub.f32 1.0, %v5681
    %v5683 = vmul.f32 %v5680, %v5682
    %v5684 = vadd.f32 %v5680, %v5683
    %vm5685 = vweird.f32 %v5664
    %vm5686 = vweird.f32 %v5680
    %vm5687 = vmor %vm5685, %vm5686
    %v5688 = vsel %vm5687, %v5680, %v5684
    %v5689 = vand.u32 2147483647, %v5664
    %vm5690 = vcmp.eq.f32.partialorder %v5689, 8.507059e+37
    %v5691 = vand.u32 %v5664, 2147483648
    %v5692 = vor.u32 1.1754944e-38, %v5691
    %v5693 = vsel %vm5690, %v5692, %v5688
    %v5694 = vmul.f32 1.0, %v5693
    %v5695 = vxor.u32 %v5651, 2147483648
    %v5696 = vxor.u32 %v5652, 2147483648
    %v5697 = vmul.f32 %v5695, 1.442695
    %v5698 = vpow.pop %v5697
    %v5699 = vmul.f32 %v5696, 1.442695
    %v5700 = vpow.pop %v5699
    %v5701 = vadd.f32 %v5698, 1.0
    %v5702 = vadd.f32 %v5700, 1.0
    %v5703 = vrcp.pop %v5701
    %v5704 = vmul.f32 %v5701, %v5703
    %v5705 = vsub.f32 1.0, %v5704
    %v5706 = vmul.f32 %v5703, %v5705
    %v5707 = vadd.f32 %v5703, %v5706
    %vm5708 = vweird.f32 %v5701
    %vm5709 = vweird.f32 %v5703
    %vm5710 = vmor %vm5708, %vm5709
    %v5711 = vsel %vm5710, %v5703, %v5707
    %v5712 = vand.u32 2147483647, %v5701
    %vm5713 = vcmp.eq.f32.partialorder %v5712, 8.507059e+37
    %v5714 = vand.u32 %v5701, 2147483648
    %v5715 = vor.u32 1.1754944e-38, %v5714
    %v5716 = vsel %vm5713, %v5715, %v5711
    %v5717 = vmul.f32 1.0, %v5716
    %v5718 = vrcp.pop %v5702
    %v5719 = vmul.f32 %v5702, %v5718
    %v5720 = vsub.f32 1.0, %v5719
    %v5721 = vmul.f32 %v5718, %v5720
    %v5722 = vadd.f32 %v5718, %v5721
    %vm5723 = vweird.f32 %v5702
    %vm5724 = vweird.f32 %v5718
    %vm5725 = vmor %vm5723, %vm5724
    %v5726 = vsel %vm5725, %v5718, %v5722
    %v5727 = vand.u32 2147483647, %v5702
    %vm5728 = vcmp.eq.f32.partialorder %v5727, 8.507059e+37
    %v5729 = vand.u32 %v5702, 2147483648
    %v5730 = vor.u32 1.1754944e-38, %v5729
    %v5731 = vsel %vm5728, %v5730, %v5726
    %v5732 = vmul.f32 1.0, %v5731
    %v5733 = vtanh.pop %v5653
    %v5734 = vtanh.pop %v5654
    %v5735 = vxor.u32 %v5655, 2147483648
    %v5736 = vxor.u32 %v5656, 2147483648
    %v5737 = vmul.f32 %v5735, 1.442695
    %v5738 = vpow.pop %v5737
    %v5739 = vmul.f32 %v5736, 1.442695
    %v5740 = vpow.pop %v5739
    %v5741 = vadd.f32 %v5738, 1.0
    %v5742 = vadd.f32 %v5740, 1.0
    %v5743 = vrcp.pop %v5741
    %v5744 = vmul.f32 %v5741, %v5743
    %v5745 = vsub.f32 1.0, %v5744
    %v5746 = vmul.f32 %v5743, %v5745
    %v5747 = vadd.f32 %v5743, %v5746
    %vm5748 = vweird.f32 %v5741
    %vm5749 = vweird.f32 %v5743
    %vm5750 = vmor %vm5748, %vm5749
    %v5751 = vsel %vm5750, %v5743, %v5747
    %v5752 = vand.u32 2147483647, %v5741
    %vm5753 = vcmp.eq.f32.partialorder %v5752, 8.507059e+37
    %v5754 = vand.u32 %v5741, 2147483648
    %v5755 = vor.u32 1.1754944e-38, %v5754
    %v5756 = vsel %vm5753, %v5755, %v5751
    %v5757 = vmul.f32 1.0, %v5756
    %v5758 = vrcp.pop %v5742
    %v5759 = vmul.f32 %v5742, %v5758
    %v5760 = vsub.f32 1.0, %v5759
    %v5761 = vmul.f32 %v5758, %v5760
    %v5762 = vadd.f32 %v5758, %v5761
    %vm5763 = vweird.f32 %v5742
    %vm5764 = vweird.f32 %v5758
    %vm5765 = vmor %vm5763, %vm5764
    %v5766 = vsel %vm5765, %v5758, %v5762
    %v5767 = vand.u32 2147483647, %v5742
    %vm5768 = vcmp.eq.f32.partialorder %v5767, 8.507059e+37
    %v5769 = vand.u32 %v5742, 2147483648
    %v5770 = vor.u32 1.1754944e-38, %v5769
    %v5771 = vsel %vm5768, %v5770, %v5766
    %v5772 = vmul.f32 1.0, %v5771
    %v5775 = vrot.slane %v5281, 4
    %v5776 = vrot.slane %v5282, 4
    %v5779 = vmul.f32 %v5717, %v5775
    %v5780 = vmul.f32 %v5732, %v5776
    %v5781 = vmul.f32 %v5679, %v5733
    %v5782 = vmul.f32 %v5694, %v5734
    %v5783 = vadd.f32 %v5779, %v5781
    %v5784 = vadd.f32 %v5780, %v5782
    %v5785 = vtanh.pop %v5783
    %v5786 = vtanh.pop %v5784
    %v5787 = vmul.f32 %v5757, %v5785
    %v5788 = vmul.f32 %v5772, %v5786
    %5791 = vst [vmem:[#allocation1] sm:$0xff] %v5787
    %5792 = vst [vmem:[#allocation1 + $0x9] sm:$0xff] %v5788
    %s5793 = scalar_lea.vmem [#allocation1], 7
    %v5794 = vld [vmem:[%s5793] ss:$9 sm:$0xff]
    %s5796 = scalar_lea.vmem [#allocation3], 7
    %5797 = vst.msk [vmem:[%s5796] ss:$8 sm:$0x3] %vm2342, %v5794
    %5798 = vst.msk [vmem:[%s5796] ss:$8 sm:$0x0] %vm2342, %v5794
    %v5799 = vld [vmem:[#allocation3] sm:$0xff]
    %v5800 = vld [vmem:[#allocation3 + $0x8] sm:$0xff]
    %v5801 = vld [vmem:[%s6] sm:$0xff]
    %v5802 = vld [vmem:[%s6 + $0x8] sm:$0xff]
    %v5803 = vld [vmem:[%s6 + $0x10] sm:$0xff]
    %v5804 = vld [vmem:[%s6 + $0x18] sm:$0xff]
    %v5805 = vld [vmem:[%s6 + $0x20] sm:$0xff]
    %v5806 = vld [vmem:[%s6 + $0x28] sm:$0xff]
    %v5807 = vld [vmem:[%s6 + $0x30] sm:$0xff]
    %v5808 = vld [vmem:[%s6 + $0x38] sm:$0xff]
    %v5809 = vld [vmem:[%s6 + $0x40] sm:$0xff]
    %v5810 = vld [vmem:[%s6 + $0x48] sm:$0xff]
    %v5811 = vld [vmem:[%s6 + $0x50] sm:$0xff]
    %v5812 = vld [vmem:[%s6 + $0x58] sm:$0xff]
    %v5813 = vld [vmem:[%s6 + $0x60] sm:$0xff]
    %v5814 = vld [vmem:[%s6 + $0x68] sm:$0xff]
    %v5815 = vld [vmem:[%s6 + $0x70] sm:$0xff]
    %v5816 = vld [vmem:[%s6 + $0x78] sm:$0xff]
    %v5817 = vld [vmem:[%s6 + $0x80] sm:$0xff]
    %v5818 = vld [vmem:[%s6 + $0x88] sm:$0xff]
    %v5819 = vld [vmem:[%s6 + $0x90] sm:$0xff]
    %v5820 = vld [vmem:[%s6 + $0x98] sm:$0xff]
    %v5821 = vld [vmem:[%s6 + $0xa0] sm:$0xff]
    %v5822 = vld [vmem:[%s6 + $0xa8] sm:$0xff]
    %v5823 = vld [vmem:[%s6 + $0xb0] sm:$0xff]
    %v5824 = vld [vmem:[%s6 + $0xb8] sm:$0xff]
    %v5825 = vld [vmem:[%s6 + $0xc0] sm:$0xff]
    %v5826 = vld [vmem:[%s6 + $0xc8] sm:$0xff]
    %v5827 = vld [vmem:[%s6 + $0xd0] sm:$0xff]
    %v5828 = vld [vmem:[%s6 + $0xd8] sm:$0xff]
    %v5829 = vld [vmem:[%s6 + $0xe0] sm:$0xff]
    %v5830 = vld [vmem:[%s6 + $0xe8] sm:$0xff]
    %v5831 = vld [vmem:[%s6 + $0xf0] sm:$0xff]
    %v5832 = vld [vmem:[%s6 + $0xf8] sm:$0xff]
    %v5833 = vld [vmem:[%s7] sm:$0x1]
    %v5835 = vperm.slane %v5833, 0
    %5837 = vmatpush.msra.mxu0 %v5816
    %5838 = vmatpush.msra.mxu0 %v5815
    %5839 = vmatpush.msra.mxu0 %v5814
    %5840 = vmatpush.msra.mxu0 %v5813
    %5841 = vmatpush.msra.mxu0 %v5812
    %5842 = vmatpush.msra.mxu0 %v5811
    %5843 = vmatpush.msra.mxu0 %v5810
    %5844 = vmatpush.msra.mxu0 %v5809
    %5845 = vmatpush.msra.mxu0 %v5808
    %5846 = vmatpush.msra.mxu0 %v5807
    %5847 = vmatpush.msra.mxu0 %v5806
    %5848 = vmatpush.msra.mxu0 %v5805
    %5849 = vmatpush.msra.mxu0 %v5804
    %5850 = vmatpush.msra.mxu0 %v5803
    %5851 = vmatpush.msra.mxu0 %v5802
    %5852 = vmatpush.msra.mxu0 %v5801
    %5853 = vmatmul.f32.gmra.mxu0 %v5799
    %v5854 = vpop.f32.mrf.mxu0
    %v5855 = vadd.f32 %v5835, %v5854
    %5856 = vdwg.mxu0
    %5857 = vmatpush.msra.mxu0 %v5832
    %5858 = vmatpush.msra.mxu0 %v5831
    %5859 = vmatpush.msra.mxu0 %v5830
    %5860 = vmatpush.msra.mxu0 %v5829
    %5861 = vmatpush.msra.mxu0 %v5828
    %5862 = vmatpush.msra.mxu0 %v5827
    %5863 = vmatpush.msra.mxu0 %v5826
    %5864 = vmatpush.msra.mxu0 %v5825
    %5865 = vmatpush.msra.mxu0 %v5824
    %5866 = vmatpush.msra.mxu0 %v5823
    %5867 = vmatpush.msra.mxu0 %v5822
    %5868 = vmatpush.msra.mxu0 %v5821
    %5869 = vmatpush.msra.mxu0 %v5820
    %5870 = vmatpush.msra.mxu0 %v5819
    %5871 = vmatpush.msra.mxu0 %v5818
    %5872 = vmatpush.msra.mxu0 %v5817
    %5873 = vmatmul.f32.gmra.mxu0 %v5800
    %v5874 = vpop.f32.mrf.mxu0
    %v5875 = vadd.f32 %v5855, %v5874
    %5876 = vdwg.mxu0
    %v5877 = vxor.u32 %v5875, 2147483648
    %v5878 = vmul.f32 %v5877, 1.442695
    %v5879 = vpow.pop %v5878
    %v5880 = vadd.f32 %v5879, 1.0
    %v5881 = vrcp.pop %v5880
    %v5882 = vmul.f32 %v5880, %v5881
    %v5883 = vsub.f32 1.0, %v5882
    %v5884 = vmul.f32 %v5881, %v5883
    %v5885 = vadd.f32 %v5881, %v5884
    %vm5886 = vweird.f32 %v5880
    %vm5887 = vweird.f32 %v5881
    %vm5888 = vmor %vm5886, %vm5887
    %v5889 = vsel %vm5888, %v5881, %v5885
    %v5890 = vand.u32 2147483647, %v5880
    %vm5891 = vcmp.eq.f32.partialorder %v5890, 8.507059e+37
    %v5892 = vand.u32 %v5880, 2147483648
    %v5893 = vor.u32 1.1754944e-38, %v5892
    %v5894 = vsel %vm5891, %v5893, %v5889
    %v5895 = vmul.f32 1.0, %v5894
    %vm5896 = vcmask 15360
    %5897 = vst.msk [vmem:[%s8] sm:$0xff] %vm5896, %v5895
    // Predicated region
    $region46: #{temporal_model_forward.1} parent=1 // pred_check
      _
    $region47: #{temporal_model_forward.1} parent=1 // pred_check_branch
      %5899 = sbr.rel (0) target = $region49
    $region48: #{temporal_model_forward.1} parent=1 // pred_region
      _
    $region49: #{temporal_model_forward.1} parent=1 // pred_fallthru
      _
    // Predicated region
    $region50: #{temporal_model_forward.1} parent=1 // pred_check
      _
    $region51: #{temporal_model_forward.1} parent=1 // pred_check_branch
      %5901 = sbr.rel (0) target = $region53
    $region52: #{temporal_model_forward.1} parent=1 // pred_region
      _
    $region53: #{temporal_model_forward.1} parent=1 // pred_fallthru
      _
    %5902 = vsyncpa [#allocation5], 1
    %5903 = vsyncpa [#allocation7], 1

</llo_original>
